<compile_context>
chip_gen: v7x
topology: tpu7x:2x2x1
jax: 0.10.0
libtpu: 0.0.40
codegen_flags: <defaults>
</compile_context>

<pallas_src>
import functools

import numpy as np
import jax
import jax.numpy as jnp
from jax import lax
from jax.experimental import pallas as pl
from jax.experimental.pallas import tpu as pltpu


# ----------------------------- in-kernel helpers ----------------------------

def _gelu(x):
    # TODO(synk): torch nn.GELU defaults to the exact erf GELU; the tanh
    # approximation is used since erf lowering is not guaranteed in Mosaic.
    return jax.nn.gelu(x, approximate=True)


def _mm(w, x):
    # MXU matmul: bf16 operands, f32 accumulation.
    return jnp.dot(w.astype(jnp.bfloat16), x.astype(jnp.bfloat16),
                   preferred_element_type=jnp.float32)


def _layer_norm(v, g, b, eps):
    # LayerNorm2d: normalize over the channel axis (axis 0 = sublanes).
    mu = jnp.mean(v, axis=0, keepdims=True)
    d = v - mu
    var = jnp.mean(d * d, axis=0, keepdims=True)
    return d * lax.rsqrt(var + eps) * g + b


def _softmax_last(s):
    m = jnp.max(s, axis=-1, keepdims=True)
    e = jnp.exp(s - m)
    return e / jnp.sum(e, axis=-1, keepdims=True)


def _dw_conv(v, taps, mask_ref, K, W):
    """Depthwise KxK conv, stride 1, zero padding, on (C, Ltot).

    taps:     (C, K*K) per-channel filter taps (row-major over (dy, dx)).
    mask_ref: (K*K, Ltot) precomputed {0,1} validity of the shifted source lane.
    Spatial shifts ride the XLU (pltpu.roll); lanes that would wrap across
    image rows / batches / streams are zeroed by the precomputed masks.
    """
    Ltot = v.shape[-1]
    p = (K - 1) // 2
    acc = jnp.zeros_like(v)
    t = 0
    for dy in range(-p, p + 1):
        for dx in range(-p, p + 1):
            s = dy * W + dx
            rolled = v if s == 0 else pltpu.roll(v, shift=(-s) % Ltot, axis=1)
            acc = acc + (rolled * mask_ref[t:t + 1, :]) * taps[:, t:t + 1]
            t += 1
    return acc


# ----------------------------- Pallas kernels ------------------------------

def _cbf_head_kernel(x_ref, mask9_ref, negm3_ref, pool_ref,
                     ln_g_ref, ln_b_ref,
                     hm_w_ref, hm_b_ref, hm_p2_w_ref, hm_p2_b_ref,
                     wqkv_ref,
                     cx_ref, px_ref, attn_ref,
                     *, B, H, W, high_dim, low_dim, heads, scale, eps):
    """LayerNorm2d + HighMixer + LowMixer agent attention for BOTH streams.

    Working layout: (channels, Ltot) with Ltot = 2*B*H*W lanes ordered
    [stream, batch, h, w]; every op is batched over both streams.
    """
    N = H * W
    L = B * N
    Ltot = 2 * L
    hd = low_dim // heads

    n_all = _layer_norm(x_ref[...], ln_g_ref[...], ln_b_ref[...], eps)
    nh = n_all[:high_dim, :]                           # HighMixer channels
    nl = n_all[high_dim:, :]                           # LowMixer channels

    # ---- HighMixer ----
    # cx = gelu(proj1(x + dw3 + dw5 + dw7 + dw9)) folded into ONE dw 9x9 conv;
    # the 3x3 maxpool shares the XLU shifts of the 9 inner taps.
    taps = hm_w_ref[...]                               # (high_dim, 81)
    acc = jnp.zeros_like(nh)
    mp = None
    t = 0
    t3 = 0
    for dy in range(-4, 5):
        for dx in range(-4, 5):
            s = dy * W + dx
            rolled = nh if s == 0 else pltpu.roll(nh, shift=(-s) % Ltot, axis=1)
            acc = acc + (rolled * mask9_ref[t:t + 1, :]) * taps[:, t:t + 1]
            if -1 <= dy <= 1 and -1 <= dx <= 1:
                cand = rolled + negm3_ref[t3:t3 + 1, :]
                mp = cand if mp is None else jnp.maximum(mp, cand)
                t3 += 1
            t += 1
    cx_ref[...] = _gelu(acc + hm_b_ref[...])
    px_ref[...] = _gelu(_mm(hm_p2_w_ref[...], mp) + hm_p2_b_ref[...])

    # ---- LowMixer (agent attention) ----
    qkv = _mm(wqkv_ref[...], nl)                       # (3*low_dim, Ltot)
    q = qkv[:low_dim, :]
    k = qkv[low_dim:2 * low_dim, :]
    v = qkv[2 * low_dim:, :]
    pool_m = pool_ref[...]                             # (N, agent_num), f32

    dn0 = (((0,), (0,)), ((), ()))
    for bi in range(B):
        o1 = bi * N                                    # stream-0 lanes, batch bi
        o2 = L + bi * N                                # stream-1 lanes, batch bi
        # shared agent tokens = AdaptiveAvgPool(|q1 - q2|) as one f32 matmul
        diff = jnp.abs(q[:, o1:o1 + N] - q[:, o2:o2 + N])
        agent = jnp.dot(diff, pool_m,
                        preferred_element_type=jnp.float32)   # (low_dim, A)
        for off in (o1, o2):
            qb = q[:, off:off + N]
            kb = k[:, off:off + N]
            vb = v[:, off:off + N]
            for hi in range(heads):
                c0 = hi * hd
                qh = qb[c0:c0 + hd, :]                 # (hd, N)
                kh = kb[c0:c0 + hd, :]
                vh = vb[c0:c0 + hd, :]
                ah = agent[c0:c0 + hd, :]              # (hd, A)
                # softmax((agent*scale) @ k^T) @ v
                s_ak = lax.dot_general((ah * scale).astype(jnp.bfloat16),
                                       kh.astype(jnp.bfloat16), dn0,
                                       preferred_element_type=jnp.float32)  # (A,N)
                p_ak = _softmax_last(s_ak)
                av = lax.dot_general(p_ak.astype(jnp.bfloat16),
                                     vh.astype(jnp.bfloat16),
                                     (((1,), (1,)), ((), ())),
                                     preferred_element_type=jnp.float32)    # (A,hd)
                # softmax((q*scale) @ agent^T) @ agent_v, computed transposed so
                # the store is lane-dense: oh_t[d, n] = sum_a av[a, d] p_qa[n, a]
                s_qa = lax.dot_general((qh * scale).astype(jnp.bfloat16),
                                       ah.astype(jnp.bfloat16), dn0,
                                       preferred_element_type=jnp.float32)  # (N,A)
                p_qa = _softmax_last(s_qa)
                oh_t = lax.dot_general(av.astype(jnp.bfloat16),
                                       p_qa.astype(jnp.bfloat16),
                                       (((0,), (1,)), ((), ())),
                                       preferred_element_type=jnp.float32)  # (hd,N)
                attn_ref[c0:c0 + hd, off:off + N] = oh_t


def _cbf_tail_kernel(x_ref, xs_ref, mask3_ref,
                     fuse_w_ref, proj_w_ref, proj_b_ref,
                     ln_g_ref, ln_b_ref,
                     mb_exp_w_ref, mb_exp_b_ref, mb_dw_w_ref, mb_dw_b_ref,
                     mb_prj_w_ref, out_ref, *, W, eps):
    """conv_fuse + proj + residual, then the local MBConv module (both streams).

    xs is the stacked (cx | px | low) channel block; conv_fuse's "+attn"
    identity is folded into the 3x3 center tap, so ONE depthwise conv + ONE 1x1
    matmul cover the whole AttentionModule tail.
    """
    x = x_ref[...]                                     # (dim, Ltot) residual
    fused = _dw_conv(xs_ref[...], fuse_w_ref[...], mask3_ref, 3, W)
    a = _mm(proj_w_ref[...], fused) + proj_b_ref[...] + x

    # local module: ResidualBlock(pre_norm=LN2d, main=MBConv, shortcut=Id)
    nl = _layer_norm(a, ln_g_ref[...], ln_b_ref[...], eps)
    h = _gelu(_mm(mb_exp_w_ref[...], nl) + mb_exp_b_ref[...])          # (mid,L)
    h = _gelu(_dw_conv(h, mb_dw_w_ref[...], mask3_ref, 3, W) + mb_dw_b_ref[...])
    out_ref[...] = _mm(mb_prj_w_ref[...], h) + a


# ----------------------------- host-side helpers ----------------------------

def _boundary_masks(B, H, W, K):
    """(K*K, 2*B*H*W) {0,1} table: validity of each (dy,dx)-shifted source lane."""
    N = H * W
    lane = np.arange(2 * B * N)
    n = lane % N
    h = n // W
    w = n % W
    p = (K - 1) // 2
    rows = []
    for dy in range(-p, p + 1):
        for dx in range(-p, p + 1):
            rows.append(((h + dy >= 0) & (h + dy < H) &
                         (w + dx >= 0) & (w + dx < W)).astype(np.float32))
    return np.stack(rows, 0)


def _adaptive_pool_matrix(H, W, p1):
    """(N, p1*p1) matrix reproducing torch AdaptiveAvgPool2d bin boundaries."""
    N = H * W
    P = np.zeros((N, p1 * p1), np.float32)
    for i in range(p1):
        hs, he = (i * H) // p1, -((-(i + 1) * H) // p1)
        for j in range(p1):
            ws, we = (j * W) // p1, -((-(j + 1) * W) // p1)
            inv = 1.0 / ((he - hs) * (we - ws))
            for hh in range(hs, he):
                for ww in range(ws, we):
                    P[hh * W + ww, i * p1 + j] = inv
    return P


def cbf_block(t1_nchw, t2_nchw, p, cfg):
    """Public API: NCHW in / NCHW out (PyTorch layout)."""
    B, C, H, W = t1_nchw.shape
    dim = cfg['dim']
    high_dim = cfg['high_dim']
    low_dim = cfg['low_dim']
    heads = cfg['attention_heads']
    agent_num = cfg['agent_num']
    N = H * W
    L = B * N
    Ltot = 2 * L
    p1 = int(round(agent_num ** 0.5))
    scale = float(low_dim // heads) ** -0.5

    # working layout: (channels, 2*B*H*W), lanes ordered [stream, batch, h, w].
    ts = jnp.stack([t1_nchw, t2_nchw], 0).astype(jnp.float32)
    xw = ts.reshape(2, B, C, N).transpose(2, 0, 1, 3).reshape(C, Ltot)

    m9_np = _boundary_masks(B, H, W, 9)
    m3_np = _boundary_masks(B, H, W, 3)
    mask9 = jnp.asarray(m9_np)
    mask3 = jnp.asarray(m3_np)
    negm3 = jnp.asarray((m3_np - 1.0) * np.float32(1e30))   # 0 / -1e30 additive
    pool_mat = jnp.asarray(_adaptive_pool_matrix(H, W, p1))

    # ---- kernel 1: LN + HighMixer + LowMixer attention (both streams) ----
    kernel1 = functools.partial(
        _cbf_head_kernel, B=B, H=H, W=W, high_dim=high_dim, low_dim=low_dim,
        heads=heads, scale=scale, eps=1e-5)
    cx, px, attn = pl.pallas_call(
        kernel1,
        out_shape=(jax.ShapeDtypeStruct((high_dim, Ltot), jnp.float32),
                   jax.ShapeDtypeStruct((high_dim, Ltot), jnp.float32),
                   jax.ShapeDtypeStruct((low_dim, Ltot), jnp.float32)),
    )(xw, mask9, negm3, pool_mat,
      p['ln_ctx_g'], p['ln_ctx_b'],
      p['hm_w'], p['hm_b'], p['hm_p2_w'], p['hm_p2_b'], p['wqkv'])

    # Reference LowMixer ends with a raw `.view(B, c, h, w)` memory
    # reinterpretation (NOT a transpose) of the (b, n, c) attention output.
    # Reproduce it exactly on the 4 KiB result in XLA, move it back to the
    # channel-major working layout, and stack (cx | px | low) for the tail.
    a4 = attn.reshape(low_dim, 2, B, N).transpose(1, 2, 3, 0)    # (s, b, n, ch)
    low = (a4.reshape(2, B, low_dim, N)                          # raw view
           .transpose(2, 0, 1, 3).reshape(low_dim, Ltot))
    xs = jnp.concatenate([cx, px, low], axis=0)                  # (2*hd+ld, Ltot)

    # ---- kernel 2: conv_fuse + proj + residual + local MBConv (both streams)
    kernel2 = functools.partial(_cbf_tail_kernel, W=W, eps=1e-5)
    y = pl.pallas_call(
        kernel2,
        out_shape=jax.ShapeDtypeStruct((dim, Ltot), jnp.float32),
    )(xw, xs, mask3,
      p['fuse_w'], p['proj_w'], p['proj_b'],
      p['ln_loc_g'], p['ln_loc_b'],
      p['mb_exp_w'], p['mb_exp_b'], p['mb_dw_w'], p['mb_dw_b'], p['mb_prj_w'])

    y = y.reshape(dim, 2, B, N).transpose(1, 2, 0, 3).reshape(2, B, dim, H, W)
    return y[0], y[1]


# ----------------------------- parameter init -------------------------------

def init_params(key, dim=16, num_heads=4, attention_heads=1, expand_ratio=4,
                agent_num=64):
    head_dim = dim // num_heads
    low_dim = attention_heads * head_dim
    high_dim = dim - low_dim
    cc = 2 * high_dim + low_dim
    mid = int(dim * expand_ratio)
    ks = iter(jax.random.split(key, 32))

    def nrm(shape, s=0.1):
        return s * jax.random.normal(next(ks), shape, dtype=jnp.float32)

    p = {}
    p['ln_ctx_g'] = (1.0 + nrm((dim,), 0.05)).reshape(dim, 1)
    p['ln_ctx_b'] = nrm((dim,), 0.05).reshape(dim, 1)
    p['ln_loc_g'] = (1.0 + nrm((dim,), 0.05)).reshape(dim, 1)
    p['ln_loc_b'] = nrm((dim,), 0.05).reshape(dim, 1)

    # HighMixer: dw conv3/5/7/9 + "+x" identity + per-channel 1x1 proj1 (no
    # bias) folded exactly into ONE 9x9 depthwise kernel stored as (C, 81) taps.
    w3, b3 = nrm((3, 3, high_dim)), nrm((high_dim,))
    w5, b5 = nrm((5, 5, high_dim)), nrm((high_dim,))
    w7, b7 = nrm((7, 7, high_dim)), nrm((high_dim,))
    w9, b9 = nrm((9, 9, high_dim)), nrm((high_dim,))
    proj1_s = 1.0 + nrm((high_dim,), 0.05)     # 1x1, groups=dim, no bias
    wc = jnp.zeros((9, 9, high_dim), jnp.float32)
    for wk_ in (w3, w5, w7, w9):
        Kk = wk_.shape[0]
        off = (9 - Kk) // 2
        wc = wc.at[off:off + Kk, off:off + Kk, :].add(wk_)
    wc = (wc.at[4, 4, :].add(1.0)) * proj1_s
    p['hm_w'] = jnp.transpose(wc.reshape(81, high_dim), (1, 0))    # (C, 81)
    p['hm_b'] = ((b3 + b5 + b7 + b9) * proj1_s).reshape(high_dim, 1)
    p['hm_p2_w'] = nrm((high_dim, high_dim)).astype(jnp.bfloat16)  # (out, in)
    p['hm_p2_b'] = nrm((high_dim,)).reshape(high_dim, 1)

    # LowMixer qkv (Linear, bias=False), stacked [wq; wk; wv], stored (out, in).
    p['wqkv'] = nrm((3 * low_dim, low_dim)).astype(jnp.bfloat16)

    # conv_fuse (dw 3x3, no bias) with "+attn" identity folded at center tap,
    # over the stacked (cx|px|low) channels; 1x1 proj (with bias) to dim.
    wf = nrm((3, 3, cc))
    wf = wf.at[1, 1, :].add(1.0)
    p['fuse_w'] = jnp.transpose(wf.reshape(9, cc), (1, 0))         # (cc, 9)
    p['proj_w'] = nrm((dim, cc)).astype(jnp.bfloat16)
    p['proj_b'] = nrm((dim,)).reshape(dim, 1)

    # MBConv: 1x1 expand (+bias, gelu), dw 3x3 (+bias, gelu), 1x1 proj (no bias)
    p['mb_exp_w'] = nrm((mid, dim)).astype(jnp.bfloat16)
    p['mb_exp_b'] = nrm((mid,)).reshape(mid, 1)
    p['mb_dw_w'] = jnp.transpose(nrm((3, 3, mid)).reshape(9, mid), (1, 0))
    p['mb_dw_b'] = nrm((mid,)).reshape(mid, 1)
    p['mb_prj_w'] = nrm((dim, mid)).astype(jnp.bfloat16)

    cfg = dict(dim=dim, num_heads=num_heads, attention_heads=attention_heads,
               low_dim=low_dim, high_dim=high_dim, agent_num=agent_num)
    return p, cfg


if __name__ == "__main__":
    key = jax.random.PRNGKey(0)
    kp, k1, k2 = jax.random.split(key, 3)
    params, cfg = init_params(kp, dim=16, num_heads=4, attention_heads=1)

    # spatial 8x8 so that N = H*W = 64 is a perfect square matching
    # agent_num=64 (LowMixer requires int(sqrt(N)) == H); 2*B*H*W = 256 lanes.
    B, D, H, W = 2, cfg['dim'], 8, 8
    t1 = jax.random.normal(k1, (B, D, H, W), dtype=jnp.float32)
    t2 = jax.random.normal(k2, (B, D, H, W), dtype=jnp.float32)

    fwd = jax.jit(functools.partial(cbf_block, p=params, cfg=cfg))
    y1, y2 = fwd(t1, t2)
    jax.block_until_ready((y1, y2))
    assert y1.shape == (B, D, H, W) and y2.shape == (B, D, H, W)
    assert bool(jnp.all(jnp.isfinite(y1))) and bool(jnp.all(jnp.isfinite(y2)))
    print("KERNEL_OK")
</pallas_src>

<mosaic_0001>
module attributes {stable_mosaic.version = 11 : i64} {
  func.func @_cbf_head_kernel(%arg0: memref<16x256xf32, #tpu.memory_space<vmem>>, %arg1: memref<81x256xf32, #tpu.memory_space<vmem>>, %arg2: memref<9x256xf32, #tpu.memory_space<vmem>>, %arg3: memref<64x64xf32, #tpu.memory_space<vmem>>, %arg4: memref<16x1xf32, #tpu.memory_space<vmem>>, %arg5: memref<16x1xf32, #tpu.memory_space<vmem>>, %arg6: memref<12x81xf32, #tpu.memory_space<vmem>>, %arg7: memref<12x1xf32, #tpu.memory_space<vmem>>, %arg8: memref<12x12xbf16, #tpu.memory_space<vmem>>, %arg9: memref<12x1xf32, #tpu.memory_space<vmem>>, %arg10: memref<12x4xbf16, #tpu.memory_space<vmem>>, %arg11: memref<12x256xf32, #tpu.memory_space<vmem>>, %arg12: memref<12x256xf32, #tpu.memory_space<vmem>>, %arg13: memref<4x256xf32, #tpu.memory_space<vmem>>) attributes {dimension_semantics = [], scalar_prefetch = 0 : i64, scratch_operands = 0 : i64, tpu.core_type = #tpu.core_type<tc>} {
    %c0 = arith.constant 0 : index
    %c0_0 = arith.constant 0 : index
    %0 = vector.load %arg0[%c0, %c0_0] : memref<16x256xf32, #tpu.memory_space<vmem>>, vector<16x256xf32>
    %c0_1 = arith.constant 0 : index
    %c0_2 = arith.constant 0 : index
    %1 = vector.load %arg4[%c0_1, %c0_2] : memref<16x1xf32, #tpu.memory_space<vmem>>, vector<16x1xf32>
    %c0_3 = arith.constant 0 : index
    %c0_4 = arith.constant 0 : index
    %2 = vector.load %arg5[%c0_3, %c0_4] : memref<16x1xf32, #tpu.memory_space<vmem>>, vector<16x1xf32>
    %cst = arith.constant dense<0.000000e+00> : vector<256xf32>
    %3 = vector.multi_reduction <add>, %0, %cst [0] : vector<16x256xf32> to vector<256xf32>
    %4 = vector.shape_cast %3 : vector<256xf32> to vector<1x256xf32>
    %cst_5 = arith.constant 1.600000e+01 : f32
    %5 = vector.broadcast %cst_5 : f32 to vector<1x256xf32>
    %6 = arith.divf %4, %5 : vector<1x256xf32>
    %7 = vector.broadcast %6 : vector<1x256xf32> to vector<16x256xf32>
    %8 = arith.subf %0, %7 : vector<16x256xf32>
    %9 = arith.mulf %8, %8 : vector<16x256xf32>
    %cst_6 = arith.constant dense<0.000000e+00> : vector<256xf32>
    %10 = vector.multi_reduction <add>, %9, %cst_6 [0] : vector<16x256xf32> to vector<256xf32>
    %11 = vector.shape_cast %10 : vector<256xf32> to vector<1x256xf32>
    %cst_7 = arith.constant 1.600000e+01 : f32
    %12 = vector.broadcast %cst_7 : f32 to vector<1x256xf32>
    %13 = arith.divf %11, %12 : vector<1x256xf32>
    %cst_8 = arith.constant 9.99999974E-6 : f32
    %14 = vector.broadcast %cst_8 : f32 to vector<1x256xf32>
    %15 = arith.addf %13, %14 : vector<1x256xf32>
    %16 = math.rsqrt %15 : vector<1x256xf32>
    %17 = vector.broadcast %16 : vector<1x256xf32> to vector<16x256xf32>
    %18 = arith.mulf %8, %17 : vector<16x256xf32>
    %19 = vector.broadcast %1 : vector<16x1xf32> to vector<16x256xf32>
    %20 = arith.mulf %18, %19 : vector<16x256xf32>
    %21 = vector.broadcast %2 : vector<16x1xf32> to vector<16x256xf32>
    %22 = arith.addf %20, %21 : vector<16x256xf32>
    %23 = vector.extract_strided_slice %22 {offsets = [0, 0], sizes = [12, 256], strides = [1, 1]} : vector<16x256xf32> to vector<12x256xf32>
    %24 = vector.extract_strided_slice %22 {offsets = [12, 0], sizes = [4, 256], strides = [1, 1]} : vector<16x256xf32> to vector<4x256xf32>
    %c0_9 = arith.constant 0 : index
    %c0_10 = arith.constant 0 : index
    %25 = vector.load %arg6[%c0_9, %c0_10] : memref<12x81xf32, #tpu.memory_space<vmem>>, vector<12x81xf32>
    %cst_11 = arith.constant 0.000000e+00 : f32
    %26 = vector.broadcast %cst_11 : f32 to vector<12x256xf32>
    %c36_i32 = arith.constant 36 : i32
    %27 = tpu.dynamic_rotate %23 by %c36_i32 dim 1 : vector<12x256xf32>, i32 -> vector<12x256xf32>
    %c0_12 = arith.constant 0 : index
    %c0_13 = arith.constant 0 : index
    %28 = vector.load %arg1[%c0_12, %c0_13] : memref<81x256xf32, #tpu.memory_space<vmem>>, vector<1x256xf32>
    %29 = vector.broadcast %28 : vector<1x256xf32> to vector<12x256xf32>
    %30 = arith.mulf %27, %29 : vector<12x256xf32>
    %31 = vector.extract_strided_slice %25 {offsets = [0, 0], sizes = [12, 1], strides = [1, 1]} : vector<12x81xf32> to vector<12x1xf32>
    %32 = vector.broadcast %31 : vector<12x1xf32> to vector<12x256xf32>
    %33 = arith.mulf %30, %32 : vector<12x256xf32>
    %34 = arith.addf %26, %33 : vector<12x256xf32>
    %c35_i32 = arith.constant 35 : i32
    %35 = tpu.dynamic_rotate %23 by %c35_i32 dim 1 : vector<12x256xf32>, i32 -> vector<12x256xf32>
    %c1 = arith.constant 1 : index
    %c0_14 = arith.constant 0 : index
    %36 = vector.load %arg1[%c1, %c0_14] : memref<81x256xf32, #tpu.memory_space<vmem>>, vector<1x256xf32>
    %37 = vector.broadcast %36 : vector<1x256xf32> to vector<12x256xf32>
    %38 = arith.mulf %35, %37 : vector<12x256xf32>
    %39 = vector.extract_strided_slice %25 {offsets = [0, 1], sizes = [12, 1], strides = [1, 1]} : vector<12x81xf32> to vector<12x1xf32>
    %40 = vector.broadcast %39 : vector<12x1xf32> to vector<12x256xf32>
    %41 = arith.mulf %38, %40 : vector<12x256xf32>
    %42 = arith.addf %34, %41 : vector<12x256xf32>
    %c34_i32 = arith.constant 34 : i32
    %43 = tpu.dynamic_rotate %23 by %c34_i32 dim 1 : vector<12x256xf32>, i32 -> vector<12x256xf32>
    %c2 = arith.constant 2 : index
    %c0_15 = arith.constant 0 : index
    %44 = vector.load %arg1[%c2, %c0_15] : memref<81x256xf32, #tpu.memory_space<vmem>>, vector<1x256xf32>
    %45 = vector.broadcast %44 : vector<1x256xf32> to vector<12x256xf32>
    %46 = arith.mulf %43, %45 : vector<12x256xf32>
    %47 = vector.extract_strided_slice %25 {offsets = [0, 2], sizes = [12, 1], strides = [1, 1]} : vector<12x81xf32> to vector<12x1xf32>
    %48 = vector.broadcast %47 : vector<12x1xf32> to vector<12x256xf32>
    %49 = arith.mulf %46, %48 : vector<12x256xf32>
    %50 = arith.addf %42, %49 : vector<12x256xf32>
    %c33_i32 = arith.constant 33 : i32
    %51 = tpu.dynamic_rotate %23 by %c33_i32 dim 1 : vector<12x256xf32>, i32 -> vector<12x256xf32>
    %c3 = arith.constant 3 : index
    %c0_16 = arith.constant 0 : index
    %52 = vector.load %arg1[%c3, %c0_16] : memref<81x256xf32, #tpu.memory_space<vmem>>, vector<1x256xf32>
    %53 = vector.broadcast %52 : vector<1x256xf32> to vector<12x256xf32>
    %54 = arith.mulf %51, %53 : vector<12x256xf32>
    %55 = vector.extract_strided_slice %25 {offsets = [0, 3], sizes = [12, 1], strides = [1, 1]} : vector<12x81xf32> to vector<12x1xf32>
    %56 = vector.broadcast %55 : vector<12x1xf32> to vector<12x256xf32>
    %57 = arith.mulf %54, %56 : vector<12x256xf32>
    %58 = arith.addf %50, %57 : vector<12x256xf32>
    %c32_i32 = arith.constant 32 : i32
    %59 = tpu.dynamic_rotate %23 by %c32_i32 dim 1 : vector<12x256xf32>, i32 -> vector<12x256xf32>
    %c4 = arith.constant 4 : index
    %c0_17 = arith.constant 0 : index
    %60 = vector.load %arg1[%c4, %c0_17] : memref<81x256xf32, #tpu.memory_space<vmem>>, vector<1x256xf32>
    %61 = vector.broadcast %60 : vector<1x256xf32> to vector<12x256xf32>
    %62 = arith.mulf %59, %61 : vector<12x256xf32>
    %63 = vector.extract_strided_slice %25 {offsets = [0, 4], sizes = [12, 1], strides = [1, 1]} : vector<12x81xf32> to vector<12x1xf32>
    %64 = vector.broadcast %63 : vector<12x1xf32> to vector<12x256xf32>
    %65 = arith.mulf %62, %64 : vector<12x256xf32>
    %66 = arith.addf %58, %65 : vector<12x256xf32>
    %c31_i32 = arith.constant 31 : i32
    %67 = tpu.dynamic_rotate %23 by %c31_i32 dim 1 : vector<12x256xf32>, i32 -> vector<12x256xf32>
    %c5 = arith.constant 5 : index
    %c0_18 = arith.constant 0 : index
    %68 = vector.load %arg1[%c5, %c0_18] : memref<81x256xf32, #tpu.memory_space<vmem>>, vector<1x256xf32>
    %69 = vector.broadcast %68 : vector<1x256xf32> to vector<12x256xf32>
    %70 = arith.mulf %67, %69 : vector<12x256xf32>
    %71 = vector.extract_strided_slice %25 {offsets = [0, 5], sizes = [12, 1], strides = [1, 1]} : vector<12x81xf32> to vector<12x1xf32>
    %72 = vector.broadcast %71 : vector<12x1xf32> to vector<12x256xf32>
    %73 = arith.mulf %70, %72 : vector<12x256xf32>
    %74 = arith.addf %66, %73 : vector<12x256xf32>
    %c30_i32 = arith.constant 30 : i32
    %75 = tpu.dynamic_rotate %23 by %c30_i32 dim 1 : vector<12x256xf32>, i32 -> vector<12x256xf32>
    %c6 = arith.constant 6 : index
    %c0_19 = arith.constant 0 : index
    %76 = vector.load %arg1[%c6, %c0_19] : memref<81x256xf32, #tpu.memory_space<vmem>>, vector<1x256xf32>
    %77 = vector.broadcast %76 : vector<1x256xf32> to vector<12x256xf32>
    %78 = arith.mulf %75, %77 : vector<12x256xf32>
    %79 = vector.extract_strided_slice %25 {offsets = [0, 6], sizes = [12, 1], strides = [1, 1]} : vector<12x81xf32> to vector<12x1xf32>
    %80 = vector.broadcast %79 : vector<12x1xf32> to vector<12x256xf32>
    %81 = arith.mulf %78, %80 : vector<12x256xf32>
    %82 = arith.addf %74, %81 : vector<12x256xf32>
    %c29_i32 = arith.constant 29 : i32
    %83 = tpu.dynamic_rotate %23 by %c29_i32 dim 1 : vector<12x256xf32>, i32 -> vector<12x256xf32>
    %c7 = arith.constant 7 : index
    %c0_20 = arith.constant 0 : index
    %84 = vector.load %arg1[%c7, %c0_20] : memref<81x256xf32, #tpu.memory_space<vmem>>, vector<1x256xf32>
    %85 = vector.broadcast %84 : vector<1x256xf32> to vector<12x256xf32>
    %86 = arith.mulf %83, %85 : vector<12x256xf32>
    %87 = vector.extract_strided_slice %25 {offsets = [0, 7], sizes = [12, 1], strides = [1, 1]} : vector<12x81xf32> to vector<12x1xf32>
    %88 = vector.broadcast %87 : vector<12x1xf32> to vector<12x256xf32>
    %89 = arith.mulf %86, %88 : vector<12x256xf32>
    %90 = arith.addf %82, %89 : vector<12x256xf32>
    %c28_i32 = arith.constant 28 : i32
    %91 = tpu.dynamic_rotate %23 by %c28_i32 dim 1 : vector<12x256xf32>, i32 -> vector<12x256xf32>
    %c8 = arith.constant 8 : index
    %c0_21 = arith.constant 0 : index
    %92 = vector.load %arg1[%c8, %c0_21] : memref<81x256xf32, #tpu.memory_space<vmem>>, vector<1x256xf32>
    %93 = vector.broadcast %92 : vector<1x256xf32> to vector<12x256xf32>
    %94 = arith.mulf %91, %93 : vector<12x256xf32>
    %95 = vector.extract_strided_slice %25 {offsets = [0, 8], sizes = [12, 1], strides = [1, 1]} : vector<12x81xf32> to vector<12x1xf32>
    %96 = vector.broadcast %95 : vector<12x1xf32> to vector<12x256xf32>
    %97 = arith.mulf %94, %96 : vector<12x256xf32>
    %98 = arith.addf %90, %97 : vector<12x256xf32>
    %c28_i32_22 = arith.constant 28 : i32
    %99 = tpu.dynamic_rotate %23 by %c28_i32_22 dim 1 : vector<12x256xf32>, i32 -> vector<12x256xf32>
    %c9 = arith.constant 9 : index
    %c0_23 = arith.constant 0 : index
    %100 = vector.load %arg1[%c9, %c0_23] : memref<81x256xf32, #tpu.memory_space<vmem>>, vector<1x256xf32>
    %101 = vector.broadcast %100 : vector<1x256xf32> to vector<12x256xf32>
    %102 = arith.mulf %99, %101 : vector<12x256xf32>
    %103 = vector.extract_strided_slice %25 {offsets = [0, 9], sizes = [12, 1], strides = [1, 1]} : vector<12x81xf32> to vector<12x1xf32>
    %104 = vector.broadcast %103 : vector<12x1xf32> to vector<12x256xf32>
    %105 = arith.mulf %102, %104 : vector<12x256xf32>
    %106 = arith.addf %98, %105 : vector<12x256xf32>
    %c27_i32 = arith.constant 27 : i32
    %107 = tpu.dynamic_rotate %23 by %c27_i32 dim 1 : vector<12x256xf32>, i32 -> vector<12x256xf32>
    %c10 = arith.constant 10 : index
    %c0_24 = arith.constant 0 : index
    %108 = vector.load %arg1[%c10, %c0_24] : memref<81x256xf32, #tpu.memory_space<vmem>>, vector<1x256xf32>
    %109 = vector.broadcast %108 : vector<1x256xf32> to vector<12x256xf32>
    %110 = arith.mulf %107, %109 : vector<12x256xf32>
    %111 = vector.extract_strided_slice %25 {offsets = [0, 10], sizes = [12, 1], strides = [1, 1]} : vector<12x81xf32> to vector<12x1xf32>
    %112 = vector.broadcast %111 : vector<12x1xf32> to vector<12x256xf32>
    %113 = arith.mulf %110, %112 : vector<12x256xf32>
    %114 = arith.addf %106, %113 : vector<12x256xf32>
    %c26_i32 = arith.constant 26 : i32
    %115 = tpu.dynamic_rotate %23 by %c26_i32 dim 1 : vector<12x256xf32>, i32 -> vector<12x256xf32>
    %c11 = arith.constant 11 : index
    %c0_25 = arith.constant 0 : index
    %116 = vector.load %arg1[%c11, %c0_25] : memref<81x256xf32, #tpu.memory_space<vmem>>, vector<1x256xf32>
    %117 = vector.broadcast %116 : vector<1x256xf32> to vector<12x256xf32>
    %118 = arith.mulf %115, %117 : vector<12x256xf32>
    %119 = vector.extract_strided_slice %25 {offsets = [0, 11], sizes = [12, 1], strides = [1, 1]} : vector<12x81xf32> to vector<12x1xf32>
    %120 = vector.broadcast %119 : vector<12x1xf32> to vector<12x256xf32>
    %121 = arith.mulf %118, %120 : vector<12x256xf32>
    %122 = arith.addf %114, %121 : vector<12x256xf32>
    %c25_i32 = arith.constant 25 : i32
    %123 = tpu.dynamic_rotate %23 by %c25_i32 dim 1 : vector<12x256xf32>, i32 -> vector<12x256xf32>
    %c12 = arith.constant 12 : index
    %c0_26 = arith.constant 0 : index
    %124 = vector.load %arg1[%c12, %c0_26] : memref<81x256xf32, #tpu.memory_space<vmem>>, vector<1x256xf32>
    %125 = vector.broadcast %124 : vector<1x256xf32> to vector<12x256xf32>
    %126 = arith.mulf %123, %125 : vector<12x256xf32>
    %127 = vector.extract_strided_slice %25 {offsets = [0, 12], sizes = [12, 1], strides = [1, 1]} : vector<12x81xf32> to vector<12x1xf32>
    %128 = vector.broadcast %127 : vector<12x1xf32> to vector<12x256xf32>
    %129 = arith.mulf %126, %128 : vector<12x256xf32>
    %130 = arith.addf %122, %129 : vector<12x256xf32>
    %c24_i32 = arith.constant 24 : i32
    %131 = tpu.dynamic_rotate %23 by %c24_i32 dim 1 : vector<12x256xf32>, i32 -> vector<12x256xf32>
    %c13 = arith.constant 13 : index
    %c0_27 = arith.constant 0 : index
    %132 = vector.load %arg1[%c13, %c0_27] : memref<81x256xf32, #tpu.memory_space<vmem>>, vector<1x256xf32>
    %133 = vector.broadcast %132 : vector<1x256xf32> to vector<12x256xf32>
    %134 = arith.mulf %131, %133 : vector<12x256xf32>
    %135 = vector.extract_strided_slice %25 {offsets = [0, 13], sizes = [12, 1], strides = [1, 1]} : vector<12x81xf32> to vector<12x1xf32>
    %136 = vector.broadcast %135 : vector<12x1xf32> to vector<12x256xf32>
    %137 = arith.mulf %134, %136 : vector<12x256xf32>
    %138 = arith.addf %130, %137 : vector<12x256xf32>
    %c23_i32 = arith.constant 23 : i32
    %139 = tpu.dynamic_rotate %23 by %c23_i32 dim 1 : vector<12x256xf32>, i32 -> vector<12x256xf32>
    %c14 = arith.constant 14 : index
    %c0_28 = arith.constant 0 : index
    %140 = vector.load %arg1[%c14, %c0_28] : memref<81x256xf32, #tpu.memory_space<vmem>>, vector<1x256xf32>
    %141 = vector.broadcast %140 : vector<1x256xf32> to vector<12x256xf32>
    %142 = arith.mulf %139, %141 : vector<12x256xf32>
    %143 = vector.extract_strided_slice %25 {offsets = [0, 14], sizes = [12, 1], strides = [1, 1]} : vector<12x81xf32> to vector<12x1xf32>
    %144 = vector.broadcast %143 : vector<12x1xf32> to vector<12x256xf32>
    %145 = arith.mulf %142, %144 : vector<12x256xf32>
    %146 = arith.addf %138, %145 : vector<12x256xf32>
    %c22_i32 = arith.constant 22 : i32
    %147 = tpu.dynamic_rotate %23 by %c22_i32 dim 1 : vector<12x256xf32>, i32 -> vector<12x256xf32>
    %c15 = arith.constant 15 : index
    %c0_29 = arith.constant 0 : index
    %148 = vector.load %arg1[%c15, %c0_29] : memref<81x256xf32, #tpu.memory_space<vmem>>, vector<1x256xf32>
    %149 = vector.broadcast %148 : vector<1x256xf32> to vector<12x256xf32>
    %150 = arith.mulf %147, %149 : vector<12x256xf32>
    %151 = vector.extract_strided_slice %25 {offsets = [0, 15], sizes = [12, 1], strides = [1, 1]} : vector<12x81xf32> to vector<12x1xf32>
    %152 = vector.broadcast %151 : vector<12x1xf32> to vector<12x256xf32>
    %153 = arith.mulf %150, %152 : vector<12x256xf32>
    %154 = arith.addf %146, %153 : vector<12x256xf32>
    %c21_i32 = arith.constant 21 : i32
    %155 = tpu.dynamic_rotate %23 by %c21_i32 dim 1 : vector<12x256xf32>, i32 -> vector<12x256xf32>
    %c16 = arith.constant 16 : index
    %c0_30 = arith.constant 0 : index
    %156 = vector.load %arg1[%c16, %c0_30] : memref<81x256xf32, #tpu.memory_space<vmem>>, vector<1x256xf32>
    %157 = vector.broadcast %156 : vector<1x256xf32> to vector<12x256xf32>
    %158 = arith.mulf %155, %157 : vector<12x256xf32>
    %159 = vector.extract_strided_slice %25 {offsets = [0, 16], sizes = [12, 1], strides = [1, 1]} : vector<12x81xf32> to vector<12x1xf32>
    %160 = vector.broadcast %159 : vector<12x1xf32> to vector<12x256xf32>
    %161 = arith.mulf %158, %160 : vector<12x256xf32>
    %162 = arith.addf %154, %161 : vector<12x256xf32>
    %c20_i32 = arith.constant 20 : i32
    %163 = tpu.dynamic_rotate %23 by %c20_i32 dim 1 : vector<12x256xf32>, i32 -> vector<12x256xf32>
    %c17 = arith.constant 17 : index
    %c0_31 = arith.constant 0 : index
    %164 = vector.load %arg1[%c17, %c0_31] : memref<81x256xf32, #tpu.memory_space<vmem>>, vector<1x256xf32>
    %165 = vector.broadcast %164 : vector<1x256xf32> to vector<12x256xf32>
    %166 = arith.mulf %163, %165 : vector<12x256xf32>
    %167 = vector.extract_strided_slice %25 {offsets = [0, 17], sizes = [12, 1], strides = [1, 1]} : vector<12x81xf32> to vector<12x1xf32>
    %168 = vector.broadcast %167 : vector<12x1xf32> to vector<12x256xf32>
    %169 = arith.mulf %166, %168 : vector<12x256xf32>
    %170 = arith.addf %162, %169 : vector<12x256xf32>
    %c20_i32_32 = arith.constant 20 : i32
    %171 = tpu.dynamic_rotate %23 by %c20_i32_32 dim 1 : vector<12x256xf32>, i32 -> vector<12x256xf32>
    %c18 = arith.constant 18 : index
    %c0_33 = arith.constant 0 : index
    %172 = vector.load %arg1[%c18, %c0_33] : memref<81x256xf32, #tpu.memory_space<vmem>>, vector<1x256xf32>
    %173 = vector.broadcast %172 : vector<1x256xf32> to vector<12x256xf32>
    %174 = arith.mulf %171, %173 : vector<12x256xf32>
    %175 = vector.extract_strided_slice %25 {offsets = [0, 18], sizes = [12, 1], strides = [1, 1]} : vector<12x81xf32> to vector<12x1xf32>
    %176 = vector.broadcast %175 : vector<12x1xf32> to vector<12x256xf32>
    %177 = arith.mulf %174, %176 : vector<12x256xf32>
    %178 = arith.addf %170, %177 : vector<12x256xf32>
    %c19_i32 = arith.constant 19 : i32
    %179 = tpu.dynamic_rotate %23 by %c19_i32 dim 1 : vector<12x256xf32>, i32 -> vector<12x256xf32>
    %c19 = arith.constant 19 : index
    %c0_34 = arith.constant 0 : index
    %180 = vector.load %arg1[%c19, %c0_34] : memref<81x256xf32, #tpu.memory_space<vmem>>, vector<1x256xf32>
    %181 = vector.broadcast %180 : vector<1x256xf32> to vector<12x256xf32>
    %182 = arith.mulf %179, %181 : vector<12x256xf32>
    %183 = vector.extract_strided_slice %25 {offsets = [0, 19], sizes = [12, 1], strides = [1, 1]} : vector<12x81xf32> to vector<12x1xf32>
    %184 = vector.broadcast %183 : vector<12x1xf32> to vector<12x256xf32>
    %185 = arith.mulf %182, %184 : vector<12x256xf32>
    %186 = arith.addf %178, %185 : vector<12x256xf32>
    %c18_i32 = arith.constant 18 : i32
    %187 = tpu.dynamic_rotate %23 by %c18_i32 dim 1 : vector<12x256xf32>, i32 -> vector<12x256xf32>
    %c20 = arith.constant 20 : index
    %c0_35 = arith.constant 0 : index
    %188 = vector.load %arg1[%c20, %c0_35] : memref<81x256xf32, #tpu.memory_space<vmem>>, vector<1x256xf32>
    %189 = vector.broadcast %188 : vector<1x256xf32> to vector<12x256xf32>
    %190 = arith.mulf %187, %189 : vector<12x256xf32>
    %191 = vector.extract_strided_slice %25 {offsets = [0, 20], sizes = [12, 1], strides = [1, 1]} : vector<12x81xf32> to vector<12x1xf32>
    %192 = vector.broadcast %191 : vector<12x1xf32> to vector<12x256xf32>
    %193 = arith.mulf %190, %192 : vector<12x256xf32>
    %194 = arith.addf %186, %193 : vector<12x256xf32>
    %c17_i32 = arith.constant 17 : i32
    %195 = tpu.dynamic_rotate %23 by %c17_i32 dim 1 : vector<12x256xf32>, i32 -> vector<12x256xf32>
    %c21 = arith.constant 21 : index
    %c0_36 = arith.constant 0 : index
    %196 = vector.load %arg1[%c21, %c0_36] : memref<81x256xf32, #tpu.memory_space<vmem>>, vector<1x256xf32>
    %197 = vector.broadcast %196 : vector<1x256xf32> to vector<12x256xf32>
    %198 = arith.mulf %195, %197 : vector<12x256xf32>
    %199 = vector.extract_strided_slice %25 {offsets = [0, 21], sizes = [12, 1], strides = [1, 1]} : vector<12x81xf32> to vector<12x1xf32>
    %200 = vector.broadcast %199 : vector<12x1xf32> to vector<12x256xf32>
    %201 = arith.mulf %198, %200 : vector<12x256xf32>
    %202 = arith.addf %194, %201 : vector<12x256xf32>
    %c16_i32 = arith.constant 16 : i32
    %203 = tpu.dynamic_rotate %23 by %c16_i32 dim 1 : vector<12x256xf32>, i32 -> vector<12x256xf32>
    %c22 = arith.constant 22 : index
    %c0_37 = arith.constant 0 : index
    %204 = vector.load %arg1[%c22, %c0_37] : memref<81x256xf32, #tpu.memory_space<vmem>>, vector<1x256xf32>
    %205 = vector.broadcast %204 : vector<1x256xf32> to vector<12x256xf32>
    %206 = arith.mulf %203, %205 : vector<12x256xf32>
    %207 = vector.extract_strided_slice %25 {offsets = [0, 22], sizes = [12, 1], strides = [1, 1]} : vector<12x81xf32> to vector<12x1xf32>
    %208 = vector.broadcast %207 : vector<12x1xf32> to vector<12x256xf32>
    %209 = arith.mulf %206, %208 : vector<12x256xf32>
    %210 = arith.addf %202, %209 : vector<12x256xf32>
    %c15_i32 = arith.constant 15 : i32
    %211 = tpu.dynamic_rotate %23 by %c15_i32 dim 1 : vector<12x256xf32>, i32 -> vector<12x256xf32>
    %c23 = arith.constant 23 : index
    %c0_38 = arith.constant 0 : index
    %212 = vector.load %arg1[%c23, %c0_38] : memref<81x256xf32, #tpu.memory_space<vmem>>, vector<1x256xf32>
    %213 = vector.broadcast %212 : vector<1x256xf32> to vector<12x256xf32>
    %214 = arith.mulf %211, %213 : vector<12x256xf32>
    %215 = vector.extract_strided_slice %25 {offsets = [0, 23], sizes = [12, 1], strides = [1, 1]} : vector<12x81xf32> to vector<12x1xf32>
    %216 = vector.broadcast %215 : vector<12x1xf32> to vector<12x256xf32>
    %217 = arith.mulf %214, %216 : vector<12x256xf32>
    %218 = arith.addf %210, %217 : vector<12x256xf32>
    %c14_i32 = arith.constant 14 : i32
    %219 = tpu.dynamic_rotate %23 by %c14_i32 dim 1 : vector<12x256xf32>, i32 -> vector<12x256xf32>
    %c24 = arith.constant 24 : index
    %c0_39 = arith.constant 0 : index
    %220 = vector.load %arg1[%c24, %c0_39] : memref<81x256xf32, #tpu.memory_space<vmem>>, vector<1x256xf32>
    %221 = vector.broadcast %220 : vector<1x256xf32> to vector<12x256xf32>
    %222 = arith.mulf %219, %221 : vector<12x256xf32>
    %223 = vector.extract_strided_slice %25 {offsets = [0, 24], sizes = [12, 1], strides = [1, 1]} : vector<12x81xf32> to vector<12x1xf32>
    %224 = vector.broadcast %223 : vector<12x1xf32> to vector<12x256xf32>
    %225 = arith.mulf %222, %224 : vector<12x256xf32>
    %226 = arith.addf %218, %225 : vector<12x256xf32>
    %c13_i32 = arith.constant 13 : i32
    %227 = tpu.dynamic_rotate %23 by %c13_i32 dim 1 : vector<12x256xf32>, i32 -> vector<12x256xf32>
    %c25 = arith.constant 25 : index
    %c0_40 = arith.constant 0 : index
    %228 = vector.load %arg1[%c25, %c0_40] : memref<81x256xf32, #tpu.memory_space<vmem>>, vector<1x256xf32>
    %229 = vector.broadcast %228 : vector<1x256xf32> to vector<12x256xf32>
    %230 = arith.mulf %227, %229 : vector<12x256xf32>
    %231 = vector.extract_strided_slice %25 {offsets = [0, 25], sizes = [12, 1], strides = [1, 1]} : vector<12x81xf32> to vector<12x1xf32>
    %232 = vector.broadcast %231 : vector<12x1xf32> to vector<12x256xf32>
    %233 = arith.mulf %230, %232 : vector<12x256xf32>
    %234 = arith.addf %226, %233 : vector<12x256xf32>
    %c12_i32 = arith.constant 12 : i32
    %235 = tpu.dynamic_rotate %23 by %c12_i32 dim 1 : vector<12x256xf32>, i32 -> vector<12x256xf32>
    %c26 = arith.constant 26 : index
    %c0_41 = arith.constant 0 : index
    %236 = vector.load %arg1[%c26, %c0_41] : memref<81x256xf32, #tpu.memory_space<vmem>>, vector<1x256xf32>
    %237 = vector.broadcast %236 : vector<1x256xf32> to vector<12x256xf32>
    %238 = arith.mulf %235, %237 : vector<12x256xf32>
    %239 = vector.extract_strided_slice %25 {offsets = [0, 26], sizes = [12, 1], strides = [1, 1]} : vector<12x81xf32> to vector<12x1xf32>
    %240 = vector.broadcast %239 : vector<12x1xf32> to vector<12x256xf32>
    %241 = arith.mulf %238, %240 : vector<12x256xf32>
    %242 = arith.addf %234, %241 : vector<12x256xf32>
    %c12_i32_42 = arith.constant 12 : i32
    %243 = tpu.dynamic_rotate %23 by %c12_i32_42 dim 1 : vector<12x256xf32>, i32 -> vector<12x256xf32>
    %c27 = arith.constant 27 : index
    %c0_43 = arith.constant 0 : index
    %244 = vector.load %arg1[%c27, %c0_43] : memref<81x256xf32, #tpu.memory_space<vmem>>, vector<1x256xf32>
    %245 = vector.broadcast %244 : vector<1x256xf32> to vector<12x256xf32>
    %246 = arith.mulf %243, %245 : vector<12x256xf32>
    %247 = vector.extract_strided_slice %25 {offsets = [0, 27], sizes = [12, 1], strides = [1, 1]} : vector<12x81xf32> to vector<12x1xf32>
    %248 = vector.broadcast %247 : vector<12x1xf32> to vector<12x256xf32>
    %249 = arith.mulf %246, %248 : vector<12x256xf32>
    %250 = arith.addf %242, %249 : vector<12x256xf32>
    %c11_i32 = arith.constant 11 : i32
    %251 = tpu.dynamic_rotate %23 by %c11_i32 dim 1 : vector<12x256xf32>, i32 -> vector<12x256xf32>
    %c28 = arith.constant 28 : index
    %c0_44 = arith.constant 0 : index
    %252 = vector.load %arg1[%c28, %c0_44] : memref<81x256xf32, #tpu.memory_space<vmem>>, vector<1x256xf32>
    %253 = vector.broadcast %252 : vector<1x256xf32> to vector<12x256xf32>
    %254 = arith.mulf %251, %253 : vector<12x256xf32>
    %255 = vector.extract_strided_slice %25 {offsets = [0, 28], sizes = [12, 1], strides = [1, 1]} : vector<12x81xf32> to vector<12x1xf32>
    %256 = vector.broadcast %255 : vector<12x1xf32> to vector<12x256xf32>
    %257 = arith.mulf %254, %256 : vector<12x256xf32>
    %258 = arith.addf %250, %257 : vector<12x256xf32>
    %c10_i32 = arith.constant 10 : i32
    %259 = tpu.dynamic_rotate %23 by %c10_i32 dim 1 : vector<12x256xf32>, i32 -> vector<12x256xf32>
    %c29 = arith.constant 29 : index
    %c0_45 = arith.constant 0 : index
    %260 = vector.load %arg1[%c29, %c0_45] : memref<81x256xf32, #tpu.memory_space<vmem>>, vector<1x256xf32>
    %261 = vector.broadcast %260 : vector<1x256xf32> to vector<12x256xf32>
    %262 = arith.mulf %259, %261 : vector<12x256xf32>
    %263 = vector.extract_strided_slice %25 {offsets = [0, 29], sizes = [12, 1], strides = [1, 1]} : vector<12x81xf32> to vector<12x1xf32>
    %264 = vector.broadcast %263 : vector<12x1xf32> to vector<12x256xf32>
    %265 = arith.mulf %262, %264 : vector<12x256xf32>
    %266 = arith.addf %258, %265 : vector<12x256xf32>
    %c9_i32 = arith.constant 9 : i32
    %267 = tpu.dynamic_rotate %23 by %c9_i32 dim 1 : vector<12x256xf32>, i32 -> vector<12x256xf32>
    %c30 = arith.constant 30 : index
    %c0_46 = arith.constant 0 : index
    %268 = vector.load %arg1[%c30, %c0_46] : memref<81x256xf32, #tpu.memory_space<vmem>>, vector<1x256xf32>
    %269 = vector.broadcast %268 : vector<1x256xf32> to vector<12x256xf32>
    %270 = arith.mulf %267, %269 : vector<12x256xf32>
    %271 = vector.extract_strided_slice %25 {offsets = [0, 30], sizes = [12, 1], strides = [1, 1]} : vector<12x81xf32> to vector<12x1xf32>
    %272 = vector.broadcast %271 : vector<12x1xf32> to vector<12x256xf32>
    %273 = arith.mulf %270, %272 : vector<12x256xf32>
    %274 = arith.addf %266, %273 : vector<12x256xf32>
    %c0_47 = arith.constant 0 : index
    %c0_48 = arith.constant 0 : index
    %275 = vector.load %arg2[%c0_47, %c0_48] : memref<9x256xf32, #tpu.memory_space<vmem>>, vector<1x256xf32>
    %276 = vector.broadcast %275 : vector<1x256xf32> to vector<12x256xf32>
    %277 = arith.addf %267, %276 : vector<12x256xf32>
    %c8_i32 = arith.constant 8 : i32
    %278 = tpu.dynamic_rotate %23 by %c8_i32 dim 1 : vector<12x256xf32>, i32 -> vector<12x256xf32>
    %c31 = arith.constant 31 : index
    %c0_49 = arith.constant 0 : index
    %279 = vector.load %arg1[%c31, %c0_49] : memref<81x256xf32, #tpu.memory_space<vmem>>, vector<1x256xf32>
    %280 = vector.broadcast %279 : vector<1x256xf32> to vector<12x256xf32>
    %281 = arith.mulf %278, %280 : vector<12x256xf32>
    %282 = vector.extract_strided_slice %25 {offsets = [0, 31], sizes = [12, 1], strides = [1, 1]} : vector<12x81xf32> to vector<12x1xf32>
    %283 = vector.broadcast %282 : vector<12x1xf32> to vector<12x256xf32>
    %284 = arith.mulf %281, %283 : vector<12x256xf32>
    %285 = arith.addf %274, %284 : vector<12x256xf32>
    %c1_50 = arith.constant 1 : index
    %c0_51 = arith.constant 0 : index
    %286 = vector.load %arg2[%c1_50, %c0_51] : memref<9x256xf32, #tpu.memory_space<vmem>>, vector<1x256xf32>
    %287 = vector.broadcast %286 : vector<1x256xf32> to vector<12x256xf32>
    %288 = arith.addf %278, %287 : vector<12x256xf32>
    %289 = arith.maximumf %277, %288 : vector<12x256xf32>
    %c7_i32 = arith.constant 7 : i32
    %290 = tpu.dynamic_rotate %23 by %c7_i32 dim 1 : vector<12x256xf32>, i32 -> vector<12x256xf32>
    %c32 = arith.constant 32 : index
    %c0_52 = arith.constant 0 : index
    %291 = vector.load %arg1[%c32, %c0_52] : memref<81x256xf32, #tpu.memory_space<vmem>>, vector<1x256xf32>
    %292 = vector.broadcast %291 : vector<1x256xf32> to vector<12x256xf32>
    %293 = arith.mulf %290, %292 : vector<12x256xf32>
    %294 = vector.extract_strided_slice %25 {offsets = [0, 32], sizes = [12, 1], strides = [1, 1]} : vector<12x81xf32> to vector<12x1xf32>
    %295 = vector.broadcast %294 : vector<12x1xf32> to vector<12x256xf32>
    %296 = arith.mulf %293, %295 : vector<12x256xf32>
    %297 = arith.addf %285, %296 : vector<12x256xf32>
    %c2_53 = arith.constant 2 : index
    %c0_54 = arith.constant 0 : index
    %298 = vector.load %arg2[%c2_53, %c0_54] : memref<9x256xf32, #tpu.memory_space<vmem>>, vector<1x256xf32>
    %299 = vector.broadcast %298 : vector<1x256xf32> to vector<12x256xf32>
    %300 = arith.addf %290, %299 : vector<12x256xf32>
    %301 = arith.maximumf %289, %300 : vector<12x256xf32>
    %c6_i32 = arith.constant 6 : i32
    %302 = tpu.dynamic_rotate %23 by %c6_i32 dim 1 : vector<12x256xf32>, i32 -> vector<12x256xf32>
    %c33 = arith.constant 33 : index
    %c0_55 = arith.constant 0 : index
    %303 = vector.load %arg1[%c33, %c0_55] : memref<81x256xf32, #tpu.memory_space<vmem>>, vector<1x256xf32>
    %304 = vector.broadcast %303 : vector<1x256xf32> to vector<12x256xf32>
    %305 = arith.mulf %302, %304 : vector<12x256xf32>
    %306 = vector.extract_strided_slice %25 {offsets = [0, 33], sizes = [12, 1], strides = [1, 1]} : vector<12x81xf32> to vector<12x1xf32>
    %307 = vector.broadcast %306 : vector<12x1xf32> to vector<12x256xf32>
    %308 = arith.mulf %305, %307 : vector<12x256xf32>
    %309 = arith.addf %297, %308 : vector<12x256xf32>
    %c5_i32 = arith.constant 5 : i32
    %310 = tpu.dynamic_rotate %23 by %c5_i32 dim 1 : vector<12x256xf32>, i32 -> vector<12x256xf32>
    %c34 = arith.constant 34 : index
    %c0_56 = arith.constant 0 : index
    %311 = vector.load %arg1[%c34, %c0_56] : memref<81x256xf32, #tpu.memory_space<vmem>>, vector<1x256xf32>
    %312 = vector.broadcast %311 : vector<1x256xf32> to vector<12x256xf32>
    %313 = arith.mulf %310, %312 : vector<12x256xf32>
    %314 = vector.extract_strided_slice %25 {offsets = [0, 34], sizes = [12, 1], strides = [1, 1]} : vector<12x81xf32> to vector<12x1xf32>
    %315 = vector.broadcast %314 : vector<12x1xf32> to vector<12x256xf32>
    %316 = arith.mulf %313, %315 : vector<12x256xf32>
    %317 = arith.addf %309, %316 : vector<12x256xf32>
    %c4_i32 = arith.constant 4 : i32
    %318 = tpu.dynamic_rotate %23 by %c4_i32 dim 1 : vector<12x256xf32>, i32 -> vector<12x256xf32>
    %c35 = arith.constant 35 : index
    %c0_57 = arith.constant 0 : index
    %319 = vector.load %arg1[%c35, %c0_57] : memref<81x256xf32, #tpu.memory_space<vmem>>, vector<1x256xf32>
    %320 = vector.broadcast %319 : vector<1x256xf32> to vector<12x256xf32>
    %321 = arith.mulf %318, %320 : vector<12x256xf32>
    %322 = vector.extract_strided_slice %25 {offsets = [0, 35], sizes = [12, 1], strides = [1, 1]} : vector<12x81xf32> to vector<12x1xf32>
    %323 = vector.broadcast %322 : vector<12x1xf32> to vector<12x256xf32>
    %324 = arith.mulf %321, %323 : vector<12x256xf32>
    %325 = arith.addf %317, %324 : vector<12x256xf32>
    %c4_i32_58 = arith.constant 4 : i32
    %326 = tpu.dynamic_rotate %23 by %c4_i32_58 dim 1 : vector<12x256xf32>, i32 -> vector<12x256xf32>
    %c36 = arith.constant 36 : index
    %c0_59 = arith.constant 0 : index
    %327 = vector.load %arg1[%c36, %c0_59] : memref<81x256xf32, #tpu.memory_space<vmem>>, vector<1x256xf32>
    %328 = vector.broadcast %327 : vector<1x256xf32> to vector<12x256xf32>
    %329 = arith.mulf %326, %328 : vector<12x256xf32>
    %330 = vector.extract_strided_slice %25 {offsets = [0, 36], sizes = [12, 1], strides = [1, 1]} : vector<12x81xf32> to vector<12x1xf32>
    %331 = vector.broadcast %330 : vector<12x1xf32> to vector<12x256xf32>
    %332 = arith.mulf %329, %331 : vector<12x256xf32>
    %333 = arith.addf %325, %332 : vector<12x256xf32>
    %c3_i32 = arith.constant 3 : i32
    %334 = tpu.dynamic_rotate %23 by %c3_i32 dim 1 : vector<12x256xf32>, i32 -> vector<12x256xf32>
    %c37 = arith.constant 37 : index
    %c0_60 = arith.constant 0 : index
    %335 = vector.load %arg1[%c37, %c0_60] : memref<81x256xf32, #tpu.memory_space<vmem>>, vector<1x256xf32>
    %336 = vector.broadcast %335 : vector<1x256xf32> to vector<12x256xf32>
    %337 = arith.mulf %334, %336 : vector<12x256xf32>
    %338 = vector.extract_strided_slice %25 {offsets = [0, 37], sizes = [12, 1], strides = [1, 1]} : vector<12x81xf32> to vector<12x1xf32>
    %339 = vector.broadcast %338 : vector<12x1xf32> to vector<12x256xf32>
    %340 = arith.mulf %337, %339 : vector<12x256xf32>
    %341 = arith.addf %333, %340 : vector<12x256xf32>
    %c2_i32 = arith.constant 2 : i32
    %342 = tpu.dynamic_rotate %23 by %c2_i32 dim 1 : vector<12x256xf32>, i32 -> vector<12x256xf32>
    %c38 = arith.constant 38 : index
    %c0_61 = arith.constant 0 : index
    %343 = vector.load %arg1[%c38, %c0_61] : memref<81x256xf32, #tpu.memory_space<vmem>>, vector<1x256xf32>
    %344 = vector.broadcast %343 : vector<1x256xf32> to vector<12x256xf32>
    %345 = arith.mulf %342, %344 : vector<12x256xf32>
    %346 = vector.extract_strided_slice %25 {offsets = [0, 38], sizes = [12, 1], strides = [1, 1]} : vector<12x81xf32> to vector<12x1xf32>
    %347 = vector.broadcast %346 : vector<12x1xf32> to vector<12x256xf32>
    %348 = arith.mulf %345, %347 : vector<12x256xf32>
    %349 = arith.addf %341, %348 : vector<12x256xf32>
    %c1_i32 = arith.constant 1 : i32
    %350 = tpu.dynamic_rotate %23 by %c1_i32 dim 1 : vector<12x256xf32>, i32 -> vector<12x256xf32>
    %c39 = arith.constant 39 : index
    %c0_62 = arith.constant 0 : index
    %351 = vector.load %arg1[%c39, %c0_62] : memref<81x256xf32, #tpu.memory_space<vmem>>, vector<1x256xf32>
    %352 = vector.broadcast %351 : vector<1x256xf32> to vector<12x256xf32>
    %353 = arith.mulf %350, %352 : vector<12x256xf32>
    %354 = vector.extract_strided_slice %25 {offsets = [0, 39], sizes = [12, 1], strides = [1, 1]} : vector<12x81xf32> to vector<12x1xf32>
    %355 = vector.broadcast %354 : vector<12x1xf32> to vector<12x256xf32>
    %356 = arith.mulf %353, %355 : vector<12x256xf32>
    %357 = arith.addf %349, %356 : vector<12x256xf32>
    %c3_63 = arith.constant 3 : index
    %c0_64 = arith.constant 0 : index
    %358 = vector.load %arg2[%c3_63, %c0_64] : memref<9x256xf32, #tpu.memory_space<vmem>>, vector<1x256xf32>
    %359 = vector.broadcast %358 : vector<1x256xf32> to vector<12x256xf32>
    %360 = arith.addf %350, %359 : vector<12x256xf32>
    %361 = arith.maximumf %301, %360 : vector<12x256xf32>
    %c40 = arith.constant 40 : index
    %c0_65 = arith.constant 0 : index
    %362 = vector.load %arg1[%c40, %c0_65] : memref<81x256xf32, #tpu.memory_space<vmem>>, vector<1x256xf32>
    %363 = vector.broadcast %362 : vector<1x256xf32> to vector<12x256xf32>
    %364 = arith.mulf %23, %363 : vector<12x256xf32>
    %365 = vector.extract_strided_slice %25 {offsets = [0, 40], sizes = [12, 1], strides = [1, 1]} : vector<12x81xf32> to vector<12x1xf32>
    %366 = vector.broadcast %365 : vector<12x1xf32> to vector<12x256xf32>
    %367 = arith.mulf %364, %366 : vector<12x256xf32>
    %368 = arith.addf %357, %367 : vector<12x256xf32>
    %c4_66 = arith.constant 4 : index
    %c0_67 = arith.constant 0 : index
    %369 = vector.load %arg2[%c4_66, %c0_67] : memref<9x256xf32, #tpu.memory_space<vmem>>, vector<1x256xf32>
    %370 = vector.broadcast %369 : vector<1x256xf32> to vector<12x256xf32>
    %371 = arith.addf %23, %370 : vector<12x256xf32>
    %372 = arith.maximumf %361, %371 : vector<12x256xf32>
    %c255_i32 = arith.constant 255 : i32
    %373 = tpu.dynamic_rotate %23 by %c255_i32 dim 1 : vector<12x256xf32>, i32 -> vector<12x256xf32>
    %c41 = arith.constant 41 : index
    %c0_68 = arith.constant 0 : index
    %374 = vector.load %arg1[%c41, %c0_68] : memref<81x256xf32, #tpu.memory_space<vmem>>, vector<1x256xf32>
    %375 = vector.broadcast %374 : vector<1x256xf32> to vector<12x256xf32>
    %376 = arith.mulf %373, %375 : vector<12x256xf32>
    %377 = vector.extract_strided_slice %25 {offsets = [0, 41], sizes = [12, 1], strides = [1, 1]} : vector<12x81xf32> to vector<12x1xf32>
    %378 = vector.broadcast %377 : vector<12x1xf32> to vector<12x256xf32>
    %379 = arith.mulf %376, %378 : vector<12x256xf32>
    %380 = arith.addf %368, %379 : vector<12x256xf32>
    %c5_69 = arith.constant 5 : index
    %c0_70 = arith.constant 0 : index
    %381 = vector.load %arg2[%c5_69, %c0_70] : memref<9x256xf32, #tpu.memory_space<vmem>>, vector<1x256xf32>
    %382 = vector.broadcast %381 : vector<1x256xf32> to vector<12x256xf32>
    %383 = arith.addf %373, %382 : vector<12x256xf32>
    %384 = arith.maximumf %372, %383 : vector<12x256xf32>
    %c254_i32 = arith.constant 254 : i32
    %385 = tpu.dynamic_rotate %23 by %c254_i32 dim 1 : vector<12x256xf32>, i32 -> vector<12x256xf32>
    %c42 = arith.constant 42 : index
    %c0_71 = arith.constant 0 : index
    %386 = vector.load %arg1[%c42, %c0_71] : memref<81x256xf32, #tpu.memory_space<vmem>>, vector<1x256xf32>
    %387 = vector.broadcast %386 : vector<1x256xf32> to vector<12x256xf32>
    %388 = arith.mulf %385, %387 : vector<12x256xf32>
    %389 = vector.extract_strided_slice %25 {offsets = [0, 42], sizes = [12, 1], strides = [1, 1]} : vector<12x81xf32> to vector<12x1xf32>
    %390 = vector.broadcast %389 : vector<12x1xf32> to vector<12x256xf32>
    %391 = arith.mulf %388, %390 : vector<12x256xf32>
    %392 = arith.addf %380, %391 : vector<12x256xf32>
    %c253_i32 = arith.constant 253 : i32
    %393 = tpu.dynamic_rotate %23 by %c253_i32 dim 1 : vector<12x256xf32>, i32 -> vector<12x256xf32>
    %c43 = arith.constant 43 : index
    %c0_72 = arith.constant 0 : index
    %394 = vector.load %arg1[%c43, %c0_72] : memref<81x256xf32, #tpu.memory_space<vmem>>, vector<1x256xf32>
    %395 = vector.broadcast %394 : vector<1x256xf32> to vector<12x256xf32>
    %396 = arith.mulf %393, %395 : vector<12x256xf32>
    %397 = vector.extract_strided_slice %25 {offsets = [0, 43], sizes = [12, 1], strides = [1, 1]} : vector<12x81xf32> to vector<12x1xf32>
    %398 = vector.broadcast %397 : vector<12x1xf32> to vector<12x256xf32>
    %399 = arith.mulf %396, %398 : vector<12x256xf32>
    %400 = arith.addf %392, %399 : vector<12x256xf32>
    %c252_i32 = arith.constant 252 : i32
    %401 = tpu.dynamic_rotate %23 by %c252_i32 dim 1 : vector<12x256xf32>, i32 -> vector<12x256xf32>
    %c44 = arith.constant 44 : index
    %c0_73 = arith.constant 0 : index
    %402 = vector.load %arg1[%c44, %c0_73] : memref<81x256xf32, #tpu.memory_space<vmem>>, vector<1x256xf32>
    %403 = vector.broadcast %402 : vector<1x256xf32> to vector<12x256xf32>
    %404 = arith.mulf %401, %403 : vector<12x256xf32>
    %405 = vector.extract_strided_slice %25 {offsets = [0, 44], sizes = [12, 1], strides = [1, 1]} : vector<12x81xf32> to vector<12x1xf32>
    %406 = vector.broadcast %405 : vector<12x1xf32> to vector<12x256xf32>
    %407 = arith.mulf %404, %406 : vector<12x256xf32>
    %408 = arith.addf %400, %407 : vector<12x256xf32>
    %c252_i32_74 = arith.constant 252 : i32
    %409 = tpu.dynamic_rotate %23 by %c252_i32_74 dim 1 : vector<12x256xf32>, i32 -> vector<12x256xf32>
    %c45 = arith.constant 45 : index
    %c0_75 = arith.constant 0 : index
    %410 = vector.load %arg1[%c45, %c0_75] : memref<81x256xf32, #tpu.memory_space<vmem>>, vector<1x256xf32>
    %411 = vector.broadcast %410 : vector<1x256xf32> to vector<12x256xf32>
    %412 = arith.mulf %409, %411 : vector<12x256xf32>
    %413 = vector.extract_strided_slice %25 {offsets = [0, 45], sizes = [12, 1], strides = [1, 1]} : vector<12x81xf32> to vector<12x1xf32>
    %414 = vector.broadcast %413 : vector<12x1xf32> to vector<12x256xf32>
    %415 = arith.mulf %412, %414 : vector<12x256xf32>
    %416 = arith.addf %408, %415 : vector<12x256xf32>
    %c251_i32 = arith.constant 251 : i32
    %417 = tpu.dynamic_rotate %23 by %c251_i32 dim 1 : vector<12x256xf32>, i32 -> vector<12x256xf32>
    %c46 = arith.constant 46 : index
    %c0_76 = arith.constant 0 : index
    %418 = vector.load %arg1[%c46, %c0_76] : memref<81x256xf32, #tpu.memory_space<vmem>>, vector<1x256xf32>
    %419 = vector.broadcast %418 : vector<1x256xf32> to vector<12x256xf32>
    %420 = arith.mulf %417, %419 : vector<12x256xf32>
    %421 = vector.extract_strided_slice %25 {offsets = [0, 46], sizes = [12, 1], strides = [1, 1]} : vector<12x81xf32> to vector<12x1xf32>
    %422 = vector.broadcast %421 : vector<12x1xf32> to vector<12x256xf32>
    %423 = arith.mulf %420, %422 : vector<12x256xf32>
    %424 = arith.addf %416, %423 : vector<12x256xf32>
    %c250_i32 = arith.constant 250 : i32
    %425 = tpu.dynamic_rotate %23 by %c250_i32 dim 1 : vector<12x256xf32>, i32 -> vector<12x256xf32>
    %c47 = arith.constant 47 : index
    %c0_77 = arith.constant 0 : index
    %426 = vector.load %arg1[%c47, %c0_77] : memref<81x256xf32, #tpu.memory_space<vmem>>, vector<1x256xf32>
    %427 = vector.broadcast %426 : vector<1x256xf32> to vector<12x256xf32>
    %428 = arith.mulf %425, %427 : vector<12x256xf32>
    %429 = vector.extract_strided_slice %25 {offsets = [0, 47], sizes = [12, 1], strides = [1, 1]} : vector<12x81xf32> to vector<12x1xf32>
    %430 = vector.broadcast %429 : vector<12x1xf32> to vector<12x256xf32>
    %431 = arith.mulf %428, %430 : vector<12x256xf32>
    %432 = arith.addf %424, %431 : vector<12x256xf32>
    %c249_i32 = arith.constant 249 : i32
    %433 = tpu.dynamic_rotate %23 by %c249_i32 dim 1 : vector<12x256xf32>, i32 -> vector<12x256xf32>
    %c48 = arith.constant 48 : index
    %c0_78 = arith.constant 0 : index
    %434 = vector.load %arg1[%c48, %c0_78] : memref<81x256xf32, #tpu.memory_space<vmem>>, vector<1x256xf32>
    %435 = vector.broadcast %434 : vector<1x256xf32> to vector<12x256xf32>
    %436 = arith.mulf %433, %435 : vector<12x256xf32>
    %437 = vector.extract_strided_slice %25 {offsets = [0, 48], sizes = [12, 1], strides = [1, 1]} : vector<12x81xf32> to vector<12x1xf32>
    %438 = vector.broadcast %437 : vector<12x1xf32> to vector<12x256xf32>
    %439 = arith.mulf %436, %438 : vector<12x256xf32>
    %440 = arith.addf %432, %439 : vector<12x256xf32>
    %c6_79 = arith.constant 6 : index
    %c0_80 = arith.constant 0 : index
    %441 = vector.load %arg2[%c6_79, %c0_80] : memref<9x256xf32, #tpu.memory_space<vmem>>, vector<1x256xf32>
    %442 = vector.broadcast %441 : vector<1x256xf32> to vector<12x256xf32>
    %443 = arith.addf %433, %442 : vector<12x256xf32>
    %444 = arith.maximumf %384, %443 : vector<12x256xf32>
    %c248_i32 = arith.constant 248 : i32
    %445 = tpu.dynamic_rotate %23 by %c248_i32 dim 1 : vector<12x256xf32>, i32 -> vector<12x256xf32>
    %c49 = arith.constant 49 : index
    %c0_81 = arith.constant 0 : index
    %446 = vector.load %arg1[%c49, %c0_81] : memref<81x256xf32, #tpu.memory_space<vmem>>, vector<1x256xf32>
    %447 = vector.broadcast %446 : vector<1x256xf32> to vector<12x256xf32>
    %448 = arith.mulf %445, %447 : vector<12x256xf32>
    %449 = vector.extract_strided_slice %25 {offsets = [0, 49], sizes = [12, 1], strides = [1, 1]} : vector<12x81xf32> to vector<12x1xf32>
    %450 = vector.broadcast %449 : vector<12x1xf32> to vector<12x256xf32>
    %451 = arith.mulf %448, %450 : vector<12x256xf32>
    %452 = arith.addf %440, %451 : vector<12x256xf32>
    %c7_82 = arith.constant 7 : index
    %c0_83 = arith.constant 0 : index
    %453 = vector.load %arg2[%c7_82, %c0_83] : memref<9x256xf32, #tpu.memory_space<vmem>>, vector<1x256xf32>
    %454 = vector.broadcast %453 : vector<1x256xf32> to vector<12x256xf32>
    %455 = arith.addf %445, %454 : vector<12x256xf32>
    %456 = arith.maximumf %444, %455 : vector<12x256xf32>
    %c247_i32 = arith.constant 247 : i32
    %457 = tpu.dynamic_rotate %23 by %c247_i32 dim 1 : vector<12x256xf32>, i32 -> vector<12x256xf32>
    %c50 = arith.constant 50 : index
    %c0_84 = arith.constant 0 : index
    %458 = vector.load %arg1[%c50, %c0_84] : memref<81x256xf32, #tpu.memory_space<vmem>>, vector<1x256xf32>
    %459 = vector.broadcast %458 : vector<1x256xf32> to vector<12x256xf32>
    %460 = arith.mulf %457, %459 : vector<12x256xf32>
    %461 = vector.extract_strided_slice %25 {offsets = [0, 50], sizes = [12, 1], strides = [1, 1]} : vector<12x81xf32> to vector<12x1xf32>
    %462 = vector.broadcast %461 : vector<12x1xf32> to vector<12x256xf32>
    %463 = arith.mulf %460, %462 : vector<12x256xf32>
    %464 = arith.addf %452, %463 : vector<12x256xf32>
    %c8_85 = arith.constant 8 : index
    %c0_86 = arith.constant 0 : index
    %465 = vector.load %arg2[%c8_85, %c0_86] : memref<9x256xf32, #tpu.memory_space<vmem>>, vector<1x256xf32>
    %466 = vector.broadcast %465 : vector<1x256xf32> to vector<12x256xf32>
    %467 = arith.addf %457, %466 : vector<12x256xf32>
    %468 = arith.maximumf %456, %467 : vector<12x256xf32>
    %c246_i32 = arith.constant 246 : i32
    %469 = tpu.dynamic_rotate %23 by %c246_i32 dim 1 : vector<12x256xf32>, i32 -> vector<12x256xf32>
    %c51 = arith.constant 51 : index
    %c0_87 = arith.constant 0 : index
    %470 = vector.load %arg1[%c51, %c0_87] : memref<81x256xf32, #tpu.memory_space<vmem>>, vector<1x256xf32>
    %471 = vector.broadcast %470 : vector<1x256xf32> to vector<12x256xf32>
    %472 = arith.mulf %469, %471 : vector<12x256xf32>
    %473 = vector.extract_strided_slice %25 {offsets = [0, 51], sizes = [12, 1], strides = [1, 1]} : vector<12x81xf32> to vector<12x1xf32>
    %474 = vector.broadcast %473 : vector<12x1xf32> to vector<12x256xf32>
    %475 = arith.mulf %472, %474 : vector<12x256xf32>
    %476 = arith.addf %464, %475 : vector<12x256xf32>
    %c245_i32 = arith.constant 245 : i32
    %477 = tpu.dynamic_rotate %23 by %c245_i32 dim 1 : vector<12x256xf32>, i32 -> vector<12x256xf32>
    %c52 = arith.constant 52 : index
    %c0_88 = arith.constant 0 : index
    %478 = vector.load %arg1[%c52, %c0_88] : memref<81x256xf32, #tpu.memory_space<vmem>>, vector<1x256xf32>
    %479 = vector.broadcast %478 : vector<1x256xf32> to vector<12x256xf32>
    %480 = arith.mulf %477, %479 : vector<12x256xf32>
    %481 = vector.extract_strided_slice %25 {offsets = [0, 52], sizes = [12, 1], strides = [1, 1]} : vector<12x81xf32> to vector<12x1xf32>
    %482 = vector.broadcast %481 : vector<12x1xf32> to vector<12x256xf32>
    %483 = arith.mulf %480, %482 : vector<12x256xf32>
    %484 = arith.addf %476, %483 : vector<12x256xf32>
    %c244_i32 = arith.constant 244 : i32
    %485 = tpu.dynamic_rotate %23 by %c244_i32 dim 1 : vector<12x256xf32>, i32 -> vector<12x256xf32>
    %c53 = arith.constant 53 : index
    %c0_89 = arith.constant 0 : index
    %486 = vector.load %arg1[%c53, %c0_89] : memref<81x256xf32, #tpu.memory_space<vmem>>, vector<1x256xf32>
    %487 = vector.broadcast %486 : vector<1x256xf32> to vector<12x256xf32>
    %488 = arith.mulf %485, %487 : vector<12x256xf32>
    %489 = vector.extract_strided_slice %25 {offsets = [0, 53], sizes = [12, 1], strides = [1, 1]} : vector<12x81xf32> to vector<12x1xf32>
    %490 = vector.broadcast %489 : vector<12x1xf32> to vector<12x256xf32>
    %491 = arith.mulf %488, %490 : vector<12x256xf32>
    %492 = arith.addf %484, %491 : vector<12x256xf32>
    %c244_i32_90 = arith.constant 244 : i32
    %493 = tpu.dynamic_rotate %23 by %c244_i32_90 dim 1 : vector<12x256xf32>, i32 -> vector<12x256xf32>
    %c54 = arith.constant 54 : index
    %c0_91 = arith.constant 0 : index
    %494 = vector.load %arg1[%c54, %c0_91] : memref<81x256xf32, #tpu.memory_space<vmem>>, vector<1x256xf32>
    %495 = vector.broadcast %494 : vector<1x256xf32> to vector<12x256xf32>
    %496 = arith.mulf %493, %495 : vector<12x256xf32>
    %497 = vector.extract_strided_slice %25 {offsets = [0, 54], sizes = [12, 1], strides = [1, 1]} : vector<12x81xf32> to vector<12x1xf32>
    %498 = vector.broadcast %497 : vector<12x1xf32> to vector<12x256xf32>
    %499 = arith.mulf %496, %498 : vector<12x256xf32>
    %500 = arith.addf %492, %499 : vector<12x256xf32>
    %c243_i32 = arith.constant 243 : i32
    %501 = tpu.dynamic_rotate %23 by %c243_i32 dim 1 : vector<12x256xf32>, i32 -> vector<12x256xf32>
    %c55 = arith.constant 55 : index
    %c0_92 = arith.constant 0 : index
    %502 = vector.load %arg1[%c55, %c0_92] : memref<81x256xf32, #tpu.memory_space<vmem>>, vector<1x256xf32>
    %503 = vector.broadcast %502 : vector<1x256xf32> to vector<12x256xf32>
    %504 = arith.mulf %501, %503 : vector<12x256xf32>
    %505 = vector.extract_strided_slice %25 {offsets = [0, 55], sizes = [12, 1], strides = [1, 1]} : vector<12x81xf32> to vector<12x1xf32>
    %506 = vector.broadcast %505 : vector<12x1xf32> to vector<12x256xf32>
    %507 = arith.mulf %504, %506 : vector<12x256xf32>
    %508 = arith.addf %500, %507 : vector<12x256xf32>
    %c242_i32 = arith.constant 242 : i32
    %509 = tpu.dynamic_rotate %23 by %c242_i32 dim 1 : vector<12x256xf32>, i32 -> vector<12x256xf32>
    %c56 = arith.constant 56 : index
    %c0_93 = arith.constant 0 : index
    %510 = vector.load %arg1[%c56, %c0_93] : memref<81x256xf32, #tpu.memory_space<vmem>>, vector<1x256xf32>
    %511 = vector.broadcast %510 : vector<1x256xf32> to vector<12x256xf32>
    %512 = arith.mulf %509, %511 : vector<12x256xf32>
    %513 = vector.extract_strided_slice %25 {offsets = [0, 56], sizes = [12, 1], strides = [1, 1]} : vector<12x81xf32> to vector<12x1xf32>
    %514 = vector.broadcast %513 : vector<12x1xf32> to vector<12x256xf32>
    %515 = arith.mulf %512, %514 : vector<12x256xf32>
    %516 = arith.addf %508, %515 : vector<12x256xf32>
    %c241_i32 = arith.constant 241 : i32
    %517 = tpu.dynamic_rotate %23 by %c241_i32 dim 1 : vector<12x256xf32>, i32 -> vector<12x256xf32>
    %c57 = arith.constant 57 : index
    %c0_94 = arith.constant 0 : index
    %518 = vector.load %arg1[%c57, %c0_94] : memref<81x256xf32, #tpu.memory_space<vmem>>, vector<1x256xf32>
    %519 = vector.broadcast %518 : vector<1x256xf32> to vector<12x256xf32>
    %520 = arith.mulf %517, %519 : vector<12x256xf32>
    %521 = vector.extract_strided_slice %25 {offsets = [0, 57], sizes = [12, 1], strides = [1, 1]} : vector<12x81xf32> to vector<12x1xf32>
    %522 = vector.broadcast %521 : vector<12x1xf32> to vector<12x256xf32>
    %523 = arith.mulf %520, %522 : vector<12x256xf32>
    %524 = arith.addf %516, %523 : vector<12x256xf32>
    %c240_i32 = arith.constant 240 : i32
    %525 = tpu.dynamic_rotate %23 by %c240_i32 dim 1 : vector<12x256xf32>, i32 -> vector<12x256xf32>
    %c58 = arith.constant 58 : index
    %c0_95 = arith.constant 0 : index
    %526 = vector.load %arg1[%c58, %c0_95] : memref<81x256xf32, #tpu.memory_space<vmem>>, vector<1x256xf32>
    %527 = vector.broadcast %526 : vector<1x256xf32> to vector<12x256xf32>
    %528 = arith.mulf %525, %527 : vector<12x256xf32>
    %529 = vector.extract_strided_slice %25 {offsets = [0, 58], sizes = [12, 1], strides = [1, 1]} : vector<12x81xf32> to vector<12x1xf32>
    %530 = vector.broadcast %529 : vector<12x1xf32> to vector<12x256xf32>
    %531 = arith.mulf %528, %530 : vector<12x256xf32>
    %532 = arith.addf %524, %531 : vector<12x256xf32>
    %c239_i32 = arith.constant 239 : i32
    %533 = tpu.dynamic_rotate %23 by %c239_i32 dim 1 : vector<12x256xf32>, i32 -> vector<12x256xf32>
    %c59 = arith.constant 59 : index
    %c0_96 = arith.constant 0 : index
    %534 = vector.load %arg1[%c59, %c0_96] : memref<81x256xf32, #tpu.memory_space<vmem>>, vector<1x256xf32>
    %535 = vector.broadcast %534 : vector<1x256xf32> to vector<12x256xf32>
    %536 = arith.mulf %533, %535 : vector<12x256xf32>
    %537 = vector.extract_strided_slice %25 {offsets = [0, 59], sizes = [12, 1], strides = [1, 1]} : vector<12x81xf32> to vector<12x1xf32>
    %538 = vector.broadcast %537 : vector<12x1xf32> to vector<12x256xf32>
    %539 = arith.mulf %536, %538 : vector<12x256xf32>
    %540 = arith.addf %532, %539 : vector<12x256xf32>
    %c238_i32 = arith.constant 238 : i32
    %541 = tpu.dynamic_rotate %23 by %c238_i32 dim 1 : vector<12x256xf32>, i32 -> vector<12x256xf32>
    %c60 = arith.constant 60 : index
    %c0_97 = arith.constant 0 : index
    %542 = vector.load %arg1[%c60, %c0_97] : memref<81x256xf32, #tpu.memory_space<vmem>>, vector<1x256xf32>
    %543 = vector.broadcast %542 : vector<1x256xf32> to vector<12x256xf32>
    %544 = arith.mulf %541, %543 : vector<12x256xf32>
    %545 = vector.extract_strided_slice %25 {offsets = [0, 60], sizes = [12, 1], strides = [1, 1]} : vector<12x81xf32> to vector<12x1xf32>
    %546 = vector.broadcast %545 : vector<12x1xf32> to vector<12x256xf32>
    %547 = arith.mulf %544, %546 : vector<12x256xf32>
    %548 = arith.addf %540, %547 : vector<12x256xf32>
    %c237_i32 = arith.constant 237 : i32
    %549 = tpu.dynamic_rotate %23 by %c237_i32 dim 1 : vector<12x256xf32>, i32 -> vector<12x256xf32>
    %c61 = arith.constant 61 : index
    %c0_98 = arith.constant 0 : index
    %550 = vector.load %arg1[%c61, %c0_98] : memref<81x256xf32, #tpu.memory_space<vmem>>, vector<1x256xf32>
    %551 = vector.broadcast %550 : vector<1x256xf32> to vector<12x256xf32>
    %552 = arith.mulf %549, %551 : vector<12x256xf32>
    %553 = vector.extract_strided_slice %25 {offsets = [0, 61], sizes = [12, 1], strides = [1, 1]} : vector<12x81xf32> to vector<12x1xf32>
    %554 = vector.broadcast %553 : vector<12x1xf32> to vector<12x256xf32>
    %555 = arith.mulf %552, %554 : vector<12x256xf32>
    %556 = arith.addf %548, %555 : vector<12x256xf32>
    %c236_i32 = arith.constant 236 : i32
    %557 = tpu.dynamic_rotate %23 by %c236_i32 dim 1 : vector<12x256xf32>, i32 -> vector<12x256xf32>
    %c62 = arith.constant 62 : index
    %c0_99 = arith.constant 0 : index
    %558 = vector.load %arg1[%c62, %c0_99] : memref<81x256xf32, #tpu.memory_space<vmem>>, vector<1x256xf32>
    %559 = vector.broadcast %558 : vector<1x256xf32> to vector<12x256xf32>
    %560 = arith.mulf %557, %559 : vector<12x256xf32>
    %561 = vector.extract_strided_slice %25 {offsets = [0, 62], sizes = [12, 1], strides = [1, 1]} : vector<12x81xf32> to vector<12x1xf32>
    %562 = vector.broadcast %561 : vector<12x1xf32> to vector<12x256xf32>
    %563 = arith.mulf %560, %562 : vector<12x256xf32>
    %564 = arith.addf %556, %563 : vector<12x256xf32>
    %c236_i32_100 = arith.constant 236 : i32
    %565 = tpu.dynamic_rotate %23 by %c236_i32_100 dim 1 : vector<12x256xf32>, i32 -> vector<12x256xf32>
    %c63 = arith.constant 63 : index
    %c0_101 = arith.constant 0 : index
    %566 = vector.load %arg1[%c63, %c0_101] : memref<81x256xf32, #tpu.memory_space<vmem>>, vector<1x256xf32>
    %567 = vector.broadcast %566 : vector<1x256xf32> to vector<12x256xf32>
    %568 = arith.mulf %565, %567 : vector<12x256xf32>
    %569 = vector.extract_strided_slice %25 {offsets = [0, 63], sizes = [12, 1], strides = [1, 1]} : vector<12x81xf32> to vector<12x1xf32>
    %570 = vector.broadcast %569 : vector<12x1xf32> to vector<12x256xf32>
    %571 = arith.mulf %568, %570 : vector<12x256xf32>
    %572 = arith.addf %564, %571 : vector<12x256xf32>
    %c235_i32 = arith.constant 235 : i32
    %573 = tpu.dynamic_rotate %23 by %c235_i32 dim 1 : vector<12x256xf32>, i32 -> vector<12x256xf32>
    %c64 = arith.constant 64 : index
    %c0_102 = arith.constant 0 : index
    %574 = vector.load %arg1[%c64, %c0_102] : memref<81x256xf32, #tpu.memory_space<vmem>>, vector<1x256xf32>
    %575 = vector.broadcast %574 : vector<1x256xf32> to vector<12x256xf32>
    %576 = arith.mulf %573, %575 : vector<12x256xf32>
    %577 = vector.extract_strided_slice %25 {offsets = [0, 64], sizes = [12, 1], strides = [1, 1]} : vector<12x81xf32> to vector<12x1xf32>
    %578 = vector.broadcast %577 : vector<12x1xf32> to vector<12x256xf32>
    %579 = arith.mulf %576, %578 : vector<12x256xf32>
    %580 = arith.addf %572, %579 : vector<12x256xf32>
    %c234_i32 = arith.constant 234 : i32
    %581 = tpu.dynamic_rotate %23 by %c234_i32 dim 1 : vector<12x256xf32>, i32 -> vector<12x256xf32>
    %c65 = arith.constant 65 : index
    %c0_103 = arith.constant 0 : index
    %582 = vector.load %arg1[%c65, %c0_103] : memref<81x256xf32, #tpu.memory_space<vmem>>, vector<1x256xf32>
    %583 = vector.broadcast %582 : vector<1x256xf32> to vector<12x256xf32>
    %584 = arith.mulf %581, %583 : vector<12x256xf32>
    %585 = vector.extract_strided_slice %25 {offsets = [0, 65], sizes = [12, 1], strides = [1, 1]} : vector<12x81xf32> to vector<12x1xf32>
    %586 = vector.broadcast %585 : vector<12x1xf32> to vector<12x256xf32>
    %587 = arith.mulf %584, %586 : vector<12x256xf32>
    %588 = arith.addf %580, %587 : vector<12x256xf32>
    %c233_i32 = arith.constant 233 : i32
    %589 = tpu.dynamic_rotate %23 by %c233_i32 dim 1 : vector<12x256xf32>, i32 -> vector<12x256xf32>
    %c66 = arith.constant 66 : index
    %c0_104 = arith.constant 0 : index
    %590 = vector.load %arg1[%c66, %c0_104] : memref<81x256xf32, #tpu.memory_space<vmem>>, vector<1x256xf32>
    %591 = vector.broadcast %590 : vector<1x256xf32> to vector<12x256xf32>
    %592 = arith.mulf %589, %591 : vector<12x256xf32>
    %593 = vector.extract_strided_slice %25 {offsets = [0, 66], sizes = [12, 1], strides = [1, 1]} : vector<12x81xf32> to vector<12x1xf32>
    %594 = vector.broadcast %593 : vector<12x1xf32> to vector<12x256xf32>
    %595 = arith.mulf %592, %594 : vector<12x256xf32>
    %596 = arith.addf %588, %595 : vector<12x256xf32>
    %c232_i32 = arith.constant 232 : i32
    %597 = tpu.dynamic_rotate %23 by %c232_i32 dim 1 : vector<12x256xf32>, i32 -> vector<12x256xf32>
    %c67 = arith.constant 67 : index
    %c0_105 = arith.constant 0 : index
    %598 = vector.load %arg1[%c67, %c0_105] : memref<81x256xf32, #tpu.memory_space<vmem>>, vector<1x256xf32>
    %599 = vector.broadcast %598 : vector<1x256xf32> to vector<12x256xf32>
    %600 = arith.mulf %597, %599 : vector<12x256xf32>
    %601 = vector.extract_strided_slice %25 {offsets = [0, 67], sizes = [12, 1], strides = [1, 1]} : vector<12x81xf32> to vector<12x1xf32>
    %602 = vector.broadcast %601 : vector<12x1xf32> to vector<12x256xf32>
    %603 = arith.mulf %600, %602 : vector<12x256xf32>
    %604 = arith.addf %596, %603 : vector<12x256xf32>
    %c231_i32 = arith.constant 231 : i32
    %605 = tpu.dynamic_rotate %23 by %c231_i32 dim 1 : vector<12x256xf32>, i32 -> vector<12x256xf32>
    %c68 = arith.constant 68 : index
    %c0_106 = arith.constant 0 : index
    %606 = vector.load %arg1[%c68, %c0_106] : memref<81x256xf32, #tpu.memory_space<vmem>>, vector<1x256xf32>
    %607 = vector.broadcast %606 : vector<1x256xf32> to vector<12x256xf32>
    %608 = arith.mulf %605, %607 : vector<12x256xf32>
    %609 = vector.extract_strided_slice %25 {offsets = [0, 68], sizes = [12, 1], strides = [1, 1]} : vector<12x81xf32> to vector<12x1xf32>
    %610 = vector.broadcast %609 : vector<12x1xf32> to vector<12x256xf32>
    %611 = arith.mulf %608, %610 : vector<12x256xf32>
    %612 = arith.addf %604, %611 : vector<12x256xf32>
    %c230_i32 = arith.constant 230 : i32
    %613 = tpu.dynamic_rotate %23 by %c230_i32 dim 1 : vector<12x256xf32>, i32 -> vector<12x256xf32>
    %c69 = arith.constant 69 : index
    %c0_107 = arith.constant 0 : index
    %614 = vector.load %arg1[%c69, %c0_107] : memref<81x256xf32, #tpu.memory_space<vmem>>, vector<1x256xf32>
    %615 = vector.broadcast %614 : vector<1x256xf32> to vector<12x256xf32>
    %616 = arith.mulf %613, %615 : vector<12x256xf32>
    %617 = vector.extract_strided_slice %25 {offsets = [0, 69], sizes = [12, 1], strides = [1, 1]} : vector<12x81xf32> to vector<12x1xf32>
    %618 = vector.broadcast %617 : vector<12x1xf32> to vector<12x256xf32>
    %619 = arith.mulf %616, %618 : vector<12x256xf32>
    %620 = arith.addf %612, %619 : vector<12x256xf32>
    %c229_i32 = arith.constant 229 : i32
    %621 = tpu.dynamic_rotate %23 by %c229_i32 dim 1 : vector<12x256xf32>, i32 -> vector<12x256xf32>
    %c70 = arith.constant 70 : index
    %c0_108 = arith.constant 0 : index
    %622 = vector.load %arg1[%c70, %c0_108] : memref<81x256xf32, #tpu.memory_space<vmem>>, vector<1x256xf32>
    %623 = vector.broadcast %622 : vector<1x256xf32> to vector<12x256xf32>
    %624 = arith.mulf %621, %623 : vector<12x256xf32>
    %625 = vector.extract_strided_slice %25 {offsets = [0, 70], sizes = [12, 1], strides = [1, 1]} : vector<12x81xf32> to vector<12x1xf32>
    %626 = vector.broadcast %625 : vector<12x1xf32> to vector<12x256xf32>
    %627 = arith.mulf %624, %626 : vector<12x256xf32>
    %628 = arith.addf %620, %627 : vector<12x256xf32>
    %c228_i32 = arith.constant 228 : i32
    %629 = tpu.dynamic_rotate %23 by %c228_i32 dim 1 : vector<12x256xf32>, i32 -> vector<12x256xf32>
    %c71 = arith.constant 71 : index
    %c0_109 = arith.constant 0 : index
    %630 = vector.load %arg1[%c71, %c0_109] : memref<81x256xf32, #tpu.memory_space<vmem>>, vector<1x256xf32>
    %631 = vector.broadcast %630 : vector<1x256xf32> to vector<12x256xf32>
    %632 = arith.mulf %629, %631 : vector<12x256xf32>
    %633 = vector.extract_strided_slice %25 {offsets = [0, 71], sizes = [12, 1], strides = [1, 1]} : vector<12x81xf32> to vector<12x1xf32>
    %634 = vector.broadcast %633 : vector<12x1xf32> to vector<12x256xf32>
    %635 = arith.mulf %632, %634 : vector<12x256xf32>
    %636 = arith.addf %628, %635 : vector<12x256xf32>
    %c228_i32_110 = arith.constant 228 : i32
    %637 = tpu.dynamic_rotate %23 by %c228_i32_110 dim 1 : vector<12x256xf32>, i32 -> vector<12x256xf32>
    %c72 = arith.constant 72 : index
    %c0_111 = arith.constant 0 : index
    %638 = vector.load %arg1[%c72, %c0_111] : memref<81x256xf32, #tpu.memory_space<vmem>>, vector<1x256xf32>
    %639 = vector.broadcast %638 : vector<1x256xf32> to vector<12x256xf32>
    %640 = arith.mulf %637, %639 : vector<12x256xf32>
    %641 = vector.extract_strided_slice %25 {offsets = [0, 72], sizes = [12, 1], strides = [1, 1]} : vector<12x81xf32> to vector<12x1xf32>
    %642 = vector.broadcast %641 : vector<12x1xf32> to vector<12x256xf32>
    %643 = arith.mulf %640, %642 : vector<12x256xf32>
    %644 = arith.addf %636, %643 : vector<12x256xf32>
    %c227_i32 = arith.constant 227 : i32
    %645 = tpu.dynamic_rotate %23 by %c227_i32 dim 1 : vector<12x256xf32>, i32 -> vector<12x256xf32>
    %c73 = arith.constant 73 : index
    %c0_112 = arith.constant 0 : index
    %646 = vector.load %arg1[%c73, %c0_112] : memref<81x256xf32, #tpu.memory_space<vmem>>, vector<1x256xf32>
    %647 = vector.broadcast %646 : vector<1x256xf32> to vector<12x256xf32>
    %648 = arith.mulf %645, %647 : vector<12x256xf32>
    %649 = vector.extract_strided_slice %25 {offsets = [0, 73], sizes = [12, 1], strides = [1, 1]} : vector<12x81xf32> to vector<12x1xf32>
    %650 = vector.broadcast %649 : vector<12x1xf32> to vector<12x256xf32>
    %651 = arith.mulf %648, %650 : vector<12x256xf32>
    %652 = arith.addf %644, %651 : vector<12x256xf32>
    %c226_i32 = arith.constant 226 : i32
    %653 = tpu.dynamic_rotate %23 by %c226_i32 dim 1 : vector<12x256xf32>, i32 -> vector<12x256xf32>
    %c74 = arith.constant 74 : index
    %c0_113 = arith.constant 0 : index
    %654 = vector.load %arg1[%c74, %c0_113] : memref<81x256xf32, #tpu.memory_space<vmem>>, vector<1x256xf32>
    %655 = vector.broadcast %654 : vector<1x256xf32> to vector<12x256xf32>
    %656 = arith.mulf %653, %655 : vector<12x256xf32>
    %657 = vector.extract_strided_slice %25 {offsets = [0, 74], sizes = [12, 1], strides = [1, 1]} : vector<12x81xf32> to vector<12x1xf32>
    %658 = vector.broadcast %657 : vector<12x1xf32> to vector<12x256xf32>
    %659 = arith.mulf %656, %658 : vector<12x256xf32>
    %660 = arith.addf %652, %659 : vector<12x256xf32>
    %c225_i32 = arith.constant 225 : i32
    %661 = tpu.dynamic_rotate %23 by %c225_i32 dim 1 : vector<12x256xf32>, i32 -> vector<12x256xf32>
    %c75 = arith.constant 75 : index
    %c0_114 = arith.constant 0 : index
    %662 = vector.load %arg1[%c75, %c0_114] : memref<81x256xf32, #tpu.memory_space<vmem>>, vector<1x256xf32>
    %663 = vector.broadcast %662 : vector<1x256xf32> to vector<12x256xf32>
    %664 = arith.mulf %661, %663 : vector<12x256xf32>
    %665 = vector.extract_strided_slice %25 {offsets = [0, 75], sizes = [12, 1], strides = [1, 1]} : vector<12x81xf32> to vector<12x1xf32>
    %666 = vector.broadcast %665 : vector<12x1xf32> to vector<12x256xf32>
    %667 = arith.mulf %664, %666 : vector<12x256xf32>
    %668 = arith.addf %660, %667 : vector<12x256xf32>
    %c224_i32 = arith.constant 224 : i32
    %669 = tpu.dynamic_rotate %23 by %c224_i32 dim 1 : vector<12x256xf32>, i32 -> vector<12x256xf32>
    %c76 = arith.constant 76 : index
    %c0_115 = arith.constant 0 : index
    %670 = vector.load %arg1[%c76, %c0_115] : memref<81x256xf32, #tpu.memory_space<vmem>>, vector<1x256xf32>
    %671 = vector.broadcast %670 : vector<1x256xf32> to vector<12x256xf32>
    %672 = arith.mulf %669, %671 : vector<12x256xf32>
    %673 = vector.extract_strided_slice %25 {offsets = [0, 76], sizes = [12, 1], strides = [1, 1]} : vector<12x81xf32> to vector<12x1xf32>
    %674 = vector.broadcast %673 : vector<12x1xf32> to vector<12x256xf32>
    %675 = arith.mulf %672, %674 : vector<12x256xf32>
    %676 = arith.addf %668, %675 : vector<12x256xf32>
    %c223_i32 = arith.constant 223 : i32
    %677 = tpu.dynamic_rotate %23 by %c223_i32 dim 1 : vector<12x256xf32>, i32 -> vector<12x256xf32>
    %c77 = arith.constant 77 : index
    %c0_116 = arith.constant 0 : index
    %678 = vector.load %arg1[%c77, %c0_116] : memref<81x256xf32, #tpu.memory_space<vmem>>, vector<1x256xf32>
    %679 = vector.broadcast %678 : vector<1x256xf32> to vector<12x256xf32>
    %680 = arith.mulf %677, %679 : vector<12x256xf32>
    %681 = vector.extract_strided_slice %25 {offsets = [0, 77], sizes = [12, 1], strides = [1, 1]} : vector<12x81xf32> to vector<12x1xf32>
    %682 = vector.broadcast %681 : vector<12x1xf32> to vector<12x256xf32>
    %683 = arith.mulf %680, %682 : vector<12x256xf32>
    %684 = arith.addf %676, %683 : vector<12x256xf32>
    %c222_i32 = arith.constant 222 : i32
    %685 = tpu.dynamic_rotate %23 by %c222_i32 dim 1 : vector<12x256xf32>, i32 -> vector<12x256xf32>
    %c78 = arith.constant 78 : index
    %c0_117 = arith.constant 0 : index
    %686 = vector.load %arg1[%c78, %c0_117] : memref<81x256xf32, #tpu.memory_space<vmem>>, vector<1x256xf32>
    %687 = vector.broadcast %686 : vector<1x256xf32> to vector<12x256xf32>
    %688 = arith.mulf %685, %687 : vector<12x256xf32>
    %689 = vector.extract_strided_slice %25 {offsets = [0, 78], sizes = [12, 1], strides = [1, 1]} : vector<12x81xf32> to vector<12x1xf32>
    %690 = vector.broadcast %689 : vector<12x1xf32> to vector<12x256xf32>
    %691 = arith.mulf %688, %690 : vector<12x256xf32>
    %692 = arith.addf %684, %691 : vector<12x256xf32>
    %c221_i32 = arith.constant 221 : i32
    %693 = tpu.dynamic_rotate %23 by %c221_i32 dim 1 : vector<12x256xf32>, i32 -> vector<12x256xf32>
    %c79 = arith.constant 79 : index
    %c0_118 = arith.constant 0 : index
    %694 = vector.load %arg1[%c79, %c0_118] : memref<81x256xf32, #tpu.memory_space<vmem>>, vector<1x256xf32>
    %695 = vector.broadcast %694 : vector<1x256xf32> to vector<12x256xf32>
    %696 = arith.mulf %693, %695 : vector<12x256xf32>
    %697 = vector.extract_strided_slice %25 {offsets = [0, 79], sizes = [12, 1], strides = [1, 1]} : vector<12x81xf32> to vector<12x1xf32>
    %698 = vector.broadcast %697 : vector<12x1xf32> to vector<12x256xf32>
    %699 = arith.mulf %696, %698 : vector<12x256xf32>
    %700 = arith.addf %692, %699 : vector<12x256xf32>
    %c220_i32 = arith.constant 220 : i32
    %701 = tpu.dynamic_rotate %23 by %c220_i32 dim 1 : vector<12x256xf32>, i32 -> vector<12x256xf32>
    %c80 = arith.constant 80 : index
    %c0_119 = arith.constant 0 : index
    %702 = vector.load %arg1[%c80, %c0_119] : memref<81x256xf32, #tpu.memory_space<vmem>>, vector<1x256xf32>
    %703 = vector.broadcast %702 : vector<1x256xf32> to vector<12x256xf32>
    %704 = arith.mulf %701, %703 : vector<12x256xf32>
    %705 = vector.extract_strided_slice %25 {offsets = [0, 80], sizes = [12, 1], strides = [1, 1]} : vector<12x81xf32> to vector<12x1xf32>
    %706 = vector.broadcast %705 : vector<12x1xf32> to vector<12x256xf32>
    %707 = arith.mulf %704, %706 : vector<12x256xf32>
    %708 = arith.addf %700, %707 : vector<12x256xf32>
    %c0_120 = arith.constant 0 : index
    %c0_121 = arith.constant 0 : index
    %709 = vector.load %arg7[%c0_120, %c0_121] : memref<12x1xf32, #tpu.memory_space<vmem>>, vector<12x1xf32>
    %710 = vector.broadcast %709 : vector<12x1xf32> to vector<12x256xf32>
    %711 = arith.addf %708, %710 : vector<12x256xf32>
    %712 = arith.mulf %711, %711 : vector<12x256xf32>
    %713 = arith.mulf %711, %712 : vector<12x256xf32>
    %cst_122 = arith.constant 4.471500e-02 : f32
    %714 = vector.broadcast %cst_122 : f32 to vector<12x256xf32>
    %715 = arith.mulf %714, %713 : vector<12x256xf32>
    %716 = arith.addf %711, %715 : vector<12x256xf32>
    %cst_123 = arith.constant 0.797884583 : f32
    %717 = vector.broadcast %cst_123 : f32 to vector<12x256xf32>
    %718 = arith.mulf %717, %716 : vector<12x256xf32>
    %719 = math.tanh %718 : vector<12x256xf32>
    %cst_124 = arith.constant 1.000000e+00 : f32
    %720 = vector.broadcast %cst_124 : f32 to vector<12x256xf32>
    %721 = arith.addf %720, %719 : vector<12x256xf32>
    %cst_125 = arith.constant 5.000000e-01 : f32
    %722 = vector.broadcast %cst_125 : f32 to vector<12x256xf32>
    %723 = arith.mulf %722, %721 : vector<12x256xf32>
    %724 = arith.mulf %711, %723 : vector<12x256xf32>
    %c0_126 = arith.constant 0 : index
    %c0_127 = arith.constant 0 : index
    %725 = vector.load %arg11[%c0_126, %c0_127] : memref<12x256xf32, #tpu.memory_space<vmem>>, vector<12x256xf32>
    tpu.vector_store %arg11[%c0_126, %c0_127], %724 {strides = array<i32>} : memref<12x256xf32, #tpu.memory_space<vmem>>, vector<12x256xf32>,
    %c0_128 = arith.constant 0 : index
    %c0_129 = arith.constant 0 : index
    %726 = vector.load %arg8[%c0_128, %c0_129] : memref<12x12xbf16, #tpu.memory_space<vmem>>, vector<12x12xbf16>
    %727 = arith.truncf %468 : vector<12x256xf32> to vector<12x256xbf16>
    %cst_130 = arith.constant dense<0.000000e+00> : vector<12x256xf32>
    %728 = tpu.matmul %726, %727, %cst_130 {dimension_numbers = #tpu.dot_dimension_numbers<[1], [0], [0], [1], [0, 0, 1, 1], [], []>} : vector<12x12xbf16>, vector<12x256xbf16>, vector<12x256xf32> -> vector<12x256xf32>
    %c0_131 = arith.constant 0 : index
    %c0_132 = arith.constant 0 : index
    %729 = vector.load %arg9[%c0_131, %c0_132] : memref<12x1xf32, #tpu.memory_space<vmem>>, vector<12x1xf32>
    %730 = vector.broadcast %729 : vector<12x1xf32> to vector<12x256xf32>
    %731 = arith.addf %728, %730 : vector<12x256xf32>
    %732 = arith.mulf %731, %731 : vector<12x256xf32>
    %733 = arith.mulf %731, %732 : vector<12x256xf32>
    %cst_133 = arith.constant 4.471500e-02 : f32
    %734 = vector.broadcast %cst_133 : f32 to vector<12x256xf32>
    %735 = arith.mulf %734, %733 : vector<12x256xf32>
    %736 = arith.addf %731, %735 : vector<12x256xf32>
    %cst_134 = arith.constant 0.797884583 : f32
    %737 = vector.broadcast %cst_134 : f32 to vector<12x256xf32>
    %738 = arith.mulf %737, %736 : vector<12x256xf32>
    %739 = math.tanh %738 : vector<12x256xf32>
    %cst_135 = arith.constant 1.000000e+00 : f32
    %740 = vector.broadcast %cst_135 : f32 to vector<12x256xf32>
    %741 = arith.addf %740, %739 : vector<12x256xf32>
    %cst_136 = arith.constant 5.000000e-01 : f32
    %742 = vector.broadcast %cst_136 : f32 to vector<12x256xf32>
    %743 = arith.mulf %742, %741 : vector<12x256xf32>
    %744 = arith.mulf %731, %743 : vector<12x256xf32>
    %c0_137 = arith.constant 0 : index
    %c0_138 = arith.constant 0 : index
    %745 = vector.load %arg12[%c0_137, %c0_138] : memref<12x256xf32, #tpu.memory_space<vmem>>, vector<12x256xf32>
    tpu.vector_store %arg12[%c0_137, %c0_138], %744 {strides = array<i32>} : memref<12x256xf32, #tpu.memory_space<vmem>>, vector<12x256xf32>,
    %c0_139 = arith.constant 0 : index
    %c0_140 = arith.constant 0 : index
    %746 = vector.load %arg10[%c0_139, %c0_140] : memref<12x4xbf16, #tpu.memory_space<vmem>>, vector<12x4xbf16>
    %747 = arith.truncf %24 : vector<4x256xf32> to vector<4x256xbf16>
    %cst_141 = arith.constant dense<0.000000e+00> : vector<12x256xf32>
    %748 = tpu.matmul %746, %747, %cst_141 {dimension_numbers = #tpu.dot_dimension_numbers<[1], [0], [0], [1], [0, 0, 1, 1], [], []>} : vector<12x4xbf16>, vector<4x256xbf16>, vector<12x256xf32> -> vector<12x256xf32>
    %749 = vector.extract_strided_slice %748 {offsets = [0, 0], sizes = [4, 256], strides = [1, 1]} : vector<12x256xf32> to vector<4x256xf32>
    %750 = vector.extract_strided_slice %748 {offsets = [4, 0], sizes = [4, 256], strides = [1, 1]} : vector<12x256xf32> to vector<4x256xf32>
    %751 = vector.extract_strided_slice %748 {offsets = [8, 0], sizes = [4, 256], strides = [1, 1]} : vector<12x256xf32> to vector<4x256xf32>
    %c0_142 = arith.constant 0 : index
    %c0_143 = arith.constant 0 : index
    %752 = vector.load %arg3[%c0_142, %c0_143] : memref<64x64xf32, #tpu.memory_space<vmem>>, vector<64x64xf32>
    %753 = vector.extract_strided_slice %749 {offsets = [0, 0], sizes = [4, 64], strides = [1, 1]} : vector<4x256xf32> to vector<4x64xf32>
    %754 = vector.extract_strided_slice %749 {offsets = [0, 128], sizes = [4, 64], strides = [1, 1]} : vector<4x256xf32> to vector<4x64xf32>
    %755 = arith.subf %753, %754 : vector<4x64xf32>
    %756 = math.absf %755 : vector<4x64xf32>
    %cst_144 = arith.constant dense<0.000000e+00> : vector<4x64xf32>
    %757 = tpu.matmul %756, %752, %cst_144 {dimension_numbers = #tpu.dot_dimension_numbers<[1], [0], [0], [1], [0, 0, 1, 1], [], []>} : vector<4x64xf32>, vector<64x64xf32>, vector<4x64xf32> -> vector<4x64xf32>
    %758 = vector.extract_strided_slice %749 {offsets = [0, 0], sizes = [4, 64], strides = [1, 1]} : vector<4x256xf32> to vector<4x64xf32>
    %759 = vector.extract_strided_slice %750 {offsets = [0, 0], sizes = [4, 64], strides = [1, 1]} : vector<4x256xf32> to vector<4x64xf32>
    %760 = vector.extract_strided_slice %751 {offsets = [0, 0], sizes = [4, 64], strides = [1, 1]} : vector<4x256xf32> to vector<4x64xf32>
    %cst_145 = arith.constant 5.000000e-01 : f32
    %761 = vector.broadcast %cst_145 : f32 to vector<4x64xf32>
    %762 = arith.mulf %757, %761 : vector<4x64xf32>
    %763 = arith.truncf %762 : vector<4x64xf32> to vector<4x64xbf16>
    %764 = arith.truncf %759 : vector<4x64xf32> to vector<4x64xbf16>
    %cst_146 = arith.constant dense<0.000000e+00> : vector<64x64xf32>
    %765 = tpu.matmul %763, %764, %cst_146 {dimension_numbers = #tpu.dot_dimension_numbers<[0], [0], [1], [1], [0, 1, 1, 1], [], []>} : vector<4x64xbf16>, vector<4x64xbf16>, vector<64x64xf32> -> vector<64x64xf32>
    %cst_147 = arith.constant dense<0xFF800000> : vector<64xf32>
    %766 = vector.multi_reduction <maximumf>, %765, %cst_147 [1] : vector<64x64xf32> to vector<64xf32>
    %767 = vector.shape_cast %766 : vector<64xf32> to vector<64x1xf32>
    %768 = vector.broadcast %767 : vector<64x1xf32> to vector<64x64xf32>
    %769 = arith.subf %765, %768 : vector<64x64xf32>
    %770 = math.exp %769 : vector<64x64xf32>
    %cst_148 = arith.constant dense<0.000000e+00> : vector<64xf32>
    %771 = vector.multi_reduction <add>, %770, %cst_148 [1] : vector<64x64xf32> to vector<64xf32>
    %772 = vector.shape_cast %771 : vector<64xf32> to vector<64x1xf32>
    %773 = vector.broadcast %772 : vector<64x1xf32> to vector<64x64xf32>
    %774 = arith.divf %770, %773 : vector<64x64xf32>
    %775 = arith.truncf %774 : vector<64x64xf32> to vector<64x64xbf16>
    %776 = arith.truncf %760 : vector<4x64xf32> to vector<4x64xbf16>
    %cst_149 = arith.constant dense<0.000000e+00> : vector<64x4xf32>
    %777 = tpu.matmul %775, %776, %cst_149 {dimension_numbers = #tpu.dot_dimension_numbers<[1], [1], [0], [0], [0, 0, 1, 0], [], []>} : vector<64x64xbf16>, vector<4x64xbf16>, vector<64x4xf32> -> vector<64x4xf32>
    %cst_150 = arith.constant 5.000000e-01 : f32
    %778 = vector.broadcast %cst_150 : f32 to vector<4x64xf32>
    %779 = arith.mulf %758, %778 : vector<4x64xf32>
    %780 = arith.truncf %779 : vector<4x64xf32> to vector<4x64xbf16>
    %781 = arith.truncf %757 : vector<4x64xf32> to vector<4x64xbf16>
    %cst_151 = arith.constant dense<0.000000e+00> : vector<64x64xf32>
    %782 = tpu.matmul %780, %781, %cst_151 {dimension_numbers = #tpu.dot_dimension_numbers<[0], [0], [1], [1], [0, 1, 1, 1], [], []>} : vector<4x64xbf16>, vector<4x64xbf16>, vector<64x64xf32> -> vector<64x64xf32>
    %cst_152 = arith.constant dense<0xFF800000> : vector<64xf32>
    %783 = vector.multi_reduction <maximumf>, %782, %cst_152 [1] : vector<64x64xf32> to vector<64xf32>
    %784 = vector.shape_cast %783 : vector<64xf32> to vector<64x1xf32>
    %785 = vector.broadcast %784 : vector<64x1xf32> to vector<64x64xf32>
    %786 = arith.subf %782, %785 : vector<64x64xf32>
    %787 = math.exp %786 : vector<64x64xf32>
    %cst_153 = arith.constant dense<0.000000e+00> : vector<64xf32>
    %788 = vector.multi_reduction <add>, %787, %cst_153 [1] : vector<64x64xf32> to vector<64xf32>
    %789 = vector.shape_cast %788 : vector<64xf32> to vector<64x1xf32>
    %790 = vector.broadcast %789 : vector<64x1xf32> to vector<64x64xf32>
    %791 = arith.divf %787, %790 : vector<64x64xf32>
    %792 = arith.truncf %777 : vector<64x4xf32> to vector<64x4xbf16>
    %793 = arith.truncf %791 : vector<64x64xf32> to vector<64x64xbf16>
    %cst_154 = arith.constant dense<0.000000e+00> : vector<4x64xf32>
    %794 = tpu.matmul %792, %793, %cst_154 {dimension_numbers = #tpu.dot_dimension_numbers<[0], [1], [1], [0], [0, 1, 1, 0], [], []>} : vector<64x4xbf16>, vector<64x64xbf16>, vector<4x64xf32> -> vector<4x64xf32>
    %c0_155 = arith.constant 0 : index
    %c0_156 = arith.constant 0 : index
    %795 = vector.load %arg13[%c0_155, %c0_156] : memref<4x256xf32, #tpu.memory_space<vmem>>, vector<4x64xf32>
    tpu.vector_store %arg13[%c0_155, %c0_156], %794 {strides = array<i32>} : memref<4x256xf32, #tpu.memory_space<vmem>>, vector<4x64xf32>,
    %796 = vector.extract_strided_slice %749 {offsets = [0, 128], sizes = [4, 64], strides = [1, 1]} : vector<4x256xf32> to vector<4x64xf32>
    %797 = vector.extract_strided_slice %750 {offsets = [0, 128], sizes = [4, 64], strides = [1, 1]} : vector<4x256xf32> to vector<4x64xf32>
    %798 = vector.extract_strided_slice %751 {offsets = [0, 128], sizes = [4, 64], strides = [1, 1]} : vector<4x256xf32> to vector<4x64xf32>
    %cst_157 = arith.constant 5.000000e-01 : f32
    %799 = vector.broadcast %cst_157 : f32 to vector<4x64xf32>
    %800 = arith.mulf %757, %799 : vector<4x64xf32>
    %801 = arith.truncf %800 : vector<4x64xf32> to vector<4x64xbf16>
    %802 = arith.truncf %797 : vector<4x64xf32> to vector<4x64xbf16>
    %cst_158 = arith.constant dense<0.000000e+00> : vector<64x64xf32>
    %803 = tpu.matmul %801, %802, %cst_158 {dimension_numbers = #tpu.dot_dimension_numbers<[0], [0], [1], [1], [0, 1, 1, 1], [], []>} : vector<4x64xbf16>, vector<4x64xbf16>, vector<64x64xf32> -> vector<64x64xf32>
    %cst_159 = arith.constant dense<0xFF800000> : vector<64xf32>
    %804 = vector.multi_reduction <maximumf>, %803, %cst_159 [1] : vector<64x64xf32> to vector<64xf32>
    %805 = vector.shape_cast %804 : vector<64xf32> to vector<64x1xf32>
    %806 = vector.broadcast %805 : vector<64x1xf32> to vector<64x64xf32>
    %807 = arith.subf %803, %806 : vector<64x64xf32>
    %808 = math.exp %807 : vector<64x64xf32>
    %cst_160 = arith.constant dense<0.000000e+00> : vector<64xf32>
    %809 = vector.multi_reduction <add>, %808, %cst_160 [1] : vector<64x64xf32> to vector<64xf32>
    %810 = vector.shape_cast %809 : vector<64xf32> to vector<64x1xf32>
    %811 = vector.broadcast %810 : vector<64x1xf32> to vector<64x64xf32>
    %812 = arith.divf %808, %811 : vector<64x64xf32>
    %813 = arith.truncf %812 : vector<64x64xf32> to vector<64x64xbf16>
    %814 = arith.truncf %798 : vector<4x64xf32> to vector<4x64xbf16>
    %cst_161 = arith.constant dense<0.000000e+00> : vector<64x4xf32>
    %815 = tpu.matmul %813, %814, %cst_161 {dimension_numbers = #tpu.dot_dimension_numbers<[1], [1], [0], [0], [0, 0, 1, 0], [], []>} : vector<64x64xbf16>, vector<4x64xbf16>, vector<64x4xf32> -> vector<64x4xf32>
    %cst_162 = arith.constant 5.000000e-01 : f32
    %816 = vector.broadcast %cst_162 : f32 to vector<4x64xf32>
    %817 = arith.mulf %796, %816 : vector<4x64xf32>
    %818 = arith.truncf %817 : vector<4x64xf32> to vector<4x64xbf16>
    %819 = arith.truncf %757 : vector<4x64xf32> to vector<4x64xbf16>
    %cst_163 = arith.constant dense<0.000000e+00> : vector<64x64xf32>
    %820 = tpu.matmul %818, %819, %cst_163 {dimension_numbers = #tpu.dot_dimension_numbers<[0], [0], [1], [1], [0, 1, 1, 1], [], []>} : vector<4x64xbf16>, vector<4x64xbf16>, vector<64x64xf32> -> vector<64x64xf32>
    %cst_164 = arith.constant dense<0xFF800000> : vector<64xf32>
    %821 = vector.multi_reduction <maximumf>, %820, %cst_164 [1] : vector<64x64xf32> to vector<64xf32>
    %822 = vector.shape_cast %821 : vector<64xf32> to vector<64x1xf32>
    %823 = vector.broadcast %822 : vector<64x1xf32> to vector<64x64xf32>
    %824 = arith.subf %820, %823 : vector<64x64xf32>
    %825 = math.exp %824 : vector<64x64xf32>
    %cst_165 = arith.constant dense<0.000000e+00> : vector<64xf32>
    %826 = vector.multi_reduction <add>, %825, %cst_165 [1] : vector<64x64xf32> to vector<64xf32>
    %827 = vector.shape_cast %826 : vector<64xf32> to vector<64x1xf32>
    %828 = vector.broadcast %827 : vector<64x1xf32> to vector<64x64xf32>
    %829 = arith.divf %825, %828 : vector<64x64xf32>
    %830 = arith.truncf %815 : vector<64x4xf32> to vector<64x4xbf16>
    %831 = arith.truncf %829 : vector<64x64xf32> to vector<64x64xbf16>
    %cst_166 = arith.constant dense<0.000000e+00> : vector<4x64xf32>
    %832 = tpu.matmul %830, %831, %cst_166 {dimension_numbers = #tpu.dot_dimension_numbers<[0], [1], [1], [0], [0, 1, 1, 0], [], []>} : vector<64x4xbf16>, vector<64x64xbf16>, vector<4x64xf32> -> vector<4x64xf32>
    %c0_167 = arith.constant 0 : index
    %c128 = arith.constant 128 : index
    %833 = vector.load %arg13[%c0_167, %c128] : memref<4x256xf32, #tpu.memory_space<vmem>>, vector<4x64xf32>
    tpu.vector_store %arg13[%c0_167, %c128], %832 {strides = array<i32>} : memref<4x256xf32, #tpu.memory_space<vmem>>, vector<4x64xf32>,
    %834 = vector.extract_strided_slice %749 {offsets = [0, 64], sizes = [4, 64], strides = [1, 1]} : vector<4x256xf32> to vector<4x64xf32>
    %835 = vector.extract_strided_slice %749 {offsets = [0, 192], sizes = [4, 64], strides = [1, 1]} : vector<4x256xf32> to vector<4x64xf32>
    %836 = arith.subf %834, %835 : vector<4x64xf32>
    %837 = math.absf %836 : vector<4x64xf32>
    %cst_168 = arith.constant dense<0.000000e+00> : vector<4x64xf32>
    %838 = tpu.matmul %837, %752, %cst_168 {dimension_numbers = #tpu.dot_dimension_numbers<[1], [0], [0], [1], [0, 0, 1, 1], [], []>} : vector<4x64xf32>, vector<64x64xf32>, vector<4x64xf32> -> vector<4x64xf32>
    %839 = vector.extract_strided_slice %749 {offsets = [0, 64], sizes = [4, 64], strides = [1, 1]} : vector<4x256xf32> to vector<4x64xf32>
    %840 = vector.extract_strided_slice %750 {offsets = [0, 64], sizes = [4, 64], strides = [1, 1]} : vector<4x256xf32> to vector<4x64xf32>
    %841 = vector.extract_strided_slice %751 {offsets = [0, 64], sizes = [4, 64], strides = [1, 1]} : vector<4x256xf32> to vector<4x64xf32>
    %cst_169 = arith.constant 5.000000e-01 : f32
    %842 = vector.broadcast %cst_169 : f32 to vector<4x64xf32>
    %843 = arith.mulf %838, %842 : vector<4x64xf32>
    %844 = arith.truncf %843 : vector<4x64xf32> to vector<4x64xbf16>
    %845 = arith.truncf %840 : vector<4x64xf32> to vector<4x64xbf16>
    %cst_170 = arith.constant dense<0.000000e+00> : vector<64x64xf32>
    %846 = tpu.matmul %844, %845, %cst_170 {dimension_numbers = #tpu.dot_dimension_numbers<[0], [0], [1], [1], [0, 1, 1, 1], [], []>} : vector<4x64xbf16>, vector<4x64xbf16>, vector<64x64xf32> -> vector<64x64xf32>
    %cst_171 = arith.constant dense<0xFF800000> : vector<64xf32>
    %847 = vector.multi_reduction <maximumf>, %846, %cst_171 [1] : vector<64x64xf32> to vector<64xf32>
    %848 = vector.shape_cast %847 : vector<64xf32> to vector<64x1xf32>
    %849 = vector.broadcast %848 : vector<64x1xf32> to vector<64x64xf32>
    %850 = arith.subf %846, %849 : vector<64x64xf32>
    %851 = math.exp %850 : vector<64x64xf32>
    %cst_172 = arith.constant dense<0.000000e+00> : vector<64xf32>
    %852 = vector.multi_reduction <add>, %851, %cst_172 [1] : vector<64x64xf32> to vector<64xf32>
    %853 = vector.shape_cast %852 : vector<64xf32> to vector<64x1xf32>
    %854 = vector.broadcast %853 : vector<64x1xf32> to vector<64x64xf32>
    %855 = arith.divf %851, %854 : vector<64x64xf32>
    %856 = arith.truncf %855 : vector<64x64xf32> to vector<64x64xbf16>
    %857 = arith.truncf %841 : vector<4x64xf32> to vector<4x64xbf16>
    %cst_173 = arith.constant dense<0.000000e+00> : vector<64x4xf32>
    %858 = tpu.matmul %856, %857, %cst_173 {dimension_numbers = #tpu.dot_dimension_numbers<[1], [1], [0], [0], [0, 0, 1, 0], [], []>} : vector<64x64xbf16>, vector<4x64xbf16>, vector<64x4xf32> -> vector<64x4xf32>
    %cst_174 = arith.constant 5.000000e-01 : f32
    %859 = vector.broadcast %cst_174 : f32 to vector<4x64xf32>
    %860 = arith.mulf %839, %859 : vector<4x64xf32>
    %861 = arith.truncf %860 : vector<4x64xf32> to vector<4x64xbf16>
    %862 = arith.truncf %838 : vector<4x64xf32> to vector<4x64xbf16>
    %cst_175 = arith.constant dense<0.000000e+00> : vector<64x64xf32>
    %863 = tpu.matmul %861, %862, %cst_175 {dimension_numbers = #tpu.dot_dimension_numbers<[0], [0], [1], [1], [0, 1, 1, 1], [], []>} : vector<4x64xbf16>, vector<4x64xbf16>, vector<64x64xf32> -> vector<64x64xf32>
    %cst_176 = arith.constant dense<0xFF800000> : vector<64xf32>
    %864 = vector.multi_reduction <maximumf>, %863, %cst_176 [1] : vector<64x64xf32> to vector<64xf32>
    %865 = vector.shape_cast %864 : vector<64xf32> to vector<64x1xf32>
    %866 = vector.broadcast %865 : vector<64x1xf32> to vector<64x64xf32>
    %867 = arith.subf %863, %866 : vector<64x64xf32>
    %868 = math.exp %867 : vector<64x64xf32>
    %cst_177 = arith.constant dense<0.000000e+00> : vector<64xf32>
    %869 = vector.multi_reduction <add>, %868, %cst_177 [1] : vector<64x64xf32> to vector<64xf32>
    %870 = vector.shape_cast %869 : vector<64xf32> to vector<64x1xf32>
    %871 = vector.broadcast %870 : vector<64x1xf32> to vector<64x64xf32>
    %872 = arith.divf %868, %871 : vector<64x64xf32>
    %873 = arith.truncf %858 : vector<64x4xf32> to vector<64x4xbf16>
    %874 = arith.truncf %872 : vector<64x64xf32> to vector<64x64xbf16>
    %cst_178 = arith.constant dense<0.000000e+00> : vector<4x64xf32>
    %875 = tpu.matmul %873, %874, %cst_178 {dimension_numbers = #tpu.dot_dimension_numbers<[0], [1], [1], [0], [0, 1, 1, 0], [], []>} : vector<64x4xbf16>, vector<64x64xbf16>, vector<4x64xf32> -> vector<4x64xf32>
    %c0_179 = arith.constant 0 : index
    %c64_180 = arith.constant 64 : index
    %876 = vector.load %arg13[%c0_179, %c64_180] : memref<4x256xf32, #tpu.memory_space<vmem>>, vector<4x64xf32>
    tpu.vector_store %arg13[%c0_179, %c64_180], %875 {strides = array<i32>} : memref<4x256xf32, #tpu.memory_space<vmem>>, vector<4x64xf32>,
    %877 = vector.extract_strided_slice %749 {offsets = [0, 192], sizes = [4, 64], strides = [1, 1]} : vector<4x256xf32> to vector<4x64xf32>
    %878 = vector.extract_strided_slice %750 {offsets = [0, 192], sizes = [4, 64], strides = [1, 1]} : vector<4x256xf32> to vector<4x64xf32>
    %879 = vector.extract_strided_slice %751 {offsets = [0, 192], sizes = [4, 64], strides = [1, 1]} : vector<4x256xf32> to vector<4x64xf32>
    %cst_181 = arith.constant 5.000000e-01 : f32
    %880 = vector.broadcast %cst_181 : f32 to vector<4x64xf32>
    %881 = arith.mulf %838, %880 : vector<4x64xf32>
    %882 = arith.truncf %881 : vector<4x64xf32> to vector<4x64xbf16>
    %883 = arith.truncf %878 : vector<4x64xf32> to vector<4x64xbf16>
    %cst_182 = arith.constant dense<0.000000e+00> : vector<64x64xf32>
    %884 = tpu.matmul %882, %883, %cst_182 {dimension_numbers = #tpu.dot_dimension_numbers<[0], [0], [1], [1], [0, 1, 1, 1], [], []>} : vector<4x64xbf16>, vector<4x64xbf16>, vector<64x64xf32> -> vector<64x64xf32>
    %cst_183 = arith.constant dense<0xFF800000> : vector<64xf32>
    %885 = vector.multi_reduction <maximumf>, %884, %cst_183 [1] : vector<64x64xf32> to vector<64xf32>
    %886 = vector.shape_cast %885 : vector<64xf32> to vector<64x1xf32>
    %887 = vector.broadcast %886 : vector<64x1xf32> to vector<64x64xf32>
    %888 = arith.subf %884, %887 : vector<64x64xf32>
    %889 = math.exp %888 : vector<64x64xf32>
    %cst_184 = arith.constant dense<0.000000e+00> : vector<64xf32>
    %890 = vector.multi_reduction <add>, %889, %cst_184 [1] : vector<64x64xf32> to vector<64xf32>
    %891 = vector.shape_cast %890 : vector<64xf32> to vector<64x1xf32>
    %892 = vector.broadcast %891 : vector<64x1xf32> to vector<64x64xf32>
    %893 = arith.divf %889, %892 : vector<64x64xf32>
    %894 = arith.truncf %893 : vector<64x64xf32> to vector<64x64xbf16>
    %895 = arith.truncf %879 : vector<4x64xf32> to vector<4x64xbf16>
    %cst_185 = arith.constant dense<0.000000e+00> : vector<64x4xf32>
    %896 = tpu.matmul %894, %895, %cst_185 {dimension_numbers = #tpu.dot_dimension_numbers<[1], [1], [0], [0], [0, 0, 1, 0], [], []>} : vector<64x64xbf16>, vector<4x64xbf16>, vector<64x4xf32> -> vector<64x4xf32>
    %cst_186 = arith.constant 5.000000e-01 : f32
    %897 = vector.broadcast %cst_186 : f32 to vector<4x64xf32>
    %898 = arith.mulf %877, %897 : vector<4x64xf32>
    %899 = arith.truncf %898 : vector<4x64xf32> to vector<4x64xbf16>
    %900 = arith.truncf %838 : vector<4x64xf32> to vector<4x64xbf16>
    %cst_187 = arith.constant dense<0.000000e+00> : vector<64x64xf32>
    %901 = tpu.matmul %899, %900, %cst_187 {dimension_numbers = #tpu.dot_dimension_numbers<[0], [0], [1], [1], [0, 1, 1, 1], [], []>} : vector<4x64xbf16>, vector<4x64xbf16>, vector<64x64xf32> -> vector<64x64xf32>
    %cst_188 = arith.constant dense<0xFF800000> : vector<64xf32>
    %902 = vector.multi_reduction <maximumf>, %901, %cst_188 [1] : vector<64x64xf32> to vector<64xf32>
    %903 = vector.shape_cast %902 : vector<64xf32> to vector<64x1xf32>
    %904 = vector.broadcast %903 : vector<64x1xf32> to vector<64x64xf32>
    %905 = arith.subf %901, %904 : vector<64x64xf32>
    %906 = math.exp %905 : vector<64x64xf32>
    %cst_189 = arith.constant dense<0.000000e+00> : vector<64xf32>
    %907 = vector.multi_reduction <add>, %906, %cst_189 [1] : vector<64x64xf32> to vector<64xf32>
    %908 = vector.shape_cast %907 : vector<64xf32> to vector<64x1xf32>
    %909 = vector.broadcast %908 : vector<64x1xf32> to vector<64x64xf32>
    %910 = arith.divf %906, %909 : vector<64x64xf32>
    %911 = arith.truncf %896 : vector<64x4xf32> to vector<64x4xbf16>
    %912 = arith.truncf %910 : vector<64x64xf32> to vector<64x64xbf16>
    %cst_190 = arith.constant dense<0.000000e+00> : vector<4x64xf32>
    %913 = tpu.matmul %911, %912, %cst_190 {dimension_numbers = #tpu.dot_dimension_numbers<[0], [1], [1], [0], [0, 1, 1, 0], [], []>} : vector<64x4xbf16>, vector<64x64xbf16>, vector<4x64xf32> -> vector<4x64xf32>
    %c0_191 = arith.constant 0 : index
    %c192 = arith.constant 192 : index
    %914 = vector.load %arg13[%c0_191, %c192] : memref<4x256xf32, #tpu.memory_space<vmem>>, vector<4x64xf32>
    tpu.vector_store %arg13[%c0_191, %c192], %913 {strides = array<i32>} : memref<4x256xf32, #tpu.memory_space<vmem>>, vector<4x64xf32>,
    return
  }
}

module attributes {stable_mosaic.version = 11 : i64} {
  func.func @_cbf_tail_kernel(%arg0: memref<16x256xf32, #tpu.memory_space<vmem>>, %arg1: memref<28x256xf32, #tpu.memory_space<vmem>>, %arg2: memref<9x256xf32, #tpu.memory_space<vmem>>, %arg3: memref<28x9xf32, #tpu.memory_space<vmem>>, %arg4: memref<16x28xbf16, #tpu.memory_space<vmem>>, %arg5: memref<16x1xf32, #tpu.memory_space<vmem>>, %arg6: memref<16x1xf32, #tpu.memory_space<vmem>>, %arg7: memref<16x1xf32, #tpu.memory_space<vmem>>, %arg8: memref<64x16xbf16, #tpu.memory_space<vmem>>, %arg9: memref<64x1xf32, #tpu.memory_space<vmem>>, %arg10: memref<64x9xf32, #tpu.memory_space<vmem>>, %arg11: memref<64x1xf32, #tpu.memory_space<vmem>>, %arg12: memref<16x64xbf16, #tpu.memory_space<vmem>>, %arg13: memref<16x256xf32, #tpu.memory_space<vmem>>) attributes {dimension_semantics = [], scalar_prefetch = 0 : i64, scratch_operands = 0 : i64, tpu.core_type = #tpu.core_type<tc>} {
    %c0 = arith.constant 0 : index
    %c0_0 = arith.constant 0 : index
    %0 = vector.load %arg0[%c0, %c0_0] : memref<16x256xf32, #tpu.memory_space<vmem>>, vector<16x256xf32>
    %c0_1 = arith.constant 0 : index
    %c0_2 = arith.constant 0 : index
    %1 = vector.load %arg1[%c0_1, %c0_2] : memref<28x256xf32, #tpu.memory_space<vmem>>, vector<28x256xf32>
    %c0_3 = arith.constant 0 : index
    %c0_4 = arith.constant 0 : index
    %2 = vector.load %arg3[%c0_3, %c0_4] : memref<28x9xf32, #tpu.memory_space<vmem>>, vector<28x9xf32>
    %cst = arith.constant 0.000000e+00 : f32
    %3 = vector.broadcast %cst : f32 to vector<28x256xf32>
    %c9_i32 = arith.constant 9 : i32
    %4 = tpu.dynamic_rotate %1 by %c9_i32 dim 1 : vector<28x256xf32>, i32 -> vector<28x256xf32>
    %c0_5 = arith.constant 0 : index
    %c0_6 = arith.constant 0 : index
    %5 = vector.load %arg2[%c0_5, %c0_6] : memref<9x256xf32, #tpu.memory_space<vmem>>, vector<1x256xf32>
    %6 = vector.broadcast %5 : vector<1x256xf32> to vector<28x256xf32>
    %7 = arith.mulf %4, %6 : vector<28x256xf32>
    %8 = vector.extract_strided_slice %2 {offsets = [0, 0], sizes = [28, 1], strides = [1, 1]} : vector<28x9xf32> to vector<28x1xf32>
    %9 = vector.broadcast %8 : vector<28x1xf32> to vector<28x256xf32>
    %10 = arith.mulf %7, %9 : vector<28x256xf32>
    %11 = arith.addf %3, %10 : vector<28x256xf32>
    %c8_i32 = arith.constant 8 : i32
    %12 = tpu.dynamic_rotate %1 by %c8_i32 dim 1 : vector<28x256xf32>, i32 -> vector<28x256xf32>
    %c1 = arith.constant 1 : index
    %c0_7 = arith.constant 0 : index
    %13 = vector.load %arg2[%c1, %c0_7] : memref<9x256xf32, #tpu.memory_space<vmem>>, vector<1x256xf32>
    %14 = vector.broadcast %13 : vector<1x256xf32> to vector<28x256xf32>
    %15 = arith.mulf %12, %14 : vector<28x256xf32>
    %16 = vector.extract_strided_slice %2 {offsets = [0, 1], sizes = [28, 1], strides = [1, 1]} : vector<28x9xf32> to vector<28x1xf32>
    %17 = vector.broadcast %16 : vector<28x1xf32> to vector<28x256xf32>
    %18 = arith.mulf %15, %17 : vector<28x256xf32>
    %19 = arith.addf %11, %18 : vector<28x256xf32>
    %c7_i32 = arith.constant 7 : i32
    %20 = tpu.dynamic_rotate %1 by %c7_i32 dim 1 : vector<28x256xf32>, i32 -> vector<28x256xf32>
    %c2 = arith.constant 2 : index
    %c0_8 = arith.constant 0 : index
    %21 = vector.load %arg2[%c2, %c0_8] : memref<9x256xf32, #tpu.memory_space<vmem>>, vector<1x256xf32>
    %22 = vector.broadcast %21 : vector<1x256xf32> to vector<28x256xf32>
    %23 = arith.mulf %20, %22 : vector<28x256xf32>
    %24 = vector.extract_strided_slice %2 {offsets = [0, 2], sizes = [28, 1], strides = [1, 1]} : vector<28x9xf32> to vector<28x1xf32>
    %25 = vector.broadcast %24 : vector<28x1xf32> to vector<28x256xf32>
    %26 = arith.mulf %23, %25 : vector<28x256xf32>
    %27 = arith.addf %19, %26 : vector<28x256xf32>
    %c1_i32 = arith.constant 1 : i32
    %28 = tpu.dynamic_rotate %1 by %c1_i32 dim 1 : vector<28x256xf32>, i32 -> vector<28x256xf32>
    %c3 = arith.constant 3 : index
    %c0_9 = arith.constant 0 : index
    %29 = vector.load %arg2[%c3, %c0_9] : memref<9x256xf32, #tpu.memory_space<vmem>>, vector<1x256xf32>
    %30 = vector.broadcast %29 : vector<1x256xf32> to vector<28x256xf32>
    %31 = arith.mulf %28, %30 : vector<28x256xf32>
    %32 = vector.extract_strided_slice %2 {offsets = [0, 3], sizes = [28, 1], strides = [1, 1]} : vector<28x9xf32> to vector<28x1xf32>
    %33 = vector.broadcast %32 : vector<28x1xf32> to vector<28x256xf32>
    %34 = arith.mulf %31, %33 : vector<28x256xf32>
    %35 = arith.addf %27, %34 : vector<28x256xf32>
    %c4 = arith.constant 4 : index
    %c0_10 = arith.constant 0 : index
    %36 = vector.load %arg2[%c4, %c0_10] : memref<9x256xf32, #tpu.memory_space<vmem>>, vector<1x256xf32>
    %37 = vector.broadcast %36 : vector<1x256xf32> to vector<28x256xf32>
    %38 = arith.mulf %1, %37 : vector<28x256xf32>
    %39 = vector.extract_strided_slice %2 {offsets = [0, 4], sizes = [28, 1], strides = [1, 1]} : vector<28x9xf32> to vector<28x1xf32>
    %40 = vector.broadcast %39 : vector<28x1xf32> to vector<28x256xf32>
    %41 = arith.mulf %38, %40 : vector<28x256xf32>
    %42 = arith.addf %35, %41 : vector<28x256xf32>
    %c255_i32 = arith.constant 255 : i32
    %43 = tpu.dynamic_rotate %1 by %c255_i32 dim 1 : vector<28x256xf32>, i32 -> vector<28x256xf32>
    %c5 = arith.constant 5 : index
    %c0_11 = arith.constant 0 : index
    %44 = vector.load %arg2[%c5, %c0_11] : memref<9x256xf32, #tpu.memory_space<vmem>>, vector<1x256xf32>
    %45 = vector.broadcast %44 : vector<1x256xf32> to vector<28x256xf32>
    %46 = arith.mulf %43, %45 : vector<28x256xf32>
    %47 = vector.extract_strided_slice %2 {offsets = [0, 5], sizes = [28, 1], strides = [1, 1]} : vector<28x9xf32> to vector<28x1xf32>
    %48 = vector.broadcast %47 : vector<28x1xf32> to vector<28x256xf32>
    %49 = arith.mulf %46, %48 : vector<28x256xf32>
    %50 = arith.addf %42, %49 : vector<28x256xf32>
    %c249_i32 = arith.constant 249 : i32
    %51 = tpu.dynamic_rotate %1 by %c249_i32 dim 1 : vector<28x256xf32>, i32 -> vector<28x256xf32>
    %c6 = arith.constant 6 : index
    %c0_12 = arith.constant 0 : index
    %52 = vector.load %arg2[%c6, %c0_12] : memref<9x256xf32, #tpu.memory_space<vmem>>, vector<1x256xf32>
    %53 = vector.broadcast %52 : vector<1x256xf32> to vector<28x256xf32>
    %54 = arith.mulf %51, %53 : vector<28x256xf32>
    %55 = vector.extract_strided_slice %2 {offsets = [0, 6], sizes = [28, 1], strides = [1, 1]} : vector<28x9xf32> to vector<28x1xf32>
    %56 = vector.broadcast %55 : vector<28x1xf32> to vector<28x256xf32>
    %57 = arith.mulf %54, %56 : vector<28x256xf32>
    %58 = arith.addf %50, %57 : vector<28x256xf32>
    %c248_i32 = arith.constant 248 : i32
    %59 = tpu.dynamic_rotate %1 by %c248_i32 dim 1 : vector<28x256xf32>, i32 -> vector<28x256xf32>
    %c7 = arith.constant 7 : index
    %c0_13 = arith.constant 0 : index
    %60 = vector.load %arg2[%c7, %c0_13] : memref<9x256xf32, #tpu.memory_space<vmem>>, vector<1x256xf32>
    %61 = vector.broadcast %60 : vector<1x256xf32> to vector<28x256xf32>
    %62 = arith.mulf %59, %61 : vector<28x256xf32>
    %63 = vector.extract_strided_slice %2 {offsets = [0, 7], sizes = [28, 1], strides = [1, 1]} : vector<28x9xf32> to vector<28x1xf32>
    %64 = vector.broadcast %63 : vector<28x1xf32> to vector<28x256xf32>
    %65 = arith.mulf %62, %64 : vector<28x256xf32>
    %66 = arith.addf %58, %65 : vector<28x256xf32>
    %c247_i32 = arith.constant 247 : i32
    %67 = tpu.dynamic_rotate %1 by %c247_i32 dim 1 : vector<28x256xf32>, i32 -> vector<28x256xf32>
    %c8 = arith.constant 8 : index
    %c0_14 = arith.constant 0 : index
    %68 = vector.load %arg2[%c8, %c0_14] : memref<9x256xf32, #tpu.memory_space<vmem>>, vector<1x256xf32>
    %69 = vector.broadcast %68 : vector<1x256xf32> to vector<28x256xf32>
    %70 = arith.mulf %67, %69 : vector<28x256xf32>
    %71 = vector.extract_strided_slice %2 {offsets = [0, 8], sizes = [28, 1], strides = [1, 1]} : vector<28x9xf32> to vector<28x1xf32>
    %72 = vector.broadcast %71 : vector<28x1xf32> to vector<28x256xf32>
    %73 = arith.mulf %70, %72 : vector<28x256xf32>
    %74 = arith.addf %66, %73 : vector<28x256xf32>
    %c0_15 = arith.constant 0 : index
    %c0_16 = arith.constant 0 : index
    %75 = vector.load %arg4[%c0_15, %c0_16] : memref<16x28xbf16, #tpu.memory_space<vmem>>, vector<16x28xbf16>
    %76 = arith.truncf %74 : vector<28x256xf32> to vector<28x256xbf16>
    %cst_17 = arith.constant dense<0.000000e+00> : vector<16x256xf32>
    %77 = tpu.matmul %75, %76, %cst_17 {dimension_numbers = #tpu.dot_dimension_numbers<[1], [0], [0], [1], [0, 0, 1, 1], [], []>} : vector<16x28xbf16>, vector<28x256xbf16>, vector<16x256xf32> -> vector<16x256xf32>
    %c0_18 = arith.constant 0 : index
    %c0_19 = arith.constant 0 : index
    %78 = vector.load %arg5[%c0_18, %c0_19] : memref<16x1xf32, #tpu.memory_space<vmem>>, vector<16x1xf32>
    %79 = vector.broadcast %78 : vector<16x1xf32> to vector<16x256xf32>
    %80 = arith.addf %77, %79 : vector<16x256xf32>
    %81 = arith.addf %80, %0 : vector<16x256xf32>
    %c0_20 = arith.constant 0 : index
    %c0_21 = arith.constant 0 : index
    %82 = vector.load %arg6[%c0_20, %c0_21] : memref<16x1xf32, #tpu.memory_space<vmem>>, vector<16x1xf32>
    %c0_22 = arith.constant 0 : index
    %c0_23 = arith.constant 0 : index
    %83 = vector.load %arg7[%c0_22, %c0_23] : memref<16x1xf32, #tpu.memory_space<vmem>>, vector<16x1xf32>
    %cst_24 = arith.constant dense<0.000000e+00> : vector<256xf32>
    %84 = vector.multi_reduction <add>, %81, %cst_24 [0] : vector<16x256xf32> to vector<256xf32>
    %85 = vector.shape_cast %84 : vector<256xf32> to vector<1x256xf32>
    %cst_25 = arith.constant 1.600000e+01 : f32
    %86 = vector.broadcast %cst_25 : f32 to vector<1x256xf32>
    %87 = arith.divf %85, %86 : vector<1x256xf32>
    %88 = vector.broadcast %87 : vector<1x256xf32> to vector<16x256xf32>
    %89 = arith.subf %81, %88 : vector<16x256xf32>
    %90 = arith.mulf %89, %89 : vector<16x256xf32>
    %cst_26 = arith.constant dense<0.000000e+00> : vector<256xf32>
    %91 = vector.multi_reduction <add>, %90, %cst_26 [0] : vector<16x256xf32> to vector<256xf32>
    %92 = vector.shape_cast %91 : vector<256xf32> to vector<1x256xf32>
    %cst_27 = arith.constant 1.600000e+01 : f32
    %93 = vector.broadcast %cst_27 : f32 to vector<1x256xf32>
    %94 = arith.divf %92, %93 : vector<1x256xf32>
    %cst_28 = arith.constant 9.99999974E-6 : f32
    %95 = vector.broadcast %cst_28 : f32 to vector<1x256xf32>
    %96 = arith.addf %94, %95 : vector<1x256xf32>
    %97 = math.rsqrt %96 : vector<1x256xf32>
    %98 = vector.broadcast %97 : vector<1x256xf32> to vector<16x256xf32>
    %99 = arith.mulf %89, %98 : vector<16x256xf32>
    %100 = vector.broadcast %82 : vector<16x1xf32> to vector<16x256xf32>
    %101 = arith.mulf %99, %100 : vector<16x256xf32>
    %102 = vector.broadcast %83 : vector<16x1xf32> to vector<16x256xf32>
    %103 = arith.addf %101, %102 : vector<16x256xf32>
    %c0_29 = arith.constant 0 : index
    %c0_30 = arith.constant 0 : index
    %104 = vector.load %arg8[%c0_29, %c0_30] : memref<64x16xbf16, #tpu.memory_space<vmem>>, vector<64x16xbf16>
    %105 = arith.truncf %103 : vector<16x256xf32> to vector<16x256xbf16>
    %cst_31 = arith.constant dense<0.000000e+00> : vector<64x256xf32>
    %106 = tpu.matmul %104, %105, %cst_31 {dimension_numbers = #tpu.dot_dimension_numbers<[1], [0], [0], [1], [0, 0, 1, 1], [], []>} : vector<64x16xbf16>, vector<16x256xbf16>, vector<64x256xf32> -> vector<64x256xf32>
    %c0_32 = arith.constant 0 : index
    %c0_33 = arith.constant 0 : index
    %107 = vector.load %arg9[%c0_32, %c0_33] : memref<64x1xf32, #tpu.memory_space<vmem>>, vector<64x1xf32>
    %108 = vector.broadcast %107 : vector<64x1xf32> to vector<64x256xf32>
    %109 = arith.addf %106, %108 : vector<64x256xf32>
    %110 = arith.mulf %109, %109 : vector<64x256xf32>
    %111 = arith.mulf %109, %110 : vector<64x256xf32>
    %cst_34 = arith.constant 4.471500e-02 : f32
    %112 = vector.broadcast %cst_34 : f32 to vector<64x256xf32>
    %113 = arith.mulf %112, %111 : vector<64x256xf32>
    %114 = arith.addf %109, %113 : vector<64x256xf32>
    %cst_35 = arith.constant 0.797884583 : f32
    %115 = vector.broadcast %cst_35 : f32 to vector<64x256xf32>
    %116 = arith.mulf %115, %114 : vector<64x256xf32>
    %117 = math.tanh %116 : vector<64x256xf32>
    %cst_36 = arith.constant 1.000000e+00 : f32
    %118 = vector.broadcast %cst_36 : f32 to vector<64x256xf32>
    %119 = arith.addf %118, %117 : vector<64x256xf32>
    %cst_37 = arith.constant 5.000000e-01 : f32
    %120 = vector.broadcast %cst_37 : f32 to vector<64x256xf32>
    %121 = arith.mulf %120, %119 : vector<64x256xf32>
    %122 = arith.mulf %109, %121 : vector<64x256xf32>
    %c0_38 = arith.constant 0 : index
    %c0_39 = arith.constant 0 : index
    %123 = vector.load %arg10[%c0_38, %c0_39] : memref<64x9xf32, #tpu.memory_space<vmem>>, vector<64x9xf32>
    %cst_40 = arith.constant 0.000000e+00 : f32
    %124 = vector.broadcast %cst_40 : f32 to vector<64x256xf32>
    %c9_i32_41 = arith.constant 9 : i32
    %125 = tpu.dynamic_rotate %122 by %c9_i32_41 dim 1 : vector<64x256xf32>, i32 -> vector<64x256xf32>
    %c0_42 = arith.constant 0 : index
    %c0_43 = arith.constant 0 : index
    %126 = vector.load %arg2[%c0_42, %c0_43] : memref<9x256xf32, #tpu.memory_space<vmem>>, vector<1x256xf32>
    %127 = vector.broadcast %126 : vector<1x256xf32> to vector<64x256xf32>
    %128 = arith.mulf %125, %127 : vector<64x256xf32>
    %129 = vector.extract_strided_slice %123 {offsets = [0, 0], sizes = [64, 1], strides = [1, 1]} : vector<64x9xf32> to vector<64x1xf32>
    %130 = vector.broadcast %129 : vector<64x1xf32> to vector<64x256xf32>
    %131 = arith.mulf %128, %130 : vector<64x256xf32>
    %132 = arith.addf %124, %131 : vector<64x256xf32>
    %c8_i32_44 = arith.constant 8 : i32
    %133 = tpu.dynamic_rotate %122 by %c8_i32_44 dim 1 : vector<64x256xf32>, i32 -> vector<64x256xf32>
    %c1_45 = arith.constant 1 : index
    %c0_46 = arith.constant 0 : index
    %134 = vector.load %arg2[%c1_45, %c0_46] : memref<9x256xf32, #tpu.memory_space<vmem>>, vector<1x256xf32>
    %135 = vector.broadcast %134 : vector<1x256xf32> to vector<64x256xf32>
    %136 = arith.mulf %133, %135 : vector<64x256xf32>
    %137 = vector.extract_strided_slice %123 {offsets = [0, 1], sizes = [64, 1], strides = [1, 1]} : vector<64x9xf32> to vector<64x1xf32>
    %138 = vector.broadcast %137 : vector<64x1xf32> to vector<64x256xf32>
    %139 = arith.mulf %136, %138 : vector<64x256xf32>
    %140 = arith.addf %132, %139 : vector<64x256xf32>
    %c7_i32_47 = arith.constant 7 : i32
    %141 = tpu.dynamic_rotate %122 by %c7_i32_47 dim 1 : vector<64x256xf32>, i32 -> vector<64x256xf32>
    %c2_48 = arith.constant 2 : index
    %c0_49 = arith.constant 0 : index
    %142 = vector.load %arg2[%c2_48, %c0_49] : memref<9x256xf32, #tpu.memory_space<vmem>>, vector<1x256xf32>
    %143 = vector.broadcast %142 : vector<1x256xf32> to vector<64x256xf32>
    %144 = arith.mulf %141, %143 : vector<64x256xf32>
    %145 = vector.extract_strided_slice %123 {offsets = [0, 2], sizes = [64, 1], strides = [1, 1]} : vector<64x9xf32> to vector<64x1xf32>
    %146 = vector.broadcast %145 : vector<64x1xf32> to vector<64x256xf32>
    %147 = arith.mulf %144, %146 : vector<64x256xf32>
    %148 = arith.addf %140, %147 : vector<64x256xf32>
    %c1_i32_50 = arith.constant 1 : i32
    %149 = tpu.dynamic_rotate %122 by %c1_i32_50 dim 1 : vector<64x256xf32>, i32 -> vector<64x256xf32>
    %c3_51 = arith.constant 3 : index
    %c0_52 = arith.constant 0 : index
    %150 = vector.load %arg2[%c3_51, %c0_52] : memref<9x256xf32, #tpu.memory_space<vmem>>, vector<1x256xf32>
    %151 = vector.broadcast %150 : vector<1x256xf32> to vector<64x256xf32>
    %152 = arith.mulf %149, %151 : vector<64x256xf32>
    %153 = vector.extract_strided_slice %123 {offsets = [0, 3], sizes = [64, 1], strides = [1, 1]} : vector<64x9xf32> to vector<64x1xf32>
    %154 = vector.broadcast %153 : vector<64x1xf32> to vector<64x256xf32>
    %155 = arith.mulf %152, %154 : vector<64x256xf32>
    %156 = arith.addf %148, %155 : vector<64x256xf32>
    %c4_53 = arith.constant 4 : index
    %c0_54 = arith.constant 0 : index
    %157 = vector.load %arg2[%c4_53, %c0_54] : memref<9x256xf32, #tpu.memory_space<vmem>>, vector<1x256xf32>
    %158 = vector.broadcast %157 : vector<1x256xf32> to vector<64x256xf32>
    %159 = arith.mulf %122, %158 : vector<64x256xf32>
    %160 = vector.extract_strided_slice %123 {offsets = [0, 4], sizes = [64, 1], strides = [1, 1]} : vector<64x9xf32> to vector<64x1xf32>
    %161 = vector.broadcast %160 : vector<64x1xf32> to vector<64x256xf32>
    %162 = arith.mulf %159, %161 : vector<64x256xf32>
    %163 = arith.addf %156, %162 : vector<64x256xf32>
    %c255_i32_55 = arith.constant 255 : i32
    %164 = tpu.dynamic_rotate %122 by %c255_i32_55 dim 1 : vector<64x256xf32>, i32 -> vector<64x256xf32>
    %c5_56 = arith.constant 5 : index
    %c0_57 = arith.constant 0 : index
    %165 = vector.load %arg2[%c5_56, %c0_57] : memref<9x256xf32, #tpu.memory_space<vmem>>, vector<1x256xf32>
    %166 = vector.broadcast %165 : vector<1x256xf32> to vector<64x256xf32>
    %167 = arith.mulf %164, %166 : vector<64x256xf32>
    %168 = vector.extract_strided_slice %123 {offsets = [0, 5], sizes = [64, 1], strides = [1, 1]} : vector<64x9xf32> to vector<64x1xf32>
    %169 = vector.broadcast %168 : vector<64x1xf32> to vector<64x256xf32>
    %170 = arith.mulf %167, %169 : vector<64x256xf32>
    %171 = arith.addf %163, %170 : vector<64x256xf32>
    %c249_i32_58 = arith.constant 249 : i32
    %172 = tpu.dynamic_rotate %122 by %c249_i32_58 dim 1 : vector<64x256xf32>, i32 -> vector<64x256xf32>
    %c6_59 = arith.constant 6 : index
    %c0_60 = arith.constant 0 : index
    %173 = vector.load %arg2[%c6_59, %c0_60] : memref<9x256xf32, #tpu.memory_space<vmem>>, vector<1x256xf32>
    %174 = vector.broadcast %173 : vector<1x256xf32> to vector<64x256xf32>
    %175 = arith.mulf %172, %174 : vector<64x256xf32>
    %176 = vector.extract_strided_slice %123 {offsets = [0, 6], sizes = [64, 1], strides = [1, 1]} : vector<64x9xf32> to vector<64x1xf32>
    %177 = vector.broadcast %176 : vector<64x1xf32> to vector<64x256xf32>
    %178 = arith.mulf %175, %177 : vector<64x256xf32>
    %179 = arith.addf %171, %178 : vector<64x256xf32>
    %c248_i32_61 = arith.constant 248 : i32
    %180 = tpu.dynamic_rotate %122 by %c248_i32_61 dim 1 : vector<64x256xf32>, i32 -> vector<64x256xf32>
    %c7_62 = arith.constant 7 : index
    %c0_63 = arith.constant 0 : index
    %181 = vector.load %arg2[%c7_62, %c0_63] : memref<9x256xf32, #tpu.memory_space<vmem>>, vector<1x256xf32>
    %182 = vector.broadcast %181 : vector<1x256xf32> to vector<64x256xf32>
    %183 = arith.mulf %180, %182 : vector<64x256xf32>
    %184 = vector.extract_strided_slice %123 {offsets = [0, 7], sizes = [64, 1], strides = [1, 1]} : vector<64x9xf32> to vector<64x1xf32>
    %185 = vector.broadcast %184 : vector<64x1xf32> to vector<64x256xf32>
    %186 = arith.mulf %183, %185 : vector<64x256xf32>
    %187 = arith.addf %179, %186 : vector<64x256xf32>
    %c247_i32_64 = arith.constant 247 : i32
    %188 = tpu.dynamic_rotate %122 by %c247_i32_64 dim 1 : vector<64x256xf32>, i32 -> vector<64x256xf32>
    %c8_65 = arith.constant 8 : index
    %c0_66 = arith.constant 0 : index
    %189 = vector.load %arg2[%c8_65, %c0_66] : memref<9x256xf32, #tpu.memory_space<vmem>>, vector<1x256xf32>
    %190 = vector.broadcast %189 : vector<1x256xf32> to vector<64x256xf32>
    %191 = arith.mulf %188, %190 : vector<64x256xf32>
    %192 = vector.extract_strided_slice %123 {offsets = [0, 8], sizes = [64, 1], strides = [1, 1]} : vector<64x9xf32> to vector<64x1xf32>
    %193 = vector.broadcast %192 : vector<64x1xf32> to vector<64x256xf32>
    %194 = arith.mulf %191, %193 : vector<64x256xf32>
    %195 = arith.addf %187, %194 : vector<64x256xf32>
    %c0_67 = arith.constant 0 : index
    %c0_68 = arith.constant 0 : index
    %196 = vector.load %arg11[%c0_67, %c0_68] : memref<64x1xf32, #tpu.memory_space<vmem>>, vector<64x1xf32>
    %197 = vector.broadcast %196 : vector<64x1xf32> to vector<64x256xf32>
    %198 = arith.addf %195, %197 : vector<64x256xf32>
    %199 = arith.mulf %198, %198 : vector<64x256xf32>
    %200 = arith.mulf %198, %199 : vector<64x256xf32>
    %cst_69 = arith.constant 4.471500e-02 : f32
    %201 = vector.broadcast %cst_69 : f32 to vector<64x256xf32>
    %202 = arith.mulf %201, %200 : vector<64x256xf32>
    %203 = arith.addf %198, %202 : vector<64x256xf32>
    %cst_70 = arith.constant 0.797884583 : f32
    %204 = vector.broadcast %cst_70 : f32 to vector<64x256xf32>
    %205 = arith.mulf %204, %203 : vector<64x256xf32>
    %206 = math.tanh %205 : vector<64x256xf32>
    %cst_71 = arith.constant 1.000000e+00 : f32
    %207 = vector.broadcast %cst_71 : f32 to vector<64x256xf32>
    %208 = arith.addf %207, %206 : vector<64x256xf32>
    %cst_72 = arith.constant 5.000000e-01 : f32
    %209 = vector.broadcast %cst_72 : f32 to vector<64x256xf32>
    %210 = arith.mulf %209, %208 : vector<64x256xf32>
    %211 = arith.mulf %198, %210 : vector<64x256xf32>
    %c0_73 = arith.constant 0 : index
    %c0_74 = arith.constant 0 : index
    %212 = vector.load %arg12[%c0_73, %c0_74] : memref<16x64xbf16, #tpu.memory_space<vmem>>, vector<16x64xbf16>
    %213 = arith.truncf %211 : vector<64x256xf32> to vector<64x256xbf16>
    %cst_75 = arith.constant dense<0.000000e+00> : vector<16x256xf32>
    %214 = tpu.matmul %212, %213, %cst_75 {dimension_numbers = #tpu.dot_dimension_numbers<[1], [0], [0], [1], [0, 0, 1, 1], [], []>} : vector<16x64xbf16>, vector<64x256xbf16>, vector<16x256xf32> -> vector<16x256xf32>
    %215 = arith.addf %214, %81 : vector<16x256xf32>
    %c0_76 = arith.constant 0 : index
    %c0_77 = arith.constant 0 : index
    %216 = vector.load %arg13[%c0_76, %c0_77] : memref<16x256xf32, #tpu.memory_space<vmem>>, vector<16x256xf32>
    tpu.vector_store %arg13[%c0_76, %c0_77], %215 {strides = array<i32>} : memref<16x256xf32, #tpu.memory_space<vmem>>, vector<16x256xf32>,
    return
  }
}

</mosaic_0001>

<llo_original>
// kernel: cbf_block.3
$region0: #{cbf_block.3}
  #allocation0 [shape = 'u32[]', space=smem, size = 0x4, offset = 0x4, fixed_abs, tag = 'smem constant byte address 0x4 - core index']
  #allocation1 [shape = 'u32[144,128]{1,0:T(1,128)}', space=vmem, size = 0x12000, scoped, tag = 'internal scratch']
  %s0 = inlined_call_operand.vmem [shape: f32[16,256], index: 0, kind: input, shape index: {}]
  %s1 = inlined_call_operand.vmem [shape: f32[28,256], index: 1, kind: input, shape index: {}]
  %s2 = inlined_call_operand.vmem [shape: f32[9,256], index: 2, kind: input, shape index: {}]
  %s3 = inlined_call_operand.vmem [shape: f32[28,9], index: 3, kind: input, shape index: {}]
  %s4 = inlined_call_operand.vmem [shape: bf16[16,28], index: 4, kind: input, shape index: {}]
  %s5 = inlined_call_operand.vmem [shape: f32[16,1], index: 5, kind: input, shape index: {}]
  %s6 = inlined_call_operand.vmem [shape: f32[16,1], index: 6, kind: input, shape index: {}]
  %s7 = inlined_call_operand.vmem [shape: f32[16,1], index: 7, kind: input, shape index: {}]
  %s8 = inlined_call_operand.vmem [shape: bf16[64,16], index: 8, kind: input, shape index: {}]
  %s9 = inlined_call_operand.vmem [shape: f32[64,1], index: 9, kind: input, shape index: {}]
  %s10 = inlined_call_operand.vmem [shape: f32[64,9], index: 10, kind: input, shape index: {}]
  %s11 = inlined_call_operand.vmem [shape: f32[64,1], index: 11, kind: input, shape index: {}]
  %s12 = inlined_call_operand.vmem [shape: bf16[16,64], index: 12, kind: input, shape index: {}]
  %s13 = inlined_call_operand.vmem [shape: f32[16,256], index: 13, kind: output, shape index: {}]
  %s14 = sld [smem:[#allocation0]]
  $region62: #{cbf_block.3} parent=0
    _
  %s16 = ssub.s32 1, %s14
  %s17 = scalar_select 0, %s16, %s14
  // Predicated region
  $region2: #{cbf_block.3} parent=0 // pred_check
    _
  $region3: #{cbf_block.3} parent=0 // pred_check_branch
    %19 = sbr.rel (0) target = $region5
  $region4: #{cbf_block.3} parent=0 // pred_region
    _
  $region5: #{cbf_block.3} parent=0 // pred_fallthru
    _
  // Predicated region
  $region6: #{cbf_block.3} parent=0 // pred_check
    _
  $region7: #{cbf_block.3} parent=0 // pred_check_branch
    %21 = sbr.rel (0) target = $region9
  $region8: #{cbf_block.3} parent=0 // pred_region
    _
  $region9: #{cbf_block.3} parent=0 // pred_fallthru
    _
  // Predicated region
  $region10: #{cbf_block.3} parent=0 // pred_check
    _
  $region11: #{cbf_block.3} parent=0 // pred_check_branch
    %23 = sbr.rel (0) target = $region13
  $region12: #{cbf_block.3} parent=0 // pred_region
    _
  $region13: #{cbf_block.3} parent=0 // pred_fallthru
    _
  // Predicated region
  $region14: #{cbf_block.3} parent=0 // pred_check
    _
  $region15: #{cbf_block.3} parent=0 // pred_check_branch
    %25 = sbr.rel (0) target = $region17
  $region16: #{cbf_block.3} parent=0 // pred_region
    _
  $region17: #{cbf_block.3} parent=0 // pred_fallthru
    _
  // Predicated region
  $region18: #{cbf_block.3} parent=0 // pred_check
    _
  $region19: #{cbf_block.3} parent=0 // pred_check_branch
    %27 = sbr.rel (0) target = $region21
  $region20: #{cbf_block.3} parent=0 // pred_region
    _
  $region21: #{cbf_block.3} parent=0 // pred_fallthru
    _
  // Predicated region
  $region22: #{cbf_block.3} parent=0 // pred_check
    _
  $region23: #{cbf_block.3} parent=0 // pred_check_branch
    %29 = sbr.rel (0) target = $region25
  $region24: #{cbf_block.3} parent=0 // pred_region
    _
  $region25: #{cbf_block.3} parent=0 // pred_fallthru
    _
  // Predicated region
  $region26: #{cbf_block.3} parent=0 // pred_check
    _
  $region27: #{cbf_block.3} parent=0 // pred_check_branch
    %31 = sbr.rel (0) target = $region29
  $region28: #{cbf_block.3} parent=0 // pred_region
    _
  $region29: #{cbf_block.3} parent=0 // pred_fallthru
    _
  // Predicated region
  $region30: #{cbf_block.3} parent=0 // pred_check
    _
  $region31: #{cbf_block.3} parent=0 // pred_check_branch
    %33 = sbr.rel (0) target = $region33
  $region32: #{cbf_block.3} parent=0 // pred_region
    _
  $region33: #{cbf_block.3} parent=0 // pred_fallthru
    _
  // Predicated region
  $region34: #{cbf_block.3} parent=0 // pred_check
    _
  $region35: #{cbf_block.3} parent=0 // pred_check_branch
    %35 = sbr.rel (0) target = $region37
  $region36: #{cbf_block.3} parent=0 // pred_region
    _
  $region37: #{cbf_block.3} parent=0 // pred_fallthru
    _
  // Predicated region
  $region38: #{cbf_block.3} parent=0 // pred_check
    _
  $region39: #{cbf_block.3} parent=0 // pred_check_branch
    %37 = sbr.rel (0) target = $region41
  $region40: #{cbf_block.3} parent=0 // pred_region
    _
  $region41: #{cbf_block.3} parent=0 // pred_fallthru
    _
  // Predicated region
  $region42: #{cbf_block.3} parent=0 // pred_check
    _
  $region43: #{cbf_block.3} parent=0 // pred_check_branch
    %39 = sbr.rel (0) target = $region45
  $region44: #{cbf_block.3} parent=0 // pred_region
    _
  $region45: #{cbf_block.3} parent=0 // pred_fallthru
    _
  // Predicated region
  $region46: #{cbf_block.3} parent=0 // pred_check
    _
  $region47: #{cbf_block.3} parent=0 // pred_check_branch
    %41 = sbr.rel (0) target = $region49
  $region48: #{cbf_block.3} parent=0 // pred_region
    _
  $region49: #{cbf_block.3} parent=0 // pred_fallthru
    _
  // Predicated region
  $region50: #{cbf_block.3} parent=0 // pred_check
    _
  $region51: #{cbf_block.3} parent=0 // pred_check_branch
    %43 = sbr.rel (0) target = $region53
  $region52: #{cbf_block.3} parent=0 // pred_region
    _
  $region53: #{cbf_block.3} parent=0 // pred_fallthru
    _
  %v45 = vld [vmem:[%s0] sm:$0xff]
  %v46 = vld [vmem:[%s0 + $0x8] sm:$0xff]
  %v47 = vld [vmem:[%s0 + $0x10] sm:$0xff]
  %v48 = vld [vmem:[%s0 + $0x18] sm:$0xff]
  %v49 = vld [vmem:[%s1] sm:$0xff]
  %v50 = vld [vmem:[%s1 + $0x8] sm:$0xff]
  %v51 = vld [vmem:[%s1 + $0x10] sm:$0xff]
  %v52 = vld [vmem:[%s1 + $0x18] sm:$0xff]
  %v53 = vld [vmem:[%s1 + $0x20] sm:$0xff]
  %v54 = vld [vmem:[%s1 + $0x28] sm:$0xff]
  %v55 = vld [vmem:[%s1 + $0x30] sm:$0xf]
  %v56 = vld [vmem:[%s1 + $0x38] sm:$0xf]
  %v57 = vld [vmem:[%s3] sm:$0xff]
  %v58 = vld [vmem:[%s3 + $0x8] sm:$0xff]
  %v59 = vld [vmem:[%s3 + $0x10] sm:$0xff]
  %v60 = vld [vmem:[%s3 + $0x18] sm:$0xf]
  %61 = vrot.lane.b32.xlu0 %v49, 9
  %v62 = vpop.permute.xlu0 %61
  %63 = vrot.lane.b32.xlu0 %v51, 9
  %v64 = vpop.permute.xlu0 %63
  %65 = vrot.lane.b32.xlu0 %v53, 9
  %v66 = vpop.permute.xlu0 %65
  %67 = vrot.lane.b32.xlu0 %v55, 9
  %v68 = vpop.permute.xlu0 %67
  %69 = vrot.lane.b32.xlu0 %v50, 9
  %v70 = vpop.permute.xlu0 %69
  %71 = vrot.lane.b32.xlu0 %v52, 9
  %v72 = vpop.permute.xlu0 %71
  %73 = vrot.lane.b32.xlu0 %v54, 9
  %v74 = vpop.permute.xlu0 %73
  %75 = vrot.lane.b32.xlu0 %v56, 9
  %v76 = vpop.permute.xlu0 %75
  %v77 = vlaneseq
  %v78 = vand.u32 %v77, 127
  %vm79 = vcmp.lt.s32.totalorder %v78, 9
  %v80 = vsel %vm79, %v62, %v70
  %v81 = vsel %vm79, %v64, %v72
  %v82 = vsel %vm79, %v66, %v74
  %v83 = vsel %vm79, %v68, %v76
  %v84 = vsel %vm79, %v70, %v62
  %v85 = vsel %vm79, %v72, %v64
  %v86 = vsel %vm79, %v74, %v66
  %v87 = vsel %vm79, %v76, %v68
  %v88 = vld [vmem:[%s2] ss:$8 sm:$0x3]
  %v90 = vlaneseq
  %v91 = vshrl.u32 %v90, 7
  %v92 = vsub.s32 0, %v91
  %v93 = vrot.slane %v88, %v92
  %v94 = vlaneseq
  %v95 = vshrl.u32 %v94, 7
  %v96 = vsub.s32 1, %v95
  %v97 = vrot.slane %v88, %v96
  %v100 = vmul.f32 %v84, %v93
  %v101 = vmul.f32 %v80, %v97
  %v102 = vmul.f32 %v85, %v93
  %v103 = vmul.f32 %v81, %v97
  %v104 = vmul.f32 %v86, %v93
  %v105 = vmul.f32 %v82, %v97
  %v106 = vmul.f32 %v87, %v93
  %v107 = vmul.f32 %v83, %v97
  %109 = vset.pattern.permute.xlu0 0
  %110 = vperm.xlu0 %109, %v57
  %v111 = vpop.permute.xlu0 %110
  %114 = vset.pattern.permute.xlu0 0
  %115 = vperm.xlu0 %114, %v58
  %v116 = vpop.permute.xlu0 %115
  %119 = vset.pattern.permute.xlu0 0
  %120 = vperm.xlu0 %119, %v59
  %v121 = vpop.permute.xlu0 %120
  %124 = vset.pattern.permute.xlu0 0
  %125 = vperm.xlu0 %124, %v60
  %v126 = vpop.permute.xlu0 %125
  %v128 = vmul.f32 %v100, %v111
  %v129 = vmul.f32 %v101, %v111
  %v130 = vmul.f32 %v102, %v116
  %v131 = vmul.f32 %v103, %v116
  %v132 = vmul.f32 %v104, %v121
  %v133 = vmul.f32 %v105, %v121
  %v134 = vmul.f32 %v106, %v126
  %v135 = vmul.f32 %v107, %v126
  %v136 = vadd.f32 %v128, 0.0
  %v137 = vadd.f32 %v129, 0.0
  %v138 = vadd.f32 %v130, 0.0
  %v139 = vadd.f32 %v131, 0.0
  %v140 = vadd.f32 %v132, 0.0
  %v141 = vadd.f32 %v133, 0.0
  %v142 = vadd.f32 %v134, 0.0
  %v143 = vadd.f32 %v135, 0.0
  %144 = vrot.lane.b32.xlu0 %v49, 8
  %v145 = vpop.permute.xlu0 %144
  %146 = vrot.lane.b32.xlu0 %v51, 8
  %v147 = vpop.permute.xlu0 %146
  %148 = vrot.lane.b32.xlu0 %v53, 8
  %v149 = vpop.permute.xlu0 %148
  %150 = vrot.lane.b32.xlu0 %v55, 8
  %v151 = vpop.permute.xlu0 %150
  %152 = vrot.lane.b32.xlu0 %v50, 8
  %v153 = vpop.permute.xlu0 %152
  %154 = vrot.lane.b32.xlu0 %v52, 8
  %v155 = vpop.permute.xlu0 %154
  %156 = vrot.lane.b32.xlu0 %v54, 8
  %v157 = vpop.permute.xlu0 %156
  %158 = vrot.lane.b32.xlu0 %v56, 8
  %v159 = vpop.permute.xlu0 %158
  %vm160 = vcmp.lt.s32.totalorder %v78, 8
  %v161 = vsel %vm160, %v145, %v153
  %v162 = vsel %vm160, %v147, %v155
  %v163 = vsel %vm160, %v149, %v157
  %v164 = vsel %vm160, %v151, %v159
  %v165 = vsel %vm160, %v153, %v145
  %v166 = vsel %vm160, %v155, %v147
  %v167 = vsel %vm160, %v157, %v149
  %v168 = vsel %vm160, %v159, %v151
  %s169 = scalar_lea.vmem %s2, 1
  %v170 = vld [vmem:[%s169] ss:$8 sm:$0x3]
  %v172 = vlaneseq
  %v173 = vshrl.u32 %v172, 7
  %v174 = vsub.s32 0, %v173
  %v175 = vrot.slane %v170, %v174
  %v176 = vlaneseq
  %v177 = vshrl.u32 %v176, 7
  %v178 = vsub.s32 1, %v177
  %v179 = vrot.slane %v170, %v178
  %v182 = vmul.f32 %v165, %v175
  %v183 = vmul.f32 %v161, %v179
  %v184 = vmul.f32 %v166, %v175
  %v185 = vmul.f32 %v162, %v179
  %v186 = vmul.f32 %v167, %v175
  %v187 = vmul.f32 %v163, %v179
  %v188 = vmul.f32 %v168, %v175
  %v189 = vmul.f32 %v164, %v179
  %190 = vset.pattern.permute.xlu0 1
  %191 = vperm.xlu0 %190, %v57
  %v192 = vpop.permute.xlu0 %191
  %194 = vset.pattern.permute.xlu0 1
  %195 = vperm.xlu0 %194, %v58
  %v196 = vpop.permute.xlu0 %195
  %198 = vset.pattern.permute.xlu0 1
  %199 = vperm.xlu0 %198, %v59
  %v200 = vpop.permute.xlu0 %199
  %202 = vset.pattern.permute.xlu0 1
  %203 = vperm.xlu0 %202, %v60
  %v204 = vpop.permute.xlu0 %203
  %v206 = vmul.f32 %v182, %v192
  %v207 = vmul.f32 %v183, %v192
  %v208 = vmul.f32 %v184, %v196
  %v209 = vmul.f32 %v185, %v196
  %v210 = vmul.f32 %v186, %v200
  %v211 = vmul.f32 %v187, %v200
  %v212 = vmul.f32 %v188, %v204
  %v213 = vmul.f32 %v189, %v204
  %v214 = vadd.f32 %v136, %v206
  %v215 = vadd.f32 %v137, %v207
  %v216 = vadd.f32 %v138, %v208
  %v217 = vadd.f32 %v139, %v209
  %v218 = vadd.f32 %v140, %v210
  %v219 = vadd.f32 %v141, %v211
  %v220 = vadd.f32 %v142, %v212
  %v221 = vadd.f32 %v143, %v213
  %222 = vrot.lane.b32.xlu0 %v49, 7
  %v223 = vpop.permute.xlu0 %222
  %224 = vrot.lane.b32.xlu0 %v51, 7
  %v225 = vpop.permute.xlu0 %224
  %226 = vrot.lane.b32.xlu0 %v53, 7
  %v227 = vpop.permute.xlu0 %226
  %228 = vrot.lane.b32.xlu0 %v55, 7
  %v229 = vpop.permute.xlu0 %228
  %230 = vrot.lane.b32.xlu0 %v50, 7
  %v231 = vpop.permute.xlu0 %230
  %232 = vrot.lane.b32.xlu0 %v52, 7
  %v233 = vpop.permute.xlu0 %232
  %234 = vrot.lane.b32.xlu0 %v54, 7
  %v235 = vpop.permute.xlu0 %234
  %236 = vrot.lane.b32.xlu0 %v56, 7
  %v237 = vpop.permute.xlu0 %236
  %vm238 = vcmp.lt.s32.totalorder %v78, 7
  %v239 = vsel %vm238, %v223, %v231
  %v240 = vsel %vm238, %v225, %v233
  %v241 = vsel %vm238, %v227, %v235
  %v242 = vsel %vm238, %v229, %v237
  %v243 = vsel %vm238, %v231, %v223
  %v244 = vsel %vm238, %v233, %v225
  %v245 = vsel %vm238, %v235, %v227
  %v246 = vsel %vm238, %v237, %v229
  %s247 = scalar_lea.vmem %s2, 2
  %v248 = vld [vmem:[%s247] ss:$8 sm:$0x3]
  %v250 = vlaneseq
  %v251 = vshrl.u32 %v250, 7
  %v252 = vsub.s32 0, %v251
  %v253 = vrot.slane %v248, %v252
  %v254 = vlaneseq
  %v255 = vshrl.u32 %v254, 7
  %v256 = vsub.s32 1, %v255
  %v257 = vrot.slane %v248, %v256
  %v260 = vmul.f32 %v243, %v253
  %v261 = vmul.f32 %v239, %v257
  %v262 = vmul.f32 %v244, %v253
  %v263 = vmul.f32 %v240, %v257
  %v264 = vmul.f32 %v245, %v253
  %v265 = vmul.f32 %v241, %v257
  %v266 = vmul.f32 %v246, %v253
  %v267 = vmul.f32 %v242, %v257
  %268 = vset.pattern.permute.xlu0 2
  %269 = vperm.xlu0 %268, %v57
  %v270 = vpop.permute.xlu0 %269
  %272 = vset.pattern.permute.xlu0 2
  %273 = vperm.xlu0 %272, %v58
  %v274 = vpop.permute.xlu0 %273
  %276 = vset.pattern.permute.xlu0 2
  %277 = vperm.xlu0 %276, %v59
  %v278 = vpop.permute.xlu0 %277
  %280 = vset.pattern.permute.xlu0 2
  %281 = vperm.xlu0 %280, %v60
  %v282 = vpop.permute.xlu0 %281
  %v284 = vmul.f32 %v260, %v270
  %v285 = vmul.f32 %v261, %v270
  %v286 = vmul.f32 %v262, %v274
  %v287 = vmul.f32 %v263, %v274
  %v288 = vmul.f32 %v264, %v278
  %v289 = vmul.f32 %v265, %v278
  %v290 = vmul.f32 %v266, %v282
  %v291 = vmul.f32 %v267, %v282
  %v292 = vadd.f32 %v214, %v284
  %v293 = vadd.f32 %v215, %v285
  %v294 = vadd.f32 %v216, %v286
  %v295 = vadd.f32 %v217, %v287
  %v296 = vadd.f32 %v218, %v288
  %v297 = vadd.f32 %v219, %v289
  %v298 = vadd.f32 %v220, %v290
  %v299 = vadd.f32 %v221, %v291
  %300 = vrot.lane.b32.xlu0 %v49, 1
  %v301 = vpop.permute.xlu0 %300
  %302 = vrot.lane.b32.xlu0 %v51, 1
  %v303 = vpop.permute.xlu0 %302
  %304 = vrot.lane.b32.xlu0 %v53, 1
  %v305 = vpop.permute.xlu0 %304
  %306 = vrot.lane.b32.xlu0 %v55, 1
  %v307 = vpop.permute.xlu0 %306
  %308 = vrot.lane.b32.xlu0 %v50, 1
  %v309 = vpop.permute.xlu0 %308
  %310 = vrot.lane.b32.xlu0 %v52, 1
  %v311 = vpop.permute.xlu0 %310
  %312 = vrot.lane.b32.xlu0 %v54, 1
  %v313 = vpop.permute.xlu0 %312
  %314 = vrot.lane.b32.xlu0 %v56, 1
  %v315 = vpop.permute.xlu0 %314
  %vm316 = vcmp.lt.s32.totalorder %v78, 1
  %v317 = vsel %vm316, %v301, %v309
  %v318 = vsel %vm316, %v303, %v311
  %v319 = vsel %vm316, %v305, %v313
  %v320 = vsel %vm316, %v307, %v315
  %v321 = vsel %vm316, %v309, %v301
  %v322 = vsel %vm316, %v311, %v303
  %v323 = vsel %vm316, %v313, %v305
  %v324 = vsel %vm316, %v315, %v307
  %s325 = scalar_lea.vmem %s2, 3
  %v326 = vld [vmem:[%s325] ss:$8 sm:$0x3]
  %v328 = vlaneseq
  %v329 = vshrl.u32 %v328, 7
  %v330 = vsub.s32 0, %v329
  %v331 = vrot.slane %v326, %v330
  %v332 = vlaneseq
  %v333 = vshrl.u32 %v332, 7
  %v334 = vsub.s32 1, %v333
  %v335 = vrot.slane %v326, %v334
  %v338 = vmul.f32 %v321, %v331
  %v339 = vmul.f32 %v317, %v335
  %v340 = vmul.f32 %v322, %v331
  %v341 = vmul.f32 %v318, %v335
  %v342 = vmul.f32 %v323, %v331
  %v343 = vmul.f32 %v319, %v335
  %v344 = vmul.f32 %v324, %v331
  %v345 = vmul.f32 %v320, %v335
  %346 = vset.pattern.permute.xlu0 3
  %347 = vperm.xlu0 %346, %v57
  %v348 = vpop.permute.xlu0 %347
  %350 = vset.pattern.permute.xlu0 3
  %351 = vperm.xlu0 %350, %v58
  %v352 = vpop.permute.xlu0 %351
  %354 = vset.pattern.permute.xlu0 3
  %355 = vperm.xlu0 %354, %v59
  %v356 = vpop.permute.xlu0 %355
  %358 = vset.pattern.permute.xlu0 3
  %359 = vperm.xlu0 %358, %v60
  %v360 = vpop.permute.xlu0 %359
  %v362 = vmul.f32 %v338, %v348
  %v363 = vmul.f32 %v339, %v348
  %v364 = vmul.f32 %v340, %v352
  %v365 = vmul.f32 %v341, %v352
  %v366 = vmul.f32 %v342, %v356
  %v367 = vmul.f32 %v343, %v356
  %v368 = vmul.f32 %v344, %v360
  %v369 = vmul.f32 %v345, %v360
  %v370 = vadd.f32 %v292, %v362
  %v371 = vadd.f32 %v293, %v363
  %v372 = vadd.f32 %v294, %v364
  %v373 = vadd.f32 %v295, %v365
  %v374 = vadd.f32 %v296, %v366
  %v375 = vadd.f32 %v297, %v367
  %v376 = vadd.f32 %v298, %v368
  %v377 = vadd.f32 %v299, %v369
  %s378 = scalar_lea.vmem %s2, 4
  %v379 = vld [vmem:[%s378] ss:$8 sm:$0x3]
  %v381 = vlaneseq
  %v382 = vshrl.u32 %v381, 7
  %v383 = vsub.s32 0, %v382
  %v384 = vrot.slane %v379, %v383
  %v385 = vlaneseq
  %v386 = vshrl.u32 %v385, 7
  %v387 = vsub.s32 1, %v386
  %v388 = vrot.slane %v379, %v387
  %v391 = vmul.f32 %v49, %v384
  %v392 = vmul.f32 %v50, %v388
  %v393 = vmul.f32 %v51, %v384
  %v394 = vmul.f32 %v52, %v388
  %v395 = vmul.f32 %v53, %v384
  %v396 = vmul.f32 %v54, %v388
  %v397 = vmul.f32 %v55, %v384
  %v398 = vmul.f32 %v56, %v388
  %399 = vset.pattern.permute.xlu0 4
  %400 = vperm.xlu0 %399, %v57
  %v401 = vpop.permute.xlu0 %400
  %403 = vset.pattern.permute.xlu0 4
  %404 = vperm.xlu0 %403, %v58
  %v405 = vpop.permute.xlu0 %404
  %407 = vset.pattern.permute.xlu0 4
  %408 = vperm.xlu0 %407, %v59
  %v409 = vpop.permute.xlu0 %408
  %411 = vset.pattern.permute.xlu0 4
  %412 = vperm.xlu0 %411, %v60
  %v413 = vpop.permute.xlu0 %412
  %v415 = vmul.f32 %v391, %v401
  %v416 = vmul.f32 %v392, %v401
  %v417 = vmul.f32 %v393, %v405
  %v418 = vmul.f32 %v394, %v405
  %v419 = vmul.f32 %v395, %v409
  %v420 = vmul.f32 %v396, %v409
  %v421 = vmul.f32 %v397, %v413
  %v422 = vmul.f32 %v398, %v413
  %v423 = vadd.f32 %v370, %v415
  %v424 = vadd.f32 %v371, %v416
  %v425 = vadd.f32 %v372, %v417
  %v426 = vadd.f32 %v373, %v418
  %v427 = vadd.f32 %v374, %v419
  %v428 = vadd.f32 %v375, %v420
  %v429 = vadd.f32 %v376, %v421
  %v430 = vadd.f32 %v377, %v422
  %431 = vrot.lane.b32.xlu0 %v49, 127
  %v432 = vpop.permute.xlu0 %431
  %433 = vrot.lane.b32.xlu0 %v51, 127
  %v434 = vpop.permute.xlu0 %433
  %435 = vrot.lane.b32.xlu0 %v53, 127
  %v436 = vpop.permute.xlu0 %435
  %437 = vrot.lane.b32.xlu0 %v55, 127
  %v438 = vpop.permute.xlu0 %437
  %439 = vrot.lane.b32.xlu0 %v50, 127
  %v440 = vpop.permute.xlu0 %439
  %441 = vrot.lane.b32.xlu0 %v52, 127
  %v442 = vpop.permute.xlu0 %441
  %443 = vrot.lane.b32.xlu0 %v54, 127
  %v444 = vpop.permute.xlu0 %443
  %445 = vrot.lane.b32.xlu0 %v56, 127
  %v446 = vpop.permute.xlu0 %445
  %vm447 = vcmp.lt.s32.totalorder %v78, 127
  %v448 = vsel %vm447, %v432, %v440
  %v449 = vsel %vm447, %v434, %v442
  %v450 = vsel %vm447, %v436, %v444
  %v451 = vsel %vm447, %v438, %v446
  %v452 = vsel %vm447, %v440, %v432
  %v453 = vsel %vm447, %v442, %v434
  %v454 = vsel %vm447, %v444, %v436
  %v455 = vsel %vm447, %v446, %v438
  %s456 = scalar_lea.vmem %s2, 5
  %v457 = vld [vmem:[%s456] ss:$8 sm:$0x3]
  %v459 = vlaneseq
  %v460 = vshrl.u32 %v459, 7
  %v461 = vsub.s32 0, %v460
  %v462 = vrot.slane %v457, %v461
  %v463 = vlaneseq
  %v464 = vshrl.u32 %v463, 7
  %v465 = vsub.s32 1, %v464
  %v466 = vrot.slane %v457, %v465
  %v469 = vmul.f32 %v448, %v462
  %v470 = vmul.f32 %v452, %v466
  %v471 = vmul.f32 %v449, %v462
  %v472 = vmul.f32 %v453, %v466
  %v473 = vmul.f32 %v450, %v462
  %v474 = vmul.f32 %v454, %v466
  %v475 = vmul.f32 %v451, %v462
  %v476 = vmul.f32 %v455, %v466
  %477 = vset.pattern.permute.xlu0 5
  %478 = vperm.xlu0 %477, %v57
  %v479 = vpop.permute.xlu0 %478
  %481 = vset.pattern.permute.xlu0 5
  %482 = vperm.xlu0 %481, %v58
  %v483 = vpop.permute.xlu0 %482
  %485 = vset.pattern.permute.xlu0 5
  %486 = vperm.xlu0 %485, %v59
  %v487 = vpop.permute.xlu0 %486
  %489 = vset.pattern.permute.xlu0 5
  %490 = vperm.xlu0 %489, %v60
  %v491 = vpop.permute.xlu0 %490
  %v493 = vmul.f32 %v469, %v479
  %v494 = vmul.f32 %v470, %v479
  %v495 = vmul.f32 %v471, %v483
  %v496 = vmul.f32 %v472, %v483
  %v497 = vmul.f32 %v473, %v487
  %v498 = vmul.f32 %v474, %v487
  %v499 = vmul.f32 %v475, %v491
  %v500 = vmul.f32 %v476, %v491
  %v501 = vadd.f32 %v423, %v493
  %v502 = vadd.f32 %v424, %v494
  %v503 = vadd.f32 %v425, %v495
  %v504 = vadd.f32 %v426, %v496
  %v505 = vadd.f32 %v427, %v497
  %v506 = vadd.f32 %v428, %v498
  %v507 = vadd.f32 %v429, %v499
  %v508 = vadd.f32 %v430, %v500
  %509 = vrot.lane.b32.xlu0 %v49, 121
  %v510 = vpop.permute.xlu0 %509
  %511 = vrot.lane.b32.xlu0 %v51, 121
  %v512 = vpop.permute.xlu0 %511
  %513 = vrot.lane.b32.xlu0 %v53, 121
  %v514 = vpop.permute.xlu0 %513
  %515 = vrot.lane.b32.xlu0 %v55, 121
  %v516 = vpop.permute.xlu0 %515
  %517 = vrot.lane.b32.xlu0 %v50, 121
  %v518 = vpop.permute.xlu0 %517
  %519 = vrot.lane.b32.xlu0 %v52, 121
  %v520 = vpop.permute.xlu0 %519
  %521 = vrot.lane.b32.xlu0 %v54, 121
  %v522 = vpop.permute.xlu0 %521
  %523 = vrot.lane.b32.xlu0 %v56, 121
  %v524 = vpop.permute.xlu0 %523
  %vm525 = vcmp.lt.s32.totalorder %v78, 121
  %v526 = vsel %vm525, %v510, %v518
  %v527 = vsel %vm525, %v512, %v520
  %v528 = vsel %vm525, %v514, %v522
  %v529 = vsel %vm525, %v516, %v524
  %v530 = vsel %vm525, %v518, %v510
  %v531 = vsel %vm525, %v520, %v512
  %v532 = vsel %vm525, %v522, %v514
  %v533 = vsel %vm525, %v524, %v516
  %s534 = scalar_lea.vmem %s2, 6
  %v535 = vld [vmem:[%s534] ss:$8 sm:$0x3]
  %v537 = vlaneseq
  %v538 = vshrl.u32 %v537, 7
  %v539 = vsub.s32 0, %v538
  %v540 = vrot.slane %v535, %v539
  %v541 = vlaneseq
  %v542 = vshrl.u32 %v541, 7
  %v543 = vsub.s32 1, %v542
  %v544 = vrot.slane %v535, %v543
  %v547 = vmul.f32 %v526, %v540
  %v548 = vmul.f32 %v530, %v544
  %v549 = vmul.f32 %v527, %v540
  %v550 = vmul.f32 %v531, %v544
  %v551 = vmul.f32 %v528, %v540
  %v552 = vmul.f32 %v532, %v544
  %v553 = vmul.f32 %v529, %v540
  %v554 = vmul.f32 %v533, %v544
  %555 = vset.pattern.permute.xlu0 6
  %556 = vperm.xlu0 %555, %v57
  %v557 = vpop.permute.xlu0 %556
  %559 = vset.pattern.permute.xlu0 6
  %560 = vperm.xlu0 %559, %v58
  %v561 = vpop.permute.xlu0 %560
  %563 = vset.pattern.permute.xlu0 6
  %564 = vperm.xlu0 %563, %v59
  %v565 = vpop.permute.xlu0 %564
  %567 = vset.pattern.permute.xlu0 6
  %568 = vperm.xlu0 %567, %v60
  %v569 = vpop.permute.xlu0 %568
  %v571 = vmul.f32 %v547, %v557
  %v572 = vmul.f32 %v548, %v557
  %v573 = vmul.f32 %v549, %v561
  %v574 = vmul.f32 %v550, %v561
  %v575 = vmul.f32 %v551, %v565
  %v576 = vmul.f32 %v552, %v565
  %v577 = vmul.f32 %v553, %v569
  %v578 = vmul.f32 %v554, %v569
  %v579 = vadd.f32 %v501, %v571
  %v580 = vadd.f32 %v502, %v572
  %v581 = vadd.f32 %v503, %v573
  %v582 = vadd.f32 %v504, %v574
  %v583 = vadd.f32 %v505, %v575
  %v584 = vadd.f32 %v506, %v576
  %v585 = vadd.f32 %v507, %v577
  %v586 = vadd.f32 %v508, %v578
  %587 = vrot.lane.b32.xlu0 %v49, 120
  %v588 = vpop.permute.xlu0 %587
  %589 = vrot.lane.b32.xlu0 %v51, 120
  %v590 = vpop.permute.xlu0 %589
  %591 = vrot.lane.b32.xlu0 %v53, 120
  %v592 = vpop.permute.xlu0 %591
  %593 = vrot.lane.b32.xlu0 %v55, 120
  %v594 = vpop.permute.xlu0 %593
  %595 = vrot.lane.b32.xlu0 %v50, 120
  %v596 = vpop.permute.xlu0 %595
  %597 = vrot.lane.b32.xlu0 %v52, 120
  %v598 = vpop.permute.xlu0 %597
  %599 = vrot.lane.b32.xlu0 %v54, 120
  %v600 = vpop.permute.xlu0 %599
  %601 = vrot.lane.b32.xlu0 %v56, 120
  %v602 = vpop.permute.xlu0 %601
  %vm603 = vcmp.lt.s32.totalorder %v78, 120
  %v604 = vsel %vm603, %v588, %v596
  %v605 = vsel %vm603, %v590, %v598
  %v606 = vsel %vm603, %v592, %v600
  %v607 = vsel %vm603, %v594, %v602
  %v608 = vsel %vm603, %v596, %v588
  %v609 = vsel %vm603, %v598, %v590
  %v610 = vsel %vm603, %v600, %v592
  %v611 = vsel %vm603, %v602, %v594
  %s612 = scalar_lea.vmem %s2, 7
  %v613 = vld [vmem:[%s612] ss:$8 sm:$0x3]
  %v615 = vlaneseq
  %v616 = vshrl.u32 %v615, 7
  %v617 = vsub.s32 0, %v616
  %v618 = vrot.slane %v613, %v617
  %v619 = vlaneseq
  %v620 = vshrl.u32 %v619, 7
  %v621 = vsub.s32 1, %v620
  %v622 = vrot.slane %v613, %v621
  %v625 = vmul.f32 %v604, %v618
  %v626 = vmul.f32 %v608, %v622
  %v627 = vmul.f32 %v605, %v618
  %v628 = vmul.f32 %v609, %v622
  %v629 = vmul.f32 %v606, %v618
  %v630 = vmul.f32 %v610, %v622
  %v631 = vmul.f32 %v607, %v618
  %v632 = vmul.f32 %v611, %v622
  %633 = vset.pattern.permute.xlu0 7
  %634 = vperm.xlu0 %633, %v57
  %v635 = vpop.permute.xlu0 %634
  %637 = vset.pattern.permute.xlu0 7
  %638 = vperm.xlu0 %637, %v58
  %v639 = vpop.permute.xlu0 %638
  %641 = vset.pattern.permute.xlu0 7
  %642 = vperm.xlu0 %641, %v59
  %v643 = vpop.permute.xlu0 %642
  %645 = vset.pattern.permute.xlu0 7
  %646 = vperm.xlu0 %645, %v60
  %v647 = vpop.permute.xlu0 %646
  %v649 = vmul.f32 %v625, %v635
  %v650 = vmul.f32 %v626, %v635
  %v651 = vmul.f32 %v627, %v639
  %v652 = vmul.f32 %v628, %v639
  %v653 = vmul.f32 %v629, %v643
  %v654 = vmul.f32 %v630, %v643
  %v655 = vmul.f32 %v631, %v647
  %v656 = vmul.f32 %v632, %v647
  %v657 = vadd.f32 %v579, %v649
  %v658 = vadd.f32 %v580, %v650
  %v659 = vadd.f32 %v581, %v651
  %v660 = vadd.f32 %v582, %v652
  %v661 = vadd.f32 %v583, %v653
  %v662 = vadd.f32 %v584, %v654
  %v663 = vadd.f32 %v585, %v655
  %v664 = vadd.f32 %v586, %v656
  %665 = vrot.lane.b32.xlu0 %v49, 119
  %v666 = vpop.permute.xlu0 %665
  %667 = vrot.lane.b32.xlu0 %v51, 119
  %v668 = vpop.permute.xlu0 %667
  %669 = vrot.lane.b32.xlu0 %v53, 119
  %v670 = vpop.permute.xlu0 %669
  %671 = vrot.lane.b32.xlu0 %v55, 119
  %v672 = vpop.permute.xlu0 %671
  %673 = vrot.lane.b32.xlu0 %v50, 119
  %v674 = vpop.permute.xlu0 %673
  %675 = vrot.lane.b32.xlu0 %v52, 119
  %v676 = vpop.permute.xlu0 %675
  %677 = vrot.lane.b32.xlu0 %v54, 119
  %v678 = vpop.permute.xlu0 %677
  %679 = vrot.lane.b32.xlu0 %v56, 119
  %v680 = vpop.permute.xlu0 %679
  %vm681 = vcmp.lt.s32.totalorder %v78, 119
  %v682 = vsel %vm681, %v666, %v674
  %v683 = vsel %vm681, %v668, %v676
  %v684 = vsel %vm681, %v670, %v678
  %v685 = vsel %vm681, %v672, %v680
  %v686 = vsel %vm681, %v674, %v666
  %v687 = vsel %vm681, %v676, %v668
  %v688 = vsel %vm681, %v678, %v670
  %v689 = vsel %vm681, %v680, %v672
  %s690 = scalar_lea.vmem %s2, 16
  %v691 = vld [vmem:[%s690] ss:$8 sm:$0x3]
  %v693 = vlaneseq
  %v694 = vshrl.u32 %v693, 7
  %v695 = vsub.s32 0, %v694
  %v696 = vrot.slane %v691, %v695
  %v697 = vlaneseq
  %v698 = vshrl.u32 %v697, 7
  %v699 = vsub.s32 1, %v698
  %v700 = vrot.slane %v691, %v699
  %v703 = vmul.f32 %v682, %v696
  %v704 = vmul.f32 %v686, %v700
  %v705 = vmul.f32 %v683, %v696
  %v706 = vmul.f32 %v687, %v700
  %v707 = vmul.f32 %v684, %v696
  %v708 = vmul.f32 %v688, %v700
  %v709 = vmul.f32 %v685, %v696
  %v710 = vmul.f32 %v689, %v700
  %711 = vset.pattern.permute.xlu0 8
  %712 = vperm.xlu0 %711, %v57
  %v713 = vpop.permute.xlu0 %712
  %715 = vset.pattern.permute.xlu0 8
  %716 = vperm.xlu0 %715, %v58
  %v717 = vpop.permute.xlu0 %716
  %719 = vset.pattern.permute.xlu0 8
  %720 = vperm.xlu0 %719, %v59
  %v721 = vpop.permute.xlu0 %720
  %723 = vset.pattern.permute.xlu0 8
  %724 = vperm.xlu0 %723, %v60
  %v725 = vpop.permute.xlu0 %724
  %v727 = vmul.f32 %v703, %v713
  %v728 = vmul.f32 %v704, %v713
  %v729 = vmul.f32 %v705, %v717
  %v730 = vmul.f32 %v706, %v717
  %v731 = vmul.f32 %v707, %v721
  %v732 = vmul.f32 %v708, %v721
  %v733 = vmul.f32 %v709, %v725
  %v734 = vmul.f32 %v710, %v725
  %v735 = vadd.f32 %v657, %v727
  %v736 = vadd.f32 %v658, %v728
  %v737 = vadd.f32 %v659, %v729
  %v738 = vadd.f32 %v660, %v730
  %v739 = vadd.f32 %v661, %v731
  %v740 = vadd.f32 %v662, %v732
  %v741 = vadd.f32 %v663, %v733
  %v742 = vadd.f32 %v664, %v734
  %v743 = vld [vmem:[%s4] sm:$0xf]
  %v744 = vld [vmem:[%s4 + $0x4] sm:$0xf]
  %v745 = vpack.c.bf16 %v737, %v735
  %v746 = vpack.c.bf16 %v738, %v736
  %v747 = vpack.c.bf16 %v741, %v739
  %v748 = vpack.c.bf16 %v742, %v740
  %v749 = vld [vmem:[%s5] sm:$0xff]
  %v750 = vld [vmem:[%s5 + $0x8] sm:$0xff]
  %752 = vset.pattern.permute.xlu0 0
  %753 = vperm.xlu0 %752, %v749
  %v754 = vpop.permute.xlu0 %753
  %757 = vset.pattern.permute.xlu0 0
  %758 = vperm.xlu0 %757, %v750
  %v759 = vpop.permute.xlu0 %758
  %v763 = vunpack.c.l.b16 %v743
  %v764 = vunpack.c.l.b16 %v744
  %v765 = vpack.c.b16 %v764, %v763
  %vm766 = vcmask 228352
  %v768 = vsel %vm766, %v765, 0
  %vm770 = vcmask 1045504
  %v772 = vsel %vm770, %v747, 0
  %v775 = vsel %vm770, %v748, 0
  %777 = vmatprep.subr.bf16.mxu0 %v746
  %778 = vmatpush1.bf16.msra.mxu0 %v745
  %779 = vmatprep.subr.bf16.mxu0 %v775
  %780 = vmatpush1.bf16.msra.mxu0 %v772
  %781 = vmatprep.subr.bf16.mxu0 0
  %782 = vmatpush1.bf16.msra.mxu0 0
  %783 = vmatprep.subr.bf16.mxu0 0
  %784 = vmatpush1.bf16.msra.mxu0 0
  %785 = vmatprep.subr.bf16.mxu0 0
  %786 = vmatpush1.bf16.msra.mxu0 0
  %787 = vmatprep.subr.bf16.mxu0 0
  %788 = vmatpush1.bf16.msra.mxu0 0
  %789 = vmatprep.subr.bf16.mxu0 0
  %790 = vmatpush1.bf16.msra.mxu0 0
  %791 = vmatprep.subr.bf16.mxu0 0
  %792 = vmatpush1.bf16.msra.mxu0 0
  %793 = vmatprep.subr.bf16.mxu0 0
  %794 = vmatpush1.bf16.msra.mxu0 0
  %795 = vmatprep.subr.bf16.mxu0 0
  %796 = vmatpush1.bf16.msra.mxu0 0
  %797 = vmatprep.subr.bf16.mxu0 0
  %798 = vmatpush1.bf16.msra.mxu0 0
  %799 = vmatprep.subr.bf16.mxu0 0
  %800 = vmatpush1.bf16.msra.mxu0 0
  %801 = vmatprep.subr.bf16.mxu0 0
  %802 = vmatpush1.bf16.msra.mxu0 0
  %803 = vmatprep.subr.bf16.mxu0 0
  %804 = vmatpush1.bf16.msra.mxu0 0
  %805 = vmatprep.subr.bf16.mxu0 0
  %806 = vmatpush1.bf16.msra.mxu0 0
  %807 = vmatprep.subr.bf16.mxu0 0
  %808 = vmatpush1.bf16.msra.mxu0 0
  %809 = vmatprep.mubr.bf16.mxu0 0
  %810 = vmatmul.mubr.bf16.gmra.mrb[0].mxu0 %v768
  %v811 = vpop.f32.mrb[0].mxu0
  %v812 = vadd.f32 %v754, %v811
  %v813 = vpop.f32.mrb[0].mxu0
  %v814 = vadd.f32 %v754, %v813
  %v815 = vpop.f32.mrb[0].mxu0
  %v816 = vadd.f32 %v759, %v815
  %v817 = vpop.f32.mrb[0].mxu0
  %v818 = vadd.f32 %v759, %v817
  %819 = vdwg.mxu0
  %v820 = vadd.f32 %v812, %v45
  %v821 = vadd.f32 %v814, %v46
  %v822 = vadd.f32 %v816, %v47
  %v823 = vadd.f32 %v818, %v48
  %v824 = vld [vmem:[%s6] sm:$0xff]
  %v825 = vld [vmem:[%s6 + $0x8] sm:$0xff]
  %v826 = vld [vmem:[%s7] sm:$0xff]
  %v827 = vld [vmem:[%s7 + $0x8] sm:$0xff]
  %v828 = vadd.f32 %v820, %v822
  %v829 = vrot.slane %v828, 4
  %v830 = vadd.f32 %v828, %v829
  %v831 = vrot.slane %v830, 2
  %v832 = vadd.f32 %v830, %v831
  %v833 = vrot.slane %v832, 1
  %v834 = vadd.f32 %v832, %v833
  %v835 = vadd.f32 %v821, %v823
  %v836 = vrot.slane %v835, 4
  %v837 = vadd.f32 %v835, %v836
  %v838 = vrot.slane %v837, 2
  %v839 = vadd.f32 %v837, %v838
  %v840 = vrot.slane %v839, 1
  %v841 = vadd.f32 %v839, %v840
  %v842 = vrcp.pop 16.0
  %v843 = vmul.f32 %v834, %v842
  %v844 = vmul.f32 %v841, %v842
  %v845 = vsub.f32 %v820, %v843
  %v846 = vsub.f32 %v821, %v844
  %v847 = vsub.f32 %v822, %v843
  %v848 = vsub.f32 %v823, %v844
  %v849 = vmul.f32 %v845, %v845
  %v850 = vmul.f32 %v846, %v846
  %v851 = vmul.f32 %v847, %v847
  %v852 = vmul.f32 %v848, %v848
  %v853 = vadd.f32 %v849, %v851
  %v854 = vrot.slane %v853, 4
  %v855 = vadd.f32 %v853, %v854
  %v856 = vrot.slane %v855, 2
  %v857 = vadd.f32 %v855, %v856
  %v858 = vrot.slane %v857, 1
  %v859 = vadd.f32 %v857, %v858
  %v860 = vadd.f32 %v850, %v852
  %v861 = vrot.slane %v860, 4
  %v862 = vadd.f32 %v860, %v861
  %v863 = vrot.slane %v862, 2
  %v864 = vadd.f32 %v862, %v863
  %v865 = vrot.slane %v864, 1
  %v866 = vadd.f32 %v864, %v865
  %v867 = vmul.f32 %v859, %v842
  %v868 = vmul.f32 %v866, %v842
  %v869 = vadd.f32 %v867, 1e-05
  %v870 = vadd.f32 %v868, 1e-05
  %v871 = vrsqrt.pop %v869
  %v872 = vrsqrt.pop %v870
  %v873 = vmul.f32 %v845, %v871
  %v874 = vmul.f32 %v846, %v872
  %v875 = vmul.f32 %v847, %v871
  %v876 = vmul.f32 %v848, %v872
  %878 = vset.pattern.permute.xlu0 0
  %879 = vperm.xlu0 %878, %v824
  %v880 = vpop.permute.xlu0 %879
  %883 = vset.pattern.permute.xlu0 0
  %884 = vperm.xlu0 %883, %v825
  %v885 = vpop.permute.xlu0 %884
  %v887 = vmul.f32 %v873, %v880
  %v888 = vmul.f32 %v874, %v880
  %v889 = vmul.f32 %v875, %v885
  %v890 = vmul.f32 %v876, %v885
  %892 = vset.pattern.permute.xlu0 0
  %893 = vperm.xlu0 %892, %v826
  %v894 = vpop.permute.xlu0 %893
  %897 = vset.pattern.permute.xlu0 0
  %898 = vperm.xlu0 %897, %v827
  %v899 = vpop.permute.xlu0 %898
  %v901 = vadd.f32 %v887, %v894
  %v902 = vadd.f32 %v888, %v894
  %v903 = vadd.f32 %v889, %v899
  %v904 = vadd.f32 %v890, %v899
  %v905 = vld [vmem:[%s8] sm:$0xf]
  %v906 = vld [vmem:[%s8 + $0x4] sm:$0xf]
  %v907 = vld [vmem:[%s8 + $0x8] sm:$0xf]
  %v908 = vld [vmem:[%s8 + $0xc] sm:$0xf]
  %v909 = vld [vmem:[%s8 + $0x10] sm:$0xf]
  %v910 = vld [vmem:[%s8 + $0x14] sm:$0xf]
  %v911 = vld [vmem:[%s8 + $0x18] sm:$0xf]
  %v912 = vld [vmem:[%s8 + $0x1c] sm:$0xf]
  %v913 = vpack.c.bf16 %v903, %v901
  %v914 = vpack.c.bf16 %v904, %v902
  %v915 = vld [vmem:[%s9] sm:$0xff]
  %v916 = vld [vmem:[%s9 + $0x8] sm:$0xff]
  %v917 = vld [vmem:[%s9 + $0x10] sm:$0xff]
  %v918 = vld [vmem:[%s9 + $0x18] sm:$0xff]
  %v919 = vld [vmem:[%s9 + $0x20] sm:$0xff]
  %v920 = vld [vmem:[%s9 + $0x28] sm:$0xff]
  %v921 = vld [vmem:[%s9 + $0x30] sm:$0xff]
  %v922 = vld [vmem:[%s9 + $0x38] sm:$0xff]
  %924 = vset.pattern.permute.xlu0 0
  %925 = vperm.xlu0 %924, %v915
  %v926 = vpop.permute.xlu0 %925
  %929 = vset.pattern.permute.xlu0 0
  %930 = vperm.xlu0 %929, %v916
  %v931 = vpop.permute.xlu0 %930
  %934 = vset.pattern.permute.xlu0 0
  %935 = vperm.xlu0 %934, %v917
  %v936 = vpop.permute.xlu0 %935
  %939 = vset.pattern.permute.xlu0 0
  %940 = vperm.xlu0 %939, %v918
  %v941 = vpop.permute.xlu0 %940
  %944 = vset.pattern.permute.xlu0 0
  %945 = vperm.xlu0 %944, %v919
  %v946 = vpop.permute.xlu0 %945
  %949 = vset.pattern.permute.xlu0 0
  %950 = vperm.xlu0 %949, %v920
  %v951 = vpop.permute.xlu0 %950
  %954 = vset.pattern.permute.xlu0 0
  %955 = vperm.xlu0 %954, %v921
  %v956 = vpop.permute.xlu0 %955
  %959 = vset.pattern.permute.xlu0 0
  %960 = vperm.xlu0 %959, %v922
  %v961 = vpop.permute.xlu0 %960
  %v971 = vunpack.c.l.b16 %v905
  %v972 = vunpack.c.l.b16 %v906
  %v973 = vunpack.c.l.b16 %v907
  %v974 = vunpack.c.l.b16 %v908
  %v975 = vunpack.c.l.b16 %v909
  %v976 = vunpack.c.l.b16 %v910
  %v977 = vunpack.c.l.b16 %v911
  %v978 = vunpack.c.l.b16 %v912
  %v979 = vpack.c.b16 %v972, %v971
  %v980 = vpack.c.b16 %v974, %v973
  %v981 = vpack.c.b16 %v976, %v975
  %v982 = vpack.c.b16 %v978, %v977
  %vm983 = vcmask 130048
  %v985 = vsel %vm983, %v979, 0
  %v988 = vsel %vm983, %v980, 0
  %v991 = vsel %vm983, %v981, 0
  %v994 = vsel %vm983, %v982, 0
  %996 = vmatprep.subr.bf16.mxu0 %v914
  %997 = vmatpush1.bf16.msra.mxu0 %v913
  %998 = vmatprep.subr.bf16.mxu0 0
  %999 = vmatpush1.bf16.msra.mxu0 0
  %1000 = vmatprep.subr.bf16.mxu0 0
  %1001 = vmatpush1.bf16.msra.mxu0 0
  %1002 = vmatprep.subr.bf16.mxu0 0
  %1003 = vmatpush1.bf16.msra.mxu0 0
  %1004 = vmatprep.subr.bf16.mxu0 0
  %1005 = vmatpush1.bf16.msra.mxu0 0
  %1006 = vmatprep.subr.bf16.mxu0 0
  %1007 = vmatpush1.bf16.msra.mxu0 0
  %1008 = vmatprep.subr.bf16.mxu0 0
  %1009 = vmatpush1.bf16.msra.mxu0 0
  %1010 = vmatprep.subr.bf16.mxu0 0
  %1011 = vmatpush1.bf16.msra.mxu0 0
  %1012 = vmatprep.subr.bf16.mxu0 0
  %1013 = vmatpush1.bf16.msra.mxu0 0
  %1014 = vmatprep.subr.bf16.mxu0 0
  %1015 = vmatpush1.bf16.msra.mxu0 0
  %1016 = vmatprep.subr.bf16.mxu0 0
  %1017 = vmatpush1.bf16.msra.mxu0 0
  %1018 = vmatprep.subr.bf16.mxu0 0
  %1019 = vmatpush1.bf16.msra.mxu0 0
  %1020 = vmatprep.subr.bf16.mxu0 0
  %1021 = vmatpush1.bf16.msra.mxu0 0
  %1022 = vmatprep.subr.bf16.mxu0 0
  %1023 = vmatpush1.bf16.msra.mxu0 0
  %1024 = vmatprep.subr.bf16.mxu0 0
  %1025 = vmatpush1.bf16.msra.mxu0 0
  %1026 = vmatprep.subr.bf16.mxu0 0
  %1027 = vmatpush1.bf16.msra.mxu0 0
  %1028 = vmatprep.mubr.bf16.mxu0 0
  %1029 = vmatmul.mubr.bf16.gmra.mrb[0].mxu0 %v985
  %v1030 = vpop.f32.mrb[0].mxu0
  %v1031 = vadd.f32 %v926, %v1030
  %v1032 = vpop.f32.mrb[0].mxu0
  %v1033 = vadd.f32 %v926, %v1032
  %v1034 = vpop.f32.mrb[0].mxu0
  %v1035 = vadd.f32 %v931, %v1034
  %v1036 = vpop.f32.mrb[0].mxu0
  %v1037 = vadd.f32 %v931, %v1036
  %1038 = vmatprep.mubr.bf16.mxu0 0
  %1039 = vmatmul.mubr.bf16.gmra.mrb[0].mxu0 %v988
  %v1040 = vpop.f32.mrb[0].mxu0
  %v1041 = vadd.f32 %v936, %v1040
  %v1042 = vpop.f32.mrb[0].mxu0
  %v1043 = vadd.f32 %v936, %v1042
  %v1044 = vpop.f32.mrb[0].mxu0
  %v1045 = vadd.f32 %v941, %v1044
  %v1046 = vpop.f32.mrb[0].mxu0
  %v1047 = vadd.f32 %v941, %v1046
  %1048 = vmatprep.mubr.bf16.mxu0 0
  %1049 = vmatmul.mubr.bf16.gmra.mrb[0].mxu0 %v991
  %v1050 = vpop.f32.mrb[0].mxu0
  %v1051 = vadd.f32 %v946, %v1050
  %v1052 = vpop.f32.mrb[0].mxu0
  %v1053 = vadd.f32 %v946, %v1052
  %v1054 = vpop.f32.mrb[0].mxu0
  %v1055 = vadd.f32 %v951, %v1054
  %v1056 = vpop.f32.mrb[0].mxu0
  %v1057 = vadd.f32 %v951, %v1056
  %1058 = vmatprep.mubr.bf16.mxu0 0
  %1059 = vmatmul.mubr.bf16.gmra.mrb[0].mxu0 %v994
  %v1060 = vpop.f32.mrb[0].mxu0
  %v1061 = vadd.f32 %v956, %v1060
  %v1062 = vpop.f32.mrb[0].mxu0
  %v1063 = vadd.f32 %v956, %v1062
  %v1064 = vpop.f32.mrb[0].mxu0
  %v1065 = vadd.f32 %v961, %v1064
  %v1066 = vpop.f32.mrb[0].mxu0
  %v1067 = vadd.f32 %v961, %v1066
  %1068 = vdwg.mxu0
  %v1069 = vmul.f32 %v1031, %v1031
  %v1070 = vmul.f32 %v1033, %v1033
  %v1071 = vmul.f32 %v1035, %v1035
  %v1072 = vmul.f32 %v1037, %v1037
  %v1073 = vmul.f32 %v1041, %v1041
  %v1074 = vmul.f32 %v1043, %v1043
  %v1075 = vmul.f32 %v1045, %v1045
  %v1076 = vmul.f32 %v1047, %v1047
  %v1077 = vmul.f32 %v1051, %v1051
  %v1078 = vmul.f32 %v1053, %v1053
  %v1079 = vmul.f32 %v1055, %v1055
  %v1080 = vmul.f32 %v1057, %v1057
  %v1081 = vmul.f32 %v1061, %v1061
  %v1082 = vmul.f32 %v1063, %v1063
  %v1083 = vmul.f32 %v1065, %v1065
  %v1084 = vmul.f32 %v1067, %v1067
  %v1085 = vmul.f32 %v1031, %v1069
  %v1086 = vmul.f32 %v1033, %v1070
  %v1087 = vmul.f32 %v1035, %v1071
  %v1088 = vmul.f32 %v1037, %v1072
  %v1089 = vmul.f32 %v1041, %v1073
  %v1090 = vmul.f32 %v1043, %v1074
  %v1091 = vmul.f32 %v1045, %v1075
  %v1092 = vmul.f32 %v1047, %v1076
  %v1093 = vmul.f32 %v1051, %v1077
  %v1094 = vmul.f32 %v1053, %v1078
  %v1095 = vmul.f32 %v1055, %v1079
  %v1096 = vmul.f32 %v1057, %v1080
  %v1097 = vmul.f32 %v1061, %v1081
  %v1098 = vmul.f32 %v1063, %v1082
  %v1099 = vmul.f32 %v1065, %v1083
  %v1100 = vmul.f32 %v1067, %v1084
  %v1101 = vmul.f32 %v1085, 0.044715
  %v1102 = vmul.f32 %v1086, 0.044715
  %v1103 = vmul.f32 %v1087, 0.044715
  %v1104 = vmul.f32 %v1088, 0.044715
  %v1105 = vmul.f32 %v1089, 0.044715
  %v1106 = vmul.f32 %v1090, 0.044715
  %v1107 = vmul.f32 %v1091, 0.044715
  %v1108 = vmul.f32 %v1092, 0.044715
  %v1109 = vmul.f32 %v1093, 0.044715
  %v1110 = vmul.f32 %v1094, 0.044715
  %v1111 = vmul.f32 %v1095, 0.044715
  %v1112 = vmul.f32 %v1096, 0.044715
  %v1113 = vmul.f32 %v1097, 0.044715
  %v1114 = vmul.f32 %v1098, 0.044715
  %v1115 = vmul.f32 %v1099, 0.044715
  %v1116 = vmul.f32 %v1100, 0.044715
  %v1117 = vadd.f32 %v1031, %v1101
  %v1118 = vadd.f32 %v1033, %v1102
  %v1119 = vadd.f32 %v1035, %v1103
  %v1120 = vadd.f32 %v1037, %v1104
  %v1121 = vadd.f32 %v1041, %v1105
  %v1122 = vadd.f32 %v1043, %v1106
  %v1123 = vadd.f32 %v1045, %v1107
  %v1124 = vadd.f32 %v1047, %v1108
  %v1125 = vadd.f32 %v1051, %v1109
  %v1126 = vadd.f32 %v1053, %v1110
  %v1127 = vadd.f32 %v1055, %v1111
  %v1128 = vadd.f32 %v1057, %v1112
  %v1129 = vadd.f32 %v1061, %v1113
  %v1130 = vadd.f32 %v1063, %v1114
  %v1131 = vadd.f32 %v1065, %v1115
  %v1132 = vadd.f32 %v1067, %v1116
  %v1133 = vmul.f32 %v1117, 0.7978846
  %v1134 = vmul.f32 %v1118, 0.7978846
  %v1135 = vmul.f32 %v1119, 0.7978846
  %v1136 = vmul.f32 %v1120, 0.7978846
  %v1137 = vmul.f32 %v1121, 0.7978846
  %v1138 = vmul.f32 %v1122, 0.7978846
  %v1139 = vmul.f32 %v1123, 0.7978846
  %v1140 = vmul.f32 %v1124, 0.7978846
  %v1141 = vmul.f32 %v1125, 0.7978846
  %v1142 = vmul.f32 %v1126, 0.7978846
  %v1143 = vmul.f32 %v1127, 0.7978846
  %v1144 = vmul.f32 %v1128, 0.7978846
  %v1145 = vmul.f32 %v1129, 0.7978846
  %v1146 = vmul.f32 %v1130, 0.7978846
  %v1147 = vmul.f32 %v1131, 0.7978846
  %v1148 = vmul.f32 %v1132, 0.7978846
  %v1149 = vtanh.pop %v1133
  %v1150 = vtanh.pop %v1134
  %v1151 = vtanh.pop %v1135
  %v1152 = vtanh.pop %v1136
  %v1153 = vtanh.pop %v1137
  %v1154 = vtanh.pop %v1138
  %v1155 = vtanh.pop %v1139
  %v1156 = vtanh.pop %v1140
  %v1157 = vtanh.pop %v1141
  %v1158 = vtanh.pop %v1142
  %v1159 = vtanh.pop %v1143
  %v1160 = vtanh.pop %v1144
  %v1161 = vtanh.pop %v1145
  %v1162 = vtanh.pop %v1146
  %v1163 = vtanh.pop %v1147
  %v1164 = vtanh.pop %v1148
  %v1165 = vadd.f32 %v1149, 1.0
  %v1166 = vadd.f32 %v1150, 1.0
  %v1167 = vadd.f32 %v1151, 1.0
  %v1168 = vadd.f32 %v1152, 1.0
  %v1169 = vadd.f32 %v1153, 1.0
  %v1170 = vadd.f32 %v1154, 1.0
  %v1171 = vadd.f32 %v1155, 1.0
  %v1172 = vadd.f32 %v1156, 1.0
  %v1173 = vadd.f32 %v1157, 1.0
  %v1174 = vadd.f32 %v1158, 1.0
  %v1175 = vadd.f32 %v1159, 1.0
  %v1176 = vadd.f32 %v1160, 1.0
  %v1177 = vadd.f32 %v1161, 1.0
  %v1178 = vadd.f32 %v1162, 1.0
  %v1179 = vadd.f32 %v1163, 1.0
  %v1180 = vadd.f32 %v1164, 1.0
  %v1181 = vmul.f32 %v1165, 0.5
  %v1182 = vmul.f32 %v1166, 0.5
  %v1183 = vmul.f32 %v1167, 0.5
  %v1184 = vmul.f32 %v1168, 0.5
  %v1185 = vmul.f32 %v1169, 0.5
  %v1186 = vmul.f32 %v1170, 0.5
  %v1187 = vmul.f32 %v1171, 0.5
  %v1188 = vmul.f32 %v1172, 0.5
  %v1189 = vmul.f32 %v1173, 0.5
  %v1190 = vmul.f32 %v1174, 0.5
  %v1191 = vmul.f32 %v1175, 0.5
  %v1192 = vmul.f32 %v1176, 0.5
  %v1193 = vmul.f32 %v1177, 0.5
  %v1194 = vmul.f32 %v1178, 0.5
  %v1195 = vmul.f32 %v1179, 0.5
  %v1196 = vmul.f32 %v1180, 0.5
  %v1197 = vmul.f32 %v1031, %v1181
  %v1198 = vmul.f32 %v1033, %v1182
  %v1199 = vmul.f32 %v1035, %v1183
  %v1200 = vmul.f32 %v1037, %v1184
  %v1201 = vmul.f32 %v1041, %v1185
  %v1202 = vmul.f32 %v1043, %v1186
  %v1203 = vmul.f32 %v1045, %v1187
  %v1204 = vmul.f32 %v1047, %v1188
  %v1205 = vmul.f32 %v1051, %v1189
  %v1206 = vmul.f32 %v1053, %v1190
  %v1207 = vmul.f32 %v1055, %v1191
  %v1208 = vmul.f32 %v1057, %v1192
  %v1209 = vmul.f32 %v1061, %v1193
  %v1210 = vmul.f32 %v1063, %v1194
  %v1211 = vmul.f32 %v1065, %v1195
  %v1212 = vmul.f32 %v1067, %v1196
  %v1213 = vld [vmem:[%s10] sm:$0xff]
  %v1214 = vld [vmem:[%s10 + $0x8] sm:$0xff]
  %v1215 = vld [vmem:[%s10 + $0x10] sm:$0xff]
  %v1216 = vld [vmem:[%s10 + $0x18] sm:$0xff]
  %v1217 = vld [vmem:[%s10 + $0x20] sm:$0xff]
  %v1218 = vld [vmem:[%s10 + $0x28] sm:$0xff]
  %v1219 = vld [vmem:[%s10 + $0x30] sm:$0xff]
  %v1220 = vld [vmem:[%s10 + $0x38] sm:$0xff]
  %1221 = vrot.lane.b32.xlu0 %v1197, 9
  %v1222 = vpop.permute.xlu0 %1221
  %1223 = vrot.lane.b32.xlu0 %v1199, 9
  %v1224 = vpop.permute.xlu0 %1223
  %1225 = vrot.lane.b32.xlu0 %v1201, 9
  %v1226 = vpop.permute.xlu0 %1225
  %1227 = vrot.lane.b32.xlu0 %v1203, 9
  %v1228 = vpop.permute.xlu0 %1227
  %1229 = vrot.lane.b32.xlu0 %v1205, 9
  %v1230 = vpop.permute.xlu0 %1229
  %1231 = vrot.lane.b32.xlu0 %v1207, 9
  %v1232 = vpop.permute.xlu0 %1231
  %1233 = vrot.lane.b32.xlu0 %v1209, 9
  %v1234 = vpop.permute.xlu0 %1233
  %1235 = vrot.lane.b32.xlu0 %v1211, 9
  %v1236 = vpop.permute.xlu0 %1235
  %1237 = vrot.lane.b32.xlu0 %v1198, 9
  %v1238 = vpop.permute.xlu0 %1237
  %1239 = vrot.lane.b32.xlu0 %v1200, 9
  %v1240 = vpop.permute.xlu0 %1239
  %1241 = vrot.lane.b32.xlu0 %v1202, 9
  %v1242 = vpop.permute.xlu0 %1241
  %1243 = vrot.lane.b32.xlu0 %v1204, 9
  %v1244 = vpop.permute.xlu0 %1243
  %1245 = vrot.lane.b32.xlu0 %v1206, 9
  %v1246 = vpop.permute.xlu0 %1245
  %1247 = vrot.lane.b32.xlu0 %v1208, 9
  %v1248 = vpop.permute.xlu0 %1247
  %1249 = vrot.lane.b32.xlu0 %v1210, 9
  %v1250 = vpop.permute.xlu0 %1249
  %1251 = vrot.lane.b32.xlu0 %v1212, 9
  %v1252 = vpop.permute.xlu0 %1251
  %v1253 = vsel %vm79, %v1222, %v1238
  %v1254 = vsel %vm79, %v1224, %v1240
  %v1255 = vsel %vm79, %v1226, %v1242
  %v1256 = vsel %vm79, %v1228, %v1244
  %v1257 = vsel %vm79, %v1230, %v1246
  %v1258 = vsel %vm79, %v1232, %v1248
  %v1259 = vsel %vm79, %v1234, %v1250
  %v1260 = vsel %vm79, %v1236, %v1252
  %v1261 = vsel %vm79, %v1238, %v1222
  %v1262 = vsel %vm79, %v1240, %v1224
  %v1263 = vsel %vm79, %v1242, %v1226
  %v1264 = vsel %vm79, %v1244, %v1228
  %v1265 = vsel %vm79, %v1246, %v1230
  %v1266 = vsel %vm79, %v1248, %v1232
  %v1267 = vsel %vm79, %v1250, %v1234
  %v1268 = vsel %vm79, %v1252, %v1236
  %v1269 = vmul.f32 %v1261, %v93
  %v1270 = vmul.f32 %v1253, %v97
  %v1271 = vmul.f32 %v1262, %v93
  %v1272 = vmul.f32 %v1254, %v97
  %v1273 = vmul.f32 %v1263, %v93
  %v1274 = vmul.f32 %v1255, %v97
  %v1275 = vmul.f32 %v1264, %v93
  %v1276 = vmul.f32 %v1256, %v97
  %v1277 = vmul.f32 %v1265, %v93
  %v1278 = vmul.f32 %v1257, %v97
  %v1279 = vmul.f32 %v1266, %v93
  %v1280 = vmul.f32 %v1258, %v97
  %v1281 = vmul.f32 %v1267, %v93
  %v1282 = vmul.f32 %v1259, %v97
  %v1283 = vmul.f32 %v1268, %v93
  %v1284 = vmul.f32 %v1260, %v97
  %1286 = vset.pattern.permute.xlu0 0
  %1287 = vperm.xlu0 %1286, %v1213
  %v1288 = vpop.permute.xlu0 %1287
  %1291 = vset.pattern.permute.xlu0 0
  %1292 = vperm.xlu0 %1291, %v1214
  %v1293 = vpop.permute.xlu0 %1292
  %1296 = vset.pattern.permute.xlu0 0
  %1297 = vperm.xlu0 %1296, %v1215
  %v1298 = vpop.permute.xlu0 %1297
  %1301 = vset.pattern.permute.xlu0 0
  %1302 = vperm.xlu0 %1301, %v1216
  %v1303 = vpop.permute.xlu0 %1302
  %1306 = vset.pattern.permute.xlu0 0
  %1307 = vperm.xlu0 %1306, %v1217
  %v1308 = vpop.permute.xlu0 %1307
  %1311 = vset.pattern.permute.xlu0 0
  %1312 = vperm.xlu0 %1311, %v1218
  %v1313 = vpop.permute.xlu0 %1312
  %1316 = vset.pattern.permute.xlu0 0
  %1317 = vperm.xlu0 %1316, %v1219
  %v1318 = vpop.permute.xlu0 %1317
  %1321 = vset.pattern.permute.xlu0 0
  %1322 = vperm.xlu0 %1321, %v1220
  %v1323 = vpop.permute.xlu0 %1322
  %v1325 = vmul.f32 %v1269, %v1288
  %v1326 = vmul.f32 %v1270, %v1288
  %v1327 = vmul.f32 %v1271, %v1293
  %v1328 = vmul.f32 %v1272, %v1293
  %v1329 = vmul.f32 %v1273, %v1298
  %v1330 = vmul.f32 %v1274, %v1298
  %v1331 = vmul.f32 %v1275, %v1303
  %v1332 = vmul.f32 %v1276, %v1303
  %v1333 = vmul.f32 %v1277, %v1308
  %v1334 = vmul.f32 %v1278, %v1308
  %v1335 = vmul.f32 %v1279, %v1313
  %v1336 = vmul.f32 %v1280, %v1313
  %v1337 = vmul.f32 %v1281, %v1318
  %v1338 = vmul.f32 %v1282, %v1318
  %v1339 = vmul.f32 %v1283, %v1323
  %v1340 = vmul.f32 %v1284, %v1323
  %v1341 = vadd.f32 %v1325, 0.0
  %v1342 = vadd.f32 %v1326, 0.0
  %v1343 = vadd.f32 %v1327, 0.0
  %v1344 = vadd.f32 %v1328, 0.0
  %v1345 = vadd.f32 %v1329, 0.0
  %v1346 = vadd.f32 %v1330, 0.0
  %v1347 = vadd.f32 %v1331, 0.0
  %v1348 = vadd.f32 %v1332, 0.0
  %v1349 = vadd.f32 %v1333, 0.0
  %v1350 = vadd.f32 %v1334, 0.0
  %v1351 = vadd.f32 %v1335, 0.0
  %v1352 = vadd.f32 %v1336, 0.0
  %v1353 = vadd.f32 %v1337, 0.0
  %v1354 = vadd.f32 %v1338, 0.0
  %v1355 = vadd.f32 %v1339, 0.0
  %v1356 = vadd.f32 %v1340, 0.0
  %1357 = vrot.lane.b32.xlu0 %v1197, 8
  %v1358 = vpop.permute.xlu0 %1357
  %1359 = vrot.lane.b32.xlu0 %v1199, 8
  %v1360 = vpop.permute.xlu0 %1359
  %1361 = vrot.lane.b32.xlu0 %v1201, 8
  %v1362 = vpop.permute.xlu0 %1361
  %1363 = vrot.lane.b32.xlu0 %v1203, 8
  %v1364 = vpop.permute.xlu0 %1363
  %1365 = vrot.lane.b32.xlu0 %v1205, 8
  %v1366 = vpop.permute.xlu0 %1365
  %1367 = vrot.lane.b32.xlu0 %v1207, 8
  %v1368 = vpop.permute.xlu0 %1367
  %1369 = vrot.lane.b32.xlu0 %v1209, 8
  %v1370 = vpop.permute.xlu0 %1369
  %1371 = vrot.lane.b32.xlu0 %v1211, 8
  %v1372 = vpop.permute.xlu0 %1371
  %1373 = vrot.lane.b32.xlu0 %v1198, 8
  %v1374 = vpop.permute.xlu0 %1373
  %1375 = vrot.lane.b32.xlu0 %v1200, 8
  %v1376 = vpop.permute.xlu0 %1375
  %1377 = vrot.lane.b32.xlu0 %v1202, 8
  %v1378 = vpop.permute.xlu0 %1377
  %1379 = vrot.lane.b32.xlu0 %v1204, 8
  %v1380 = vpop.permute.xlu0 %1379
  %1381 = vrot.lane.b32.xlu0 %v1206, 8
  %v1382 = vpop.permute.xlu0 %1381
  %1383 = vrot.lane.b32.xlu0 %v1208, 8
  %v1384 = vpop.permute.xlu0 %1383
  %1385 = vrot.lane.b32.xlu0 %v1210, 8
  %v1386 = vpop.permute.xlu0 %1385
  %1387 = vrot.lane.b32.xlu0 %v1212, 8
  %v1388 = vpop.permute.xlu0 %1387
  %v1389 = vsel %vm160, %v1358, %v1374
  %v1390 = vsel %vm160, %v1360, %v1376
  %v1391 = vsel %vm160, %v1362, %v1378
  %v1392 = vsel %vm160, %v1364, %v1380
  %v1393 = vsel %vm160, %v1366, %v1382
  %v1394 = vsel %vm160, %v1368, %v1384
  %v1395 = vsel %vm160, %v1370, %v1386
  %v1396 = vsel %vm160, %v1372, %v1388
  %v1397 = vsel %vm160, %v1374, %v1358
  %v1398 = vsel %vm160, %v1376, %v1360
  %v1399 = vsel %vm160, %v1378, %v1362
  %v1400 = vsel %vm160, %v1380, %v1364
  %v1401 = vsel %vm160, %v1382, %v1366
  %v1402 = vsel %vm160, %v1384, %v1368
  %v1403 = vsel %vm160, %v1386, %v1370
  %v1404 = vsel %vm160, %v1388, %v1372
  %v1405 = vmul.f32 %v1397, %v175
  %v1406 = vmul.f32 %v1389, %v179
  %v1407 = vmul.f32 %v1398, %v175
  %v1408 = vmul.f32 %v1390, %v179
  %v1409 = vmul.f32 %v1399, %v175
  %v1410 = vmul.f32 %v1391, %v179
  %v1411 = vmul.f32 %v1400, %v175
  %v1412 = vmul.f32 %v1392, %v179
  %v1413 = vmul.f32 %v1401, %v175
  %v1414 = vmul.f32 %v1393, %v179
  %v1415 = vmul.f32 %v1402, %v175
  %v1416 = vmul.f32 %v1394, %v179
  %v1417 = vmul.f32 %v1403, %v175
  %v1418 = vmul.f32 %v1395, %v179
  %v1419 = vmul.f32 %v1404, %v175
  %v1420 = vmul.f32 %v1396, %v179
  %1421 = vset.pattern.permute.xlu0 1
  %1422 = vperm.xlu0 %1421, %v1213
  %v1423 = vpop.permute.xlu0 %1422
  %1425 = vset.pattern.permute.xlu0 1
  %1426 = vperm.xlu0 %1425, %v1214
  %v1427 = vpop.permute.xlu0 %1426
  %1429 = vset.pattern.permute.xlu0 1
  %1430 = vperm.xlu0 %1429, %v1215
  %v1431 = vpop.permute.xlu0 %1430
  %1433 = vset.pattern.permute.xlu0 1
  %1434 = vperm.xlu0 %1433, %v1216
  %v1435 = vpop.permute.xlu0 %1434
  %1437 = vset.pattern.permute.xlu0 1
  %1438 = vperm.xlu0 %1437, %v1217
  %v1439 = vpop.permute.xlu0 %1438
  %1441 = vset.pattern.permute.xlu0 1
  %1442 = vperm.xlu0 %1441, %v1218
  %v1443 = vpop.permute.xlu0 %1442
  %1445 = vset.pattern.permute.xlu0 1
  %1446 = vperm.xlu0 %1445, %v1219
  %v1447 = vpop.permute.xlu0 %1446
  %1449 = vset.pattern.permute.xlu0 1
  %1450 = vperm.xlu0 %1449, %v1220
  %v1451 = vpop.permute.xlu0 %1450
  %v1453 = vmul.f32 %v1405, %v1423
  %v1454 = vmul.f32 %v1406, %v1423
  %v1455 = vmul.f32 %v1407, %v1427
  %v1456 = vmul.f32 %v1408, %v1427
  %v1457 = vmul.f32 %v1409, %v1431
  %v1458 = vmul.f32 %v1410, %v1431
  %v1459 = vmul.f32 %v1411, %v1435
  %v1460 = vmul.f32 %v1412, %v1435
  %v1461 = vmul.f32 %v1413, %v1439
  %v1462 = vmul.f32 %v1414, %v1439
  %v1463 = vmul.f32 %v1415, %v1443
  %v1464 = vmul.f32 %v1416, %v1443
  %v1465 = vmul.f32 %v1417, %v1447
  %v1466 = vmul.f32 %v1418, %v1447
  %v1467 = vmul.f32 %v1419, %v1451
  %v1468 = vmul.f32 %v1420, %v1451
  %v1469 = vadd.f32 %v1341, %v1453
  %v1470 = vadd.f32 %v1342, %v1454
  %v1471 = vadd.f32 %v1343, %v1455
  %v1472 = vadd.f32 %v1344, %v1456
  %v1473 = vadd.f32 %v1345, %v1457
  %v1474 = vadd.f32 %v1346, %v1458
  %v1475 = vadd.f32 %v1347, %v1459
  %v1476 = vadd.f32 %v1348, %v1460
  %v1477 = vadd.f32 %v1349, %v1461
  %v1478 = vadd.f32 %v1350, %v1462
  %v1479 = vadd.f32 %v1351, %v1463
  %v1480 = vadd.f32 %v1352, %v1464
  %v1481 = vadd.f32 %v1353, %v1465
  %v1482 = vadd.f32 %v1354, %v1466
  %v1483 = vadd.f32 %v1355, %v1467
  %v1484 = vadd.f32 %v1356, %v1468
  %1485 = vrot.lane.b32.xlu0 %v1197, 7
  %v1486 = vpop.permute.xlu0 %1485
  %1487 = vrot.lane.b32.xlu0 %v1199, 7
  %v1488 = vpop.permute.xlu0 %1487
  %1489 = vrot.lane.b32.xlu0 %v1201, 7
  %v1490 = vpop.permute.xlu0 %1489
  %1491 = vrot.lane.b32.xlu0 %v1203, 7
  %v1492 = vpop.permute.xlu0 %1491
  %1493 = vrot.lane.b32.xlu0 %v1205, 7
  %v1494 = vpop.permute.xlu0 %1493
  %1495 = vrot.lane.b32.xlu0 %v1207, 7
  %v1496 = vpop.permute.xlu0 %1495
  %1497 = vrot.lane.b32.xlu0 %v1209, 7
  %v1498 = vpop.permute.xlu0 %1497
  %1499 = vrot.lane.b32.xlu0 %v1211, 7
  %v1500 = vpop.permute.xlu0 %1499
  %1501 = vrot.lane.b32.xlu0 %v1198, 7
  %v1502 = vpop.permute.xlu0 %1501
  %1503 = vrot.lane.b32.xlu0 %v1200, 7
  %v1504 = vpop.permute.xlu0 %1503
  %1505 = vrot.lane.b32.xlu0 %v1202, 7
  %v1506 = vpop.permute.xlu0 %1505
  %1507 = vrot.lane.b32.xlu0 %v1204, 7
  %v1508 = vpop.permute.xlu0 %1507
  %1509 = vrot.lane.b32.xlu0 %v1206, 7
  %v1510 = vpop.permute.xlu0 %1509
  %1511 = vrot.lane.b32.xlu0 %v1208, 7
  %v1512 = vpop.permute.xlu0 %1511
  %1513 = vrot.lane.b32.xlu0 %v1210, 7
  %v1514 = vpop.permute.xlu0 %1513
  %1515 = vrot.lane.b32.xlu0 %v1212, 7
  %v1516 = vpop.permute.xlu0 %1515
  %v1517 = vsel %vm238, %v1486, %v1502
  %v1518 = vsel %vm238, %v1488, %v1504
  %v1519 = vsel %vm238, %v1490, %v1506
  %v1520 = vsel %vm238, %v1492, %v1508
  %v1521 = vsel %vm238, %v1494, %v1510
  %v1522 = vsel %vm238, %v1496, %v1512
  %v1523 = vsel %vm238, %v1498, %v1514
  %v1524 = vsel %vm238, %v1500, %v1516
  %v1525 = vsel %vm238, %v1502, %v1486
  %v1526 = vsel %vm238, %v1504, %v1488
  %v1527 = vsel %vm238, %v1506, %v1490
  %v1528 = vsel %vm238, %v1508, %v1492
  %v1529 = vsel %vm238, %v1510, %v1494
  %v1530 = vsel %vm238, %v1512, %v1496
  %v1531 = vsel %vm238, %v1514, %v1498
  %v1532 = vsel %vm238, %v1516, %v1500
  %v1533 = vmul.f32 %v1525, %v253
  %v1534 = vmul.f32 %v1517, %v257
  %v1535 = vmul.f32 %v1526, %v253
  %v1536 = vmul.f32 %v1518, %v257
  %v1537 = vmul.f32 %v1527, %v253
  %v1538 = vmul.f32 %v1519, %v257
  %v1539 = vmul.f32 %v1528, %v253
  %v1540 = vmul.f32 %v1520, %v257
  %v1541 = vmul.f32 %v1529, %v253
  %v1542 = vmul.f32 %v1521, %v257
  %v1543 = vmul.f32 %v1530, %v253
  %v1544 = vmul.f32 %v1522, %v257
  %v1545 = vmul.f32 %v1531, %v253
  %v1546 = vmul.f32 %v1523, %v257
  %v1547 = vmul.f32 %v1532, %v253
  %v1548 = vmul.f32 %v1524, %v257
  %1549 = vset.pattern.permute.xlu0 2
  %1550 = vperm.xlu0 %1549, %v1213
  %v1551 = vpop.permute.xlu0 %1550
  %1553 = vset.pattern.permute.xlu0 2
  %1554 = vperm.xlu0 %1553, %v1214
  %v1555 = vpop.permute.xlu0 %1554
  %1557 = vset.pattern.permute.xlu0 2
  %1558 = vperm.xlu0 %1557, %v1215
  %v1559 = vpop.permute.xlu0 %1558
  %1561 = vset.pattern.permute.xlu0 2
  %1562 = vperm.xlu0 %1561, %v1216
  %v1563 = vpop.permute.xlu0 %1562
  %1565 = vset.pattern.permute.xlu0 2
  %1566 = vperm.xlu0 %1565, %v1217
  %v1567 = vpop.permute.xlu0 %1566
  %1569 = vset.pattern.permute.xlu0 2
  %1570 = vperm.xlu0 %1569, %v1218
  %v1571 = vpop.permute.xlu0 %1570
  %1573 = vset.pattern.permute.xlu0 2
  %1574 = vperm.xlu0 %1573, %v1219
  %v1575 = vpop.permute.xlu0 %1574
  %1577 = vset.pattern.permute.xlu0 2
  %1578 = vperm.xlu0 %1577, %v1220
  %v1579 = vpop.permute.xlu0 %1578
  %v1581 = vmul.f32 %v1533, %v1551
  %v1582 = vmul.f32 %v1534, %v1551
  %v1583 = vmul.f32 %v1535, %v1555
  %v1584 = vmul.f32 %v1536, %v1555
  %v1585 = vmul.f32 %v1537, %v1559
  %v1586 = vmul.f32 %v1538, %v1559
  %v1587 = vmul.f32 %v1539, %v1563
  %v1588 = vmul.f32 %v1540, %v1563
  %v1589 = vmul.f32 %v1541, %v1567
  %v1590 = vmul.f32 %v1542, %v1567
  %v1591 = vmul.f32 %v1543, %v1571
  %v1592 = vmul.f32 %v1544, %v1571
  %v1593 = vmul.f32 %v1545, %v1575
  %v1594 = vmul.f32 %v1546, %v1575
  %v1595 = vmul.f32 %v1547, %v1579
  %v1596 = vmul.f32 %v1548, %v1579
  %v1597 = vadd.f32 %v1469, %v1581
  %v1598 = vadd.f32 %v1470, %v1582
  %v1599 = vadd.f32 %v1471, %v1583
  %v1600 = vadd.f32 %v1472, %v1584
  %v1601 = vadd.f32 %v1473, %v1585
  %v1602 = vadd.f32 %v1474, %v1586
  %v1603 = vadd.f32 %v1475, %v1587
  %v1604 = vadd.f32 %v1476, %v1588
  %v1605 = vadd.f32 %v1477, %v1589
  %v1606 = vadd.f32 %v1478, %v1590
  %v1607 = vadd.f32 %v1479, %v1591
  %v1608 = vadd.f32 %v1480, %v1592
  %v1609 = vadd.f32 %v1481, %v1593
  %v1610 = vadd.f32 %v1482, %v1594
  %v1611 = vadd.f32 %v1483, %v1595
  %v1612 = vadd.f32 %v1484, %v1596
  %1613 = vrot.lane.b32.xlu0 %v1197, 1
  %v1614 = vpop.permute.xlu0 %1613
  %1615 = vrot.lane.b32.xlu0 %v1199, 1
  %v1616 = vpop.permute.xlu0 %1615
  %1617 = vrot.lane.b32.xlu0 %v1201, 1
  %v1618 = vpop.permute.xlu0 %1617
  %1619 = vrot.lane.b32.xlu0 %v1203, 1
  %v1620 = vpop.permute.xlu0 %1619
  %1621 = vrot.lane.b32.xlu0 %v1205, 1
  %v1622 = vpop.permute.xlu0 %1621
  %1623 = vrot.lane.b32.xlu0 %v1207, 1
  %v1624 = vpop.permute.xlu0 %1623
  %1625 = vrot.lane.b32.xlu0 %v1209, 1
  %v1626 = vpop.permute.xlu0 %1625
  %1627 = vrot.lane.b32.xlu0 %v1211, 1
  %v1628 = vpop.permute.xlu0 %1627
  %1629 = vrot.lane.b32.xlu0 %v1198, 1
  %v1630 = vpop.permute.xlu0 %1629
  %1631 = vrot.lane.b32.xlu0 %v1200, 1
  %v1632 = vpop.permute.xlu0 %1631
  %1633 = vrot.lane.b32.xlu0 %v1202, 1
  %v1634 = vpop.permute.xlu0 %1633
  %1635 = vrot.lane.b32.xlu0 %v1204, 1
  %v1636 = vpop.permute.xlu0 %1635
  %1637 = vrot.lane.b32.xlu0 %v1206, 1
  %v1638 = vpop.permute.xlu0 %1637
  %1639 = vrot.lane.b32.xlu0 %v1208, 1
  %v1640 = vpop.permute.xlu0 %1639
  %1641 = vrot.lane.b32.xlu0 %v1210, 1
  %v1642 = vpop.permute.xlu0 %1641
  %1643 = vrot.lane.b32.xlu0 %v1212, 1
  %v1644 = vpop.permute.xlu0 %1643
  %v1645 = vsel %vm316, %v1614, %v1630
  %v1646 = vsel %vm316, %v1616, %v1632
  %v1647 = vsel %vm316, %v1618, %v1634
  %v1648 = vsel %vm316, %v1620, %v1636
  %v1649 = vsel %vm316, %v1622, %v1638
  %v1650 = vsel %vm316, %v1624, %v1640
  %v1651 = vsel %vm316, %v1626, %v1642
  %v1652 = vsel %vm316, %v1628, %v1644
  %v1653 = vsel %vm316, %v1630, %v1614
  %v1654 = vsel %vm316, %v1632, %v1616
  %v1655 = vsel %vm316, %v1634, %v1618
  %v1656 = vsel %vm316, %v1636, %v1620
  %v1657 = vsel %vm316, %v1638, %v1622
  %v1658 = vsel %vm316, %v1640, %v1624
  %v1659 = vsel %vm316, %v1642, %v1626
  %v1660 = vsel %vm316, %v1644, %v1628
  %v1661 = vmul.f32 %v1653, %v331
  %v1662 = vmul.f32 %v1645, %v335
  %v1663 = vmul.f32 %v1654, %v331
  %v1664 = vmul.f32 %v1646, %v335
  %v1665 = vmul.f32 %v1655, %v331
  %v1666 = vmul.f32 %v1647, %v335
  %v1667 = vmul.f32 %v1656, %v331
  %v1668 = vmul.f32 %v1648, %v335
  %v1669 = vmul.f32 %v1657, %v331
  %v1670 = vmul.f32 %v1649, %v335
  %v1671 = vmul.f32 %v1658, %v331
  %v1672 = vmul.f32 %v1650, %v335
  %v1673 = vmul.f32 %v1659, %v331
  %v1674 = vmul.f32 %v1651, %v335
  %v1675 = vmul.f32 %v1660, %v331
  %v1676 = vmul.f32 %v1652, %v335
  %1677 = vset.pattern.permute.xlu0 3
  %1678 = vperm.xlu0 %1677, %v1213
  %v1679 = vpop.permute.xlu0 %1678
  %1681 = vset.pattern.permute.xlu0 3
  %1682 = vperm.xlu0 %1681, %v1214
  %v1683 = vpop.permute.xlu0 %1682
  %1685 = vset.pattern.permute.xlu0 3
  %1686 = vperm.xlu0 %1685, %v1215
  %v1687 = vpop.permute.xlu0 %1686
  %1689 = vset.pattern.permute.xlu0 3
  %1690 = vperm.xlu0 %1689, %v1216
  %v1691 = vpop.permute.xlu0 %1690
  %1693 = vset.pattern.permute.xlu0 3
  %1694 = vperm.xlu0 %1693, %v1217
  %v1695 = vpop.permute.xlu0 %1694
  %1697 = vset.pattern.permute.xlu0 3
  %1698 = vperm.xlu0 %1697, %v1218
  %v1699 = vpop.permute.xlu0 %1698
  %1701 = vset.pattern.permute.xlu0 3
  %1702 = vperm.xlu0 %1701, %v1219
  %v1703 = vpop.permute.xlu0 %1702
  %1705 = vset.pattern.permute.xlu0 3
  %1706 = vperm.xlu0 %1705, %v1220
  %v1707 = vpop.permute.xlu0 %1706
  %v1709 = vmul.f32 %v1661, %v1679
  %v1710 = vmul.f32 %v1662, %v1679
  %v1711 = vmul.f32 %v1663, %v1683
  %v1712 = vmul.f32 %v1664, %v1683
  %v1713 = vmul.f32 %v1665, %v1687
  %v1714 = vmul.f32 %v1666, %v1687
  %v1715 = vmul.f32 %v1667, %v1691
  %v1716 = vmul.f32 %v1668, %v1691
  %v1717 = vmul.f32 %v1669, %v1695
  %v1718 = vmul.f32 %v1670, %v1695
  %v1719 = vmul.f32 %v1671, %v1699
  %v1720 = vmul.f32 %v1672, %v1699
  %v1721 = vmul.f32 %v1673, %v1703
  %v1722 = vmul.f32 %v1674, %v1703
  %v1723 = vmul.f32 %v1675, %v1707
  %v1724 = vmul.f32 %v1676, %v1707
  %v1725 = vadd.f32 %v1597, %v1709
  %v1726 = vadd.f32 %v1598, %v1710
  %v1727 = vadd.f32 %v1599, %v1711
  %v1728 = vadd.f32 %v1600, %v1712
  %v1729 = vadd.f32 %v1601, %v1713
  %v1730 = vadd.f32 %v1602, %v1714
  %v1731 = vadd.f32 %v1603, %v1715
  %v1732 = vadd.f32 %v1604, %v1716
  %v1733 = vadd.f32 %v1605, %v1717
  %v1734 = vadd.f32 %v1606, %v1718
  %v1735 = vadd.f32 %v1607, %v1719
  %v1736 = vadd.f32 %v1608, %v1720
  %v1737 = vadd.f32 %v1609, %v1721
  %v1738 = vadd.f32 %v1610, %v1722
  %v1739 = vadd.f32 %v1611, %v1723
  %v1740 = vadd.f32 %v1612, %v1724
  %v1741 = vmul.f32 %v1197, %v384
  %v1742 = vmul.f32 %v1198, %v388
  %v1743 = vmul.f32 %v1199, %v384
  %v1744 = vmul.f32 %v1200, %v388
  %v1745 = vmul.f32 %v1201, %v384
  %v1746 = vmul.f32 %v1202, %v388
  %v1747 = vmul.f32 %v1203, %v384
  %v1748 = vmul.f32 %v1204, %v388
  %v1749 = vmul.f32 %v1205, %v384
  %v1750 = vmul.f32 %v1206, %v388
  %v1751 = vmul.f32 %v1207, %v384
  %v1752 = vmul.f32 %v1208, %v388
  %v1753 = vmul.f32 %v1209, %v384
  %v1754 = vmul.f32 %v1210, %v388
  %v1755 = vmul.f32 %v1211, %v384
  %v1756 = vmul.f32 %v1212, %v388
  %1757 = vset.pattern.permute.xlu0 4
  %1758 = vperm.xlu0 %1757, %v1213
  %v1759 = vpop.permute.xlu0 %1758
  %1761 = vset.pattern.permute.xlu0 4
  %1762 = vperm.xlu0 %1761, %v1214
  %v1763 = vpop.permute.xlu0 %1762
  %1765 = vset.pattern.permute.xlu0 4
  %1766 = vperm.xlu0 %1765, %v1215
  %v1767 = vpop.permute.xlu0 %1766
  %1769 = vset.pattern.permute.xlu0 4
  %1770 = vperm.xlu0 %1769, %v1216
  %v1771 = vpop.permute.xlu0 %1770
  %1773 = vset.pattern.permute.xlu0 4
  %1774 = vperm.xlu0 %1773, %v1217
  %v1775 = vpop.permute.xlu0 %1774
  %1777 = vset.pattern.permute.xlu0 4
  %1778 = vperm.xlu0 %1777, %v1218
  %v1779 = vpop.permute.xlu0 %1778
  %1781 = vset.pattern.permute.xlu0 4
  %1782 = vperm.xlu0 %1781, %v1219
  %v1783 = vpop.permute.xlu0 %1782
  %1785 = vset.pattern.permute.xlu0 4
  %1786 = vperm.xlu0 %1785, %v1220
  %v1787 = vpop.permute.xlu0 %1786
  %v1789 = vmul.f32 %v1741, %v1759
  %v1790 = vmul.f32 %v1742, %v1759
  %v1791 = vmul.f32 %v1743, %v1763
  %v1792 = vmul.f32 %v1744, %v1763
  %v1793 = vmul.f32 %v1745, %v1767
  %v1794 = vmul.f32 %v1746, %v1767
  %v1795 = vmul.f32 %v1747, %v1771
  %v1796 = vmul.f32 %v1748, %v1771
  %v1797 = vmul.f32 %v1749, %v1775
  %v1798 = vmul.f32 %v1750, %v1775
  %v1799 = vmul.f32 %v1751, %v1779
  %v1800 = vmul.f32 %v1752, %v1779
  %v1801 = vmul.f32 %v1753, %v1783
  %v1802 = vmul.f32 %v1754, %v1783
  %v1803 = vmul.f32 %v1755, %v1787
  %v1804 = vmul.f32 %v1756, %v1787
  %v1805 = vadd.f32 %v1725, %v1789
  %v1806 = vadd.f32 %v1726, %v1790
  %v1807 = vadd.f32 %v1727, %v1791
  %v1808 = vadd.f32 %v1728, %v1792
  %v1809 = vadd.f32 %v1729, %v1793
  %v1810 = vadd.f32 %v1730, %v1794
  %v1811 = vadd.f32 %v1731, %v1795
  %v1812 = vadd.f32 %v1732, %v1796
  %v1813 = vadd.f32 %v1733, %v1797
  %v1814 = vadd.f32 %v1734, %v1798
  %v1815 = vadd.f32 %v1735, %v1799
  %v1816 = vadd.f32 %v1736, %v1800
  %v1817 = vadd.f32 %v1737, %v1801
  %v1818 = vadd.f32 %v1738, %v1802
  %v1819 = vadd.f32 %v1739, %v1803
  %v1820 = vadd.f32 %v1740, %v1804
  %1821 = vrot.lane.b32.xlu0 %v1197, 127
  %v1822 = vpop.permute.xlu0 %1821
  %1823 = vrot.lane.b32.xlu0 %v1199, 127
  %v1824 = vpop.permute.xlu0 %1823
  %1825 = vrot.lane.b32.xlu0 %v1201, 127
  %v1826 = vpop.permute.xlu0 %1825
  %1827 = vrot.lane.b32.xlu0 %v1203, 127
  %v1828 = vpop.permute.xlu0 %1827
  %1829 = vrot.lane.b32.xlu0 %v1205, 127
  %v1830 = vpop.permute.xlu0 %1829
  %1831 = vrot.lane.b32.xlu0 %v1207, 127
  %v1832 = vpop.permute.xlu0 %1831
  %1833 = vrot.lane.b32.xlu0 %v1209, 127
  %v1834 = vpop.permute.xlu0 %1833
  %1835 = vrot.lane.b32.xlu0 %v1211, 127
  %v1836 = vpop.permute.xlu0 %1835
  %1837 = vrot.lane.b32.xlu0 %v1198, 127
  %v1838 = vpop.permute.xlu0 %1837
  %1839 = vrot.lane.b32.xlu0 %v1200, 127
  %v1840 = vpop.permute.xlu0 %1839
  %1841 = vrot.lane.b32.xlu0 %v1202, 127
  %v1842 = vpop.permute.xlu0 %1841
  %1843 = vrot.lane.b32.xlu0 %v1204, 127
  %v1844 = vpop.permute.xlu0 %1843
  %1845 = vrot.lane.b32.xlu0 %v1206, 127
  %v1846 = vpop.permute.xlu0 %1845
  %1847 = vrot.lane.b32.xlu0 %v1208, 127
  %v1848 = vpop.permute.xlu0 %1847
  %1849 = vrot.lane.b32.xlu0 %v1210, 127
  %v1850 = vpop.permute.xlu0 %1849
  %1851 = vrot.lane.b32.xlu0 %v1212, 127
  %v1852 = vpop.permute.xlu0 %1851
  %v1853 = vsel %vm447, %v1822, %v1838
  %v1854 = vsel %vm447, %v1824, %v1840
  %v1855 = vsel %vm447, %v1826, %v1842
  %v1856 = vsel %vm447, %v1828, %v1844
  %v1857 = vsel %vm447, %v1830, %v1846
  %v1858 = vsel %vm447, %v1832, %v1848
  %v1859 = vsel %vm447, %v1834, %v1850
  %v1860 = vsel %vm447, %v1836, %v1852
  %v1861 = vsel %vm447, %v1838, %v1822
  %v1862 = vsel %vm447, %v1840, %v1824
  %v1863 = vsel %vm447, %v1842, %v1826
  %v1864 = vsel %vm447, %v1844, %v1828
  %v1865 = vsel %vm447, %v1846, %v1830
  %v1866 = vsel %vm447, %v1848, %v1832
  %v1867 = vsel %vm447, %v1850, %v1834
  %v1868 = vsel %vm447, %v1852, %v1836
  %v1869 = vmul.f32 %v1853, %v462
  %v1870 = vmul.f32 %v1861, %v466
  %v1871 = vmul.f32 %v1854, %v462
  %v1872 = vmul.f32 %v1862, %v466
  %v1873 = vmul.f32 %v1855, %v462
  %v1874 = vmul.f32 %v1863, %v466
  %v1875 = vmul.f32 %v1856, %v462
  %v1876 = vmul.f32 %v1864, %v466
  %v1877 = vmul.f32 %v1857, %v462
  %v1878 = vmul.f32 %v1865, %v466
  %v1879 = vmul.f32 %v1858, %v462
  %v1880 = vmul.f32 %v1866, %v466
  %v1881 = vmul.f32 %v1859, %v462
  %v1882 = vmul.f32 %v1867, %v466
  %v1883 = vmul.f32 %v1860, %v462
  %v1884 = vmul.f32 %v1868, %v466
  %1885 = vset.pattern.permute.xlu0 5
  %1886 = vperm.xlu0 %1885, %v1213
  %v1887 = vpop.permute.xlu0 %1886
  %1889 = vset.pattern.permute.xlu0 5
  %1890 = vperm.xlu0 %1889, %v1214
  %v1891 = vpop.permute.xlu0 %1890
  %1893 = vset.pattern.permute.xlu0 5
  %1894 = vperm.xlu0 %1893, %v1215
  %v1895 = vpop.permute.xlu0 %1894
  %1897 = vset.pattern.permute.xlu0 5
  %1898 = vperm.xlu0 %1897, %v1216
  %v1899 = vpop.permute.xlu0 %1898
  %1901 = vset.pattern.permute.xlu0 5
  %1902 = vperm.xlu0 %1901, %v1217
  %v1903 = vpop.permute.xlu0 %1902
  %1905 = vset.pattern.permute.xlu0 5
  %1906 = vperm.xlu0 %1905, %v1218
  %v1907 = vpop.permute.xlu0 %1906
  %1909 = vset.pattern.permute.xlu0 5
  %1910 = vperm.xlu0 %1909, %v1219
  %v1911 = vpop.permute.xlu0 %1910
  %1913 = vset.pattern.permute.xlu0 5
  %1914 = vperm.xlu0 %1913, %v1220
  %v1915 = vpop.permute.xlu0 %1914
  %v1917 = vmul.f32 %v1869, %v1887
  %v1918 = vmul.f32 %v1870, %v1887
  %v1919 = vmul.f32 %v1871, %v1891
  %v1920 = vmul.f32 %v1872, %v1891
  %v1921 = vmul.f32 %v1873, %v1895
  %v1922 = vmul.f32 %v1874, %v1895
  %v1923 = vmul.f32 %v1875, %v1899
  %v1924 = vmul.f32 %v1876, %v1899
  %v1925 = vmul.f32 %v1877, %v1903
  %v1926 = vmul.f32 %v1878, %v1903
  %v1927 = vmul.f32 %v1879, %v1907
  %v1928 = vmul.f32 %v1880, %v1907
  %v1929 = vmul.f32 %v1881, %v1911
  %v1930 = vmul.f32 %v1882, %v1911
  %v1931 = vmul.f32 %v1883, %v1915
  %v1932 = vmul.f32 %v1884, %v1915
  %v1933 = vadd.f32 %v1805, %v1917
  %v1934 = vadd.f32 %v1806, %v1918
  %v1935 = vadd.f32 %v1807, %v1919
  %v1936 = vadd.f32 %v1808, %v1920
  %v1937 = vadd.f32 %v1809, %v1921
  %v1938 = vadd.f32 %v1810, %v1922
  %v1939 = vadd.f32 %v1811, %v1923
  %v1940 = vadd.f32 %v1812, %v1924
  %v1941 = vadd.f32 %v1813, %v1925
  %v1942 = vadd.f32 %v1814, %v1926
  %v1943 = vadd.f32 %v1815, %v1927
  %v1944 = vadd.f32 %v1816, %v1928
  %v1945 = vadd.f32 %v1817, %v1929
  %v1946 = vadd.f32 %v1818, %v1930
  %v1947 = vadd.f32 %v1819, %v1931
  %v1948 = vadd.f32 %v1820, %v1932
  %1949 = vrot.lane.b32.xlu0 %v1197, 121
  %v1950 = vpop.permute.xlu0 %1949
  %1951 = vrot.lane.b32.xlu0 %v1199, 121
  %v1952 = vpop.permute.xlu0 %1951
  %1953 = vrot.lane.b32.xlu0 %v1201, 121
  %v1954 = vpop.permute.xlu0 %1953
  %1955 = vrot.lane.b32.xlu0 %v1203, 121
  %v1956 = vpop.permute.xlu0 %1955
  %1957 = vrot.lane.b32.xlu0 %v1205, 121
  %v1958 = vpop.permute.xlu0 %1957
  %1959 = vrot.lane.b32.xlu0 %v1207, 121
  %v1960 = vpop.permute.xlu0 %1959
  %1961 = vrot.lane.b32.xlu0 %v1209, 121
  %v1962 = vpop.permute.xlu0 %1961
  %1963 = vrot.lane.b32.xlu0 %v1211, 121
  %v1964 = vpop.permute.xlu0 %1963
  %1965 = vrot.lane.b32.xlu0 %v1198, 121
  %v1966 = vpop.permute.xlu0 %1965
  %1967 = vrot.lane.b32.xlu0 %v1200, 121
  %v1968 = vpop.permute.xlu0 %1967
  %1969 = vrot.lane.b32.xlu0 %v1202, 121
  %v1970 = vpop.permute.xlu0 %1969
  %1971 = vrot.lane.b32.xlu0 %v1204, 121
  %v1972 = vpop.permute.xlu0 %1971
  %1973 = vrot.lane.b32.xlu0 %v1206, 121
  %v1974 = vpop.permute.xlu0 %1973
  %1975 = vrot.lane.b32.xlu0 %v1208, 121
  %v1976 = vpop.permute.xlu0 %1975
  %1977 = vrot.lane.b32.xlu0 %v1210, 121
  %v1978 = vpop.permute.xlu0 %1977
  %1979 = vrot.lane.b32.xlu0 %v1212, 121
  %v1980 = vpop.permute.xlu0 %1979
  %v1981 = vsel %vm525, %v1950, %v1966
  %v1982 = vsel %vm525, %v1952, %v1968
  %v1983 = vsel %vm525, %v1954, %v1970
  %v1984 = vsel %vm525, %v1956, %v1972
  %v1985 = vsel %vm525, %v1958, %v1974
  %v1986 = vsel %vm525, %v1960, %v1976
  %v1987 = vsel %vm525, %v1962, %v1978
  %v1988 = vsel %vm525, %v1964, %v1980
  %v1989 = vsel %vm525, %v1966, %v1950
  %v1990 = vsel %vm525, %v1968, %v1952
  %v1991 = vsel %vm525, %v1970, %v1954
  %v1992 = vsel %vm525, %v1972, %v1956
  %v1993 = vsel %vm525, %v1974, %v1958
  %v1994 = vsel %vm525, %v1976, %v1960
  %v1995 = vsel %vm525, %v1978, %v1962
  %v1996 = vsel %vm525, %v1980, %v1964
  %v1997 = vmul.f32 %v1981, %v540
  %v1998 = vmul.f32 %v1989, %v544
  %v1999 = vmul.f32 %v1982, %v540
  %v2000 = vmul.f32 %v1990, %v544
  %v2001 = vmul.f32 %v1983, %v540
  %v2002 = vmul.f32 %v1991, %v544
  %v2003 = vmul.f32 %v1984, %v540
  %v2004 = vmul.f32 %v1992, %v544
  %v2005 = vmul.f32 %v1985, %v540
  %v2006 = vmul.f32 %v1993, %v544
  %v2007 = vmul.f32 %v1986, %v540
  %v2008 = vmul.f32 %v1994, %v544
  %v2009 = vmul.f32 %v1987, %v540
  %v2010 = vmul.f32 %v1995, %v544
  %v2011 = vmul.f32 %v1988, %v540
  %v2012 = vmul.f32 %v1996, %v544
  %2013 = vset.pattern.permute.xlu0 6
  %2014 = vperm.xlu0 %2013, %v1213
  %v2015 = vpop.permute.xlu0 %2014
  %2017 = vset.pattern.permute.xlu0 6
  %2018 = vperm.xlu0 %2017, %v1214
  %v2019 = vpop.permute.xlu0 %2018
  %2021 = vset.pattern.permute.xlu0 6
  %2022 = vperm.xlu0 %2021, %v1215
  %v2023 = vpop.permute.xlu0 %2022
  %2025 = vset.pattern.permute.xlu0 6
  %2026 = vperm.xlu0 %2025, %v1216
  %v2027 = vpop.permute.xlu0 %2026
  %2029 = vset.pattern.permute.xlu0 6
  %2030 = vperm.xlu0 %2029, %v1217
  %v2031 = vpop.permute.xlu0 %2030
  %2033 = vset.pattern.permute.xlu0 6
  %2034 = vperm.xlu0 %2033, %v1218
  %v2035 = vpop.permute.xlu0 %2034
  %2037 = vset.pattern.permute.xlu0 6
  %2038 = vperm.xlu0 %2037, %v1219
  %v2039 = vpop.permute.xlu0 %2038
  %2041 = vset.pattern.permute.xlu0 6
  %2042 = vperm.xlu0 %2041, %v1220
  %v2043 = vpop.permute.xlu0 %2042
  %v2045 = vmul.f32 %v1997, %v2015
  %v2046 = vmul.f32 %v1998, %v2015
  %v2047 = vmul.f32 %v1999, %v2019
  %v2048 = vmul.f32 %v2000, %v2019
  %v2049 = vmul.f32 %v2001, %v2023
  %v2050 = vmul.f32 %v2002, %v2023
  %v2051 = vmul.f32 %v2003, %v2027
  %v2052 = vmul.f32 %v2004, %v2027
  %v2053 = vmul.f32 %v2005, %v2031
  %v2054 = vmul.f32 %v2006, %v2031
  %v2055 = vmul.f32 %v2007, %v2035
  %v2056 = vmul.f32 %v2008, %v2035
  %v2057 = vmul.f32 %v2009, %v2039
  %v2058 = vmul.f32 %v2010, %v2039
  %v2059 = vmul.f32 %v2011, %v2043
  %v2060 = vmul.f32 %v2012, %v2043
  %v2061 = vadd.f32 %v1933, %v2045
  %v2062 = vadd.f32 %v1934, %v2046
  %v2063 = vadd.f32 %v1935, %v2047
  %v2064 = vadd.f32 %v1936, %v2048
  %v2065 = vadd.f32 %v1937, %v2049
  %v2066 = vadd.f32 %v1938, %v2050
  %v2067 = vadd.f32 %v1939, %v2051
  %v2068 = vadd.f32 %v1940, %v2052
  %v2069 = vadd.f32 %v1941, %v2053
  %v2070 = vadd.f32 %v1942, %v2054
  %v2071 = vadd.f32 %v1943, %v2055
  %v2072 = vadd.f32 %v1944, %v2056
  %v2073 = vadd.f32 %v1945, %v2057
  %v2074 = vadd.f32 %v1946, %v2058
  %v2075 = vadd.f32 %v1947, %v2059
  %v2076 = vadd.f32 %v1948, %v2060
  %2077 = vrot.lane.b32.xlu0 %v1197, 120
  %v2078 = vpop.permute.xlu0 %2077
  %2079 = vrot.lane.b32.xlu0 %v1199, 120
  %v2080 = vpop.permute.xlu0 %2079
  %2081 = vrot.lane.b32.xlu0 %v1201, 120
  %v2082 = vpop.permute.xlu0 %2081
  %2083 = vrot.lane.b32.xlu0 %v1203, 120
  %v2084 = vpop.permute.xlu0 %2083
  %2085 = vrot.lane.b32.xlu0 %v1205, 120
  %v2086 = vpop.permute.xlu0 %2085
  %2087 = vrot.lane.b32.xlu0 %v1207, 120
  %v2088 = vpop.permute.xlu0 %2087
  %2089 = vrot.lane.b32.xlu0 %v1209, 120
  %v2090 = vpop.permute.xlu0 %2089
  %2091 = vrot.lane.b32.xlu0 %v1211, 120
  %v2092 = vpop.permute.xlu0 %2091
  %2093 = vrot.lane.b32.xlu0 %v1198, 120
  %v2094 = vpop.permute.xlu0 %2093
  %2095 = vrot.lane.b32.xlu0 %v1200, 120
  %v2096 = vpop.permute.xlu0 %2095
  %2097 = vrot.lane.b32.xlu0 %v1202, 120
  %v2098 = vpop.permute.xlu0 %2097
  %2099 = vrot.lane.b32.xlu0 %v1204, 120
  %v2100 = vpop.permute.xlu0 %2099
  %2101 = vrot.lane.b32.xlu0 %v1206, 120
  %v2102 = vpop.permute.xlu0 %2101
  %2103 = vrot.lane.b32.xlu0 %v1208, 120
  %v2104 = vpop.permute.xlu0 %2103
  %2105 = vrot.lane.b32.xlu0 %v1210, 120
  %v2106 = vpop.permute.xlu0 %2105
  %2107 = vrot.lane.b32.xlu0 %v1212, 120
  %v2108 = vpop.permute.xlu0 %2107
  %v2109 = vsel %vm603, %v2078, %v2094
  %v2110 = vsel %vm603, %v2080, %v2096
  %v2111 = vsel %vm603, %v2082, %v2098
  %v2112 = vsel %vm603, %v2084, %v2100
  %v2113 = vsel %vm603, %v2086, %v2102
  %v2114 = vsel %vm603, %v2088, %v2104
  %v2115 = vsel %vm603, %v2090, %v2106
  %v2116 = vsel %vm603, %v2092, %v2108
  %v2117 = vsel %vm603, %v2094, %v2078
  %v2118 = vsel %vm603, %v2096, %v2080
  %v2119 = vsel %vm603, %v2098, %v2082
  %v2120 = vsel %vm603, %v2100, %v2084
  %v2121 = vsel %vm603, %v2102, %v2086
  %v2122 = vsel %vm603, %v2104, %v2088
  %v2123 = vsel %vm603, %v2106, %v2090
  %v2124 = vsel %vm603, %v2108, %v2092
  %v2125 = vmul.f32 %v2109, %v618
  %v2126 = vmul.f32 %v2117, %v622
  %v2127 = vmul.f32 %v2110, %v618
  %v2128 = vmul.f32 %v2118, %v622
  %v2129 = vmul.f32 %v2111, %v618
  %v2130 = vmul.f32 %v2119, %v622
  %v2131 = vmul.f32 %v2112, %v618
  %v2132 = vmul.f32 %v2120, %v622
  %v2133 = vmul.f32 %v2113, %v618
  %v2134 = vmul.f32 %v2121, %v622
  %v2135 = vmul.f32 %v2114, %v618
  %v2136 = vmul.f32 %v2122, %v622
  %v2137 = vmul.f32 %v2115, %v618
  %v2138 = vmul.f32 %v2123, %v622
  %v2139 = vmul.f32 %v2116, %v618
  %v2140 = vmul.f32 %v2124, %v622
  %2141 = vset.pattern.permute.xlu0 7
  %2142 = vperm.xlu0 %2141, %v1213
  %v2143 = vpop.permute.xlu0 %2142
  %2145 = vset.pattern.permute.xlu0 7
  %2146 = vperm.xlu0 %2145, %v1214
  %v2147 = vpop.permute.xlu0 %2146
  %2149 = vset.pattern.permute.xlu0 7
  %2150 = vperm.xlu0 %2149, %v1215
  %v2151 = vpop.permute.xlu0 %2150
  %2153 = vset.pattern.permute.xlu0 7
  %2154 = vperm.xlu0 %2153, %v1216
  %v2155 = vpop.permute.xlu0 %2154
  %2157 = vset.pattern.permute.xlu0 7
  %2158 = vperm.xlu0 %2157, %v1217
  %v2159 = vpop.permute.xlu0 %2158
  %2161 = vset.pattern.permute.xlu0 7
  %2162 = vperm.xlu0 %2161, %v1218
  %v2163 = vpop.permute.xlu0 %2162
  %2165 = vset.pattern.permute.xlu0 7
  %2166 = vperm.xlu0 %2165, %v1219
  %v2167 = vpop.permute.xlu0 %2166
  %2169 = vset.pattern.permute.xlu0 7
  %2170 = vperm.xlu0 %2169, %v1220
  %v2171 = vpop.permute.xlu0 %2170
  %v2173 = vmul.f32 %v2125, %v2143
  %v2174 = vmul.f32 %v2126, %v2143
  %v2175 = vmul.f32 %v2127, %v2147
  %v2176 = vmul.f32 %v2128, %v2147
  %v2177 = vmul.f32 %v2129, %v2151
  %v2178 = vmul.f32 %v2130, %v2151
  %v2179 = vmul.f32 %v2131, %v2155
  %v2180 = vmul.f32 %v2132, %v2155
  %v2181 = vmul.f32 %v2133, %v2159
  %v2182 = vmul.f32 %v2134, %v2159
  %v2183 = vmul.f32 %v2135, %v2163
  %v2184 = vmul.f32 %v2136, %v2163
  %v2185 = vmul.f32 %v2137, %v2167
  %v2186 = vmul.f32 %v2138, %v2167
  %v2187 = vmul.f32 %v2139, %v2171
  %v2188 = vmul.f32 %v2140, %v2171
  %v2189 = vadd.f32 %v2061, %v2173
  %v2190 = vadd.f32 %v2062, %v2174
  %v2191 = vadd.f32 %v2063, %v2175
  %v2192 = vadd.f32 %v2064, %v2176
  %v2193 = vadd.f32 %v2065, %v2177
  %v2194 = vadd.f32 %v2066, %v2178
  %v2195 = vadd.f32 %v2067, %v2179
  %v2196 = vadd.f32 %v2068, %v2180
  %v2197 = vadd.f32 %v2069, %v2181
  %v2198 = vadd.f32 %v2070, %v2182
  %v2199 = vadd.f32 %v2071, %v2183
  %v2200 = vadd.f32 %v2072, %v2184
  %v2201 = vadd.f32 %v2073, %v2185
  %v2202 = vadd.f32 %v2074, %v2186
  %v2203 = vadd.f32 %v2075, %v2187
  %v2204 = vadd.f32 %v2076, %v2188
  %2205 = vrot.lane.b32.xlu0 %v1197, 119
  %v2206 = vpop.permute.xlu0 %2205
  %2207 = vrot.lane.b32.xlu0 %v1199, 119
  %v2208 = vpop.permute.xlu0 %2207
  %2209 = vrot.lane.b32.xlu0 %v1201, 119
  %v2210 = vpop.permute.xlu0 %2209
  %2211 = vrot.lane.b32.xlu0 %v1203, 119
  %v2212 = vpop.permute.xlu0 %2211
  %2213 = vrot.lane.b32.xlu0 %v1205, 119
  %v2214 = vpop.permute.xlu0 %2213
  %2215 = vrot.lane.b32.xlu0 %v1207, 119
  %v2216 = vpop.permute.xlu0 %2215
  %2217 = vrot.lane.b32.xlu0 %v1209, 119
  %v2218 = vpop.permute.xlu0 %2217
  %2219 = vrot.lane.b32.xlu0 %v1211, 119
  %v2220 = vpop.permute.xlu0 %2219
  %2221 = vrot.lane.b32.xlu0 %v1198, 119
  %v2222 = vpop.permute.xlu0 %2221
  %2223 = vrot.lane.b32.xlu0 %v1200, 119
  %v2224 = vpop.permute.xlu0 %2223
  %2225 = vrot.lane.b32.xlu0 %v1202, 119
  %v2226 = vpop.permute.xlu0 %2225
  %2227 = vrot.lane.b32.xlu0 %v1204, 119
  %v2228 = vpop.permute.xlu0 %2227
  %2229 = vrot.lane.b32.xlu0 %v1206, 119
  %v2230 = vpop.permute.xlu0 %2229
  %2231 = vrot.lane.b32.xlu0 %v1208, 119
  %v2232 = vpop.permute.xlu0 %2231
  %2233 = vrot.lane.b32.xlu0 %v1210, 119
  %v2234 = vpop.permute.xlu0 %2233
  %2235 = vrot.lane.b32.xlu0 %v1212, 119
  %v2236 = vpop.permute.xlu0 %2235
  %v2237 = vsel %vm681, %v2206, %v2222
  %v2238 = vsel %vm681, %v2208, %v2224
  %v2239 = vsel %vm681, %v2210, %v2226
  %v2240 = vsel %vm681, %v2212, %v2228
  %v2241 = vsel %vm681, %v2214, %v2230
  %v2242 = vsel %vm681, %v2216, %v2232
  %v2243 = vsel %vm681, %v2218, %v2234
  %v2244 = vsel %vm681, %v2220, %v2236
  %v2245 = vsel %vm681, %v2222, %v2206
  %v2246 = vsel %vm681, %v2224, %v2208
  %v2247 = vsel %vm681, %v2226, %v2210
  %v2248 = vsel %vm681, %v2228, %v2212
  %v2249 = vsel %vm681, %v2230, %v2214
  %v2250 = vsel %vm681, %v2232, %v2216
  %v2251 = vsel %vm681, %v2234, %v2218
  %v2252 = vsel %vm681, %v2236, %v2220
  %v2253 = vmul.f32 %v2237, %v696
  %v2254 = vmul.f32 %v2245, %v700
  %v2255 = vmul.f32 %v2238, %v696
  %v2256 = vmul.f32 %v2246, %v700
  %v2257 = vmul.f32 %v2239, %v696
  %v2258 = vmul.f32 %v2247, %v700
  %v2259 = vmul.f32 %v2240, %v696
  %v2260 = vmul.f32 %v2248, %v700
  %v2261 = vmul.f32 %v2241, %v696
  %v2262 = vmul.f32 %v2249, %v700
  %v2263 = vmul.f32 %v2242, %v696
  %v2264 = vmul.f32 %v2250, %v700
  %v2265 = vmul.f32 %v2243, %v696
  %v2266 = vmul.f32 %v2251, %v700
  %v2267 = vmul.f32 %v2244, %v696
  %v2268 = vmul.f32 %v2252, %v700
  %2269 = vset.pattern.permute.xlu0 8
  %2270 = vperm.xlu0 %2269, %v1213
  %v2271 = vpop.permute.xlu0 %2270
  %2273 = vset.pattern.permute.xlu0 8
  %2274 = vperm.xlu0 %2273, %v1214
  %v2275 = vpop.permute.xlu0 %2274
  %2277 = vset.pattern.permute.xlu0 8
  %2278 = vperm.xlu0 %2277, %v1215
  %v2279 = vpop.permute.xlu0 %2278
  %2281 = vset.pattern.permute.xlu0 8
  %2282 = vperm.xlu0 %2281, %v1216
  %v2283 = vpop.permute.xlu0 %2282
  %2285 = vset.pattern.permute.xlu0 8
  %2286 = vperm.xlu0 %2285, %v1217
  %v2287 = vpop.permute.xlu0 %2286
  %2289 = vset.pattern.permute.xlu0 8
  %2290 = vperm.xlu0 %2289, %v1218
  %v2291 = vpop.permute.xlu0 %2290
  %2293 = vset.pattern.permute.xlu0 8
  %2294 = vperm.xlu0 %2293, %v1219
  %v2295 = vpop.permute.xlu0 %2294
  %2297 = vset.pattern.permute.xlu0 8
  %2298 = vperm.xlu0 %2297, %v1220
  %v2299 = vpop.permute.xlu0 %2298
  %v2301 = vmul.f32 %v2253, %v2271
  %v2302 = vmul.f32 %v2254, %v2271
  %v2303 = vmul.f32 %v2255, %v2275
  %v2304 = vmul.f32 %v2256, %v2275
  %v2305 = vmul.f32 %v2257, %v2279
  %v2306 = vmul.f32 %v2258, %v2279
  %v2307 = vmul.f32 %v2259, %v2283
  %v2308 = vmul.f32 %v2260, %v2283
  %v2309 = vmul.f32 %v2261, %v2287
  %v2310 = vmul.f32 %v2262, %v2287
  %v2311 = vmul.f32 %v2263, %v2291
  %v2312 = vmul.f32 %v2264, %v2291
  %v2313 = vmul.f32 %v2265, %v2295
  %v2314 = vmul.f32 %v2266, %v2295
  %v2315 = vmul.f32 %v2267, %v2299
  %v2316 = vmul.f32 %v2268, %v2299
  %v2317 = vadd.f32 %v2189, %v2301
  %v2318 = vadd.f32 %v2190, %v2302
  %v2319 = vadd.f32 %v2191, %v2303
  %v2320 = vadd.f32 %v2192, %v2304
  %v2321 = vadd.f32 %v2193, %v2305
  %v2322 = vadd.f32 %v2194, %v2306
  %v2323 = vadd.f32 %v2195, %v2307
  %v2324 = vadd.f32 %v2196, %v2308
  %v2325 = vadd.f32 %v2197, %v2309
  %v2326 = vadd.f32 %v2198, %v2310
  %v2327 = vadd.f32 %v2199, %v2311
  %v2328 = vadd.f32 %v2200, %v2312
  %v2329 = vadd.f32 %v2201, %v2313
  %v2330 = vadd.f32 %v2202, %v2314
  %v2331 = vadd.f32 %v2203, %v2315
  %v2332 = vadd.f32 %v2204, %v2316
  %v2333 = vld [vmem:[%s11] sm:$0xff]
  %v2334 = vld [vmem:[%s11 + $0x8] sm:$0xff]
  %v2335 = vld [vmem:[%s11 + $0x10] sm:$0xff]
  %v2336 = vld [vmem:[%s11 + $0x18] sm:$0xff]
  %v2337 = vld [vmem:[%s11 + $0x20] sm:$0xff]
  %v2338 = vld [vmem:[%s11 + $0x28] sm:$0xff]
  %v2339 = vld [vmem:[%s11 + $0x30] sm:$0xff]
  %v2340 = vld [vmem:[%s11 + $0x38] sm:$0xff]
  %2342 = vset.pattern.permute.xlu0 0
  %2343 = vperm.xlu0 %2342, %v2333
  %v2344 = vpop.permute.xlu0 %2343
  %2347 = vset.pattern.permute.xlu0 0
  %2348 = vperm.xlu0 %2347, %v2334
  %v2349 = vpop.permute.xlu0 %2348
  %2352 = vset.pattern.permute.xlu0 0
  %2353 = vperm.xlu0 %2352, %v2335
  %v2354 = vpop.permute.xlu0 %2353
  %2357 = vset.pattern.permute.xlu0 0
  %2358 = vperm.xlu0 %2357, %v2336
  %v2359 = vpop.permute.xlu0 %2358
  %2362 = vset.pattern.permute.xlu0 0
  %2363 = vperm.xlu0 %2362, %v2337
  %v2364 = vpop.permute.xlu0 %2363
  %2367 = vset.pattern.permute.xlu0 0
  %2368 = vperm.xlu0 %2367, %v2338
  %v2369 = vpop.permute.xlu0 %2368
  %2372 = vset.pattern.permute.xlu0 0
  %2373 = vperm.xlu0 %2372, %v2339
  %v2374 = vpop.permute.xlu0 %2373
  %2377 = vset.pattern.permute.xlu0 0
  %2378 = vperm.xlu0 %2377, %v2340
  %v2379 = vpop.permute.xlu0 %2378
  %v2381 = vadd.f32 %v2317, %v2344
  %v2382 = vadd.f32 %v2318, %v2344
  %v2383 = vadd.f32 %v2319, %v2349
  %v2384 = vadd.f32 %v2320, %v2349
  %v2385 = vadd.f32 %v2321, %v2354
  %v2386 = vadd.f32 %v2322, %v2354
  %v2387 = vadd.f32 %v2323, %v2359
  %v2388 = vadd.f32 %v2324, %v2359
  %v2389 = vadd.f32 %v2325, %v2364
  %v2390 = vadd.f32 %v2326, %v2364
  %v2391 = vadd.f32 %v2327, %v2369
  %v2392 = vadd.f32 %v2328, %v2369
  %v2393 = vadd.f32 %v2329, %v2374
  %v2394 = vadd.f32 %v2330, %v2374
  %v2395 = vadd.f32 %v2331, %v2379
  %v2396 = vadd.f32 %v2332, %v2379
  %v2397 = vmul.f32 %v2381, %v2381
  %v2398 = vmul.f32 %v2382, %v2382
  %v2399 = vmul.f32 %v2383, %v2383
  %v2400 = vmul.f32 %v2384, %v2384
  %v2401 = vmul.f32 %v2385, %v2385
  %v2402 = vmul.f32 %v2386, %v2386
  %v2403 = vmul.f32 %v2387, %v2387
  %v2404 = vmul.f32 %v2388, %v2388
  %v2405 = vmul.f32 %v2389, %v2389
  %v2406 = vmul.f32 %v2390, %v2390
  %v2407 = vmul.f32 %v2391, %v2391
  %v2408 = vmul.f32 %v2392, %v2392
  %v2409 = vmul.f32 %v2393, %v2393
  %v2410 = vmul.f32 %v2394, %v2394
  %v2411 = vmul.f32 %v2395, %v2395
  %v2412 = vmul.f32 %v2396, %v2396
  %v2413 = vmul.f32 %v2381, %v2397
  %v2414 = vmul.f32 %v2382, %v2398
  %v2415 = vmul.f32 %v2383, %v2399
  %v2416 = vmul.f32 %v2384, %v2400
  %v2417 = vmul.f32 %v2385, %v2401
  %v2418 = vmul.f32 %v2386, %v2402
  %v2419 = vmul.f32 %v2387, %v2403
  %v2420 = vmul.f32 %v2388, %v2404
  %v2421 = vmul.f32 %v2389, %v2405
  %v2422 = vmul.f32 %v2390, %v2406
  %v2423 = vmul.f32 %v2391, %v2407
  %v2424 = vmul.f32 %v2392, %v2408
  %v2425 = vmul.f32 %v2393, %v2409
  %v2426 = vmul.f32 %v2394, %v2410
  %v2427 = vmul.f32 %v2395, %v2411
  %v2428 = vmul.f32 %v2396, %v2412
  %v2429 = vmul.f32 %v2413, 0.044715
  %v2430 = vmul.f32 %v2414, 0.044715
  %v2431 = vmul.f32 %v2415, 0.044715
  %v2432 = vmul.f32 %v2416, 0.044715
  %v2433 = vmul.f32 %v2417, 0.044715
  %v2434 = vmul.f32 %v2418, 0.044715
  %v2435 = vmul.f32 %v2419, 0.044715
  %v2436 = vmul.f32 %v2420, 0.044715
  %v2437 = vmul.f32 %v2421, 0.044715
  %v2438 = vmul.f32 %v2422, 0.044715
  %v2439 = vmul.f32 %v2423, 0.044715
  %v2440 = vmul.f32 %v2424, 0.044715
  %v2441 = vmul.f32 %v2425, 0.044715
  %v2442 = vmul.f32 %v2426, 0.044715
  %v2443 = vmul.f32 %v2427, 0.044715
  %v2444 = vmul.f32 %v2428, 0.044715
  %v2445 = vadd.f32 %v2381, %v2429
  %v2446 = vadd.f32 %v2382, %v2430
  %v2447 = vadd.f32 %v2383, %v2431
  %v2448 = vadd.f32 %v2384, %v2432
  %v2449 = vadd.f32 %v2385, %v2433
  %v2450 = vadd.f32 %v2386, %v2434
  %v2451 = vadd.f32 %v2387, %v2435
  %v2452 = vadd.f32 %v2388, %v2436
  %v2453 = vadd.f32 %v2389, %v2437
  %v2454 = vadd.f32 %v2390, %v2438
  %v2455 = vadd.f32 %v2391, %v2439
  %v2456 = vadd.f32 %v2392, %v2440
  %v2457 = vadd.f32 %v2393, %v2441
  %v2458 = vadd.f32 %v2394, %v2442
  %v2459 = vadd.f32 %v2395, %v2443
  %v2460 = vadd.f32 %v2396, %v2444
  %v2461 = vmul.f32 %v2445, 0.7978846
  %v2462 = vmul.f32 %v2446, 0.7978846
  %v2463 = vmul.f32 %v2447, 0.7978846
  %v2464 = vmul.f32 %v2448, 0.7978846
  %v2465 = vmul.f32 %v2449, 0.7978846
  %v2466 = vmul.f32 %v2450, 0.7978846
  %v2467 = vmul.f32 %v2451, 0.7978846
  %v2468 = vmul.f32 %v2452, 0.7978846
  %v2469 = vmul.f32 %v2453, 0.7978846
  %v2470 = vmul.f32 %v2454, 0.7978846
  %v2471 = vmul.f32 %v2455, 0.7978846
  %v2472 = vmul.f32 %v2456, 0.7978846
  %v2473 = vmul.f32 %v2457, 0.7978846
  %v2474 = vmul.f32 %v2458, 0.7978846
  %v2475 = vmul.f32 %v2459, 0.7978846
  %v2476 = vmul.f32 %v2460, 0.7978846
  %v2477 = vtanh.pop %v2461
  %v2478 = vtanh.pop %v2462
  %v2479 = vtanh.pop %v2463
  %v2480 = vtanh.pop %v2464
  %v2481 = vtanh.pop %v2465
  %v2482 = vtanh.pop %v2466
  %v2483 = vtanh.pop %v2467
  %v2484 = vtanh.pop %v2468
  %v2485 = vtanh.pop %v2469
  %v2486 = vtanh.pop %v2470
  %v2487 = vtanh.pop %v2471
  %v2488 = vtanh.pop %v2472
  %v2489 = vtanh.pop %v2473
  %v2490 = vtanh.pop %v2474
  %v2491 = vtanh.pop %v2475
  %v2492 = vtanh.pop %v2476
  %v2493 = vadd.f32 %v2477, 1.0
  %v2494 = vadd.f32 %v2478, 1.0
  %v2495 = vadd.f32 %v2479, 1.0
  %v2496 = vadd.f32 %v2480, 1.0
  %v2497 = vadd.f32 %v2481, 1.0
  %v2498 = vadd.f32 %v2482, 1.0
  %v2499 = vadd.f32 %v2483, 1.0
  %v2500 = vadd.f32 %v2484, 1.0
  %v2501 = vadd.f32 %v2485, 1.0
  %v2502 = vadd.f32 %v2486, 1.0
  %v2503 = vadd.f32 %v2487, 1.0
  %v2504 = vadd.f32 %v2488, 1.0
  %v2505 = vadd.f32 %v2489, 1.0
  %v2506 = vadd.f32 %v2490, 1.0
  %v2507 = vadd.f32 %v2491, 1.0
  %v2508 = vadd.f32 %v2492, 1.0
  %v2509 = vmul.f32 %v2493, 0.5
  %v2510 = vmul.f32 %v2494, 0.5
  %v2511 = vmul.f32 %v2495, 0.5
  %v2512 = vmul.f32 %v2496, 0.5
  %v2513 = vmul.f32 %v2497, 0.5
  %v2514 = vmul.f32 %v2498, 0.5
  %v2515 = vmul.f32 %v2499, 0.5
  %v2516 = vmul.f32 %v2500, 0.5
  %v2517 = vmul.f32 %v2501, 0.5
  %v2518 = vmul.f32 %v2502, 0.5
  %v2519 = vmul.f32 %v2503, 0.5
  %v2520 = vmul.f32 %v2504, 0.5
  %v2521 = vmul.f32 %v2505, 0.5
  %v2522 = vmul.f32 %v2506, 0.5
  %v2523 = vmul.f32 %v2507, 0.5
  %v2524 = vmul.f32 %v2508, 0.5
  %v2525 = vmul.f32 %v2381, %v2509
  %v2526 = vmul.f32 %v2382, %v2510
  %v2527 = vmul.f32 %v2383, %v2511
  %v2528 = vmul.f32 %v2384, %v2512
  %v2529 = vmul.f32 %v2385, %v2513
  %v2530 = vmul.f32 %v2386, %v2514
  %v2531 = vmul.f32 %v2387, %v2515
  %v2532 = vmul.f32 %v2388, %v2516
  %v2533 = vmul.f32 %v2389, %v2517
  %v2534 = vmul.f32 %v2390, %v2518
  %v2535 = vmul.f32 %v2391, %v2519
  %v2536 = vmul.f32 %v2392, %v2520
  %v2537 = vmul.f32 %v2393, %v2521
  %v2538 = vmul.f32 %v2394, %v2522
  %v2539 = vmul.f32 %v2395, %v2523
  %v2540 = vmul.f32 %v2396, %v2524
  %v2541 = vld [vmem:[%s12] sm:$0xf]
  %v2542 = vld [vmem:[%s12 + $0x4] sm:$0xf]
  %v2543 = vpack.c.bf16 %v2527, %v2525
  %v2544 = vpack.c.bf16 %v2528, %v2526
  %v2545 = vpack.c.bf16 %v2531, %v2529
  %v2546 = vpack.c.bf16 %v2532, %v2530
  %v2547 = vpack.c.bf16 %v2535, %v2533
  %v2548 = vpack.c.bf16 %v2536, %v2534
  %v2549 = vpack.c.bf16 %v2539, %v2537
  %v2550 = vpack.c.bf16 %v2540, %v2538
  %v2553 = vunpack.c.l.b16 %v2541
  %v2554 = vunpack.c.l.b16 %v2542
  %v2555 = vpack.c.b16 %v2554, %v2553
  %vm2556 = vcmask 523264
  %v2558 = vsel %vm2556, %v2555, 0
  %2560 = vmatprep.subr.bf16.mxu0 %v2544
  %2561 = vmatpush1.bf16.msra.mxu0 %v2543
  %2562 = vmatprep.subr.bf16.mxu0 %v2546
  %2563 = vmatpush1.bf16.msra.mxu0 %v2545
  %2564 = vmatprep.subr.bf16.mxu0 %v2548
  %2565 = vmatpush1.bf16.msra.mxu0 %v2547
  %2566 = vmatprep.subr.bf16.mxu0 %v2550
  %2567 = vmatpush1.bf16.msra.mxu0 %v2549
  %2568 = vmatprep.subr.bf16.mxu0 0
  %2569 = vmatpush1.bf16.msra.mxu0 0
  %2570 = vmatprep.subr.bf16.mxu0 0
  %2571 = vmatpush1.bf16.msra.mxu0 0
  %2572 = vmatprep.subr.bf16.mxu0 0
  %2573 = vmatpush1.bf16.msra.mxu0 0
  %2574 = vmatprep.subr.bf16.mxu0 0
  %2575 = vmatpush1.bf16.msra.mxu0 0
  %2576 = vmatprep.subr.bf16.mxu0 0
  %2577 = vmatpush1.bf16.msra.mxu0 0
  %2578 = vmatprep.subr.bf16.mxu0 0
  %2579 = vmatpush1.bf16.msra.mxu0 0
  %2580 = vmatprep.subr.bf16.mxu0 0
  %2581 = vmatpush1.bf16.msra.mxu0 0
  %2582 = vmatprep.subr.bf16.mxu0 0
  %2583 = vmatpush1.bf16.msra.mxu0 0
  %2584 = vmatprep.subr.bf16.mxu0 0
  %2585 = vmatpush1.bf16.msra.mxu0 0
  %2586 = vmatprep.subr.bf16.mxu0 0
  %2587 = vmatpush1.bf16.msra.mxu0 0
  %2588 = vmatprep.subr.bf16.mxu0 0
  %2589 = vmatpush1.bf16.msra.mxu0 0
  %2590 = vmatprep.subr.bf16.mxu0 0
  %2591 = vmatpush1.bf16.msra.mxu0 0
  %2592 = vmatprep.mubr.bf16.mxu0 0
  %2593 = vmatmul.mubr.bf16.gmra.mrb[0].mxu0 %v2558
  %v2594 = vpop.f32.mrb[0].mxu0
  %v2595 = vadd.f32 %v820, %v2594
  %v2596 = vpop.f32.mrb[0].mxu0
  %v2597 = vadd.f32 %v821, %v2596
  %v2598 = vpop.f32.mrb[0].mxu0
  %v2599 = vadd.f32 %v822, %v2598
  %v2600 = vpop.f32.mrb[0].mxu0
  %v2601 = vadd.f32 %v823, %v2600
  %2602 = vdwg.mxu0
  %2603 = vst [vmem:[%s13] sm:$0xff] %v2595
  %2604 = vst [vmem:[%s13 + $0x8] sm:$0xff] %v2597
  %2605 = vst [vmem:[%s13 + $0x10] sm:$0xff] %v2599
  %2606 = vst [vmem:[%s13 + $0x18] sm:$0xff] %v2601
  // Predicated region
  $region54: #{cbf_block.3} parent=0 // pred_check
    _
  $region55: #{cbf_block.3} parent=0 // pred_check_branch
    %2608 = sbr.rel (0) target = $region57
  $region56: #{cbf_block.3} parent=0 // pred_region
    _
  $region57: #{cbf_block.3} parent=0 // pred_fallthru
    _
  // Predicated region
  $region58: #{cbf_block.3} parent=0 // pred_check
    _
  $region59: #{cbf_block.3} parent=0 // pred_check_branch
    %2610 = sbr.rel (0) target = $region61
  $region60: #{cbf_block.3} parent=0 // pred_region
    _
  $region61: #{cbf_block.3} parent=0 // pred_fallthru
    _

// kernel: cbf_block.2
$region0: #{cbf_block.2}
  #allocation0 [shape = 'u32[]', space=smem, size = 0x4, offset = 0x4, fixed_abs, tag = 'smem constant byte address 0x4 - core index']
  #allocation1 [shape = 'u32[144,128]{1,0:T(1,128)}', space=vmem, size = 0x12000, scoped, tag = 'internal scratch']
  %s0 = inlined_call_operand.vmem [shape: f32[16,256], index: 0, kind: input, shape index: {}]
  %s1 = inlined_call_operand.vmem [shape: f32[81,256], index: 1, kind: input, shape index: {}]
  %s2 = inlined_call_operand.vmem [shape: f32[9,256], index: 2, kind: input, shape index: {}]
  %s3 = inlined_call_operand.vmem [shape: f32[64,64], index: 3, kind: input, shape index: {}]
  %s4 = inlined_call_operand.vmem [shape: f32[16,1], index: 4, kind: input, shape index: {}]
  %s5 = inlined_call_operand.vmem [shape: f32[16,1], index: 5, kind: input, shape index: {}]
  %s6 = inlined_call_operand.vmem [shape: f32[12,81], index: 6, kind: input, shape index: {}]
  %s7 = inlined_call_operand.vmem [shape: f32[12,1], index: 7, kind: input, shape index: {}]
  %s8 = inlined_call_operand.vmem [shape: bf16[12,12], index: 8, kind: input, shape index: {}]
  %s9 = inlined_call_operand.vmem [shape: f32[12,1], index: 9, kind: input, shape index: {}]
  %s10 = inlined_call_operand.vmem [shape: bf16[12,4], index: 10, kind: input, shape index: {}]
  %s11 = inlined_call_operand.vmem [shape: f32[12,256], index: 11, kind: output, shape index: {0}]
  %s12 = inlined_call_operand.vmem [shape: f32[12,256], index: 12, kind: output, shape index: {1}]
  %s13 = inlined_call_operand.vmem [shape: f32[4,256], index: 13, kind: output, shape index: {2}]
  %14 = xla_tuple %s11, %s12, %s13
  %s15 = sld [smem:[#allocation0]]
  $region70: #{cbf_block.2} parent=0
    _
  %s17 = ssub.s32 1, %s15
  %s18 = scalar_select 0, %s17, %s15
  // Predicated region
  $region2: #{cbf_block.2} parent=0 // pred_check
    _
  $region3: #{cbf_block.2} parent=0 // pred_check_branch
    %20 = sbr.rel (0) target = $region5
  $region4: #{cbf_block.2} parent=0 // pred_region
    _
  $region5: #{cbf_block.2} parent=0 // pred_fallthru
    _
  // Predicated region
  $region6: #{cbf_block.2} parent=0 // pred_check
    _
  $region7: #{cbf_block.2} parent=0 // pred_check_branch
    %22 = sbr.rel (0) target = $region9
  $region8: #{cbf_block.2} parent=0 // pred_region
    _
  $region9: #{cbf_block.2} parent=0 // pred_fallthru
    _
  // Predicated region
  $region10: #{cbf_block.2} parent=0 // pred_check
    _
  $region11: #{cbf_block.2} parent=0 // pred_check_branch
    %24 = sbr.rel (0) target = $region13
  $region12: #{cbf_block.2} parent=0 // pred_region
    _
  $region13: #{cbf_block.2} parent=0 // pred_fallthru
    _
  // Predicated region
  $region14: #{cbf_block.2} parent=0 // pred_check
    _
  $region15: #{cbf_block.2} parent=0 // pred_check_branch
    %26 = sbr.rel (0) target = $region17
  $region16: #{cbf_block.2} parent=0 // pred_region
    _
  $region17: #{cbf_block.2} parent=0 // pred_fallthru
    _
  // Predicated region
  $region18: #{cbf_block.2} parent=0 // pred_check
    _
  $region19: #{cbf_block.2} parent=0 // pred_check_branch
    %28 = sbr.rel (0) target = $region21
  $region20: #{cbf_block.2} parent=0 // pred_region
    _
  $region21: #{cbf_block.2} parent=0 // pred_fallthru
    _
  // Predicated region
  $region22: #{cbf_block.2} parent=0 // pred_check
    _
  $region23: #{cbf_block.2} parent=0 // pred_check_branch
    %30 = sbr.rel (0) target = $region25
  $region24: #{cbf_block.2} parent=0 // pred_region
    _
  $region25: #{cbf_block.2} parent=0 // pred_fallthru
    _
  // Predicated region
  $region26: #{cbf_block.2} parent=0 // pred_check
    _
  $region27: #{cbf_block.2} parent=0 // pred_check_branch
    %32 = sbr.rel (0) target = $region29
  $region28: #{cbf_block.2} parent=0 // pred_region
    _
  $region29: #{cbf_block.2} parent=0 // pred_fallthru
    _
  // Predicated region
  $region30: #{cbf_block.2} parent=0 // pred_check
    _
  $region31: #{cbf_block.2} parent=0 // pred_check_branch
    %34 = sbr.rel (0) target = $region33
  $region32: #{cbf_block.2} parent=0 // pred_region
    _
  $region33: #{cbf_block.2} parent=0 // pred_fallthru
    _
  // Predicated region
  $region34: #{cbf_block.2} parent=0 // pred_check
    _
  $region35: #{cbf_block.2} parent=0 // pred_check_branch
    %36 = sbr.rel (0) target = $region37
  $region36: #{cbf_block.2} parent=0 // pred_region
    _
  $region37: #{cbf_block.2} parent=0 // pred_fallthru
    _
  // Predicated region
  $region38: #{cbf_block.2} parent=0 // pred_check
    _
  $region39: #{cbf_block.2} parent=0 // pred_check_branch
    %38 = sbr.rel (0) target = $region41
  $region40: #{cbf_block.2} parent=0 // pred_region
    _
  $region41: #{cbf_block.2} parent=0 // pred_fallthru
    _
  // Predicated region
  $region42: #{cbf_block.2} parent=0 // pred_check
    _
  $region43: #{cbf_block.2} parent=0 // pred_check_branch
    %40 = sbr.rel (0) target = $region45
  $region44: #{cbf_block.2} parent=0 // pred_region
    _
  $region45: #{cbf_block.2} parent=0 // pred_fallthru
    _
  %v42 = vld [vmem:[%s0] sm:$0xff]
  %v43 = vld [vmem:[%s0 + $0x8] sm:$0xff]
  %v44 = vld [vmem:[%s0 + $0x10] sm:$0xff]
  %v45 = vld [vmem:[%s0 + $0x18] sm:$0xff]
  %v46 = vld [vmem:[%s4] sm:$0xff]
  %v47 = vld [vmem:[%s4 + $0x8] sm:$0xff]
  %v48 = vld [vmem:[%s5] sm:$0xff]
  %v49 = vld [vmem:[%s5 + $0x8] sm:$0xff]
  %v50 = vadd.f32 %v42, %v44
  %v51 = vrot.slane %v50, 4
  %v52 = vadd.f32 %v50, %v51
  %v53 = vrot.slane %v52, 2
  %v54 = vadd.f32 %v52, %v53
  %v55 = vrot.slane %v54, 1
  %v56 = vadd.f32 %v54, %v55
  %v57 = vadd.f32 %v43, %v45
  %v58 = vrot.slane %v57, 4
  %v59 = vadd.f32 %v57, %v58
  %v60 = vrot.slane %v59, 2
  %v61 = vadd.f32 %v59, %v60
  %v62 = vrot.slane %v61, 1
  %v63 = vadd.f32 %v61, %v62
  %v64 = vrcp.pop 16.0
  %v65 = vmul.f32 %v56, %v64
  %v66 = vmul.f32 %v63, %v64
  %v67 = vsub.f32 %v42, %v65
  %v68 = vsub.f32 %v43, %v66
  %v69 = vsub.f32 %v44, %v65
  %v70 = vsub.f32 %v45, %v66
  %v71 = vmul.f32 %v67, %v67
  %v72 = vmul.f32 %v68, %v68
  %v73 = vmul.f32 %v69, %v69
  %v74 = vmul.f32 %v70, %v70
  %v75 = vadd.f32 %v71, %v73
  %v76 = vrot.slane %v75, 4
  %v77 = vadd.f32 %v75, %v76
  %v78 = vrot.slane %v77, 2
  %v79 = vadd.f32 %v77, %v78
  %v80 = vrot.slane %v79, 1
  %v81 = vadd.f32 %v79, %v80
  %v82 = vadd.f32 %v72, %v74
  %v83 = vrot.slane %v82, 4
  %v84 = vadd.f32 %v82, %v83
  %v85 = vrot.slane %v84, 2
  %v86 = vadd.f32 %v84, %v85
  %v87 = vrot.slane %v86, 1
  %v88 = vadd.f32 %v86, %v87
  %v89 = vmul.f32 %v81, %v64
  %v90 = vmul.f32 %v88, %v64
  %v91 = vadd.f32 %v89, 1e-05
  %v92 = vadd.f32 %v90, 1e-05
  %v93 = vrsqrt.pop %v91
  %v94 = vrsqrt.pop %v92
  %v95 = vmul.f32 %v67, %v93
  %v96 = vmul.f32 %v68, %v94
  %v97 = vmul.f32 %v69, %v93
  %v98 = vmul.f32 %v70, %v94
  %100 = vset.pattern.permute.xlu0 0
  %101 = vperm.xlu0 %100, %v46
  %v102 = vpop.permute.xlu0 %101
  %105 = vset.pattern.permute.xlu0 0
  %106 = vperm.xlu0 %105, %v47
  %v107 = vpop.permute.xlu0 %106
  %v109 = vmul.f32 %v95, %v102
  %v110 = vmul.f32 %v96, %v102
  %v111 = vmul.f32 %v97, %v107
  %v112 = vmul.f32 %v98, %v107
  %114 = vset.pattern.permute.xlu0 0
  %115 = vperm.xlu0 %114, %v48
  %v116 = vpop.permute.xlu0 %115
  %119 = vset.pattern.permute.xlu0 0
  %120 = vperm.xlu0 %119, %v49
  %v121 = vpop.permute.xlu0 %120
  %v123 = vadd.f32 %v109, %v116
  %v124 = vadd.f32 %v110, %v116
  %v125 = vadd.f32 %v111, %v121
  %v126 = vadd.f32 %v112, %v121
  %v127 = vld [vmem:[%s6] sm:$0xff]
  %v128 = vld [vmem:[%s6 + $0x8] sm:$0xf]
  %129 = vrot.lane.b32.xlu0 %v123, 36
  %v130 = vpop.permute.xlu0 %129
  %131 = vrot.lane.b32.xlu0 %v125, 36
  %v132 = vpop.permute.xlu0 %131
  %133 = vrot.lane.b32.xlu0 %v124, 36
  %v134 = vpop.permute.xlu0 %133
  %135 = vrot.lane.b32.xlu0 %v126, 36
  %v136 = vpop.permute.xlu0 %135
  %v137 = vlaneseq
  %v138 = vand.u32 %v137, 127
  %vm139 = vcmp.lt.s32.totalorder %v138, 36
  %v140 = vsel %vm139, %v130, %v134
  %v141 = vsel %vm139, %v132, %v136
  %v142 = vsel %vm139, %v134, %v130
  %v143 = vsel %vm139, %v136, %v132
  %v144 = vld [vmem:[%s1] ss:$8 sm:$0x3]
  %v146 = vlaneseq
  %v147 = vshrl.u32 %v146, 7
  %v148 = vsub.s32 0, %v147
  %v149 = vrot.slane %v144, %v148
  %v150 = vlaneseq
  %v151 = vshrl.u32 %v150, 7
  %v152 = vsub.s32 1, %v151
  %v153 = vrot.slane %v144, %v152
  %v156 = vmul.f32 %v142, %v149
  %v157 = vmul.f32 %v140, %v153
  %v158 = vmul.f32 %v143, %v149
  %v159 = vmul.f32 %v141, %v153
  %161 = vset.pattern.permute.xlu0 0
  %162 = vperm.xlu0 %161, %v127
  %v163 = vpop.permute.xlu0 %162
  %166 = vset.pattern.permute.xlu0 0
  %167 = vperm.xlu0 %166, %v128
  %v168 = vpop.permute.xlu0 %167
  %v170 = vmul.f32 %v156, %v163
  %v171 = vmul.f32 %v157, %v163
  %v172 = vmul.f32 %v158, %v168
  %v173 = vmul.f32 %v159, %v168
  %v174 = vadd.f32 %v170, 0.0
  %v175 = vadd.f32 %v171, 0.0
  %v176 = vadd.f32 %v172, 0.0
  %v177 = vadd.f32 %v173, 0.0
  %178 = vrot.lane.b32.xlu0 %v123, 35
  %v179 = vpop.permute.xlu0 %178
  %180 = vrot.lane.b32.xlu0 %v125, 35
  %v181 = vpop.permute.xlu0 %180
  %182 = vrot.lane.b32.xlu0 %v124, 35
  %v183 = vpop.permute.xlu0 %182
  %184 = vrot.lane.b32.xlu0 %v126, 35
  %v185 = vpop.permute.xlu0 %184
  %vm186 = vcmp.lt.s32.totalorder %v138, 35
  %v187 = vsel %vm186, %v179, %v183
  %v188 = vsel %vm186, %v181, %v185
  %v189 = vsel %vm186, %v183, %v179
  %v190 = vsel %vm186, %v185, %v181
  %s191 = scalar_lea.vmem %s1, 1
  %v192 = vld [vmem:[%s191] ss:$8 sm:$0x3]
  %v194 = vlaneseq
  %v195 = vshrl.u32 %v194, 7
  %v196 = vsub.s32 0, %v195
  %v197 = vrot.slane %v192, %v196
  %v198 = vlaneseq
  %v199 = vshrl.u32 %v198, 7
  %v200 = vsub.s32 1, %v199
  %v201 = vrot.slane %v192, %v200
  %v204 = vmul.f32 %v189, %v197
  %v205 = vmul.f32 %v187, %v201
  %v206 = vmul.f32 %v190, %v197
  %v207 = vmul.f32 %v188, %v201
  %208 = vset.pattern.permute.xlu0 1
  %209 = vperm.xlu0 %208, %v127
  %v210 = vpop.permute.xlu0 %209
  %212 = vset.pattern.permute.xlu0 1
  %213 = vperm.xlu0 %212, %v128
  %v214 = vpop.permute.xlu0 %213
  %v216 = vmul.f32 %v204, %v210
  %v217 = vmul.f32 %v205, %v210
  %v218 = vmul.f32 %v206, %v214
  %v219 = vmul.f32 %v207, %v214
  %v220 = vadd.f32 %v174, %v216
  %v221 = vadd.f32 %v175, %v217
  %v222 = vadd.f32 %v176, %v218
  %v223 = vadd.f32 %v177, %v219
  %224 = vrot.lane.b32.xlu0 %v123, 34
  %v225 = vpop.permute.xlu0 %224
  %226 = vrot.lane.b32.xlu0 %v125, 34
  %v227 = vpop.permute.xlu0 %226
  %228 = vrot.lane.b32.xlu0 %v124, 34
  %v229 = vpop.permute.xlu0 %228
  %230 = vrot.lane.b32.xlu0 %v126, 34
  %v231 = vpop.permute.xlu0 %230
  %vm232 = vcmp.lt.s32.totalorder %v138, 34
  %v233 = vsel %vm232, %v225, %v229
  %v234 = vsel %vm232, %v227, %v231
  %v235 = vsel %vm232, %v229, %v225
  %v236 = vsel %vm232, %v231, %v227
  %s237 = scalar_lea.vmem %s1, 2
  %v238 = vld [vmem:[%s237] ss:$8 sm:$0x3]
  %v240 = vlaneseq
  %v241 = vshrl.u32 %v240, 7
  %v242 = vsub.s32 0, %v241
  %v243 = vrot.slane %v238, %v242
  %v244 = vlaneseq
  %v245 = vshrl.u32 %v244, 7
  %v246 = vsub.s32 1, %v245
  %v247 = vrot.slane %v238, %v246
  %v250 = vmul.f32 %v235, %v243
  %v251 = vmul.f32 %v233, %v247
  %v252 = vmul.f32 %v236, %v243
  %v253 = vmul.f32 %v234, %v247
  %254 = vset.pattern.permute.xlu0 2
  %255 = vperm.xlu0 %254, %v127
  %v256 = vpop.permute.xlu0 %255
  %258 = vset.pattern.permute.xlu0 2
  %259 = vperm.xlu0 %258, %v128
  %v260 = vpop.permute.xlu0 %259
  %v262 = vmul.f32 %v250, %v256
  %v263 = vmul.f32 %v251, %v256
  %v264 = vmul.f32 %v252, %v260
  %v265 = vmul.f32 %v253, %v260
  %v266 = vadd.f32 %v220, %v262
  %v267 = vadd.f32 %v221, %v263
  %v268 = vadd.f32 %v222, %v264
  %v269 = vadd.f32 %v223, %v265
  %270 = vrot.lane.b32.xlu0 %v123, 33
  %v271 = vpop.permute.xlu0 %270
  %272 = vrot.lane.b32.xlu0 %v125, 33
  %v273 = vpop.permute.xlu0 %272
  %274 = vrot.lane.b32.xlu0 %v124, 33
  %v275 = vpop.permute.xlu0 %274
  %276 = vrot.lane.b32.xlu0 %v126, 33
  %v277 = vpop.permute.xlu0 %276
  %vm278 = vcmp.lt.s32.totalorder %v138, 33
  %v279 = vsel %vm278, %v271, %v275
  %v280 = vsel %vm278, %v273, %v277
  %v281 = vsel %vm278, %v275, %v271
  %v282 = vsel %vm278, %v277, %v273
  %s283 = scalar_lea.vmem %s1, 3
  %v284 = vld [vmem:[%s283] ss:$8 sm:$0x3]
  %v286 = vlaneseq
  %v287 = vshrl.u32 %v286, 7
  %v288 = vsub.s32 0, %v287
  %v289 = vrot.slane %v284, %v288
  %v290 = vlaneseq
  %v291 = vshrl.u32 %v290, 7
  %v292 = vsub.s32 1, %v291
  %v293 = vrot.slane %v284, %v292
  %v296 = vmul.f32 %v281, %v289
  %v297 = vmul.f32 %v279, %v293
  %v298 = vmul.f32 %v282, %v289
  %v299 = vmul.f32 %v280, %v293
  %300 = vset.pattern.permute.xlu0 3
  %301 = vperm.xlu0 %300, %v127
  %v302 = vpop.permute.xlu0 %301
  %304 = vset.pattern.permute.xlu0 3
  %305 = vperm.xlu0 %304, %v128
  %v306 = vpop.permute.xlu0 %305
  %v308 = vmul.f32 %v296, %v302
  %v309 = vmul.f32 %v297, %v302
  %v310 = vmul.f32 %v298, %v306
  %v311 = vmul.f32 %v299, %v306
  %v312 = vadd.f32 %v266, %v308
  %v313 = vadd.f32 %v267, %v309
  %v314 = vadd.f32 %v268, %v310
  %v315 = vadd.f32 %v269, %v311
  %316 = vrot.lane.b32.xlu0 %v123, 32
  %v317 = vpop.permute.xlu0 %316
  %318 = vrot.lane.b32.xlu0 %v125, 32
  %v319 = vpop.permute.xlu0 %318
  %320 = vrot.lane.b32.xlu0 %v124, 32
  %v321 = vpop.permute.xlu0 %320
  %322 = vrot.lane.b32.xlu0 %v126, 32
  %v323 = vpop.permute.xlu0 %322
  %vm324 = vcmp.lt.s32.totalorder %v138, 32
  %v325 = vsel %vm324, %v317, %v321
  %v326 = vsel %vm324, %v319, %v323
  %v327 = vsel %vm324, %v321, %v317
  %v328 = vsel %vm324, %v323, %v319
  %s329 = scalar_lea.vmem %s1, 4
  %v330 = vld [vmem:[%s329] ss:$8 sm:$0x3]
  %v332 = vlaneseq
  %v333 = vshrl.u32 %v332, 7
  %v334 = vsub.s32 0, %v333
  %v335 = vrot.slane %v330, %v334
  %v336 = vlaneseq
  %v337 = vshrl.u32 %v336, 7
  %v338 = vsub.s32 1, %v337
  %v339 = vrot.slane %v330, %v338
  %v342 = vmul.f32 %v327, %v335
  %v343 = vmul.f32 %v325, %v339
  %v344 = vmul.f32 %v328, %v335
  %v345 = vmul.f32 %v326, %v339
  %346 = vset.pattern.permute.xlu0 4
  %347 = vperm.xlu0 %346, %v127
  %v348 = vpop.permute.xlu0 %347
  %350 = vset.pattern.permute.xlu0 4
  %351 = vperm.xlu0 %350, %v128
  %v352 = vpop.permute.xlu0 %351
  %v354 = vmul.f32 %v342, %v348
  %v355 = vmul.f32 %v343, %v348
  %v356 = vmul.f32 %v344, %v352
  %v357 = vmul.f32 %v345, %v352
  %v358 = vadd.f32 %v312, %v354
  %v359 = vadd.f32 %v313, %v355
  %v360 = vadd.f32 %v314, %v356
  %v361 = vadd.f32 %v315, %v357
  %362 = vrot.lane.b32.xlu0 %v123, 31
  %v363 = vpop.permute.xlu0 %362
  %364 = vrot.lane.b32.xlu0 %v125, 31
  %v365 = vpop.permute.xlu0 %364
  %366 = vrot.lane.b32.xlu0 %v124, 31
  %v367 = vpop.permute.xlu0 %366
  %368 = vrot.lane.b32.xlu0 %v126, 31
  %v369 = vpop.permute.xlu0 %368
  %vm370 = vcmp.lt.s32.totalorder %v138, 31
  %v371 = vsel %vm370, %v363, %v367
  %v372 = vsel %vm370, %v365, %v369
  %v373 = vsel %vm370, %v367, %v363
  %v374 = vsel %vm370, %v369, %v365
  %s375 = scalar_lea.vmem %s1, 5
  %v376 = vld [vmem:[%s375] ss:$8 sm:$0x3]
  %v378 = vlaneseq
  %v379 = vshrl.u32 %v378, 7
  %v380 = vsub.s32 0, %v379
  %v381 = vrot.slane %v376, %v380
  %v382 = vlaneseq
  %v383 = vshrl.u32 %v382, 7
  %v384 = vsub.s32 1, %v383
  %v385 = vrot.slane %v376, %v384
  %v388 = vmul.f32 %v373, %v381
  %v389 = vmul.f32 %v371, %v385
  %v390 = vmul.f32 %v374, %v381
  %v391 = vmul.f32 %v372, %v385
  %392 = vset.pattern.permute.xlu0 5
  %393 = vperm.xlu0 %392, %v127
  %v394 = vpop.permute.xlu0 %393
  %396 = vset.pattern.permute.xlu0 5
  %397 = vperm.xlu0 %396, %v128
  %v398 = vpop.permute.xlu0 %397
  %v400 = vmul.f32 %v388, %v394
  %v401 = vmul.f32 %v389, %v394
  %v402 = vmul.f32 %v390, %v398
  %v403 = vmul.f32 %v391, %v398
  %v404 = vadd.f32 %v358, %v400
  %v405 = vadd.f32 %v359, %v401
  %v406 = vadd.f32 %v360, %v402
  %v407 = vadd.f32 %v361, %v403
  %408 = vrot.lane.b32.xlu0 %v123, 30
  %v409 = vpop.permute.xlu0 %408
  %410 = vrot.lane.b32.xlu0 %v125, 30
  %v411 = vpop.permute.xlu0 %410
  %412 = vrot.lane.b32.xlu0 %v124, 30
  %v413 = vpop.permute.xlu0 %412
  %414 = vrot.lane.b32.xlu0 %v126, 30
  %v415 = vpop.permute.xlu0 %414
  %vm416 = vcmp.lt.s32.totalorder %v138, 30
  %v417 = vsel %vm416, %v409, %v413
  %v418 = vsel %vm416, %v411, %v415
  %v419 = vsel %vm416, %v413, %v409
  %v420 = vsel %vm416, %v415, %v411
  %s421 = scalar_lea.vmem %s1, 6
  %v422 = vld [vmem:[%s421] ss:$8 sm:$0x3]
  %v424 = vlaneseq
  %v425 = vshrl.u32 %v424, 7
  %v426 = vsub.s32 0, %v425
  %v427 = vrot.slane %v422, %v426
  %v428 = vlaneseq
  %v429 = vshrl.u32 %v428, 7
  %v430 = vsub.s32 1, %v429
  %v431 = vrot.slane %v422, %v430
  %v434 = vmul.f32 %v419, %v427
  %v435 = vmul.f32 %v417, %v431
  %v436 = vmul.f32 %v420, %v427
  %v437 = vmul.f32 %v418, %v431
  %438 = vset.pattern.permute.xlu0 6
  %439 = vperm.xlu0 %438, %v127
  %v440 = vpop.permute.xlu0 %439
  %442 = vset.pattern.permute.xlu0 6
  %443 = vperm.xlu0 %442, %v128
  %v444 = vpop.permute.xlu0 %443
  %v446 = vmul.f32 %v434, %v440
  %v447 = vmul.f32 %v435, %v440
  %v448 = vmul.f32 %v436, %v444
  %v449 = vmul.f32 %v437, %v444
  %v450 = vadd.f32 %v404, %v446
  %v451 = vadd.f32 %v405, %v447
  %v452 = vadd.f32 %v406, %v448
  %v453 = vadd.f32 %v407, %v449
  %454 = vrot.lane.b32.xlu0 %v123, 29
  %v455 = vpop.permute.xlu0 %454
  %456 = vrot.lane.b32.xlu0 %v125, 29
  %v457 = vpop.permute.xlu0 %456
  %458 = vrot.lane.b32.xlu0 %v124, 29
  %v459 = vpop.permute.xlu0 %458
  %460 = vrot.lane.b32.xlu0 %v126, 29
  %v461 = vpop.permute.xlu0 %460
  %vm462 = vcmp.lt.s32.totalorder %v138, 29
  %v463 = vsel %vm462, %v455, %v459
  %v464 = vsel %vm462, %v457, %v461
  %v465 = vsel %vm462, %v459, %v455
  %v466 = vsel %vm462, %v461, %v457
  %s467 = scalar_lea.vmem %s1, 7
  %v468 = vld [vmem:[%s467] ss:$8 sm:$0x3]
  %v470 = vlaneseq
  %v471 = vshrl.u32 %v470, 7
  %v472 = vsub.s32 0, %v471
  %v473 = vrot.slane %v468, %v472
  %v474 = vlaneseq
  %v475 = vshrl.u32 %v474, 7
  %v476 = vsub.s32 1, %v475
  %v477 = vrot.slane %v468, %v476
  %v480 = vmul.f32 %v465, %v473
  %v481 = vmul.f32 %v463, %v477
  %v482 = vmul.f32 %v466, %v473
  %v483 = vmul.f32 %v464, %v477
  %484 = vset.pattern.permute.xlu0 7
  %485 = vperm.xlu0 %484, %v127
  %v486 = vpop.permute.xlu0 %485
  %488 = vset.pattern.permute.xlu0 7
  %489 = vperm.xlu0 %488, %v128
  %v490 = vpop.permute.xlu0 %489
  %v492 = vmul.f32 %v480, %v486
  %v493 = vmul.f32 %v481, %v486
  %v494 = vmul.f32 %v482, %v490
  %v495 = vmul.f32 %v483, %v490
  %v496 = vadd.f32 %v450, %v492
  %v497 = vadd.f32 %v451, %v493
  %v498 = vadd.f32 %v452, %v494
  %v499 = vadd.f32 %v453, %v495
  %500 = vrot.lane.b32.xlu0 %v123, 28
  %v501 = vpop.permute.xlu0 %500
  %502 = vrot.lane.b32.xlu0 %v125, 28
  %v503 = vpop.permute.xlu0 %502
  %504 = vrot.lane.b32.xlu0 %v124, 28
  %v505 = vpop.permute.xlu0 %504
  %506 = vrot.lane.b32.xlu0 %v126, 28
  %v507 = vpop.permute.xlu0 %506
  %vm508 = vcmp.lt.s32.totalorder %v138, 28
  %v509 = vsel %vm508, %v501, %v505
  %v510 = vsel %vm508, %v503, %v507
  %v511 = vsel %vm508, %v505, %v501
  %v512 = vsel %vm508, %v507, %v503
  %s513 = scalar_lea.vmem %s1, 16
  %v514 = vld [vmem:[%s513] ss:$8 sm:$0x3]
  %v516 = vlaneseq
  %v517 = vshrl.u32 %v516, 7
  %v518 = vsub.s32 0, %v517
  %v519 = vrot.slane %v514, %v518
  %v520 = vlaneseq
  %v521 = vshrl.u32 %v520, 7
  %v522 = vsub.s32 1, %v521
  %v523 = vrot.slane %v514, %v522
  %v526 = vmul.f32 %v511, %v519
  %v527 = vmul.f32 %v509, %v523
  %v528 = vmul.f32 %v512, %v519
  %v529 = vmul.f32 %v510, %v523
  %530 = vset.pattern.permute.xlu0 8
  %531 = vperm.xlu0 %530, %v127
  %v532 = vpop.permute.xlu0 %531
  %534 = vset.pattern.permute.xlu0 8
  %535 = vperm.xlu0 %534, %v128
  %v536 = vpop.permute.xlu0 %535
  %v538 = vmul.f32 %v526, %v532
  %v539 = vmul.f32 %v527, %v532
  %v540 = vmul.f32 %v528, %v536
  %v541 = vmul.f32 %v529, %v536
  %v542 = vadd.f32 %v496, %v538
  %v543 = vadd.f32 %v497, %v539
  %v544 = vadd.f32 %v498, %v540
  %v545 = vadd.f32 %v499, %v541
  %s546 = scalar_lea.vmem %s1, 17
  %v547 = vld [vmem:[%s546] ss:$8 sm:$0x3]
  %v549 = vlaneseq
  %v550 = vshrl.u32 %v549, 7
  %v551 = vsub.s32 0, %v550
  %v552 = vrot.slane %v547, %v551
  %v553 = vlaneseq
  %v554 = vshrl.u32 %v553, 7
  %v555 = vsub.s32 1, %v554
  %v556 = vrot.slane %v547, %v555
  %v559 = vmul.f32 %v511, %v552
  %v560 = vmul.f32 %v509, %v556
  %v561 = vmul.f32 %v512, %v552
  %v562 = vmul.f32 %v510, %v556
  %563 = vset.pattern.permute.xlu0 9
  %564 = vperm.xlu0 %563, %v127
  %v565 = vpop.permute.xlu0 %564
  %567 = vset.pattern.permute.xlu0 9
  %568 = vperm.xlu0 %567, %v128
  %v569 = vpop.permute.xlu0 %568
  %v571 = vmul.f32 %v559, %v565
  %v572 = vmul.f32 %v560, %v565
  %v573 = vmul.f32 %v561, %v569
  %v574 = vmul.f32 %v562, %v569
  %v575 = vadd.f32 %v542, %v571
  %v576 = vadd.f32 %v543, %v572
  %v577 = vadd.f32 %v544, %v573
  %v578 = vadd.f32 %v545, %v574
  %579 = vrot.lane.b32.xlu0 %v123, 27
  %v580 = vpop.permute.xlu0 %579
  %581 = vrot.lane.b32.xlu0 %v125, 27
  %v582 = vpop.permute.xlu0 %581
  %583 = vrot.lane.b32.xlu0 %v124, 27
  %v584 = vpop.permute.xlu0 %583
  %585 = vrot.lane.b32.xlu0 %v126, 27
  %v586 = vpop.permute.xlu0 %585
  %vm587 = vcmp.lt.s32.totalorder %v138, 27
  %v588 = vsel %vm587, %v580, %v584
  %v589 = vsel %vm587, %v582, %v586
  %v590 = vsel %vm587, %v584, %v580
  %v591 = vsel %vm587, %v586, %v582
  %s592 = scalar_lea.vmem %s1, 18
  %v593 = vld [vmem:[%s592] ss:$8 sm:$0x3]
  %v595 = vlaneseq
  %v596 = vshrl.u32 %v595, 7
  %v597 = vsub.s32 0, %v596
  %v598 = vrot.slane %v593, %v597
  %v599 = vlaneseq
  %v600 = vshrl.u32 %v599, 7
  %v601 = vsub.s32 1, %v600
  %v602 = vrot.slane %v593, %v601
  %v605 = vmul.f32 %v590, %v598
  %v606 = vmul.f32 %v588, %v602
  %v607 = vmul.f32 %v591, %v598
  %v608 = vmul.f32 %v589, %v602
  %609 = vset.pattern.permute.xlu0 10
  %610 = vperm.xlu0 %609, %v127
  %v611 = vpop.permute.xlu0 %610
  %613 = vset.pattern.permute.xlu0 10
  %614 = vperm.xlu0 %613, %v128
  %v615 = vpop.permute.xlu0 %614
  %v617 = vmul.f32 %v605, %v611
  %v618 = vmul.f32 %v606, %v611
  %v619 = vmul.f32 %v607, %v615
  %v620 = vmul.f32 %v608, %v615
  %v621 = vadd.f32 %v575, %v617
  %v622 = vadd.f32 %v576, %v618
  %v623 = vadd.f32 %v577, %v619
  %v624 = vadd.f32 %v578, %v620
  %625 = vrot.lane.b32.xlu0 %v123, 26
  %v626 = vpop.permute.xlu0 %625
  %627 = vrot.lane.b32.xlu0 %v125, 26
  %v628 = vpop.permute.xlu0 %627
  %629 = vrot.lane.b32.xlu0 %v124, 26
  %v630 = vpop.permute.xlu0 %629
  %631 = vrot.lane.b32.xlu0 %v126, 26
  %v632 = vpop.permute.xlu0 %631
  %vm633 = vcmp.lt.s32.totalorder %v138, 26
  %v634 = vsel %vm633, %v626, %v630
  %v635 = vsel %vm633, %v628, %v632
  %v636 = vsel %vm633, %v630, %v626
  %v637 = vsel %vm633, %v632, %v628
  %s638 = scalar_lea.vmem %s1, 19
  %v639 = vld [vmem:[%s638] ss:$8 sm:$0x3]
  %v641 = vlaneseq
  %v642 = vshrl.u32 %v641, 7
  %v643 = vsub.s32 0, %v642
  %v644 = vrot.slane %v639, %v643
  %v645 = vlaneseq
  %v646 = vshrl.u32 %v645, 7
  %v647 = vsub.s32 1, %v646
  %v648 = vrot.slane %v639, %v647
  %v651 = vmul.f32 %v636, %v644
  %v652 = vmul.f32 %v634, %v648
  %v653 = vmul.f32 %v637, %v644
  %v654 = vmul.f32 %v635, %v648
  %655 = vset.pattern.permute.xlu0 11
  %656 = vperm.xlu0 %655, %v127
  %v657 = vpop.permute.xlu0 %656
  %659 = vset.pattern.permute.xlu0 11
  %660 = vperm.xlu0 %659, %v128
  %v661 = vpop.permute.xlu0 %660
  %v663 = vmul.f32 %v651, %v657
  %v664 = vmul.f32 %v652, %v657
  %v665 = vmul.f32 %v653, %v661
  %v666 = vmul.f32 %v654, %v661
  %v667 = vadd.f32 %v621, %v663
  %v668 = vadd.f32 %v622, %v664
  %v669 = vadd.f32 %v623, %v665
  %v670 = vadd.f32 %v624, %v666
  %671 = vrot.lane.b32.xlu0 %v123, 25
  %v672 = vpop.permute.xlu0 %671
  %673 = vrot.lane.b32.xlu0 %v125, 25
  %v674 = vpop.permute.xlu0 %673
  %675 = vrot.lane.b32.xlu0 %v124, 25
  %v676 = vpop.permute.xlu0 %675
  %677 = vrot.lane.b32.xlu0 %v126, 25
  %v678 = vpop.permute.xlu0 %677
  %vm679 = vcmp.lt.s32.totalorder %v138, 25
  %v680 = vsel %vm679, %v672, %v676
  %v681 = vsel %vm679, %v674, %v678
  %v682 = vsel %vm679, %v676, %v672
  %v683 = vsel %vm679, %v678, %v674
  %s684 = scalar_lea.vmem %s1, 20
  %v685 = vld [vmem:[%s684] ss:$8 sm:$0x3]
  %v687 = vlaneseq
  %v688 = vshrl.u32 %v687, 7
  %v689 = vsub.s32 0, %v688
  %v690 = vrot.slane %v685, %v689
  %v691 = vlaneseq
  %v692 = vshrl.u32 %v691, 7
  %v693 = vsub.s32 1, %v692
  %v694 = vrot.slane %v685, %v693
  %v697 = vmul.f32 %v682, %v690
  %v698 = vmul.f32 %v680, %v694
  %v699 = vmul.f32 %v683, %v690
  %v700 = vmul.f32 %v681, %v694
  %701 = vset.pattern.permute.xlu0 12
  %702 = vperm.xlu0 %701, %v127
  %v703 = vpop.permute.xlu0 %702
  %705 = vset.pattern.permute.xlu0 12
  %706 = vperm.xlu0 %705, %v128
  %v707 = vpop.permute.xlu0 %706
  %v709 = vmul.f32 %v697, %v703
  %v710 = vmul.f32 %v698, %v703
  %v711 = vmul.f32 %v699, %v707
  %v712 = vmul.f32 %v700, %v707
  %v713 = vadd.f32 %v667, %v709
  %v714 = vadd.f32 %v668, %v710
  %v715 = vadd.f32 %v669, %v711
  %v716 = vadd.f32 %v670, %v712
  %717 = vrot.lane.b32.xlu0 %v123, 24
  %v718 = vpop.permute.xlu0 %717
  %719 = vrot.lane.b32.xlu0 %v125, 24
  %v720 = vpop.permute.xlu0 %719
  %721 = vrot.lane.b32.xlu0 %v124, 24
  %v722 = vpop.permute.xlu0 %721
  %723 = vrot.lane.b32.xlu0 %v126, 24
  %v724 = vpop.permute.xlu0 %723
  %vm725 = vcmp.lt.s32.totalorder %v138, 24
  %v726 = vsel %vm725, %v718, %v722
  %v727 = vsel %vm725, %v720, %v724
  %v728 = vsel %vm725, %v722, %v718
  %v729 = vsel %vm725, %v724, %v720
  %s730 = scalar_lea.vmem %s1, 21
  %v731 = vld [vmem:[%s730] ss:$8 sm:$0x3]
  %v733 = vlaneseq
  %v734 = vshrl.u32 %v733, 7
  %v735 = vsub.s32 0, %v734
  %v736 = vrot.slane %v731, %v735
  %v737 = vlaneseq
  %v738 = vshrl.u32 %v737, 7
  %v739 = vsub.s32 1, %v738
  %v740 = vrot.slane %v731, %v739
  %v743 = vmul.f32 %v728, %v736
  %v744 = vmul.f32 %v726, %v740
  %v745 = vmul.f32 %v729, %v736
  %v746 = vmul.f32 %v727, %v740
  %747 = vset.pattern.permute.xlu0 13
  %748 = vperm.xlu0 %747, %v127
  %v749 = vpop.permute.xlu0 %748
  %751 = vset.pattern.permute.xlu0 13
  %752 = vperm.xlu0 %751, %v128
  %v753 = vpop.permute.xlu0 %752
  %v755 = vmul.f32 %v743, %v749
  %v756 = vmul.f32 %v744, %v749
  %v757 = vmul.f32 %v745, %v753
  %v758 = vmul.f32 %v746, %v753
  %v759 = vadd.f32 %v713, %v755
  %v760 = vadd.f32 %v714, %v756
  %v761 = vadd.f32 %v715, %v757
  %v762 = vadd.f32 %v716, %v758
  %763 = vrot.lane.b32.xlu0 %v123, 23
  %v764 = vpop.permute.xlu0 %763
  %765 = vrot.lane.b32.xlu0 %v125, 23
  %v766 = vpop.permute.xlu0 %765
  %767 = vrot.lane.b32.xlu0 %v124, 23
  %v768 = vpop.permute.xlu0 %767
  %769 = vrot.lane.b32.xlu0 %v126, 23
  %v770 = vpop.permute.xlu0 %769
  %vm771 = vcmp.lt.s32.totalorder %v138, 23
  %v772 = vsel %vm771, %v764, %v768
  %v773 = vsel %vm771, %v766, %v770
  %v774 = vsel %vm771, %v768, %v764
  %v775 = vsel %vm771, %v770, %v766
  %s776 = scalar_lea.vmem %s1, 22
  %v777 = vld [vmem:[%s776] ss:$8 sm:$0x3]
  %v779 = vlaneseq
  %v780 = vshrl.u32 %v779, 7
  %v781 = vsub.s32 0, %v780
  %v782 = vrot.slane %v777, %v781
  %v783 = vlaneseq
  %v784 = vshrl.u32 %v783, 7
  %v785 = vsub.s32 1, %v784
  %v786 = vrot.slane %v777, %v785
  %v789 = vmul.f32 %v774, %v782
  %v790 = vmul.f32 %v772, %v786
  %v791 = vmul.f32 %v775, %v782
  %v792 = vmul.f32 %v773, %v786
  %793 = vset.pattern.permute.xlu0 14
  %794 = vperm.xlu0 %793, %v127
  %v795 = vpop.permute.xlu0 %794
  %797 = vset.pattern.permute.xlu0 14
  %798 = vperm.xlu0 %797, %v128
  %v799 = vpop.permute.xlu0 %798
  %v801 = vmul.f32 %v789, %v795
  %v802 = vmul.f32 %v790, %v795
  %v803 = vmul.f32 %v791, %v799
  %v804 = vmul.f32 %v792, %v799
  %v805 = vadd.f32 %v759, %v801
  %v806 = vadd.f32 %v760, %v802
  %v807 = vadd.f32 %v761, %v803
  %v808 = vadd.f32 %v762, %v804
  %809 = vrot.lane.b32.xlu0 %v123, 22
  %v810 = vpop.permute.xlu0 %809
  %811 = vrot.lane.b32.xlu0 %v125, 22
  %v812 = vpop.permute.xlu0 %811
  %813 = vrot.lane.b32.xlu0 %v124, 22
  %v814 = vpop.permute.xlu0 %813
  %815 = vrot.lane.b32.xlu0 %v126, 22
  %v816 = vpop.permute.xlu0 %815
  %vm817 = vcmp.lt.s32.totalorder %v138, 22
  %v818 = vsel %vm817, %v810, %v814
  %v819 = vsel %vm817, %v812, %v816
  %v820 = vsel %vm817, %v814, %v810
  %v821 = vsel %vm817, %v816, %v812
  %s822 = scalar_lea.vmem %s1, 23
  %v823 = vld [vmem:[%s822] ss:$8 sm:$0x3]
  %v825 = vlaneseq
  %v826 = vshrl.u32 %v825, 7
  %v827 = vsub.s32 0, %v826
  %v828 = vrot.slane %v823, %v827
  %v829 = vlaneseq
  %v830 = vshrl.u32 %v829, 7
  %v831 = vsub.s32 1, %v830
  %v832 = vrot.slane %v823, %v831
  %v835 = vmul.f32 %v820, %v828
  %v836 = vmul.f32 %v818, %v832
  %v837 = vmul.f32 %v821, %v828
  %v838 = vmul.f32 %v819, %v832
  %839 = vset.pattern.permute.xlu0 15
  %840 = vperm.xlu0 %839, %v127
  %v841 = vpop.permute.xlu0 %840
  %843 = vset.pattern.permute.xlu0 15
  %844 = vperm.xlu0 %843, %v128
  %v845 = vpop.permute.xlu0 %844
  %v847 = vmul.f32 %v835, %v841
  %v848 = vmul.f32 %v836, %v841
  %v849 = vmul.f32 %v837, %v845
  %v850 = vmul.f32 %v838, %v845
  %v851 = vadd.f32 %v805, %v847
  %v852 = vadd.f32 %v806, %v848
  %v853 = vadd.f32 %v807, %v849
  %v854 = vadd.f32 %v808, %v850
  %855 = vrot.lane.b32.xlu0 %v123, 21
  %v856 = vpop.permute.xlu0 %855
  %857 = vrot.lane.b32.xlu0 %v125, 21
  %v858 = vpop.permute.xlu0 %857
  %859 = vrot.lane.b32.xlu0 %v124, 21
  %v860 = vpop.permute.xlu0 %859
  %861 = vrot.lane.b32.xlu0 %v126, 21
  %v862 = vpop.permute.xlu0 %861
  %vm863 = vcmp.lt.s32.totalorder %v138, 21
  %v864 = vsel %vm863, %v856, %v860
  %v865 = vsel %vm863, %v858, %v862
  %v866 = vsel %vm863, %v860, %v856
  %v867 = vsel %vm863, %v862, %v858
  %s868 = scalar_lea.vmem %s1, 32
  %v869 = vld [vmem:[%s868] ss:$8 sm:$0x3]
  %v871 = vlaneseq
  %v872 = vshrl.u32 %v871, 7
  %v873 = vsub.s32 0, %v872
  %v874 = vrot.slane %v869, %v873
  %v875 = vlaneseq
  %v876 = vshrl.u32 %v875, 7
  %v877 = vsub.s32 1, %v876
  %v878 = vrot.slane %v869, %v877
  %v881 = vmul.f32 %v866, %v874
  %v882 = vmul.f32 %v864, %v878
  %v883 = vmul.f32 %v867, %v874
  %v884 = vmul.f32 %v865, %v878
  %885 = vset.pattern.permute.xlu0 16
  %886 = vperm.xlu0 %885, %v127
  %v887 = vpop.permute.xlu0 %886
  %889 = vset.pattern.permute.xlu0 16
  %890 = vperm.xlu0 %889, %v128
  %v891 = vpop.permute.xlu0 %890
  %v893 = vmul.f32 %v881, %v887
  %v894 = vmul.f32 %v882, %v887
  %v895 = vmul.f32 %v883, %v891
  %v896 = vmul.f32 %v884, %v891
  %v897 = vadd.f32 %v851, %v893
  %v898 = vadd.f32 %v852, %v894
  %v899 = vadd.f32 %v853, %v895
  %v900 = vadd.f32 %v854, %v896
  %901 = vrot.lane.b32.xlu0 %v123, 20
  %v902 = vpop.permute.xlu0 %901
  %903 = vrot.lane.b32.xlu0 %v125, 20
  %v904 = vpop.permute.xlu0 %903
  %905 = vrot.lane.b32.xlu0 %v124, 20
  %v906 = vpop.permute.xlu0 %905
  %907 = vrot.lane.b32.xlu0 %v126, 20
  %v908 = vpop.permute.xlu0 %907
  %vm909 = vcmp.lt.s32.totalorder %v138, 20
  %v910 = vsel %vm909, %v902, %v906
  %v911 = vsel %vm909, %v904, %v908
  %v912 = vsel %vm909, %v906, %v902
  %v913 = vsel %vm909, %v908, %v904
  %s914 = scalar_lea.vmem %s1, 33
  %v915 = vld [vmem:[%s914] ss:$8 sm:$0x3]
  %v917 = vlaneseq
  %v918 = vshrl.u32 %v917, 7
  %v919 = vsub.s32 0, %v918
  %v920 = vrot.slane %v915, %v919
  %v921 = vlaneseq
  %v922 = vshrl.u32 %v921, 7
  %v923 = vsub.s32 1, %v922
  %v924 = vrot.slane %v915, %v923
  %v927 = vmul.f32 %v912, %v920
  %v928 = vmul.f32 %v910, %v924
  %v929 = vmul.f32 %v913, %v920
  %v930 = vmul.f32 %v911, %v924
  %931 = vset.pattern.permute.xlu0 17
  %932 = vperm.xlu0 %931, %v127
  %v933 = vpop.permute.xlu0 %932
  %935 = vset.pattern.permute.xlu0 17
  %936 = vperm.xlu0 %935, %v128
  %v937 = vpop.permute.xlu0 %936
  %v939 = vmul.f32 %v927, %v933
  %v940 = vmul.f32 %v928, %v933
  %v941 = vmul.f32 %v929, %v937
  %v942 = vmul.f32 %v930, %v937
  %v943 = vadd.f32 %v897, %v939
  %v944 = vadd.f32 %v898, %v940
  %v945 = vadd.f32 %v899, %v941
  %v946 = vadd.f32 %v900, %v942
  %s947 = scalar_lea.vmem %s1, 34
  %v948 = vld [vmem:[%s947] ss:$8 sm:$0x3]
  %v950 = vlaneseq
  %v951 = vshrl.u32 %v950, 7
  %v952 = vsub.s32 0, %v951
  %v953 = vrot.slane %v948, %v952
  %v954 = vlaneseq
  %v955 = vshrl.u32 %v954, 7
  %v956 = vsub.s32 1, %v955
  %v957 = vrot.slane %v948, %v956
  %v960 = vmul.f32 %v912, %v953
  %v961 = vmul.f32 %v910, %v957
  %v962 = vmul.f32 %v913, %v953
  %v963 = vmul.f32 %v911, %v957
  %964 = vset.pattern.permute.xlu0 18
  %965 = vperm.xlu0 %964, %v127
  %v966 = vpop.permute.xlu0 %965
  %968 = vset.pattern.permute.xlu0 18
  %969 = vperm.xlu0 %968, %v128
  %v970 = vpop.permute.xlu0 %969
  %v972 = vmul.f32 %v960, %v966
  %v973 = vmul.f32 %v961, %v966
  %v974 = vmul.f32 %v962, %v970
  %v975 = vmul.f32 %v963, %v970
  %v976 = vadd.f32 %v943, %v972
  %v977 = vadd.f32 %v944, %v973
  %v978 = vadd.f32 %v945, %v974
  %v979 = vadd.f32 %v946, %v975
  %980 = vrot.lane.b32.xlu0 %v123, 19
  %v981 = vpop.permute.xlu0 %980
  %982 = vrot.lane.b32.xlu0 %v125, 19
  %v983 = vpop.permute.xlu0 %982
  %984 = vrot.lane.b32.xlu0 %v124, 19
  %v985 = vpop.permute.xlu0 %984
  %986 = vrot.lane.b32.xlu0 %v126, 19
  %v987 = vpop.permute.xlu0 %986
  %vm988 = vcmp.lt.s32.totalorder %v138, 19
  %v989 = vsel %vm988, %v981, %v985
  %v990 = vsel %vm988, %v983, %v987
  %v991 = vsel %vm988, %v985, %v981
  %v992 = vsel %vm988, %v987, %v983
  %s993 = scalar_lea.vmem %s1, 35
  %v994 = vld [vmem:[%s993] ss:$8 sm:$0x3]
  %v996 = vlaneseq
  %v997 = vshrl.u32 %v996, 7
  %v998 = vsub.s32 0, %v997
  %v999 = vrot.slane %v994, %v998
  %v1000 = vlaneseq
  %v1001 = vshrl.u32 %v1000, 7
  %v1002 = vsub.s32 1, %v1001
  %v1003 = vrot.slane %v994, %v1002
  %v1006 = vmul.f32 %v991, %v999
  %v1007 = vmul.f32 %v989, %v1003
  %v1008 = vmul.f32 %v992, %v999
  %v1009 = vmul.f32 %v990, %v1003
  %1010 = vset.pattern.permute.xlu0 19
  %1011 = vperm.xlu0 %1010, %v127
  %v1012 = vpop.permute.xlu0 %1011
  %1014 = vset.pattern.permute.xlu0 19
  %1015 = vperm.xlu0 %1014, %v128
  %v1016 = vpop.permute.xlu0 %1015
  %v1018 = vmul.f32 %v1006, %v1012
  %v1019 = vmul.f32 %v1007, %v1012
  %v1020 = vmul.f32 %v1008, %v1016
  %v1021 = vmul.f32 %v1009, %v1016
  %v1022 = vadd.f32 %v976, %v1018
  %v1023 = vadd.f32 %v977, %v1019
  %v1024 = vadd.f32 %v978, %v1020
  %v1025 = vadd.f32 %v979, %v1021
  %1026 = vrot.lane.b32.xlu0 %v123, 18
  %v1027 = vpop.permute.xlu0 %1026
  %1028 = vrot.lane.b32.xlu0 %v125, 18
  %v1029 = vpop.permute.xlu0 %1028
  %1030 = vrot.lane.b32.xlu0 %v124, 18
  %v1031 = vpop.permute.xlu0 %1030
  %1032 = vrot.lane.b32.xlu0 %v126, 18
  %v1033 = vpop.permute.xlu0 %1032
  %vm1034 = vcmp.lt.s32.totalorder %v138, 18
  %v1035 = vsel %vm1034, %v1027, %v1031
  %v1036 = vsel %vm1034, %v1029, %v1033
  %v1037 = vsel %vm1034, %v1031, %v1027
  %v1038 = vsel %vm1034, %v1033, %v1029
  %s1039 = scalar_lea.vmem %s1, 36
  %v1040 = vld [vmem:[%s1039] ss:$8 sm:$0x3]
  %v1042 = vlaneseq
  %v1043 = vshrl.u32 %v1042, 7
  %v1044 = vsub.s32 0, %v1043
  %v1045 = vrot.slane %v1040, %v1044
  %v1046 = vlaneseq
  %v1047 = vshrl.u32 %v1046, 7
  %v1048 = vsub.s32 1, %v1047
  %v1049 = vrot.slane %v1040, %v1048
  %v1052 = vmul.f32 %v1037, %v1045
  %v1053 = vmul.f32 %v1035, %v1049
  %v1054 = vmul.f32 %v1038, %v1045
  %v1055 = vmul.f32 %v1036, %v1049
  %1056 = vset.pattern.permute.xlu0 20
  %1057 = vperm.xlu0 %1056, %v127
  %v1058 = vpop.permute.xlu0 %1057
  %1060 = vset.pattern.permute.xlu0 20
  %1061 = vperm.xlu0 %1060, %v128
  %v1062 = vpop.permute.xlu0 %1061
  %v1064 = vmul.f32 %v1052, %v1058
  %v1065 = vmul.f32 %v1053, %v1058
  %v1066 = vmul.f32 %v1054, %v1062
  %v1067 = vmul.f32 %v1055, %v1062
  %v1068 = vadd.f32 %v1022, %v1064
  %v1069 = vadd.f32 %v1023, %v1065
  %v1070 = vadd.f32 %v1024, %v1066
  %v1071 = vadd.f32 %v1025, %v1067
  %1072 = vrot.lane.b32.xlu0 %v123, 17
  %v1073 = vpop.permute.xlu0 %1072
  %1074 = vrot.lane.b32.xlu0 %v125, 17
  %v1075 = vpop.permute.xlu0 %1074
  %1076 = vrot.lane.b32.xlu0 %v124, 17
  %v1077 = vpop.permute.xlu0 %1076
  %1078 = vrot.lane.b32.xlu0 %v126, 17
  %v1079 = vpop.permute.xlu0 %1078
  %vm1080 = vcmp.lt.s32.totalorder %v138, 17
  %v1081 = vsel %vm1080, %v1073, %v1077
  %v1082 = vsel %vm1080, %v1075, %v1079
  %v1083 = vsel %vm1080, %v1077, %v1073
  %v1084 = vsel %vm1080, %v1079, %v1075
  %s1085 = scalar_lea.vmem %s1, 37
  %v1086 = vld [vmem:[%s1085] ss:$8 sm:$0x3]
  %v1088 = vlaneseq
  %v1089 = vshrl.u32 %v1088, 7
  %v1090 = vsub.s32 0, %v1089
  %v1091 = vrot.slane %v1086, %v1090
  %v1092 = vlaneseq
  %v1093 = vshrl.u32 %v1092, 7
  %v1094 = vsub.s32 1, %v1093
  %v1095 = vrot.slane %v1086, %v1094
  %v1098 = vmul.f32 %v1083, %v1091
  %v1099 = vmul.f32 %v1081, %v1095
  %v1100 = vmul.f32 %v1084, %v1091
  %v1101 = vmul.f32 %v1082, %v1095
  %1102 = vset.pattern.permute.xlu0 21
  %1103 = vperm.xlu0 %1102, %v127
  %v1104 = vpop.permute.xlu0 %1103
  %1106 = vset.pattern.permute.xlu0 21
  %1107 = vperm.xlu0 %1106, %v128
  %v1108 = vpop.permute.xlu0 %1107
  %v1110 = vmul.f32 %v1098, %v1104
  %v1111 = vmul.f32 %v1099, %v1104
  %v1112 = vmul.f32 %v1100, %v1108
  %v1113 = vmul.f32 %v1101, %v1108
  %v1114 = vadd.f32 %v1068, %v1110
  %v1115 = vadd.f32 %v1069, %v1111
  %v1116 = vadd.f32 %v1070, %v1112
  %v1117 = vadd.f32 %v1071, %v1113
  %1118 = vrot.lane.b32.xlu0 %v123, 16
  %v1119 = vpop.permute.xlu0 %1118
  %1120 = vrot.lane.b32.xlu0 %v125, 16
  %v1121 = vpop.permute.xlu0 %1120
  %1122 = vrot.lane.b32.xlu0 %v124, 16
  %v1123 = vpop.permute.xlu0 %1122
  %1124 = vrot.lane.b32.xlu0 %v126, 16
  %v1125 = vpop.permute.xlu0 %1124
  %vm1126 = vcmp.lt.s32.totalorder %v138, 16
  %v1127 = vsel %vm1126, %v1119, %v1123
  %v1128 = vsel %vm1126, %v1121, %v1125
  %v1129 = vsel %vm1126, %v1123, %v1119
  %v1130 = vsel %vm1126, %v1125, %v1121
  %s1131 = scalar_lea.vmem %s1, 38
  %v1132 = vld [vmem:[%s1131] ss:$8 sm:$0x3]
  %v1134 = vlaneseq
  %v1135 = vshrl.u32 %v1134, 7
  %v1136 = vsub.s32 0, %v1135
  %v1137 = vrot.slane %v1132, %v1136
  %v1138 = vlaneseq
  %v1139 = vshrl.u32 %v1138, 7
  %v1140 = vsub.s32 1, %v1139
  %v1141 = vrot.slane %v1132, %v1140
  %v1144 = vmul.f32 %v1129, %v1137
  %v1145 = vmul.f32 %v1127, %v1141
  %v1146 = vmul.f32 %v1130, %v1137
  %v1147 = vmul.f32 %v1128, %v1141
  %1148 = vset.pattern.permute.xlu0 22
  %1149 = vperm.xlu0 %1148, %v127
  %v1150 = vpop.permute.xlu0 %1149
  %1152 = vset.pattern.permute.xlu0 22
  %1153 = vperm.xlu0 %1152, %v128
  %v1154 = vpop.permute.xlu0 %1153
  %v1156 = vmul.f32 %v1144, %v1150
  %v1157 = vmul.f32 %v1145, %v1150
  %v1158 = vmul.f32 %v1146, %v1154
  %v1159 = vmul.f32 %v1147, %v1154
  %v1160 = vadd.f32 %v1114, %v1156
  %v1161 = vadd.f32 %v1115, %v1157
  %v1162 = vadd.f32 %v1116, %v1158
  %v1163 = vadd.f32 %v1117, %v1159
  %1164 = vrot.lane.b32.xlu0 %v123, 15
  %v1165 = vpop.permute.xlu0 %1164
  %1166 = vrot.lane.b32.xlu0 %v125, 15
  %v1167 = vpop.permute.xlu0 %1166
  %1168 = vrot.lane.b32.xlu0 %v124, 15
  %v1169 = vpop.permute.xlu0 %1168
  %1170 = vrot.lane.b32.xlu0 %v126, 15
  %v1171 = vpop.permute.xlu0 %1170
  %vm1172 = vcmp.lt.s32.totalorder %v138, 15
  %v1173 = vsel %vm1172, %v1165, %v1169
  %v1174 = vsel %vm1172, %v1167, %v1171
  %v1175 = vsel %vm1172, %v1169, %v1165
  %v1176 = vsel %vm1172, %v1171, %v1167
  %s1177 = scalar_lea.vmem %s1, 39
  %v1178 = vld [vmem:[%s1177] ss:$8 sm:$0x3]
  %v1180 = vlaneseq
  %v1181 = vshrl.u32 %v1180, 7
  %v1182 = vsub.s32 0, %v1181
  %v1183 = vrot.slane %v1178, %v1182
  %v1184 = vlaneseq
  %v1185 = vshrl.u32 %v1184, 7
  %v1186 = vsub.s32 1, %v1185
  %v1187 = vrot.slane %v1178, %v1186
  %v1190 = vmul.f32 %v1175, %v1183
  %v1191 = vmul.f32 %v1173, %v1187
  %v1192 = vmul.f32 %v1176, %v1183
  %v1193 = vmul.f32 %v1174, %v1187
  %1194 = vset.pattern.permute.xlu0 23
  %1195 = vperm.xlu0 %1194, %v127
  %v1196 = vpop.permute.xlu0 %1195
  %1198 = vset.pattern.permute.xlu0 23
  %1199 = vperm.xlu0 %1198, %v128
  %v1200 = vpop.permute.xlu0 %1199
  %v1202 = vmul.f32 %v1190, %v1196
  %v1203 = vmul.f32 %v1191, %v1196
  %v1204 = vmul.f32 %v1192, %v1200
  %v1205 = vmul.f32 %v1193, %v1200
  %v1206 = vadd.f32 %v1160, %v1202
  %v1207 = vadd.f32 %v1161, %v1203
  %v1208 = vadd.f32 %v1162, %v1204
  %v1209 = vadd.f32 %v1163, %v1205
  %1210 = vrot.lane.b32.xlu0 %v123, 14
  %v1211 = vpop.permute.xlu0 %1210
  %1212 = vrot.lane.b32.xlu0 %v125, 14
  %v1213 = vpop.permute.xlu0 %1212
  %1214 = vrot.lane.b32.xlu0 %v124, 14
  %v1215 = vpop.permute.xlu0 %1214
  %1216 = vrot.lane.b32.xlu0 %v126, 14
  %v1217 = vpop.permute.xlu0 %1216
  %vm1218 = vcmp.lt.s32.totalorder %v138, 14
  %v1219 = vsel %vm1218, %v1211, %v1215
  %v1220 = vsel %vm1218, %v1213, %v1217
  %v1221 = vsel %vm1218, %v1215, %v1211
  %v1222 = vsel %vm1218, %v1217, %v1213
  %s1223 = scalar_lea.vmem %s1, 48
  %v1224 = vld [vmem:[%s1223] ss:$8 sm:$0x3]
  %v1226 = vlaneseq
  %v1227 = vshrl.u32 %v1226, 7
  %v1228 = vsub.s32 0, %v1227
  %v1229 = vrot.slane %v1224, %v1228
  %v1230 = vlaneseq
  %v1231 = vshrl.u32 %v1230, 7
  %v1232 = vsub.s32 1, %v1231
  %v1233 = vrot.slane %v1224, %v1232
  %v1236 = vmul.f32 %v1221, %v1229
  %v1237 = vmul.f32 %v1219, %v1233
  %v1238 = vmul.f32 %v1222, %v1229
  %v1239 = vmul.f32 %v1220, %v1233
  %1240 = vset.pattern.permute.xlu0 24
  %1241 = vperm.xlu0 %1240, %v127
  %v1242 = vpop.permute.xlu0 %1241
  %1244 = vset.pattern.permute.xlu0 24
  %1245 = vperm.xlu0 %1244, %v128
  %v1246 = vpop.permute.xlu0 %1245
  %v1248 = vmul.f32 %v1236, %v1242
  %v1249 = vmul.f32 %v1237, %v1242
  %v1250 = vmul.f32 %v1238, %v1246
  %v1251 = vmul.f32 %v1239, %v1246
  %v1252 = vadd.f32 %v1206, %v1248
  %v1253 = vadd.f32 %v1207, %v1249
  %v1254 = vadd.f32 %v1208, %v1250
  %v1255 = vadd.f32 %v1209, %v1251
  %1256 = vrot.lane.b32.xlu0 %v123, 13
  %v1257 = vpop.permute.xlu0 %1256
  %1258 = vrot.lane.b32.xlu0 %v125, 13
  %v1259 = vpop.permute.xlu0 %1258
  %1260 = vrot.lane.b32.xlu0 %v124, 13
  %v1261 = vpop.permute.xlu0 %1260
  %1262 = vrot.lane.b32.xlu0 %v126, 13
  %v1263 = vpop.permute.xlu0 %1262
  %vm1264 = vcmp.lt.s32.totalorder %v138, 13
  %v1265 = vsel %vm1264, %v1257, %v1261
  %v1266 = vsel %vm1264, %v1259, %v1263
  %v1267 = vsel %vm1264, %v1261, %v1257
  %v1268 = vsel %vm1264, %v1263, %v1259
  %s1269 = scalar_lea.vmem %s1, 49
  %v1270 = vld [vmem:[%s1269] ss:$8 sm:$0x3]
  %v1272 = vlaneseq
  %v1273 = vshrl.u32 %v1272, 7
  %v1274 = vsub.s32 0, %v1273
  %v1275 = vrot.slane %v1270, %v1274
  %v1276 = vlaneseq
  %v1277 = vshrl.u32 %v1276, 7
  %v1278 = vsub.s32 1, %v1277
  %v1279 = vrot.slane %v1270, %v1278
  %v1282 = vmul.f32 %v1267, %v1275
  %v1283 = vmul.f32 %v1265, %v1279
  %v1284 = vmul.f32 %v1268, %v1275
  %v1285 = vmul.f32 %v1266, %v1279
  %1286 = vset.pattern.permute.xlu0 25
  %1287 = vperm.xlu0 %1286, %v127
  %v1288 = vpop.permute.xlu0 %1287
  %1290 = vset.pattern.permute.xlu0 25
  %1291 = vperm.xlu0 %1290, %v128
  %v1292 = vpop.permute.xlu0 %1291
  %v1294 = vmul.f32 %v1282, %v1288
  %v1295 = vmul.f32 %v1283, %v1288
  %v1296 = vmul.f32 %v1284, %v1292
  %v1297 = vmul.f32 %v1285, %v1292
  %v1298 = vadd.f32 %v1252, %v1294
  %v1299 = vadd.f32 %v1253, %v1295
  %v1300 = vadd.f32 %v1254, %v1296
  %v1301 = vadd.f32 %v1255, %v1297
  %1302 = vrot.lane.b32.xlu0 %v123, 12
  %v1303 = vpop.permute.xlu0 %1302
  %1304 = vrot.lane.b32.xlu0 %v125, 12
  %v1305 = vpop.permute.xlu0 %1304
  %1306 = vrot.lane.b32.xlu0 %v124, 12
  %v1307 = vpop.permute.xlu0 %1306
  %1308 = vrot.lane.b32.xlu0 %v126, 12
  %v1309 = vpop.permute.xlu0 %1308
  %vm1310 = vcmp.lt.s32.totalorder %v138, 12
  %v1311 = vsel %vm1310, %v1303, %v1307
  %v1312 = vsel %vm1310, %v1305, %v1309
  %v1313 = vsel %vm1310, %v1307, %v1303
  %v1314 = vsel %vm1310, %v1309, %v1305
  %s1315 = scalar_lea.vmem %s1, 50
  %v1316 = vld [vmem:[%s1315] ss:$8 sm:$0x3]
  %v1318 = vlaneseq
  %v1319 = vshrl.u32 %v1318, 7
  %v1320 = vsub.s32 0, %v1319
  %v1321 = vrot.slane %v1316, %v1320
  %v1322 = vlaneseq
  %v1323 = vshrl.u32 %v1322, 7
  %v1324 = vsub.s32 1, %v1323
  %v1325 = vrot.slane %v1316, %v1324
  %v1328 = vmul.f32 %v1313, %v1321
  %v1329 = vmul.f32 %v1311, %v1325
  %v1330 = vmul.f32 %v1314, %v1321
  %v1331 = vmul.f32 %v1312, %v1325
  %1332 = vset.pattern.permute.xlu0 26
  %1333 = vperm.xlu0 %1332, %v127
  %v1334 = vpop.permute.xlu0 %1333
  %1336 = vset.pattern.permute.xlu0 26
  %1337 = vperm.xlu0 %1336, %v128
  %v1338 = vpop.permute.xlu0 %1337
  %v1340 = vmul.f32 %v1328, %v1334
  %v1341 = vmul.f32 %v1329, %v1334
  %v1342 = vmul.f32 %v1330, %v1338
  %v1343 = vmul.f32 %v1331, %v1338
  %v1344 = vadd.f32 %v1298, %v1340
  %v1345 = vadd.f32 %v1299, %v1341
  %v1346 = vadd.f32 %v1300, %v1342
  %v1347 = vadd.f32 %v1301, %v1343
  %s1348 = scalar_lea.vmem %s1, 51
  %v1349 = vld [vmem:[%s1348] ss:$8 sm:$0x3]
  %v1351 = vlaneseq
  %v1352 = vshrl.u32 %v1351, 7
  %v1353 = vsub.s32 0, %v1352
  %v1354 = vrot.slane %v1349, %v1353
  %v1355 = vlaneseq
  %v1356 = vshrl.u32 %v1355, 7
  %v1357 = vsub.s32 1, %v1356
  %v1358 = vrot.slane %v1349, %v1357
  %v1361 = vmul.f32 %v1313, %v1354
  %v1362 = vmul.f32 %v1311, %v1358
  %v1363 = vmul.f32 %v1314, %v1354
  %v1364 = vmul.f32 %v1312, %v1358
  %1365 = vset.pattern.permute.xlu0 27
  %1366 = vperm.xlu0 %1365, %v127
  %v1367 = vpop.permute.xlu0 %1366
  %1369 = vset.pattern.permute.xlu0 27
  %1370 = vperm.xlu0 %1369, %v128
  %v1371 = vpop.permute.xlu0 %1370
  %v1373 = vmul.f32 %v1361, %v1367
  %v1374 = vmul.f32 %v1362, %v1367
  %v1375 = vmul.f32 %v1363, %v1371
  %v1376 = vmul.f32 %v1364, %v1371
  %v1377 = vadd.f32 %v1344, %v1373
  %v1378 = vadd.f32 %v1345, %v1374
  %v1379 = vadd.f32 %v1346, %v1375
  %v1380 = vadd.f32 %v1347, %v1376
  %1381 = vrot.lane.b32.xlu0 %v123, 11
  %v1382 = vpop.permute.xlu0 %1381
  %1383 = vrot.lane.b32.xlu0 %v125, 11
  %v1384 = vpop.permute.xlu0 %1383
  %1385 = vrot.lane.b32.xlu0 %v124, 11
  %v1386 = vpop.permute.xlu0 %1385
  %1387 = vrot.lane.b32.xlu0 %v126, 11
  %v1388 = vpop.permute.xlu0 %1387
  %vm1389 = vcmp.lt.s32.totalorder %v138, 11
  %v1390 = vsel %vm1389, %v1382, %v1386
  %v1391 = vsel %vm1389, %v1384, %v1388
  %v1392 = vsel %vm1389, %v1386, %v1382
  %v1393 = vsel %vm1389, %v1388, %v1384
  %s1394 = scalar_lea.vmem %s1, 52
  %v1395 = vld [vmem:[%s1394] ss:$8 sm:$0x3]
  %v1397 = vlaneseq
  %v1398 = vshrl.u32 %v1397, 7
  %v1399 = vsub.s32 0, %v1398
  %v1400 = vrot.slane %v1395, %v1399
  %v1401 = vlaneseq
  %v1402 = vshrl.u32 %v1401, 7
  %v1403 = vsub.s32 1, %v1402
  %v1404 = vrot.slane %v1395, %v1403
  %v1407 = vmul.f32 %v1392, %v1400
  %v1408 = vmul.f32 %v1390, %v1404
  %v1409 = vmul.f32 %v1393, %v1400
  %v1410 = vmul.f32 %v1391, %v1404
  %1411 = vset.pattern.permute.xlu0 28
  %1412 = vperm.xlu0 %1411, %v127
  %v1413 = vpop.permute.xlu0 %1412
  %1415 = vset.pattern.permute.xlu0 28
  %1416 = vperm.xlu0 %1415, %v128
  %v1417 = vpop.permute.xlu0 %1416
  %v1419 = vmul.f32 %v1407, %v1413
  %v1420 = vmul.f32 %v1408, %v1413
  %v1421 = vmul.f32 %v1409, %v1417
  %v1422 = vmul.f32 %v1410, %v1417
  %v1423 = vadd.f32 %v1377, %v1419
  %v1424 = vadd.f32 %v1378, %v1420
  %v1425 = vadd.f32 %v1379, %v1421
  %v1426 = vadd.f32 %v1380, %v1422
  %1427 = vrot.lane.b32.xlu0 %v123, 10
  %v1428 = vpop.permute.xlu0 %1427
  %1429 = vrot.lane.b32.xlu0 %v125, 10
  %v1430 = vpop.permute.xlu0 %1429
  %1431 = vrot.lane.b32.xlu0 %v124, 10
  %v1432 = vpop.permute.xlu0 %1431
  %1433 = vrot.lane.b32.xlu0 %v126, 10
  %v1434 = vpop.permute.xlu0 %1433
  %vm1435 = vcmp.lt.s32.totalorder %v138, 10
  %v1436 = vsel %vm1435, %v1428, %v1432
  %v1437 = vsel %vm1435, %v1430, %v1434
  %v1438 = vsel %vm1435, %v1432, %v1428
  %v1439 = vsel %vm1435, %v1434, %v1430
  %s1440 = scalar_lea.vmem %s1, 53
  %v1441 = vld [vmem:[%s1440] ss:$8 sm:$0x3]
  %v1443 = vlaneseq
  %v1444 = vshrl.u32 %v1443, 7
  %v1445 = vsub.s32 0, %v1444
  %v1446 = vrot.slane %v1441, %v1445
  %v1447 = vlaneseq
  %v1448 = vshrl.u32 %v1447, 7
  %v1449 = vsub.s32 1, %v1448
  %v1450 = vrot.slane %v1441, %v1449
  %v1453 = vmul.f32 %v1438, %v1446
  %v1454 = vmul.f32 %v1436, %v1450
  %v1455 = vmul.f32 %v1439, %v1446
  %v1456 = vmul.f32 %v1437, %v1450
  %1457 = vset.pattern.permute.xlu0 29
  %1458 = vperm.xlu0 %1457, %v127
  %v1459 = vpop.permute.xlu0 %1458
  %1461 = vset.pattern.permute.xlu0 29
  %1462 = vperm.xlu0 %1461, %v128
  %v1463 = vpop.permute.xlu0 %1462
  %v1465 = vmul.f32 %v1453, %v1459
  %v1466 = vmul.f32 %v1454, %v1459
  %v1467 = vmul.f32 %v1455, %v1463
  %v1468 = vmul.f32 %v1456, %v1463
  %v1469 = vadd.f32 %v1423, %v1465
  %v1470 = vadd.f32 %v1424, %v1466
  %v1471 = vadd.f32 %v1425, %v1467
  %v1472 = vadd.f32 %v1426, %v1468
  %1473 = vrot.lane.b32.xlu0 %v123, 9
  %v1474 = vpop.permute.xlu0 %1473
  %1475 = vrot.lane.b32.xlu0 %v125, 9
  %v1476 = vpop.permute.xlu0 %1475
  %1477 = vrot.lane.b32.xlu0 %v124, 9
  %v1478 = vpop.permute.xlu0 %1477
  %1479 = vrot.lane.b32.xlu0 %v126, 9
  %v1480 = vpop.permute.xlu0 %1479
  %vm1481 = vcmp.lt.s32.totalorder %v138, 9
  %v1482 = vsel %vm1481, %v1474, %v1478
  %v1483 = vsel %vm1481, %v1476, %v1480
  %v1484 = vsel %vm1481, %v1478, %v1474
  %v1485 = vsel %vm1481, %v1480, %v1476
  %s1486 = scalar_lea.vmem %s1, 54
  %v1487 = vld [vmem:[%s1486] ss:$8 sm:$0x3]
  %v1489 = vlaneseq
  %v1490 = vshrl.u32 %v1489, 7
  %v1491 = vsub.s32 0, %v1490
  %v1492 = vrot.slane %v1487, %v1491
  %v1493 = vlaneseq
  %v1494 = vshrl.u32 %v1493, 7
  %v1495 = vsub.s32 1, %v1494
  %v1496 = vrot.slane %v1487, %v1495
  %v1499 = vmul.f32 %v1484, %v1492
  %v1500 = vmul.f32 %v1482, %v1496
  %v1501 = vmul.f32 %v1485, %v1492
  %v1502 = vmul.f32 %v1483, %v1496
  %1503 = vset.pattern.permute.xlu0 30
  %1504 = vperm.xlu0 %1503, %v127
  %v1505 = vpop.permute.xlu0 %1504
  %1507 = vset.pattern.permute.xlu0 30
  %1508 = vperm.xlu0 %1507, %v128
  %v1509 = vpop.permute.xlu0 %1508
  %v1511 = vmul.f32 %v1499, %v1505
  %v1512 = vmul.f32 %v1500, %v1505
  %v1513 = vmul.f32 %v1501, %v1509
  %v1514 = vmul.f32 %v1502, %v1509
  %v1515 = vadd.f32 %v1469, %v1511
  %v1516 = vadd.f32 %v1470, %v1512
  %v1517 = vadd.f32 %v1471, %v1513
  %v1518 = vadd.f32 %v1472, %v1514
  %v1519 = vld [vmem:[%s2] ss:$8 sm:$0x3]
  %v1521 = vlaneseq
  %v1522 = vshrl.u32 %v1521, 7
  %v1523 = vsub.s32 0, %v1522
  %v1524 = vrot.slane %v1519, %v1523
  %v1525 = vlaneseq
  %v1526 = vshrl.u32 %v1525, 7
  %v1527 = vsub.s32 1, %v1526
  %v1528 = vrot.slane %v1519, %v1527
  %v1531 = vadd.f32 %v1484, %v1524
  %v1532 = vadd.f32 %v1482, %v1528
  %v1533 = vadd.f32 %v1485, %v1524
  %v1534 = vadd.f32 %v1483, %v1528
  %1535 = vrot.lane.b32.xlu0 %v123, 8
  %v1536 = vpop.permute.xlu0 %1535
  %1537 = vrot.lane.b32.xlu0 %v125, 8
  %v1538 = vpop.permute.xlu0 %1537
  %1539 = vrot.lane.b32.xlu0 %v124, 8
  %v1540 = vpop.permute.xlu0 %1539
  %1541 = vrot.lane.b32.xlu0 %v126, 8
  %v1542 = vpop.permute.xlu0 %1541
  %vm1543 = vcmp.lt.s32.totalorder %v138, 8
  %v1544 = vsel %vm1543, %v1536, %v1540
  %v1545 = vsel %vm1543, %v1538, %v1542
  %v1546 = vsel %vm1543, %v1540, %v1536
  %v1547 = vsel %vm1543, %v1542, %v1538
  %s1548 = scalar_lea.vmem %s1, 55
  %v1549 = vld [vmem:[%s1548] ss:$8 sm:$0x3]
  %v1551 = vlaneseq
  %v1552 = vshrl.u32 %v1551, 7
  %v1553 = vsub.s32 0, %v1552
  %v1554 = vrot.slane %v1549, %v1553
  %v1555 = vlaneseq
  %v1556 = vshrl.u32 %v1555, 7
  %v1557 = vsub.s32 1, %v1556
  %v1558 = vrot.slane %v1549, %v1557
  %v1561 = vmul.f32 %v1546, %v1554
  %v1562 = vmul.f32 %v1544, %v1558
  %v1563 = vmul.f32 %v1547, %v1554
  %v1564 = vmul.f32 %v1545, %v1558
  %1565 = vset.pattern.permute.xlu0 31
  %1566 = vperm.xlu0 %1565, %v127
  %v1567 = vpop.permute.xlu0 %1566
  %1569 = vset.pattern.permute.xlu0 31
  %1570 = vperm.xlu0 %1569, %v128
  %v1571 = vpop.permute.xlu0 %1570
  %v1573 = vmul.f32 %v1561, %v1567
  %v1574 = vmul.f32 %v1562, %v1567
  %v1575 = vmul.f32 %v1563, %v1571
  %v1576 = vmul.f32 %v1564, %v1571
  %v1577 = vadd.f32 %v1515, %v1573
  %v1578 = vadd.f32 %v1516, %v1574
  %v1579 = vadd.f32 %v1517, %v1575
  %v1580 = vadd.f32 %v1518, %v1576
  %s1581 = scalar_lea.vmem %s2, 1
  %v1582 = vld [vmem:[%s1581] ss:$8 sm:$0x3]
  %v1584 = vlaneseq
  %v1585 = vshrl.u32 %v1584, 7
  %v1586 = vsub.s32 0, %v1585
  %v1587 = vrot.slane %v1582, %v1586
  %v1588 = vlaneseq
  %v1589 = vshrl.u32 %v1588, 7
  %v1590 = vsub.s32 1, %v1589
  %v1591 = vrot.slane %v1582, %v1590
  %v1594 = vadd.f32 %v1546, %v1587
  %v1595 = vadd.f32 %v1544, %v1591
  %v1596 = vadd.f32 %v1547, %v1587
  %v1597 = vadd.f32 %v1545, %v1591
  %v1598 = vmax.f32 %v1531, %v1594
  %v1599 = vmax.f32 %v1532, %v1595
  %v1600 = vmax.f32 %v1533, %v1596
  %v1601 = vmax.f32 %v1534, %v1597
  %1602 = vrot.lane.b32.xlu0 %v123, 7
  %v1603 = vpop.permute.xlu0 %1602
  %1604 = vrot.lane.b32.xlu0 %v125, 7
  %v1605 = vpop.permute.xlu0 %1604
  %1606 = vrot.lane.b32.xlu0 %v124, 7
  %v1607 = vpop.permute.xlu0 %1606
  %1608 = vrot.lane.b32.xlu0 %v126, 7
  %v1609 = vpop.permute.xlu0 %1608
  %vm1610 = vcmp.lt.s32.totalorder %v138, 7
  %v1611 = vsel %vm1610, %v1603, %v1607
  %v1612 = vsel %vm1610, %v1605, %v1609
  %v1613 = vsel %vm1610, %v1607, %v1603
  %v1614 = vsel %vm1610, %v1609, %v1605
  %s1615 = scalar_lea.vmem %s1, 64
  %v1616 = vld [vmem:[%s1615] ss:$8 sm:$0x3]
  %v1618 = vlaneseq
  %v1619 = vshrl.u32 %v1618, 7
  %v1620 = vsub.s32 0, %v1619
  %v1621 = vrot.slane %v1616, %v1620
  %v1622 = vlaneseq
  %v1623 = vshrl.u32 %v1622, 7
  %v1624 = vsub.s32 1, %v1623
  %v1625 = vrot.slane %v1616, %v1624
  %v1628 = vmul.f32 %v1613, %v1621
  %v1629 = vmul.f32 %v1611, %v1625
  %v1630 = vmul.f32 %v1614, %v1621
  %v1631 = vmul.f32 %v1612, %v1625
  %1632 = vset.pattern.permute.xlu0 32
  %1633 = vperm.xlu0 %1632, %v127
  %v1634 = vpop.permute.xlu0 %1633
  %1636 = vset.pattern.permute.xlu0 32
  %1637 = vperm.xlu0 %1636, %v128
  %v1638 = vpop.permute.xlu0 %1637
  %v1640 = vmul.f32 %v1628, %v1634
  %v1641 = vmul.f32 %v1629, %v1634
  %v1642 = vmul.f32 %v1630, %v1638
  %v1643 = vmul.f32 %v1631, %v1638
  %v1644 = vadd.f32 %v1577, %v1640
  %v1645 = vadd.f32 %v1578, %v1641
  %v1646 = vadd.f32 %v1579, %v1642
  %v1647 = vadd.f32 %v1580, %v1643
  %s1648 = scalar_lea.vmem %s2, 2
  %v1649 = vld [vmem:[%s1648] ss:$8 sm:$0x3]
  %v1651 = vlaneseq
  %v1652 = vshrl.u32 %v1651, 7
  %v1653 = vsub.s32 0, %v1652
  %v1654 = vrot.slane %v1649, %v1653
  %v1655 = vlaneseq
  %v1656 = vshrl.u32 %v1655, 7
  %v1657 = vsub.s32 1, %v1656
  %v1658 = vrot.slane %v1649, %v1657
  %v1661 = vadd.f32 %v1613, %v1654
  %v1662 = vadd.f32 %v1611, %v1658
  %v1663 = vadd.f32 %v1614, %v1654
  %v1664 = vadd.f32 %v1612, %v1658
  %v1665 = vmax.f32 %v1598, %v1661
  %v1666 = vmax.f32 %v1599, %v1662
  %v1667 = vmax.f32 %v1600, %v1663
  %v1668 = vmax.f32 %v1601, %v1664
  %1669 = vrot.lane.b32.xlu0 %v123, 6
  %v1670 = vpop.permute.xlu0 %1669
  %1671 = vrot.lane.b32.xlu0 %v125, 6
  %v1672 = vpop.permute.xlu0 %1671
  %1673 = vrot.lane.b32.xlu0 %v124, 6
  %v1674 = vpop.permute.xlu0 %1673
  %1675 = vrot.lane.b32.xlu0 %v126, 6
  %v1676 = vpop.permute.xlu0 %1675
  %vm1677 = vcmp.lt.s32.totalorder %v138, 6
  %v1678 = vsel %vm1677, %v1670, %v1674
  %v1679 = vsel %vm1677, %v1672, %v1676
  %v1680 = vsel %vm1677, %v1674, %v1670
  %v1681 = vsel %vm1677, %v1676, %v1672
  %s1682 = scalar_lea.vmem %s1, 65
  %v1683 = vld [vmem:[%s1682] ss:$8 sm:$0x3]
  %v1685 = vlaneseq
  %v1686 = vshrl.u32 %v1685, 7
  %v1687 = vsub.s32 0, %v1686
  %v1688 = vrot.slane %v1683, %v1687
  %v1689 = vlaneseq
  %v1690 = vshrl.u32 %v1689, 7
  %v1691 = vsub.s32 1, %v1690
  %v1692 = vrot.slane %v1683, %v1691
  %v1695 = vmul.f32 %v1680, %v1688
  %v1696 = vmul.f32 %v1678, %v1692
  %v1697 = vmul.f32 %v1681, %v1688
  %v1698 = vmul.f32 %v1679, %v1692
  %1699 = vset.pattern.permute.xlu0 33
  %1700 = vperm.xlu0 %1699, %v127
  %v1701 = vpop.permute.xlu0 %1700
  %1703 = vset.pattern.permute.xlu0 33
  %1704 = vperm.xlu0 %1703, %v128
  %v1705 = vpop.permute.xlu0 %1704
  %v1707 = vmul.f32 %v1695, %v1701
  %v1708 = vmul.f32 %v1696, %v1701
  %v1709 = vmul.f32 %v1697, %v1705
  %v1710 = vmul.f32 %v1698, %v1705
  %v1711 = vadd.f32 %v1644, %v1707
  %v1712 = vadd.f32 %v1645, %v1708
  %v1713 = vadd.f32 %v1646, %v1709
  %v1714 = vadd.f32 %v1647, %v1710
  %1715 = vrot.lane.b32.xlu0 %v123, 5
  %v1716 = vpop.permute.xlu0 %1715
  %1717 = vrot.lane.b32.xlu0 %v125, 5
  %v1718 = vpop.permute.xlu0 %1717
  %1719 = vrot.lane.b32.xlu0 %v124, 5
  %v1720 = vpop.permute.xlu0 %1719
  %1721 = vrot.lane.b32.xlu0 %v126, 5
  %v1722 = vpop.permute.xlu0 %1721
  %vm1723 = vcmp.lt.s32.totalorder %v138, 5
  %v1724 = vsel %vm1723, %v1716, %v1720
  %v1725 = vsel %vm1723, %v1718, %v1722
  %v1726 = vsel %vm1723, %v1720, %v1716
  %v1727 = vsel %vm1723, %v1722, %v1718
  %s1728 = scalar_lea.vmem %s1, 66
  %v1729 = vld [vmem:[%s1728] ss:$8 sm:$0x3]
  %v1731 = vlaneseq
  %v1732 = vshrl.u32 %v1731, 7
  %v1733 = vsub.s32 0, %v1732
  %v1734 = vrot.slane %v1729, %v1733
  %v1735 = vlaneseq
  %v1736 = vshrl.u32 %v1735, 7
  %v1737 = vsub.s32 1, %v1736
  %v1738 = vrot.slane %v1729, %v1737
  %v1741 = vmul.f32 %v1726, %v1734
  %v1742 = vmul.f32 %v1724, %v1738
  %v1743 = vmul.f32 %v1727, %v1734
  %v1744 = vmul.f32 %v1725, %v1738
  %1745 = vset.pattern.permute.xlu0 34
  %1746 = vperm.xlu0 %1745, %v127
  %v1747 = vpop.permute.xlu0 %1746
  %1749 = vset.pattern.permute.xlu0 34
  %1750 = vperm.xlu0 %1749, %v128
  %v1751 = vpop.permute.xlu0 %1750
  %v1753 = vmul.f32 %v1741, %v1747
  %v1754 = vmul.f32 %v1742, %v1747
  %v1755 = vmul.f32 %v1743, %v1751
  %v1756 = vmul.f32 %v1744, %v1751
  %v1757 = vadd.f32 %v1711, %v1753
  %v1758 = vadd.f32 %v1712, %v1754
  %v1759 = vadd.f32 %v1713, %v1755
  %v1760 = vadd.f32 %v1714, %v1756
  %1761 = vrot.lane.b32.xlu0 %v123, 4
  %v1762 = vpop.permute.xlu0 %1761
  %1763 = vrot.lane.b32.xlu0 %v125, 4
  %v1764 = vpop.permute.xlu0 %1763
  %1765 = vrot.lane.b32.xlu0 %v124, 4
  %v1766 = vpop.permute.xlu0 %1765
  %1767 = vrot.lane.b32.xlu0 %v126, 4
  %v1768 = vpop.permute.xlu0 %1767
  %vm1769 = vcmp.lt.s32.totalorder %v138, 4
  %v1770 = vsel %vm1769, %v1762, %v1766
  %v1771 = vsel %vm1769, %v1764, %v1768
  %v1772 = vsel %vm1769, %v1766, %v1762
  %v1773 = vsel %vm1769, %v1768, %v1764
  %s1774 = scalar_lea.vmem %s1, 67
  %v1775 = vld [vmem:[%s1774] ss:$8 sm:$0x3]
  %v1777 = vlaneseq
  %v1778 = vshrl.u32 %v1777, 7
  %v1779 = vsub.s32 0, %v1778
  %v1780 = vrot.slane %v1775, %v1779
  %v1781 = vlaneseq
  %v1782 = vshrl.u32 %v1781, 7
  %v1783 = vsub.s32 1, %v1782
  %v1784 = vrot.slane %v1775, %v1783
  %v1787 = vmul.f32 %v1772, %v1780
  %v1788 = vmul.f32 %v1770, %v1784
  %v1789 = vmul.f32 %v1773, %v1780
  %v1790 = vmul.f32 %v1771, %v1784
  %1791 = vset.pattern.permute.xlu0 35
  %1792 = vperm.xlu0 %1791, %v127
  %v1793 = vpop.permute.xlu0 %1792
  %1795 = vset.pattern.permute.xlu0 35
  %1796 = vperm.xlu0 %1795, %v128
  %v1797 = vpop.permute.xlu0 %1796
  %v1799 = vmul.f32 %v1787, %v1793
  %v1800 = vmul.f32 %v1788, %v1793
  %v1801 = vmul.f32 %v1789, %v1797
  %v1802 = vmul.f32 %v1790, %v1797
  %v1803 = vadd.f32 %v1757, %v1799
  %v1804 = vadd.f32 %v1758, %v1800
  %v1805 = vadd.f32 %v1759, %v1801
  %v1806 = vadd.f32 %v1760, %v1802
  %s1807 = scalar_lea.vmem %s1, 68
  %v1808 = vld [vmem:[%s1807] ss:$8 sm:$0x3]
  %v1810 = vlaneseq
  %v1811 = vshrl.u32 %v1810, 7
  %v1812 = vsub.s32 0, %v1811
  %v1813 = vrot.slane %v1808, %v1812
  %v1814 = vlaneseq
  %v1815 = vshrl.u32 %v1814, 7
  %v1816 = vsub.s32 1, %v1815
  %v1817 = vrot.slane %v1808, %v1816
  %v1820 = vmul.f32 %v1772, %v1813
  %v1821 = vmul.f32 %v1770, %v1817
  %v1822 = vmul.f32 %v1773, %v1813
  %v1823 = vmul.f32 %v1771, %v1817
  %1824 = vset.pattern.permute.xlu0 36
  %1825 = vperm.xlu0 %1824, %v127
  %v1826 = vpop.permute.xlu0 %1825
  %1828 = vset.pattern.permute.xlu0 36
  %1829 = vperm.xlu0 %1828, %v128
  %v1830 = vpop.permute.xlu0 %1829
  %v1832 = vmul.f32 %v1820, %v1826
  %v1833 = vmul.f32 %v1821, %v1826
  %v1834 = vmul.f32 %v1822, %v1830
  %v1835 = vmul.f32 %v1823, %v1830
  %v1836 = vadd.f32 %v1803, %v1832
  %v1837 = vadd.f32 %v1804, %v1833
  %v1838 = vadd.f32 %v1805, %v1834
  %v1839 = vadd.f32 %v1806, %v1835
  %1840 = vrot.lane.b32.xlu0 %v123, 3
  %v1841 = vpop.permute.xlu0 %1840
  %1842 = vrot.lane.b32.xlu0 %v125, 3
  %v1843 = vpop.permute.xlu0 %1842
  %1844 = vrot.lane.b32.xlu0 %v124, 3
  %v1845 = vpop.permute.xlu0 %1844
  %1846 = vrot.lane.b32.xlu0 %v126, 3
  %v1847 = vpop.permute.xlu0 %1846
  %vm1848 = vcmp.lt.s32.totalorder %v138, 3
  %v1849 = vsel %vm1848, %v1841, %v1845
  %v1850 = vsel %vm1848, %v1843, %v1847
  %v1851 = vsel %vm1848, %v1845, %v1841
  %v1852 = vsel %vm1848, %v1847, %v1843
  %s1853 = scalar_lea.vmem %s1, 69
  %v1854 = vld [vmem:[%s1853] ss:$8 sm:$0x3]
  %v1856 = vlaneseq
  %v1857 = vshrl.u32 %v1856, 7
  %v1858 = vsub.s32 0, %v1857
  %v1859 = vrot.slane %v1854, %v1858
  %v1860 = vlaneseq
  %v1861 = vshrl.u32 %v1860, 7
  %v1862 = vsub.s32 1, %v1861
  %v1863 = vrot.slane %v1854, %v1862
  %v1866 = vmul.f32 %v1851, %v1859
  %v1867 = vmul.f32 %v1849, %v1863
  %v1868 = vmul.f32 %v1852, %v1859
  %v1869 = vmul.f32 %v1850, %v1863
  %1870 = vset.pattern.permute.xlu0 37
  %1871 = vperm.xlu0 %1870, %v127
  %v1872 = vpop.permute.xlu0 %1871
  %1874 = vset.pattern.permute.xlu0 37
  %1875 = vperm.xlu0 %1874, %v128
  %v1876 = vpop.permute.xlu0 %1875
  %v1878 = vmul.f32 %v1866, %v1872
  %v1879 = vmul.f32 %v1867, %v1872
  %v1880 = vmul.f32 %v1868, %v1876
  %v1881 = vmul.f32 %v1869, %v1876
  %v1882 = vadd.f32 %v1836, %v1878
  %v1883 = vadd.f32 %v1837, %v1879
  %v1884 = vadd.f32 %v1838, %v1880
  %v1885 = vadd.f32 %v1839, %v1881
  %1886 = vrot.lane.b32.xlu0 %v123, 2
  %v1887 = vpop.permute.xlu0 %1886
  %1888 = vrot.lane.b32.xlu0 %v125, 2
  %v1889 = vpop.permute.xlu0 %1888
  %1890 = vrot.lane.b32.xlu0 %v124, 2
  %v1891 = vpop.permute.xlu0 %1890
  %1892 = vrot.lane.b32.xlu0 %v126, 2
  %v1893 = vpop.permute.xlu0 %1892
  %vm1894 = vcmp.lt.s32.totalorder %v138, 2
  %v1895 = vsel %vm1894, %v1887, %v1891
  %v1896 = vsel %vm1894, %v1889, %v1893
  %v1897 = vsel %vm1894, %v1891, %v1887
  %v1898 = vsel %vm1894, %v1893, %v1889
  %s1899 = scalar_lea.vmem %s1, 70
  %v1900 = vld [vmem:[%s1899] ss:$8 sm:$0x3]
  %v1902 = vlaneseq
  %v1903 = vshrl.u32 %v1902, 7
  %v1904 = vsub.s32 0, %v1903
  %v1905 = vrot.slane %v1900, %v1904
  %v1906 = vlaneseq
  %v1907 = vshrl.u32 %v1906, 7
  %v1908 = vsub.s32 1, %v1907
  %v1909 = vrot.slane %v1900, %v1908
  %v1912 = vmul.f32 %v1897, %v1905
  %v1913 = vmul.f32 %v1895, %v1909
  %v1914 = vmul.f32 %v1898, %v1905
  %v1915 = vmul.f32 %v1896, %v1909
  %1916 = vset.pattern.permute.xlu0 38
  %1917 = vperm.xlu0 %1916, %v127
  %v1918 = vpop.permute.xlu0 %1917
  %1920 = vset.pattern.permute.xlu0 38
  %1921 = vperm.xlu0 %1920, %v128
  %v1922 = vpop.permute.xlu0 %1921
  %v1924 = vmul.f32 %v1912, %v1918
  %v1925 = vmul.f32 %v1913, %v1918
  %v1926 = vmul.f32 %v1914, %v1922
  %v1927 = vmul.f32 %v1915, %v1922
  %v1928 = vadd.f32 %v1882, %v1924
  %v1929 = vadd.f32 %v1883, %v1925
  %v1930 = vadd.f32 %v1884, %v1926
  %v1931 = vadd.f32 %v1885, %v1927
  %1932 = vrot.lane.b32.xlu0 %v123, 1
  %v1933 = vpop.permute.xlu0 %1932
  %1934 = vrot.lane.b32.xlu0 %v125, 1
  %v1935 = vpop.permute.xlu0 %1934
  %1936 = vrot.lane.b32.xlu0 %v124, 1
  %v1937 = vpop.permute.xlu0 %1936
  %1938 = vrot.lane.b32.xlu0 %v126, 1
  %v1939 = vpop.permute.xlu0 %1938
  %vm1940 = vcmp.lt.s32.totalorder %v138, 1
  %v1941 = vsel %vm1940, %v1933, %v1937
  %v1942 = vsel %vm1940, %v1935, %v1939
  %v1943 = vsel %vm1940, %v1937, %v1933
  %v1944 = vsel %vm1940, %v1939, %v1935
  %s1945 = scalar_lea.vmem %s1, 71
  %v1946 = vld [vmem:[%s1945] ss:$8 sm:$0x3]
  %v1948 = vlaneseq
  %v1949 = vshrl.u32 %v1948, 7
  %v1950 = vsub.s32 0, %v1949
  %v1951 = vrot.slane %v1946, %v1950
  %v1952 = vlaneseq
  %v1953 = vshrl.u32 %v1952, 7
  %v1954 = vsub.s32 1, %v1953
  %v1955 = vrot.slane %v1946, %v1954
  %v1958 = vmul.f32 %v1943, %v1951
  %v1959 = vmul.f32 %v1941, %v1955
  %v1960 = vmul.f32 %v1944, %v1951
  %v1961 = vmul.f32 %v1942, %v1955
  %1962 = vset.pattern.permute.xlu0 39
  %1963 = vperm.xlu0 %1962, %v127
  %v1964 = vpop.permute.xlu0 %1963
  %1966 = vset.pattern.permute.xlu0 39
  %1967 = vperm.xlu0 %1966, %v128
  %v1968 = vpop.permute.xlu0 %1967
  %v1970 = vmul.f32 %v1958, %v1964
  %v1971 = vmul.f32 %v1959, %v1964
  %v1972 = vmul.f32 %v1960, %v1968
  %v1973 = vmul.f32 %v1961, %v1968
  %v1974 = vadd.f32 %v1928, %v1970
  %v1975 = vadd.f32 %v1929, %v1971
  %v1976 = vadd.f32 %v1930, %v1972
  %v1977 = vadd.f32 %v1931, %v1973
  %s1978 = scalar_lea.vmem %s2, 3
  %v1979 = vld [vmem:[%s1978] ss:$8 sm:$0x3]
  %v1981 = vlaneseq
  %v1982 = vshrl.u32 %v1981, 7
  %v1983 = vsub.s32 0, %v1982
  %v1984 = vrot.slane %v1979, %v1983
  %v1985 = vlaneseq
  %v1986 = vshrl.u32 %v1985, 7
  %v1987 = vsub.s32 1, %v1986
  %v1988 = vrot.slane %v1979, %v1987
  %v1991 = vadd.f32 %v1943, %v1984
  %v1992 = vadd.f32 %v1941, %v1988
  %v1993 = vadd.f32 %v1944, %v1984
  %v1994 = vadd.f32 %v1942, %v1988
  %v1995 = vmax.f32 %v1665, %v1991
  %v1996 = vmax.f32 %v1666, %v1992
  %v1997 = vmax.f32 %v1667, %v1993
  %v1998 = vmax.f32 %v1668, %v1994
  %s1999 = scalar_lea.vmem %s1, 80
  %v2000 = vld [vmem:[%s1999] ss:$8 sm:$0x3]
  %v2002 = vlaneseq
  %v2003 = vshrl.u32 %v2002, 7
  %v2004 = vsub.s32 0, %v2003
  %v2005 = vrot.slane %v2000, %v2004
  %v2006 = vlaneseq
  %v2007 = vshrl.u32 %v2006, 7
  %v2008 = vsub.s32 1, %v2007
  %v2009 = vrot.slane %v2000, %v2008
  %v2012 = vmul.f32 %v123, %v2005
  %v2013 = vmul.f32 %v124, %v2009
  %v2014 = vmul.f32 %v125, %v2005
  %v2015 = vmul.f32 %v126, %v2009
  %2016 = vset.pattern.permute.xlu0 40
  %2017 = vperm.xlu0 %2016, %v127
  %v2018 = vpop.permute.xlu0 %2017
  %2020 = vset.pattern.permute.xlu0 40
  %2021 = vperm.xlu0 %2020, %v128
  %v2022 = vpop.permute.xlu0 %2021
  %v2024 = vmul.f32 %v2012, %v2018
  %v2025 = vmul.f32 %v2013, %v2018
  %v2026 = vmul.f32 %v2014, %v2022
  %v2027 = vmul.f32 %v2015, %v2022
  %v2028 = vadd.f32 %v1974, %v2024
  %v2029 = vadd.f32 %v1975, %v2025
  %v2030 = vadd.f32 %v1976, %v2026
  %v2031 = vadd.f32 %v1977, %v2027
  %s2032 = scalar_lea.vmem %s2, 4
  %v2033 = vld [vmem:[%s2032] ss:$8 sm:$0x3]
  %v2035 = vlaneseq
  %v2036 = vshrl.u32 %v2035, 7
  %v2037 = vsub.s32 0, %v2036
  %v2038 = vrot.slane %v2033, %v2037
  %v2039 = vlaneseq
  %v2040 = vshrl.u32 %v2039, 7
  %v2041 = vsub.s32 1, %v2040
  %v2042 = vrot.slane %v2033, %v2041
  %v2045 = vadd.f32 %v123, %v2038
  %v2046 = vadd.f32 %v124, %v2042
  %v2047 = vadd.f32 %v125, %v2038
  %v2048 = vadd.f32 %v126, %v2042
  %v2049 = vmax.f32 %v1995, %v2045
  %v2050 = vmax.f32 %v1996, %v2046
  %v2051 = vmax.f32 %v1997, %v2047
  %v2052 = vmax.f32 %v1998, %v2048
  %2053 = vrot.lane.b32.xlu0 %v123, 127
  %v2054 = vpop.permute.xlu0 %2053
  %2055 = vrot.lane.b32.xlu0 %v125, 127
  %v2056 = vpop.permute.xlu0 %2055
  %2057 = vrot.lane.b32.xlu0 %v124, 127
  %v2058 = vpop.permute.xlu0 %2057
  %2059 = vrot.lane.b32.xlu0 %v126, 127
  %v2060 = vpop.permute.xlu0 %2059
  %vm2061 = vcmp.lt.s32.totalorder %v138, 127
  %v2062 = vsel %vm2061, %v2054, %v2058
  %v2063 = vsel %vm2061, %v2056, %v2060
  %v2064 = vsel %vm2061, %v2058, %v2054
  %v2065 = vsel %vm2061, %v2060, %v2056
  %s2066 = scalar_lea.vmem %s1, 81
  %v2067 = vld [vmem:[%s2066] ss:$8 sm:$0x3]
  %v2069 = vlaneseq
  %v2070 = vshrl.u32 %v2069, 7
  %v2071 = vsub.s32 0, %v2070
  %v2072 = vrot.slane %v2067, %v2071
  %v2073 = vlaneseq
  %v2074 = vshrl.u32 %v2073, 7
  %v2075 = vsub.s32 1, %v2074
  %v2076 = vrot.slane %v2067, %v2075
  %v2079 = vmul.f32 %v2062, %v2072
  %v2080 = vmul.f32 %v2064, %v2076
  %v2081 = vmul.f32 %v2063, %v2072
  %v2082 = vmul.f32 %v2065, %v2076
  %2083 = vset.pattern.permute.xlu0 41
  %2084 = vperm.xlu0 %2083, %v127
  %v2085 = vpop.permute.xlu0 %2084
  %2087 = vset.pattern.permute.xlu0 41
  %2088 = vperm.xlu0 %2087, %v128
  %v2089 = vpop.permute.xlu0 %2088
  %v2091 = vmul.f32 %v2079, %v2085
  %v2092 = vmul.f32 %v2080, %v2085
  %v2093 = vmul.f32 %v2081, %v2089
  %v2094 = vmul.f32 %v2082, %v2089
  %v2095 = vadd.f32 %v2028, %v2091
  %v2096 = vadd.f32 %v2029, %v2092
  %v2097 = vadd.f32 %v2030, %v2093
  %v2098 = vadd.f32 %v2031, %v2094
  %s2099 = scalar_lea.vmem %s2, 5
  %v2100 = vld [vmem:[%s2099] ss:$8 sm:$0x3]
  %v2102 = vlaneseq
  %v2103 = vshrl.u32 %v2102, 7
  %v2104 = vsub.s32 0, %v2103
  %v2105 = vrot.slane %v2100, %v2104
  %v2106 = vlaneseq
  %v2107 = vshrl.u32 %v2106, 7
  %v2108 = vsub.s32 1, %v2107
  %v2109 = vrot.slane %v2100, %v2108
  %v2112 = vadd.f32 %v2062, %v2105
  %v2113 = vadd.f32 %v2064, %v2109
  %v2114 = vadd.f32 %v2063, %v2105
  %v2115 = vadd.f32 %v2065, %v2109
  %v2116 = vmax.f32 %v2049, %v2112
  %v2117 = vmax.f32 %v2050, %v2113
  %v2118 = vmax.f32 %v2051, %v2114
  %v2119 = vmax.f32 %v2052, %v2115
  %2120 = vrot.lane.b32.xlu0 %v123, 126
  %v2121 = vpop.permute.xlu0 %2120
  %2122 = vrot.lane.b32.xlu0 %v125, 126
  %v2123 = vpop.permute.xlu0 %2122
  %2124 = vrot.lane.b32.xlu0 %v124, 126
  %v2125 = vpop.permute.xlu0 %2124
  %2126 = vrot.lane.b32.xlu0 %v126, 126
  %v2127 = vpop.permute.xlu0 %2126
  %vm2128 = vcmp.lt.s32.totalorder %v138, 126
  %v2129 = vsel %vm2128, %v2121, %v2125
  %v2130 = vsel %vm2128, %v2123, %v2127
  %v2131 = vsel %vm2128, %v2125, %v2121
  %v2132 = vsel %vm2128, %v2127, %v2123
  %s2133 = scalar_lea.vmem %s1, 82
  %v2134 = vld [vmem:[%s2133] ss:$8 sm:$0x3]
  %v2136 = vlaneseq
  %v2137 = vshrl.u32 %v2136, 7
  %v2138 = vsub.s32 0, %v2137
  %v2139 = vrot.slane %v2134, %v2138
  %v2140 = vlaneseq
  %v2141 = vshrl.u32 %v2140, 7
  %v2142 = vsub.s32 1, %v2141
  %v2143 = vrot.slane %v2134, %v2142
  %v2146 = vmul.f32 %v2129, %v2139
  %v2147 = vmul.f32 %v2131, %v2143
  %v2148 = vmul.f32 %v2130, %v2139
  %v2149 = vmul.f32 %v2132, %v2143
  %2150 = vset.pattern.permute.xlu0 42
  %2151 = vperm.xlu0 %2150, %v127
  %v2152 = vpop.permute.xlu0 %2151
  %2154 = vset.pattern.permute.xlu0 42
  %2155 = vperm.xlu0 %2154, %v128
  %v2156 = vpop.permute.xlu0 %2155
  %v2158 = vmul.f32 %v2146, %v2152
  %v2159 = vmul.f32 %v2147, %v2152
  %v2160 = vmul.f32 %v2148, %v2156
  %v2161 = vmul.f32 %v2149, %v2156
  %v2162 = vadd.f32 %v2095, %v2158
  %v2163 = vadd.f32 %v2096, %v2159
  %v2164 = vadd.f32 %v2097, %v2160
  %v2165 = vadd.f32 %v2098, %v2161
  %2166 = vrot.lane.b32.xlu0 %v123, 125
  %v2167 = vpop.permute.xlu0 %2166
  %2168 = vrot.lane.b32.xlu0 %v125, 125
  %v2169 = vpop.permute.xlu0 %2168
  %2170 = vrot.lane.b32.xlu0 %v124, 125
  %v2171 = vpop.permute.xlu0 %2170
  %2172 = vrot.lane.b32.xlu0 %v126, 125
  %v2173 = vpop.permute.xlu0 %2172
  %vm2174 = vcmp.lt.s32.totalorder %v138, 125
  %v2175 = vsel %vm2174, %v2167, %v2171
  %v2176 = vsel %vm2174, %v2169, %v2173
  %v2177 = vsel %vm2174, %v2171, %v2167
  %v2178 = vsel %vm2174, %v2173, %v2169
  %s2179 = scalar_lea.vmem %s1, 83
  %v2180 = vld [vmem:[%s2179] ss:$8 sm:$0x3]
  %v2182 = vlaneseq
  %v2183 = vshrl.u32 %v2182, 7
  %v2184 = vsub.s32 0, %v2183
  %v2185 = vrot.slane %v2180, %v2184
  %v2186 = vlaneseq
  %v2187 = vshrl.u32 %v2186, 7
  %v2188 = vsub.s32 1, %v2187
  %v2189 = vrot.slane %v2180, %v2188
  %v2192 = vmul.f32 %v2175, %v2185
  %v2193 = vmul.f32 %v2177, %v2189
  %v2194 = vmul.f32 %v2176, %v2185
  %v2195 = vmul.f32 %v2178, %v2189
  %2196 = vset.pattern.permute.xlu0 43
  %2197 = vperm.xlu0 %2196, %v127
  %v2198 = vpop.permute.xlu0 %2197
  %2200 = vset.pattern.permute.xlu0 43
  %2201 = vperm.xlu0 %2200, %v128
  %v2202 = vpop.permute.xlu0 %2201
  %v2204 = vmul.f32 %v2192, %v2198
  %v2205 = vmul.f32 %v2193, %v2198
  %v2206 = vmul.f32 %v2194, %v2202
  %v2207 = vmul.f32 %v2195, %v2202
  %v2208 = vadd.f32 %v2162, %v2204
  %v2209 = vadd.f32 %v2163, %v2205
  %v2210 = vadd.f32 %v2164, %v2206
  %v2211 = vadd.f32 %v2165, %v2207
  %2212 = vrot.lane.b32.xlu0 %v123, 124
  %v2213 = vpop.permute.xlu0 %2212
  %2214 = vrot.lane.b32.xlu0 %v125, 124
  %v2215 = vpop.permute.xlu0 %2214
  %2216 = vrot.lane.b32.xlu0 %v124, 124
  %v2217 = vpop.permute.xlu0 %2216
  %2218 = vrot.lane.b32.xlu0 %v126, 124
  %v2219 = vpop.permute.xlu0 %2218
  %vm2220 = vcmp.lt.s32.totalorder %v138, 124
  %v2221 = vsel %vm2220, %v2213, %v2217
  %v2222 = vsel %vm2220, %v2215, %v2219
  %v2223 = vsel %vm2220, %v2217, %v2213
  %v2224 = vsel %vm2220, %v2219, %v2215
  %s2225 = scalar_lea.vmem %s1, 84
  %v2226 = vld [vmem:[%s2225] ss:$8 sm:$0x3]
  %v2228 = vlaneseq
  %v2229 = vshrl.u32 %v2228, 7
  %v2230 = vsub.s32 0, %v2229
  %v2231 = vrot.slane %v2226, %v2230
  %v2232 = vlaneseq
  %v2233 = vshrl.u32 %v2232, 7
  %v2234 = vsub.s32 1, %v2233
  %v2235 = vrot.slane %v2226, %v2234
  %v2238 = vmul.f32 %v2221, %v2231
  %v2239 = vmul.f32 %v2223, %v2235
  %v2240 = vmul.f32 %v2222, %v2231
  %v2241 = vmul.f32 %v2224, %v2235
  %2242 = vset.pattern.permute.xlu0 44
  %2243 = vperm.xlu0 %2242, %v127
  %v2244 = vpop.permute.xlu0 %2243
  %2246 = vset.pattern.permute.xlu0 44
  %2247 = vperm.xlu0 %2246, %v128
  %v2248 = vpop.permute.xlu0 %2247
  %v2250 = vmul.f32 %v2238, %v2244
  %v2251 = vmul.f32 %v2239, %v2244
  %v2252 = vmul.f32 %v2240, %v2248
  %v2253 = vmul.f32 %v2241, %v2248
  %v2254 = vadd.f32 %v2208, %v2250
  %v2255 = vadd.f32 %v2209, %v2251
  %v2256 = vadd.f32 %v2210, %v2252
  %v2257 = vadd.f32 %v2211, %v2253
  %s2258 = scalar_lea.vmem %s1, 85
  %v2259 = vld [vmem:[%s2258] ss:$8 sm:$0x3]
  %v2261 = vlaneseq
  %v2262 = vshrl.u32 %v2261, 7
  %v2263 = vsub.s32 0, %v2262
  %v2264 = vrot.slane %v2259, %v2263
  %v2265 = vlaneseq
  %v2266 = vshrl.u32 %v2265, 7
  %v2267 = vsub.s32 1, %v2266
  %v2268 = vrot.slane %v2259, %v2267
  %v2271 = vmul.f32 %v2221, %v2264
  %v2272 = vmul.f32 %v2223, %v2268
  %v2273 = vmul.f32 %v2222, %v2264
  %v2274 = vmul.f32 %v2224, %v2268
  %2275 = vset.pattern.permute.xlu0 45
  %2276 = vperm.xlu0 %2275, %v127
  %v2277 = vpop.permute.xlu0 %2276
  %2279 = vset.pattern.permute.xlu0 45
  %2280 = vperm.xlu0 %2279, %v128
  %v2281 = vpop.permute.xlu0 %2280
  %v2283 = vmul.f32 %v2271, %v2277
  %v2284 = vmul.f32 %v2272, %v2277
  %v2285 = vmul.f32 %v2273, %v2281
  %v2286 = vmul.f32 %v2274, %v2281
  %v2287 = vadd.f32 %v2254, %v2283
  %v2288 = vadd.f32 %v2255, %v2284
  %v2289 = vadd.f32 %v2256, %v2285
  %v2290 = vadd.f32 %v2257, %v2286
  %2291 = vrot.lane.b32.xlu0 %v123, 123
  %v2292 = vpop.permute.xlu0 %2291
  %2293 = vrot.lane.b32.xlu0 %v125, 123
  %v2294 = vpop.permute.xlu0 %2293
  %2295 = vrot.lane.b32.xlu0 %v124, 123
  %v2296 = vpop.permute.xlu0 %2295
  %2297 = vrot.lane.b32.xlu0 %v126, 123
  %v2298 = vpop.permute.xlu0 %2297
  %vm2299 = vcmp.lt.s32.totalorder %v138, 123
  %v2300 = vsel %vm2299, %v2292, %v2296
  %v2301 = vsel %vm2299, %v2294, %v2298
  %v2302 = vsel %vm2299, %v2296, %v2292
  %v2303 = vsel %vm2299, %v2298, %v2294
  %s2304 = scalar_lea.vmem %s1, 86
  %v2305 = vld [vmem:[%s2304] ss:$8 sm:$0x3]
  %v2307 = vlaneseq
  %v2308 = vshrl.u32 %v2307, 7
  %v2309 = vsub.s32 0, %v2308
  %v2310 = vrot.slane %v2305, %v2309
  %v2311 = vlaneseq
  %v2312 = vshrl.u32 %v2311, 7
  %v2313 = vsub.s32 1, %v2312
  %v2314 = vrot.slane %v2305, %v2313
  %v2317 = vmul.f32 %v2300, %v2310
  %v2318 = vmul.f32 %v2302, %v2314
  %v2319 = vmul.f32 %v2301, %v2310
  %v2320 = vmul.f32 %v2303, %v2314
  %2321 = vset.pattern.permute.xlu0 46
  %2322 = vperm.xlu0 %2321, %v127
  %v2323 = vpop.permute.xlu0 %2322
  %2325 = vset.pattern.permute.xlu0 46
  %2326 = vperm.xlu0 %2325, %v128
  %v2327 = vpop.permute.xlu0 %2326
  %v2329 = vmul.f32 %v2317, %v2323
  %v2330 = vmul.f32 %v2318, %v2323
  %v2331 = vmul.f32 %v2319, %v2327
  %v2332 = vmul.f32 %v2320, %v2327
  %v2333 = vadd.f32 %v2287, %v2329
  %v2334 = vadd.f32 %v2288, %v2330
  %v2335 = vadd.f32 %v2289, %v2331
  %v2336 = vadd.f32 %v2290, %v2332
  %2337 = vrot.lane.b32.xlu0 %v123, 122
  %v2338 = vpop.permute.xlu0 %2337
  %2339 = vrot.lane.b32.xlu0 %v125, 122
  %v2340 = vpop.permute.xlu0 %2339
  %2341 = vrot.lane.b32.xlu0 %v124, 122
  %v2342 = vpop.permute.xlu0 %2341
  %2343 = vrot.lane.b32.xlu0 %v126, 122
  %v2344 = vpop.permute.xlu0 %2343
  %vm2345 = vcmp.lt.s32.totalorder %v138, 122
  %v2346 = vsel %vm2345, %v2338, %v2342
  %v2347 = vsel %vm2345, %v2340, %v2344
  %v2348 = vsel %vm2345, %v2342, %v2338
  %v2349 = vsel %vm2345, %v2344, %v2340
  %s2350 = scalar_lea.vmem %s1, 87
  %v2351 = vld [vmem:[%s2350] ss:$8 sm:$0x3]
  %v2353 = vlaneseq
  %v2354 = vshrl.u32 %v2353, 7
  %v2355 = vsub.s32 0, %v2354
  %v2356 = vrot.slane %v2351, %v2355
  %v2357 = vlaneseq
  %v2358 = vshrl.u32 %v2357, 7
  %v2359 = vsub.s32 1, %v2358
  %v2360 = vrot.slane %v2351, %v2359
  %v2363 = vmul.f32 %v2346, %v2356
  %v2364 = vmul.f32 %v2348, %v2360
  %v2365 = vmul.f32 %v2347, %v2356
  %v2366 = vmul.f32 %v2349, %v2360
  %2367 = vset.pattern.permute.xlu0 47
  %2368 = vperm.xlu0 %2367, %v127
  %v2369 = vpop.permute.xlu0 %2368
  %2371 = vset.pattern.permute.xlu0 47
  %2372 = vperm.xlu0 %2371, %v128
  %v2373 = vpop.permute.xlu0 %2372
  %v2375 = vmul.f32 %v2363, %v2369
  %v2376 = vmul.f32 %v2364, %v2369
  %v2377 = vmul.f32 %v2365, %v2373
  %v2378 = vmul.f32 %v2366, %v2373
  %v2379 = vadd.f32 %v2333, %v2375
  %v2380 = vadd.f32 %v2334, %v2376
  %v2381 = vadd.f32 %v2335, %v2377
  %v2382 = vadd.f32 %v2336, %v2378
  %2383 = vrot.lane.b32.xlu0 %v123, 121
  %v2384 = vpop.permute.xlu0 %2383
  %2385 = vrot.lane.b32.xlu0 %v125, 121
  %v2386 = vpop.permute.xlu0 %2385
  %2387 = vrot.lane.b32.xlu0 %v124, 121
  %v2388 = vpop.permute.xlu0 %2387
  %2389 = vrot.lane.b32.xlu0 %v126, 121
  %v2390 = vpop.permute.xlu0 %2389
  %vm2391 = vcmp.lt.s32.totalorder %v138, 121
  %v2392 = vsel %vm2391, %v2384, %v2388
  %v2393 = vsel %vm2391, %v2386, %v2390
  %v2394 = vsel %vm2391, %v2388, %v2384
  %v2395 = vsel %vm2391, %v2390, %v2386
  %s2396 = scalar_lea.vmem %s1, 96
  %v2397 = vld [vmem:[%s2396] ss:$8 sm:$0x3]
  %v2399 = vlaneseq
  %v2400 = vshrl.u32 %v2399, 7
  %v2401 = vsub.s32 0, %v2400
  %v2402 = vrot.slane %v2397, %v2401
  %v2403 = vlaneseq
  %v2404 = vshrl.u32 %v2403, 7
  %v2405 = vsub.s32 1, %v2404
  %v2406 = vrot.slane %v2397, %v2405
  %v2409 = vmul.f32 %v2392, %v2402
  %v2410 = vmul.f32 %v2394, %v2406
  %v2411 = vmul.f32 %v2393, %v2402
  %v2412 = vmul.f32 %v2395, %v2406
  %2413 = vset.pattern.permute.xlu0 48
  %2414 = vperm.xlu0 %2413, %v127
  %v2415 = vpop.permute.xlu0 %2414
  %2417 = vset.pattern.permute.xlu0 48
  %2418 = vperm.xlu0 %2417, %v128
  %v2419 = vpop.permute.xlu0 %2418
  %v2421 = vmul.f32 %v2409, %v2415
  %v2422 = vmul.f32 %v2410, %v2415
  %v2423 = vmul.f32 %v2411, %v2419
  %v2424 = vmul.f32 %v2412, %v2419
  %v2425 = vadd.f32 %v2379, %v2421
  %v2426 = vadd.f32 %v2380, %v2422
  %v2427 = vadd.f32 %v2381, %v2423
  %v2428 = vadd.f32 %v2382, %v2424
  %s2429 = scalar_lea.vmem %s2, 6
  %v2430 = vld [vmem:[%s2429] ss:$8 sm:$0x3]
  %v2432 = vlaneseq
  %v2433 = vshrl.u32 %v2432, 7
  %v2434 = vsub.s32 0, %v2433
  %v2435 = vrot.slane %v2430, %v2434
  %v2436 = vlaneseq
  %v2437 = vshrl.u32 %v2436, 7
  %v2438 = vsub.s32 1, %v2437
  %v2439 = vrot.slane %v2430, %v2438
  %v2442 = vadd.f32 %v2392, %v2435
  %v2443 = vadd.f32 %v2394, %v2439
  %v2444 = vadd.f32 %v2393, %v2435
  %v2445 = vadd.f32 %v2395, %v2439
  %v2446 = vmax.f32 %v2116, %v2442
  %v2447 = vmax.f32 %v2117, %v2443
  %v2448 = vmax.f32 %v2118, %v2444
  %v2449 = vmax.f32 %v2119, %v2445
  %2450 = vrot.lane.b32.xlu0 %v123, 120
  %v2451 = vpop.permute.xlu0 %2450
  %2452 = vrot.lane.b32.xlu0 %v125, 120
  %v2453 = vpop.permute.xlu0 %2452
  %2454 = vrot.lane.b32.xlu0 %v124, 120
  %v2455 = vpop.permute.xlu0 %2454
  %2456 = vrot.lane.b32.xlu0 %v126, 120
  %v2457 = vpop.permute.xlu0 %2456
  %vm2458 = vcmp.lt.s32.totalorder %v138, 120
  %v2459 = vsel %vm2458, %v2451, %v2455
  %v2460 = vsel %vm2458, %v2453, %v2457
  %v2461 = vsel %vm2458, %v2455, %v2451
  %v2462 = vsel %vm2458, %v2457, %v2453
  %s2463 = scalar_lea.vmem %s1, 97
  %v2464 = vld [vmem:[%s2463] ss:$8 sm:$0x3]
  %v2466 = vlaneseq
  %v2467 = vshrl.u32 %v2466, 7
  %v2468 = vsub.s32 0, %v2467
  %v2469 = vrot.slane %v2464, %v2468
  %v2470 = vlaneseq
  %v2471 = vshrl.u32 %v2470, 7
  %v2472 = vsub.s32 1, %v2471
  %v2473 = vrot.slane %v2464, %v2472
  %v2476 = vmul.f32 %v2459, %v2469
  %v2477 = vmul.f32 %v2461, %v2473
  %v2478 = vmul.f32 %v2460, %v2469
  %v2479 = vmul.f32 %v2462, %v2473
  %2480 = vset.pattern.permute.xlu0 49
  %2481 = vperm.xlu0 %2480, %v127
  %v2482 = vpop.permute.xlu0 %2481
  %2484 = vset.pattern.permute.xlu0 49
  %2485 = vperm.xlu0 %2484, %v128
  %v2486 = vpop.permute.xlu0 %2485
  %v2488 = vmul.f32 %v2476, %v2482
  %v2489 = vmul.f32 %v2477, %v2482
  %v2490 = vmul.f32 %v2478, %v2486
  %v2491 = vmul.f32 %v2479, %v2486
  %v2492 = vadd.f32 %v2425, %v2488
  %v2493 = vadd.f32 %v2426, %v2489
  %v2494 = vadd.f32 %v2427, %v2490
  %v2495 = vadd.f32 %v2428, %v2491
  %s2496 = scalar_lea.vmem %s2, 7
  %v2497 = vld [vmem:[%s2496] ss:$8 sm:$0x3]
  %v2499 = vlaneseq
  %v2500 = vshrl.u32 %v2499, 7
  %v2501 = vsub.s32 0, %v2500
  %v2502 = vrot.slane %v2497, %v2501
  %v2503 = vlaneseq
  %v2504 = vshrl.u32 %v2503, 7
  %v2505 = vsub.s32 1, %v2504
  %v2506 = vrot.slane %v2497, %v2505
  %v2509 = vadd.f32 %v2459, %v2502
  %v2510 = vadd.f32 %v2461, %v2506
  %v2511 = vadd.f32 %v2460, %v2502
  %v2512 = vadd.f32 %v2462, %v2506
  %v2513 = vmax.f32 %v2446, %v2509
  %v2514 = vmax.f32 %v2447, %v2510
  %v2515 = vmax.f32 %v2448, %v2511
  %v2516 = vmax.f32 %v2449, %v2512
  %2517 = vrot.lane.b32.xlu0 %v123, 119
  %v2518 = vpop.permute.xlu0 %2517
  %2519 = vrot.lane.b32.xlu0 %v125, 119
  %v2520 = vpop.permute.xlu0 %2519
  %2521 = vrot.lane.b32.xlu0 %v124, 119
  %v2522 = vpop.permute.xlu0 %2521
  %2523 = vrot.lane.b32.xlu0 %v126, 119
  %v2524 = vpop.permute.xlu0 %2523
  %vm2525 = vcmp.lt.s32.totalorder %v138, 119
  %v2526 = vsel %vm2525, %v2518, %v2522
  %v2527 = vsel %vm2525, %v2520, %v2524
  %v2528 = vsel %vm2525, %v2522, %v2518
  %v2529 = vsel %vm2525, %v2524, %v2520
  %s2530 = scalar_lea.vmem %s1, 98
  %v2531 = vld [vmem:[%s2530] ss:$8 sm:$0x3]
  %v2533 = vlaneseq
  %v2534 = vshrl.u32 %v2533, 7
  %v2535 = vsub.s32 0, %v2534
  %v2536 = vrot.slane %v2531, %v2535
  %v2537 = vlaneseq
  %v2538 = vshrl.u32 %v2537, 7
  %v2539 = vsub.s32 1, %v2538
  %v2540 = vrot.slane %v2531, %v2539
  %v2543 = vmul.f32 %v2526, %v2536
  %v2544 = vmul.f32 %v2528, %v2540
  %v2545 = vmul.f32 %v2527, %v2536
  %v2546 = vmul.f32 %v2529, %v2540
  %2547 = vset.pattern.permute.xlu0 50
  %2548 = vperm.xlu0 %2547, %v127
  %v2549 = vpop.permute.xlu0 %2548
  %2551 = vset.pattern.permute.xlu0 50
  %2552 = vperm.xlu0 %2551, %v128
  %v2553 = vpop.permute.xlu0 %2552
  %v2555 = vmul.f32 %v2543, %v2549
  %v2556 = vmul.f32 %v2544, %v2549
  %v2557 = vmul.f32 %v2545, %v2553
  %v2558 = vmul.f32 %v2546, %v2553
  %v2559 = vadd.f32 %v2492, %v2555
  %v2560 = vadd.f32 %v2493, %v2556
  %v2561 = vadd.f32 %v2494, %v2557
  %v2562 = vadd.f32 %v2495, %v2558
  %s2563 = scalar_lea.vmem %s2, 16
  %v2564 = vld [vmem:[%s2563] ss:$8 sm:$0x3]
  %v2566 = vlaneseq
  %v2567 = vshrl.u32 %v2566, 7
  %v2568 = vsub.s32 0, %v2567
  %v2569 = vrot.slane %v2564, %v2568
  %v2570 = vlaneseq
  %v2571 = vshrl.u32 %v2570, 7
  %v2572 = vsub.s32 1, %v2571
  %v2573 = vrot.slane %v2564, %v2572
  %v2576 = vadd.f32 %v2526, %v2569
  %v2577 = vadd.f32 %v2528, %v2573
  %v2578 = vadd.f32 %v2527, %v2569
  %v2579 = vadd.f32 %v2529, %v2573
  %v2580 = vmax.f32 %v2513, %v2576
  %v2581 = vmax.f32 %v2514, %v2577
  %v2582 = vmax.f32 %v2515, %v2578
  %v2583 = vmax.f32 %v2516, %v2579
  %2584 = vrot.lane.b32.xlu0 %v123, 118
  %v2585 = vpop.permute.xlu0 %2584
  %2586 = vrot.lane.b32.xlu0 %v125, 118
  %v2587 = vpop.permute.xlu0 %2586
  %2588 = vrot.lane.b32.xlu0 %v124, 118
  %v2589 = vpop.permute.xlu0 %2588
  %2590 = vrot.lane.b32.xlu0 %v126, 118
  %v2591 = vpop.permute.xlu0 %2590
  %vm2592 = vcmp.lt.s32.totalorder %v138, 118
  %v2593 = vsel %vm2592, %v2585, %v2589
  %v2594 = vsel %vm2592, %v2587, %v2591
  %v2595 = vsel %vm2592, %v2589, %v2585
  %v2596 = vsel %vm2592, %v2591, %v2587
  %s2597 = scalar_lea.vmem %s1, 99
  %v2598 = vld [vmem:[%s2597] ss:$8 sm:$0x3]
  %v2600 = vlaneseq
  %v2601 = vshrl.u32 %v2600, 7
  %v2602 = vsub.s32 0, %v2601
  %v2603 = vrot.slane %v2598, %v2602
  %v2604 = vlaneseq
  %v2605 = vshrl.u32 %v2604, 7
  %v2606 = vsub.s32 1, %v2605
  %v2607 = vrot.slane %v2598, %v2606
  %v2610 = vmul.f32 %v2593, %v2603
  %v2611 = vmul.f32 %v2595, %v2607
  %v2612 = vmul.f32 %v2594, %v2603
  %v2613 = vmul.f32 %v2596, %v2607
  %2614 = vset.pattern.permute.xlu0 51
  %2615 = vperm.xlu0 %2614, %v127
  %v2616 = vpop.permute.xlu0 %2615
  %2618 = vset.pattern.permute.xlu0 51
  %2619 = vperm.xlu0 %2618, %v128
  %v2620 = vpop.permute.xlu0 %2619
  %v2622 = vmul.f32 %v2610, %v2616
  %v2623 = vmul.f32 %v2611, %v2616
  %v2624 = vmul.f32 %v2612, %v2620
  %v2625 = vmul.f32 %v2613, %v2620
  %v2626 = vadd.f32 %v2559, %v2622
  %v2627 = vadd.f32 %v2560, %v2623
  %v2628 = vadd.f32 %v2561, %v2624
  %v2629 = vadd.f32 %v2562, %v2625
  %2630 = vrot.lane.b32.xlu0 %v123, 117
  %v2631 = vpop.permute.xlu0 %2630
  %2632 = vrot.lane.b32.xlu0 %v125, 117
  %v2633 = vpop.permute.xlu0 %2632
  %2634 = vrot.lane.b32.xlu0 %v124, 117
  %v2635 = vpop.permute.xlu0 %2634
  %2636 = vrot.lane.b32.xlu0 %v126, 117
  %v2637 = vpop.permute.xlu0 %2636
  %vm2638 = vcmp.lt.s32.totalorder %v138, 117
  %v2639 = vsel %vm2638, %v2631, %v2635
  %v2640 = vsel %vm2638, %v2633, %v2637
  %v2641 = vsel %vm2638, %v2635, %v2631
  %v2642 = vsel %vm2638, %v2637, %v2633
  %s2643 = scalar_lea.vmem %s1, 100
  %v2644 = vld [vmem:[%s2643] ss:$8 sm:$0x3]
  %v2646 = vlaneseq
  %v2647 = vshrl.u32 %v2646, 7
  %v2648 = vsub.s32 0, %v2647
  %v2649 = vrot.slane %v2644, %v2648
  %v2650 = vlaneseq
  %v2651 = vshrl.u32 %v2650, 7
  %v2652 = vsub.s32 1, %v2651
  %v2653 = vrot.slane %v2644, %v2652
  %v2656 = vmul.f32 %v2639, %v2649
  %v2657 = vmul.f32 %v2641, %v2653
  %v2658 = vmul.f32 %v2640, %v2649
  %v2659 = vmul.f32 %v2642, %v2653
  %2660 = vset.pattern.permute.xlu0 52
  %2661 = vperm.xlu0 %2660, %v127
  %v2662 = vpop.permute.xlu0 %2661
  %2664 = vset.pattern.permute.xlu0 52
  %2665 = vperm.xlu0 %2664, %v128
  %v2666 = vpop.permute.xlu0 %2665
  %v2668 = vmul.f32 %v2656, %v2662
  %v2669 = vmul.f32 %v2657, %v2662
  %v2670 = vmul.f32 %v2658, %v2666
  %v2671 = vmul.f32 %v2659, %v2666
  %v2672 = vadd.f32 %v2626, %v2668
  %v2673 = vadd.f32 %v2627, %v2669
  %v2674 = vadd.f32 %v2628, %v2670
  %v2675 = vadd.f32 %v2629, %v2671
  %2676 = vrot.lane.b32.xlu0 %v123, 116
  %v2677 = vpop.permute.xlu0 %2676
  %2678 = vrot.lane.b32.xlu0 %v125, 116
  %v2679 = vpop.permute.xlu0 %2678
  %2680 = vrot.lane.b32.xlu0 %v124, 116
  %v2681 = vpop.permute.xlu0 %2680
  %2682 = vrot.lane.b32.xlu0 %v126, 116
  %v2683 = vpop.permute.xlu0 %2682
  %vm2684 = vcmp.lt.s32.totalorder %v138, 116
  %v2685 = vsel %vm2684, %v2677, %v2681
  %v2686 = vsel %vm2684, %v2679, %v2683
  %v2687 = vsel %vm2684, %v2681, %v2677
  %v2688 = vsel %vm2684, %v2683, %v2679
  %s2689 = scalar_lea.vmem %s1, 101
  %v2690 = vld [vmem:[%s2689] ss:$8 sm:$0x3]
  %v2692 = vlaneseq
  %v2693 = vshrl.u32 %v2692, 7
  %v2694 = vsub.s32 0, %v2693
  %v2695 = vrot.slane %v2690, %v2694
  %v2696 = vlaneseq
  %v2697 = vshrl.u32 %v2696, 7
  %v2698 = vsub.s32 1, %v2697
  %v2699 = vrot.slane %v2690, %v2698
  %v2702 = vmul.f32 %v2685, %v2695
  %v2703 = vmul.f32 %v2687, %v2699
  %v2704 = vmul.f32 %v2686, %v2695
  %v2705 = vmul.f32 %v2688, %v2699
  %2706 = vset.pattern.permute.xlu0 53
  %2707 = vperm.xlu0 %2706, %v127
  %v2708 = vpop.permute.xlu0 %2707
  %2710 = vset.pattern.permute.xlu0 53
  %2711 = vperm.xlu0 %2710, %v128
  %v2712 = vpop.permute.xlu0 %2711
  %v2714 = vmul.f32 %v2702, %v2708
  %v2715 = vmul.f32 %v2703, %v2708
  %v2716 = vmul.f32 %v2704, %v2712
  %v2717 = vmul.f32 %v2705, %v2712
  %v2718 = vadd.f32 %v2672, %v2714
  %v2719 = vadd.f32 %v2673, %v2715
  %v2720 = vadd.f32 %v2674, %v2716
  %v2721 = vadd.f32 %v2675, %v2717
  %s2722 = scalar_lea.vmem %s1, 102
  %v2723 = vld [vmem:[%s2722] ss:$8 sm:$0x3]
  %v2725 = vlaneseq
  %v2726 = vshrl.u32 %v2725, 7
  %v2727 = vsub.s32 0, %v2726
  %v2728 = vrot.slane %v2723, %v2727
  %v2729 = vlaneseq
  %v2730 = vshrl.u32 %v2729, 7
  %v2731 = vsub.s32 1, %v2730
  %v2732 = vrot.slane %v2723, %v2731
  %v2735 = vmul.f32 %v2685, %v2728
  %v2736 = vmul.f32 %v2687, %v2732
  %v2737 = vmul.f32 %v2686, %v2728
  %v2738 = vmul.f32 %v2688, %v2732
  %2739 = vset.pattern.permute.xlu0 54
  %2740 = vperm.xlu0 %2739, %v127
  %v2741 = vpop.permute.xlu0 %2740
  %2743 = vset.pattern.permute.xlu0 54
  %2744 = vperm.xlu0 %2743, %v128
  %v2745 = vpop.permute.xlu0 %2744
  %v2747 = vmul.f32 %v2735, %v2741
  %v2748 = vmul.f32 %v2736, %v2741
  %v2749 = vmul.f32 %v2737, %v2745
  %v2750 = vmul.f32 %v2738, %v2745
  %v2751 = vadd.f32 %v2718, %v2747
  %v2752 = vadd.f32 %v2719, %v2748
  %v2753 = vadd.f32 %v2720, %v2749
  %v2754 = vadd.f32 %v2721, %v2750
  %2755 = vrot.lane.b32.xlu0 %v123, 115
  %v2756 = vpop.permute.xlu0 %2755
  %2757 = vrot.lane.b32.xlu0 %v125, 115
  %v2758 = vpop.permute.xlu0 %2757
  %2759 = vrot.lane.b32.xlu0 %v124, 115
  %v2760 = vpop.permute.xlu0 %2759
  %2761 = vrot.lane.b32.xlu0 %v126, 115
  %v2762 = vpop.permute.xlu0 %2761
  %vm2763 = vcmp.lt.s32.totalorder %v138, 115
  %v2764 = vsel %vm2763, %v2756, %v2760
  %v2765 = vsel %vm2763, %v2758, %v2762
  %v2766 = vsel %vm2763, %v2760, %v2756
  %v2767 = vsel %vm2763, %v2762, %v2758
  %s2768 = scalar_lea.vmem %s1, 103
  %v2769 = vld [vmem:[%s2768] ss:$8 sm:$0x3]
  %v2771 = vlaneseq
  %v2772 = vshrl.u32 %v2771, 7
  %v2773 = vsub.s32 0, %v2772
  %v2774 = vrot.slane %v2769, %v2773
  %v2775 = vlaneseq
  %v2776 = vshrl.u32 %v2775, 7
  %v2777 = vsub.s32 1, %v2776
  %v2778 = vrot.slane %v2769, %v2777
  %v2781 = vmul.f32 %v2764, %v2774
  %v2782 = vmul.f32 %v2766, %v2778
  %v2783 = vmul.f32 %v2765, %v2774
  %v2784 = vmul.f32 %v2767, %v2778
  %2785 = vset.pattern.permute.xlu0 55
  %2786 = vperm.xlu0 %2785, %v127
  %v2787 = vpop.permute.xlu0 %2786
  %2789 = vset.pattern.permute.xlu0 55
  %2790 = vperm.xlu0 %2789, %v128
  %v2791 = vpop.permute.xlu0 %2790
  %v2793 = vmul.f32 %v2781, %v2787
  %v2794 = vmul.f32 %v2782, %v2787
  %v2795 = vmul.f32 %v2783, %v2791
  %v2796 = vmul.f32 %v2784, %v2791
  %v2797 = vadd.f32 %v2751, %v2793
  %v2798 = vadd.f32 %v2752, %v2794
  %v2799 = vadd.f32 %v2753, %v2795
  %v2800 = vadd.f32 %v2754, %v2796
  %2801 = vrot.lane.b32.xlu0 %v123, 114
  %v2802 = vpop.permute.xlu0 %2801
  %2803 = vrot.lane.b32.xlu0 %v125, 114
  %v2804 = vpop.permute.xlu0 %2803
  %2805 = vrot.lane.b32.xlu0 %v124, 114
  %v2806 = vpop.permute.xlu0 %2805
  %2807 = vrot.lane.b32.xlu0 %v126, 114
  %v2808 = vpop.permute.xlu0 %2807
  %vm2809 = vcmp.lt.s32.totalorder %v138, 114
  %v2810 = vsel %vm2809, %v2802, %v2806
  %v2811 = vsel %vm2809, %v2804, %v2808
  %v2812 = vsel %vm2809, %v2806, %v2802
  %v2813 = vsel %vm2809, %v2808, %v2804
  %s2814 = scalar_lea.vmem %s1, 112
  %v2815 = vld [vmem:[%s2814] ss:$8 sm:$0x3]
  %v2817 = vlaneseq
  %v2818 = vshrl.u32 %v2817, 7
  %v2819 = vsub.s32 0, %v2818
  %v2820 = vrot.slane %v2815, %v2819
  %v2821 = vlaneseq
  %v2822 = vshrl.u32 %v2821, 7
  %v2823 = vsub.s32 1, %v2822
  %v2824 = vrot.slane %v2815, %v2823
  %v2827 = vmul.f32 %v2810, %v2820
  %v2828 = vmul.f32 %v2812, %v2824
  %v2829 = vmul.f32 %v2811, %v2820
  %v2830 = vmul.f32 %v2813, %v2824
  %2831 = vset.pattern.permute.xlu0 56
  %2832 = vperm.xlu0 %2831, %v127
  %v2833 = vpop.permute.xlu0 %2832
  %2835 = vset.pattern.permute.xlu0 56
  %2836 = vperm.xlu0 %2835, %v128
  %v2837 = vpop.permute.xlu0 %2836
  %v2839 = vmul.f32 %v2827, %v2833
  %v2840 = vmul.f32 %v2828, %v2833
  %v2841 = vmul.f32 %v2829, %v2837
  %v2842 = vmul.f32 %v2830, %v2837
  %v2843 = vadd.f32 %v2797, %v2839
  %v2844 = vadd.f32 %v2798, %v2840
  %v2845 = vadd.f32 %v2799, %v2841
  %v2846 = vadd.f32 %v2800, %v2842
  %2847 = vrot.lane.b32.xlu0 %v123, 113
  %v2848 = vpop.permute.xlu0 %2847
  %2849 = vrot.lane.b32.xlu0 %v125, 113
  %v2850 = vpop.permute.xlu0 %2849
  %2851 = vrot.lane.b32.xlu0 %v124, 113
  %v2852 = vpop.permute.xlu0 %2851
  %2853 = vrot.lane.b32.xlu0 %v126, 113
  %v2854 = vpop.permute.xlu0 %2853
  %vm2855 = vcmp.lt.s32.totalorder %v138, 113
  %v2856 = vsel %vm2855, %v2848, %v2852
  %v2857 = vsel %vm2855, %v2850, %v2854
  %v2858 = vsel %vm2855, %v2852, %v2848
  %v2859 = vsel %vm2855, %v2854, %v2850
  %s2860 = scalar_lea.vmem %s1, 113
  %v2861 = vld [vmem:[%s2860] ss:$8 sm:$0x3]
  %v2863 = vlaneseq
  %v2864 = vshrl.u32 %v2863, 7
  %v2865 = vsub.s32 0, %v2864
  %v2866 = vrot.slane %v2861, %v2865
  %v2867 = vlaneseq
  %v2868 = vshrl.u32 %v2867, 7
  %v2869 = vsub.s32 1, %v2868
  %v2870 = vrot.slane %v2861, %v2869
  %v2873 = vmul.f32 %v2856, %v2866
  %v2874 = vmul.f32 %v2858, %v2870
  %v2875 = vmul.f32 %v2857, %v2866
  %v2876 = vmul.f32 %v2859, %v2870
  %2877 = vset.pattern.permute.xlu0 57
  %2878 = vperm.xlu0 %2877, %v127
  %v2879 = vpop.permute.xlu0 %2878
  %2881 = vset.pattern.permute.xlu0 57
  %2882 = vperm.xlu0 %2881, %v128
  %v2883 = vpop.permute.xlu0 %2882
  %v2885 = vmul.f32 %v2873, %v2879
  %v2886 = vmul.f32 %v2874, %v2879
  %v2887 = vmul.f32 %v2875, %v2883
  %v2888 = vmul.f32 %v2876, %v2883
  %v2889 = vadd.f32 %v2843, %v2885
  %v2890 = vadd.f32 %v2844, %v2886
  %v2891 = vadd.f32 %v2845, %v2887
  %v2892 = vadd.f32 %v2846, %v2888
  %2893 = vrot.lane.b32.xlu0 %v123, 112
  %v2894 = vpop.permute.xlu0 %2893
  %2895 = vrot.lane.b32.xlu0 %v125, 112
  %v2896 = vpop.permute.xlu0 %2895
  %2897 = vrot.lane.b32.xlu0 %v124, 112
  %v2898 = vpop.permute.xlu0 %2897
  %2899 = vrot.lane.b32.xlu0 %v126, 112
  %v2900 = vpop.permute.xlu0 %2899
  %vm2901 = vcmp.lt.s32.totalorder %v138, 112
  %v2902 = vsel %vm2901, %v2894, %v2898
  %v2903 = vsel %vm2901, %v2896, %v2900
  %v2904 = vsel %vm2901, %v2898, %v2894
  %v2905 = vsel %vm2901, %v2900, %v2896
  %s2906 = scalar_lea.vmem %s1, 114
  %v2907 = vld [vmem:[%s2906] ss:$8 sm:$0x3]
  %v2909 = vlaneseq
  %v2910 = vshrl.u32 %v2909, 7
  %v2911 = vsub.s32 0, %v2910
  %v2912 = vrot.slane %v2907, %v2911
  %v2913 = vlaneseq
  %v2914 = vshrl.u32 %v2913, 7
  %v2915 = vsub.s32 1, %v2914
  %v2916 = vrot.slane %v2907, %v2915
  %v2919 = vmul.f32 %v2902, %v2912
  %v2920 = vmul.f32 %v2904, %v2916
  %v2921 = vmul.f32 %v2903, %v2912
  %v2922 = vmul.f32 %v2905, %v2916
  %2923 = vset.pattern.permute.xlu0 58
  %2924 = vperm.xlu0 %2923, %v127
  %v2925 = vpop.permute.xlu0 %2924
  %2927 = vset.pattern.permute.xlu0 58
  %2928 = vperm.xlu0 %2927, %v128
  %v2929 = vpop.permute.xlu0 %2928
  %v2931 = vmul.f32 %v2919, %v2925
  %v2932 = vmul.f32 %v2920, %v2925
  %v2933 = vmul.f32 %v2921, %v2929
  %v2934 = vmul.f32 %v2922, %v2929
  %v2935 = vadd.f32 %v2889, %v2931
  %v2936 = vadd.f32 %v2890, %v2932
  %v2937 = vadd.f32 %v2891, %v2933
  %v2938 = vadd.f32 %v2892, %v2934
  %2939 = vrot.lane.b32.xlu0 %v123, 111
  %v2940 = vpop.permute.xlu0 %2939
  %2941 = vrot.lane.b32.xlu0 %v125, 111
  %v2942 = vpop.permute.xlu0 %2941
  %2943 = vrot.lane.b32.xlu0 %v124, 111
  %v2944 = vpop.permute.xlu0 %2943
  %2945 = vrot.lane.b32.xlu0 %v126, 111
  %v2946 = vpop.permute.xlu0 %2945
  %vm2947 = vcmp.lt.s32.totalorder %v138, 111
  %v2948 = vsel %vm2947, %v2940, %v2944
  %v2949 = vsel %vm2947, %v2942, %v2946
  %v2950 = vsel %vm2947, %v2944, %v2940
  %v2951 = vsel %vm2947, %v2946, %v2942
  %s2952 = scalar_lea.vmem %s1, 115
  %v2953 = vld [vmem:[%s2952] ss:$8 sm:$0x3]
  %v2955 = vlaneseq
  %v2956 = vshrl.u32 %v2955, 7
  %v2957 = vsub.s32 0, %v2956
  %v2958 = vrot.slane %v2953, %v2957
  %v2959 = vlaneseq
  %v2960 = vshrl.u32 %v2959, 7
  %v2961 = vsub.s32 1, %v2960
  %v2962 = vrot.slane %v2953, %v2961
  %v2965 = vmul.f32 %v2948, %v2958
  %v2966 = vmul.f32 %v2950, %v2962
  %v2967 = vmul.f32 %v2949, %v2958
  %v2968 = vmul.f32 %v2951, %v2962
  %2969 = vset.pattern.permute.xlu0 59
  %2970 = vperm.xlu0 %2969, %v127
  %v2971 = vpop.permute.xlu0 %2970
  %2973 = vset.pattern.permute.xlu0 59
  %2974 = vperm.xlu0 %2973, %v128
  %v2975 = vpop.permute.xlu0 %2974
  %v2977 = vmul.f32 %v2965, %v2971
  %v2978 = vmul.f32 %v2966, %v2971
  %v2979 = vmul.f32 %v2967, %v2975
  %v2980 = vmul.f32 %v2968, %v2975
  %v2981 = vadd.f32 %v2935, %v2977
  %v2982 = vadd.f32 %v2936, %v2978
  %v2983 = vadd.f32 %v2937, %v2979
  %v2984 = vadd.f32 %v2938, %v2980
  %2985 = vrot.lane.b32.xlu0 %v123, 110
  %v2986 = vpop.permute.xlu0 %2985
  %2987 = vrot.lane.b32.xlu0 %v125, 110
  %v2988 = vpop.permute.xlu0 %2987
  %2989 = vrot.lane.b32.xlu0 %v124, 110
  %v2990 = vpop.permute.xlu0 %2989
  %2991 = vrot.lane.b32.xlu0 %v126, 110
  %v2992 = vpop.permute.xlu0 %2991
  %vm2993 = vcmp.lt.s32.totalorder %v138, 110
  %v2994 = vsel %vm2993, %v2986, %v2990
  %v2995 = vsel %vm2993, %v2988, %v2992
  %v2996 = vsel %vm2993, %v2990, %v2986
  %v2997 = vsel %vm2993, %v2992, %v2988
  %s2998 = scalar_lea.vmem %s1, 116
  %v2999 = vld [vmem:[%s2998] ss:$8 sm:$0x3]
  %v3001 = vlaneseq
  %v3002 = vshrl.u32 %v3001, 7
  %v3003 = vsub.s32 0, %v3002
  %v3004 = vrot.slane %v2999, %v3003
  %v3005 = vlaneseq
  %v3006 = vshrl.u32 %v3005, 7
  %v3007 = vsub.s32 1, %v3006
  %v3008 = vrot.slane %v2999, %v3007
  %v3011 = vmul.f32 %v2994, %v3004
  %v3012 = vmul.f32 %v2996, %v3008
  %v3013 = vmul.f32 %v2995, %v3004
  %v3014 = vmul.f32 %v2997, %v3008
  %3015 = vset.pattern.permute.xlu0 60
  %3016 = vperm.xlu0 %3015, %v127
  %v3017 = vpop.permute.xlu0 %3016
  %3019 = vset.pattern.permute.xlu0 60
  %3020 = vperm.xlu0 %3019, %v128
  %v3021 = vpop.permute.xlu0 %3020
  %v3023 = vmul.f32 %v3011, %v3017
  %v3024 = vmul.f32 %v3012, %v3017
  %v3025 = vmul.f32 %v3013, %v3021
  %v3026 = vmul.f32 %v3014, %v3021
  %v3027 = vadd.f32 %v2981, %v3023
  %v3028 = vadd.f32 %v2982, %v3024
  %v3029 = vadd.f32 %v2983, %v3025
  %v3030 = vadd.f32 %v2984, %v3026
  %3031 = vrot.lane.b32.xlu0 %v123, 109
  %v3032 = vpop.permute.xlu0 %3031
  %3033 = vrot.lane.b32.xlu0 %v125, 109
  %v3034 = vpop.permute.xlu0 %3033
  %3035 = vrot.lane.b32.xlu0 %v124, 109
  %v3036 = vpop.permute.xlu0 %3035
  %3037 = vrot.lane.b32.xlu0 %v126, 109
  %v3038 = vpop.permute.xlu0 %3037
  %vm3039 = vcmp.lt.s32.totalorder %v138, 109
  %v3040 = vsel %vm3039, %v3032, %v3036
  %v3041 = vsel %vm3039, %v3034, %v3038
  %v3042 = vsel %vm3039, %v3036, %v3032
  %v3043 = vsel %vm3039, %v3038, %v3034
  %s3044 = scalar_lea.vmem %s1, 117
  %v3045 = vld [vmem:[%s3044] ss:$8 sm:$0x3]
  %v3047 = vlaneseq
  %v3048 = vshrl.u32 %v3047, 7
  %v3049 = vsub.s32 0, %v3048
  %v3050 = vrot.slane %v3045, %v3049
  %v3051 = vlaneseq
  %v3052 = vshrl.u32 %v3051, 7
  %v3053 = vsub.s32 1, %v3052
  %v3054 = vrot.slane %v3045, %v3053
  %v3057 = vmul.f32 %v3040, %v3050
  %v3058 = vmul.f32 %v3042, %v3054
  %v3059 = vmul.f32 %v3041, %v3050
  %v3060 = vmul.f32 %v3043, %v3054
  %3061 = vset.pattern.permute.xlu0 61
  %3062 = vperm.xlu0 %3061, %v127
  %v3063 = vpop.permute.xlu0 %3062
  %3065 = vset.pattern.permute.xlu0 61
  %3066 = vperm.xlu0 %3065, %v128
  %v3067 = vpop.permute.xlu0 %3066
  %v3069 = vmul.f32 %v3057, %v3063
  %v3070 = vmul.f32 %v3058, %v3063
  %v3071 = vmul.f32 %v3059, %v3067
  %v3072 = vmul.f32 %v3060, %v3067
  %v3073 = vadd.f32 %v3027, %v3069
  %v3074 = vadd.f32 %v3028, %v3070
  %v3075 = vadd.f32 %v3029, %v3071
  %v3076 = vadd.f32 %v3030, %v3072
  %3077 = vrot.lane.b32.xlu0 %v123, 108
  %v3078 = vpop.permute.xlu0 %3077
  %3079 = vrot.lane.b32.xlu0 %v125, 108
  %v3080 = vpop.permute.xlu0 %3079
  %3081 = vrot.lane.b32.xlu0 %v124, 108
  %v3082 = vpop.permute.xlu0 %3081
  %3083 = vrot.lane.b32.xlu0 %v126, 108
  %v3084 = vpop.permute.xlu0 %3083
  %vm3085 = vcmp.lt.s32.totalorder %v138, 108
  %v3086 = vsel %vm3085, %v3078, %v3082
  %v3087 = vsel %vm3085, %v3080, %v3084
  %v3088 = vsel %vm3085, %v3082, %v3078
  %v3089 = vsel %vm3085, %v3084, %v3080
  %s3090 = scalar_lea.vmem %s1, 118
  %v3091 = vld [vmem:[%s3090] ss:$8 sm:$0x3]
  %v3093 = vlaneseq
  %v3094 = vshrl.u32 %v3093, 7
  %v3095 = vsub.s32 0, %v3094
  %v3096 = vrot.slane %v3091, %v3095
  %v3097 = vlaneseq
  %v3098 = vshrl.u32 %v3097, 7
  %v3099 = vsub.s32 1, %v3098
  %v3100 = vrot.slane %v3091, %v3099
  %v3103 = vmul.f32 %v3086, %v3096
  %v3104 = vmul.f32 %v3088, %v3100
  %v3105 = vmul.f32 %v3087, %v3096
  %v3106 = vmul.f32 %v3089, %v3100
  %3107 = vset.pattern.permute.xlu0 62
  %3108 = vperm.xlu0 %3107, %v127
  %v3109 = vpop.permute.xlu0 %3108
  %3111 = vset.pattern.permute.xlu0 62
  %3112 = vperm.xlu0 %3111, %v128
  %v3113 = vpop.permute.xlu0 %3112
  %v3115 = vmul.f32 %v3103, %v3109
  %v3116 = vmul.f32 %v3104, %v3109
  %v3117 = vmul.f32 %v3105, %v3113
  %v3118 = vmul.f32 %v3106, %v3113
  %v3119 = vadd.f32 %v3073, %v3115
  %v3120 = vadd.f32 %v3074, %v3116
  %v3121 = vadd.f32 %v3075, %v3117
  %v3122 = vadd.f32 %v3076, %v3118
  %s3123 = scalar_lea.vmem %s1, 119
  %v3124 = vld [vmem:[%s3123] ss:$8 sm:$0x3]
  %v3126 = vlaneseq
  %v3127 = vshrl.u32 %v3126, 7
  %v3128 = vsub.s32 0, %v3127
  %v3129 = vrot.slane %v3124, %v3128
  %v3130 = vlaneseq
  %v3131 = vshrl.u32 %v3130, 7
  %v3132 = vsub.s32 1, %v3131
  %v3133 = vrot.slane %v3124, %v3132
  %v3136 = vmul.f32 %v3086, %v3129
  %v3137 = vmul.f32 %v3088, %v3133
  %v3138 = vmul.f32 %v3087, %v3129
  %v3139 = vmul.f32 %v3089, %v3133
  %3140 = vset.pattern.permute.xlu0 63
  %3141 = vperm.xlu0 %3140, %v127
  %v3142 = vpop.permute.xlu0 %3141
  %3144 = vset.pattern.permute.xlu0 63
  %3145 = vperm.xlu0 %3144, %v128
  %v3146 = vpop.permute.xlu0 %3145
  %v3148 = vmul.f32 %v3136, %v3142
  %v3149 = vmul.f32 %v3137, %v3142
  %v3150 = vmul.f32 %v3138, %v3146
  %v3151 = vmul.f32 %v3139, %v3146
  %v3152 = vadd.f32 %v3119, %v3148
  %v3153 = vadd.f32 %v3120, %v3149
  %v3154 = vadd.f32 %v3121, %v3150
  %v3155 = vadd.f32 %v3122, %v3151
  %3156 = vrot.lane.b32.xlu0 %v123, 107
  %v3157 = vpop.permute.xlu0 %3156
  %3158 = vrot.lane.b32.xlu0 %v125, 107
  %v3159 = vpop.permute.xlu0 %3158
  %3160 = vrot.lane.b32.xlu0 %v124, 107
  %v3161 = vpop.permute.xlu0 %3160
  %3162 = vrot.lane.b32.xlu0 %v126, 107
  %v3163 = vpop.permute.xlu0 %3162
  %vm3164 = vcmp.lt.s32.totalorder %v138, 107
  %v3165 = vsel %vm3164, %v3157, %v3161
  %v3166 = vsel %vm3164, %v3159, %v3163
  %v3167 = vsel %vm3164, %v3161, %v3157
  %v3168 = vsel %vm3164, %v3163, %v3159
  %s3169 = scalar_lea.vmem %s1, 128
  %v3170 = vld [vmem:[%s3169] ss:$8 sm:$0x3]
  %v3172 = vlaneseq
  %v3173 = vshrl.u32 %v3172, 7
  %v3174 = vsub.s32 0, %v3173
  %v3175 = vrot.slane %v3170, %v3174
  %v3176 = vlaneseq
  %v3177 = vshrl.u32 %v3176, 7
  %v3178 = vsub.s32 1, %v3177
  %v3179 = vrot.slane %v3170, %v3178
  %v3182 = vmul.f32 %v3165, %v3175
  %v3183 = vmul.f32 %v3167, %v3179
  %v3184 = vmul.f32 %v3166, %v3175
  %v3185 = vmul.f32 %v3168, %v3179
  %3186 = vset.pattern.permute.xlu0 64
  %3187 = vperm.xlu0 %3186, %v127
  %v3188 = vpop.permute.xlu0 %3187
  %3190 = vset.pattern.permute.xlu0 64
  %3191 = vperm.xlu0 %3190, %v128
  %v3192 = vpop.permute.xlu0 %3191
  %v3194 = vmul.f32 %v3182, %v3188
  %v3195 = vmul.f32 %v3183, %v3188
  %v3196 = vmul.f32 %v3184, %v3192
  %v3197 = vmul.f32 %v3185, %v3192
  %v3198 = vadd.f32 %v3152, %v3194
  %v3199 = vadd.f32 %v3153, %v3195
  %v3200 = vadd.f32 %v3154, %v3196
  %v3201 = vadd.f32 %v3155, %v3197
  %3202 = vrot.lane.b32.xlu0 %v123, 106
  %v3203 = vpop.permute.xlu0 %3202
  %3204 = vrot.lane.b32.xlu0 %v125, 106
  %v3205 = vpop.permute.xlu0 %3204
  %3206 = vrot.lane.b32.xlu0 %v124, 106
  %v3207 = vpop.permute.xlu0 %3206
  %3208 = vrot.lane.b32.xlu0 %v126, 106
  %v3209 = vpop.permute.xlu0 %3208
  %vm3210 = vcmp.lt.s32.totalorder %v138, 106
  %v3211 = vsel %vm3210, %v3203, %v3207
  %v3212 = vsel %vm3210, %v3205, %v3209
  %v3213 = vsel %vm3210, %v3207, %v3203
  %v3214 = vsel %vm3210, %v3209, %v3205
  %s3215 = scalar_lea.vmem %s1, 129
  %v3216 = vld [vmem:[%s3215] ss:$8 sm:$0x3]
  %v3218 = vlaneseq
  %v3219 = vshrl.u32 %v3218, 7
  %v3220 = vsub.s32 0, %v3219
  %v3221 = vrot.slane %v3216, %v3220
  %v3222 = vlaneseq
  %v3223 = vshrl.u32 %v3222, 7
  %v3224 = vsub.s32 1, %v3223
  %v3225 = vrot.slane %v3216, %v3224
  %v3228 = vmul.f32 %v3211, %v3221
  %v3229 = vmul.f32 %v3213, %v3225
  %v3230 = vmul.f32 %v3212, %v3221
  %v3231 = vmul.f32 %v3214, %v3225
  %3232 = vset.pattern.permute.xlu0 65
  %3233 = vperm.xlu0 %3232, %v127
  %v3234 = vpop.permute.xlu0 %3233
  %3236 = vset.pattern.permute.xlu0 65
  %3237 = vperm.xlu0 %3236, %v128
  %v3238 = vpop.permute.xlu0 %3237
  %v3240 = vmul.f32 %v3228, %v3234
  %v3241 = vmul.f32 %v3229, %v3234
  %v3242 = vmul.f32 %v3230, %v3238
  %v3243 = vmul.f32 %v3231, %v3238
  %v3244 = vadd.f32 %v3198, %v3240
  %v3245 = vadd.f32 %v3199, %v3241
  %v3246 = vadd.f32 %v3200, %v3242
  %v3247 = vadd.f32 %v3201, %v3243
  %3248 = vrot.lane.b32.xlu0 %v123, 105
  %v3249 = vpop.permute.xlu0 %3248
  %3250 = vrot.lane.b32.xlu0 %v125, 105
  %v3251 = vpop.permute.xlu0 %3250
  %3252 = vrot.lane.b32.xlu0 %v124, 105
  %v3253 = vpop.permute.xlu0 %3252
  %3254 = vrot.lane.b32.xlu0 %v126, 105
  %v3255 = vpop.permute.xlu0 %3254
  %vm3256 = vcmp.lt.s32.totalorder %v138, 105
  %v3257 = vsel %vm3256, %v3249, %v3253
  %v3258 = vsel %vm3256, %v3251, %v3255
  %v3259 = vsel %vm3256, %v3253, %v3249
  %v3260 = vsel %vm3256, %v3255, %v3251
  %s3261 = scalar_lea.vmem %s1, 130
  %v3262 = vld [vmem:[%s3261] ss:$8 sm:$0x3]
  %v3264 = vlaneseq
  %v3265 = vshrl.u32 %v3264, 7
  %v3266 = vsub.s32 0, %v3265
  %v3267 = vrot.slane %v3262, %v3266
  %v3268 = vlaneseq
  %v3269 = vshrl.u32 %v3268, 7
  %v3270 = vsub.s32 1, %v3269
  %v3271 = vrot.slane %v3262, %v3270
  %v3274 = vmul.f32 %v3257, %v3267
  %v3275 = vmul.f32 %v3259, %v3271
  %v3276 = vmul.f32 %v3258, %v3267
  %v3277 = vmul.f32 %v3260, %v3271
  %3278 = vset.pattern.permute.xlu0 66
  %3279 = vperm.xlu0 %3278, %v127
  %v3280 = vpop.permute.xlu0 %3279
  %3282 = vset.pattern.permute.xlu0 66
  %3283 = vperm.xlu0 %3282, %v128
  %v3284 = vpop.permute.xlu0 %3283
  %v3286 = vmul.f32 %v3274, %v3280
  %v3287 = vmul.f32 %v3275, %v3280
  %v3288 = vmul.f32 %v3276, %v3284
  %v3289 = vmul.f32 %v3277, %v3284
  %v3290 = vadd.f32 %v3244, %v3286
  %v3291 = vadd.f32 %v3245, %v3287
  %v3292 = vadd.f32 %v3246, %v3288
  %v3293 = vadd.f32 %v3247, %v3289
  %3294 = vrot.lane.b32.xlu0 %v123, 104
  %v3295 = vpop.permute.xlu0 %3294
  %3296 = vrot.lane.b32.xlu0 %v125, 104
  %v3297 = vpop.permute.xlu0 %3296
  %3298 = vrot.lane.b32.xlu0 %v124, 104
  %v3299 = vpop.permute.xlu0 %3298
  %3300 = vrot.lane.b32.xlu0 %v126, 104
  %v3301 = vpop.permute.xlu0 %3300
  %vm3302 = vcmp.lt.s32.totalorder %v138, 104
  %v3303 = vsel %vm3302, %v3295, %v3299
  %v3304 = vsel %vm3302, %v3297, %v3301
  %v3305 = vsel %vm3302, %v3299, %v3295
  %v3306 = vsel %vm3302, %v3301, %v3297
  %s3307 = scalar_lea.vmem %s1, 131
  %v3308 = vld [vmem:[%s3307] ss:$8 sm:$0x3]
  %v3310 = vlaneseq
  %v3311 = vshrl.u32 %v3310, 7
  %v3312 = vsub.s32 0, %v3311
  %v3313 = vrot.slane %v3308, %v3312
  %v3314 = vlaneseq
  %v3315 = vshrl.u32 %v3314, 7
  %v3316 = vsub.s32 1, %v3315
  %v3317 = vrot.slane %v3308, %v3316
  %v3320 = vmul.f32 %v3303, %v3313
  %v3321 = vmul.f32 %v3305, %v3317
  %v3322 = vmul.f32 %v3304, %v3313
  %v3323 = vmul.f32 %v3306, %v3317
  %3324 = vset.pattern.permute.xlu0 67
  %3325 = vperm.xlu0 %3324, %v127
  %v3326 = vpop.permute.xlu0 %3325
  %3328 = vset.pattern.permute.xlu0 67
  %3329 = vperm.xlu0 %3328, %v128
  %v3330 = vpop.permute.xlu0 %3329
  %v3332 = vmul.f32 %v3320, %v3326
  %v3333 = vmul.f32 %v3321, %v3326
  %v3334 = vmul.f32 %v3322, %v3330
  %v3335 = vmul.f32 %v3323, %v3330
  %v3336 = vadd.f32 %v3290, %v3332
  %v3337 = vadd.f32 %v3291, %v3333
  %v3338 = vadd.f32 %v3292, %v3334
  %v3339 = vadd.f32 %v3293, %v3335
  %3340 = vrot.lane.b32.xlu0 %v123, 103
  %v3341 = vpop.permute.xlu0 %3340
  %3342 = vrot.lane.b32.xlu0 %v125, 103
  %v3343 = vpop.permute.xlu0 %3342
  %3344 = vrot.lane.b32.xlu0 %v124, 103
  %v3345 = vpop.permute.xlu0 %3344
  %3346 = vrot.lane.b32.xlu0 %v126, 103
  %v3347 = vpop.permute.xlu0 %3346
  %vm3348 = vcmp.lt.s32.totalorder %v138, 103
  %v3349 = vsel %vm3348, %v3341, %v3345
  %v3350 = vsel %vm3348, %v3343, %v3347
  %v3351 = vsel %vm3348, %v3345, %v3341
  %v3352 = vsel %vm3348, %v3347, %v3343
  %s3353 = scalar_lea.vmem %s1, 132
  %v3354 = vld [vmem:[%s3353] ss:$8 sm:$0x3]
  %v3356 = vlaneseq
  %v3357 = vshrl.u32 %v3356, 7
  %v3358 = vsub.s32 0, %v3357
  %v3359 = vrot.slane %v3354, %v3358
  %v3360 = vlaneseq
  %v3361 = vshrl.u32 %v3360, 7
  %v3362 = vsub.s32 1, %v3361
  %v3363 = vrot.slane %v3354, %v3362
  %v3366 = vmul.f32 %v3349, %v3359
  %v3367 = vmul.f32 %v3351, %v3363
  %v3368 = vmul.f32 %v3350, %v3359
  %v3369 = vmul.f32 %v3352, %v3363
  %3370 = vset.pattern.permute.xlu0 68
  %3371 = vperm.xlu0 %3370, %v127
  %v3372 = vpop.permute.xlu0 %3371
  %3374 = vset.pattern.permute.xlu0 68
  %3375 = vperm.xlu0 %3374, %v128
  %v3376 = vpop.permute.xlu0 %3375
  %v3378 = vmul.f32 %v3366, %v3372
  %v3379 = vmul.f32 %v3367, %v3372
  %v3380 = vmul.f32 %v3368, %v3376
  %v3381 = vmul.f32 %v3369, %v3376
  %v3382 = vadd.f32 %v3336, %v3378
  %v3383 = vadd.f32 %v3337, %v3379
  %v3384 = vadd.f32 %v3338, %v3380
  %v3385 = vadd.f32 %v3339, %v3381
  %3386 = vrot.lane.b32.xlu0 %v123, 102
  %v3387 = vpop.permute.xlu0 %3386
  %3388 = vrot.lane.b32.xlu0 %v125, 102
  %v3389 = vpop.permute.xlu0 %3388
  %3390 = vrot.lane.b32.xlu0 %v124, 102
  %v3391 = vpop.permute.xlu0 %3390
  %3392 = vrot.lane.b32.xlu0 %v126, 102
  %v3393 = vpop.permute.xlu0 %3392
  %vm3394 = vcmp.lt.s32.totalorder %v138, 102
  %v3395 = vsel %vm3394, %v3387, %v3391
  %v3396 = vsel %vm3394, %v3389, %v3393
  %v3397 = vsel %vm3394, %v3391, %v3387
  %v3398 = vsel %vm3394, %v3393, %v3389
  %s3399 = scalar_lea.vmem %s1, 133
  %v3400 = vld [vmem:[%s3399] ss:$8 sm:$0x3]
  %v3402 = vlaneseq
  %v3403 = vshrl.u32 %v3402, 7
  %v3404 = vsub.s32 0, %v3403
  %v3405 = vrot.slane %v3400, %v3404
  %v3406 = vlaneseq
  %v3407 = vshrl.u32 %v3406, 7
  %v3408 = vsub.s32 1, %v3407
  %v3409 = vrot.slane %v3400, %v3408
  %v3412 = vmul.f32 %v3395, %v3405
  %v3413 = vmul.f32 %v3397, %v3409
  %v3414 = vmul.f32 %v3396, %v3405
  %v3415 = vmul.f32 %v3398, %v3409
  %3416 = vset.pattern.permute.xlu0 69
  %3417 = vperm.xlu0 %3416, %v127
  %v3418 = vpop.permute.xlu0 %3417
  %3420 = vset.pattern.permute.xlu0 69
  %3421 = vperm.xlu0 %3420, %v128
  %v3422 = vpop.permute.xlu0 %3421
  %v3424 = vmul.f32 %v3412, %v3418
  %v3425 = vmul.f32 %v3413, %v3418
  %v3426 = vmul.f32 %v3414, %v3422
  %v3427 = vmul.f32 %v3415, %v3422
  %v3428 = vadd.f32 %v3382, %v3424
  %v3429 = vadd.f32 %v3383, %v3425
  %v3430 = vadd.f32 %v3384, %v3426
  %v3431 = vadd.f32 %v3385, %v3427
  %3432 = vrot.lane.b32.xlu0 %v123, 101
  %v3433 = vpop.permute.xlu0 %3432
  %3434 = vrot.lane.b32.xlu0 %v125, 101
  %v3435 = vpop.permute.xlu0 %3434
  %3436 = vrot.lane.b32.xlu0 %v124, 101
  %v3437 = vpop.permute.xlu0 %3436
  %3438 = vrot.lane.b32.xlu0 %v126, 101
  %v3439 = vpop.permute.xlu0 %3438
  %vm3440 = vcmp.lt.s32.totalorder %v138, 101
  %v3441 = vsel %vm3440, %v3433, %v3437
  %v3442 = vsel %vm3440, %v3435, %v3439
  %v3443 = vsel %vm3440, %v3437, %v3433
  %v3444 = vsel %vm3440, %v3439, %v3435
  %s3445 = scalar_lea.vmem %s1, 134
  %v3446 = vld [vmem:[%s3445] ss:$8 sm:$0x3]
  %v3448 = vlaneseq
  %v3449 = vshrl.u32 %v3448, 7
  %v3450 = vsub.s32 0, %v3449
  %v3451 = vrot.slane %v3446, %v3450
  %v3452 = vlaneseq
  %v3453 = vshrl.u32 %v3452, 7
  %v3454 = vsub.s32 1, %v3453
  %v3455 = vrot.slane %v3446, %v3454
  %v3458 = vmul.f32 %v3441, %v3451
  %v3459 = vmul.f32 %v3443, %v3455
  %v3460 = vmul.f32 %v3442, %v3451
  %v3461 = vmul.f32 %v3444, %v3455
  %3462 = vset.pattern.permute.xlu0 70
  %3463 = vperm.xlu0 %3462, %v127
  %v3464 = vpop.permute.xlu0 %3463
  %3466 = vset.pattern.permute.xlu0 70
  %3467 = vperm.xlu0 %3466, %v128
  %v3468 = vpop.permute.xlu0 %3467
  %v3470 = vmul.f32 %v3458, %v3464
  %v3471 = vmul.f32 %v3459, %v3464
  %v3472 = vmul.f32 %v3460, %v3468
  %v3473 = vmul.f32 %v3461, %v3468
  %v3474 = vadd.f32 %v3428, %v3470
  %v3475 = vadd.f32 %v3429, %v3471
  %v3476 = vadd.f32 %v3430, %v3472
  %v3477 = vadd.f32 %v3431, %v3473
  %3478 = vrot.lane.b32.xlu0 %v123, 100
  %v3479 = vpop.permute.xlu0 %3478
  %3480 = vrot.lane.b32.xlu0 %v125, 100
  %v3481 = vpop.permute.xlu0 %3480
  %3482 = vrot.lane.b32.xlu0 %v124, 100
  %v3483 = vpop.permute.xlu0 %3482
  %3484 = vrot.lane.b32.xlu0 %v126, 100
  %v3485 = vpop.permute.xlu0 %3484
  %vm3486 = vcmp.lt.s32.totalorder %v138, 100
  %v3487 = vsel %vm3486, %v3479, %v3483
  %v3488 = vsel %vm3486, %v3481, %v3485
  %v3489 = vsel %vm3486, %v3483, %v3479
  %v3490 = vsel %vm3486, %v3485, %v3481
  %s3491 = scalar_lea.vmem %s1, 135
  %v3492 = vld [vmem:[%s3491] ss:$8 sm:$0x3]
  %v3494 = vlaneseq
  %v3495 = vshrl.u32 %v3494, 7
  %v3496 = vsub.s32 0, %v3495
  %v3497 = vrot.slane %v3492, %v3496
  %v3498 = vlaneseq
  %v3499 = vshrl.u32 %v3498, 7
  %v3500 = vsub.s32 1, %v3499
  %v3501 = vrot.slane %v3492, %v3500
  %v3504 = vmul.f32 %v3487, %v3497
  %v3505 = vmul.f32 %v3489, %v3501
  %v3506 = vmul.f32 %v3488, %v3497
  %v3507 = vmul.f32 %v3490, %v3501
  %3508 = vset.pattern.permute.xlu0 71
  %3509 = vperm.xlu0 %3508, %v127
  %v3510 = vpop.permute.xlu0 %3509
  %3512 = vset.pattern.permute.xlu0 71
  %3513 = vperm.xlu0 %3512, %v128
  %v3514 = vpop.permute.xlu0 %3513
  %v3516 = vmul.f32 %v3504, %v3510
  %v3517 = vmul.f32 %v3505, %v3510
  %v3518 = vmul.f32 %v3506, %v3514
  %v3519 = vmul.f32 %v3507, %v3514
  %v3520 = vadd.f32 %v3474, %v3516
  %v3521 = vadd.f32 %v3475, %v3517
  %v3522 = vadd.f32 %v3476, %v3518
  %v3523 = vadd.f32 %v3477, %v3519
  %s3524 = scalar_lea.vmem %s1, 144
  %v3525 = vld [vmem:[%s3524] ss:$8 sm:$0x3]
  %v3527 = vlaneseq
  %v3528 = vshrl.u32 %v3527, 7
  %v3529 = vsub.s32 0, %v3528
  %v3530 = vrot.slane %v3525, %v3529
  %v3531 = vlaneseq
  %v3532 = vshrl.u32 %v3531, 7
  %v3533 = vsub.s32 1, %v3532
  %v3534 = vrot.slane %v3525, %v3533
  %v3537 = vmul.f32 %v3487, %v3530
  %v3538 = vmul.f32 %v3489, %v3534
  %v3539 = vmul.f32 %v3488, %v3530
  %v3540 = vmul.f32 %v3490, %v3534
  %3541 = vset.pattern.permute.xlu0 72
  %3542 = vperm.xlu0 %3541, %v127
  %v3543 = vpop.permute.xlu0 %3542
  %3545 = vset.pattern.permute.xlu0 72
  %3546 = vperm.xlu0 %3545, %v128
  %v3547 = vpop.permute.xlu0 %3546
  %v3549 = vmul.f32 %v3537, %v3543
  %v3550 = vmul.f32 %v3538, %v3543
  %v3551 = vmul.f32 %v3539, %v3547
  %v3552 = vmul.f32 %v3540, %v3547
  %v3553 = vadd.f32 %v3520, %v3549
  %v3554 = vadd.f32 %v3521, %v3550
  %v3555 = vadd.f32 %v3522, %v3551
  %v3556 = vadd.f32 %v3523, %v3552
  %3557 = vrot.lane.b32.xlu0 %v123, 99
  %v3558 = vpop.permute.xlu0 %3557
  %3559 = vrot.lane.b32.xlu0 %v125, 99
  %v3560 = vpop.permute.xlu0 %3559
  %3561 = vrot.lane.b32.xlu0 %v124, 99
  %v3562 = vpop.permute.xlu0 %3561
  %3563 = vrot.lane.b32.xlu0 %v126, 99
  %v3564 = vpop.permute.xlu0 %3563
  %vm3565 = vcmp.lt.s32.totalorder %v138, 99
  %v3566 = vsel %vm3565, %v3558, %v3562
  %v3567 = vsel %vm3565, %v3560, %v3564
  %v3568 = vsel %vm3565, %v3562, %v3558
  %v3569 = vsel %vm3565, %v3564, %v3560
  %s3570 = scalar_lea.vmem %s1, 145
  %v3571 = vld [vmem:[%s3570] ss:$8 sm:$0x3]
  %v3573 = vlaneseq
  %v3574 = vshrl.u32 %v3573, 7
  %v3575 = vsub.s32 0, %v3574
  %v3576 = vrot.slane %v3571, %v3575
  %v3577 = vlaneseq
  %v3578 = vshrl.u32 %v3577, 7
  %v3579 = vsub.s32 1, %v3578
  %v3580 = vrot.slane %v3571, %v3579
  %v3583 = vmul.f32 %v3566, %v3576
  %v3584 = vmul.f32 %v3568, %v3580
  %v3585 = vmul.f32 %v3567, %v3576
  %v3586 = vmul.f32 %v3569, %v3580
  %3587 = vset.pattern.permute.xlu0 73
  %3588 = vperm.xlu0 %3587, %v127
  %v3589 = vpop.permute.xlu0 %3588
  %3591 = vset.pattern.permute.xlu0 73
  %3592 = vperm.xlu0 %3591, %v128
  %v3593 = vpop.permute.xlu0 %3592
  %v3595 = vmul.f32 %v3583, %v3589
  %v3596 = vmul.f32 %v3584, %v3589
  %v3597 = vmul.f32 %v3585, %v3593
  %v3598 = vmul.f32 %v3586, %v3593
  %v3599 = vadd.f32 %v3553, %v3595
  %v3600 = vadd.f32 %v3554, %v3596
  %v3601 = vadd.f32 %v3555, %v3597
  %v3602 = vadd.f32 %v3556, %v3598
  %3603 = vrot.lane.b32.xlu0 %v123, 98
  %v3604 = vpop.permute.xlu0 %3603
  %3605 = vrot.lane.b32.xlu0 %v125, 98
  %v3606 = vpop.permute.xlu0 %3605
  %3607 = vrot.lane.b32.xlu0 %v124, 98
  %v3608 = vpop.permute.xlu0 %3607
  %3609 = vrot.lane.b32.xlu0 %v126, 98
  %v3610 = vpop.permute.xlu0 %3609
  %vm3611 = vcmp.lt.s32.totalorder %v138, 98
  %v3612 = vsel %vm3611, %v3604, %v3608
  %v3613 = vsel %vm3611, %v3606, %v3610
  %v3614 = vsel %vm3611, %v3608, %v3604
  %v3615 = vsel %vm3611, %v3610, %v3606
  %s3616 = scalar_lea.vmem %s1, 146
  %v3617 = vld [vmem:[%s3616] ss:$8 sm:$0x3]
  %v3619 = vlaneseq
  %v3620 = vshrl.u32 %v3619, 7
  %v3621 = vsub.s32 0, %v3620
  %v3622 = vrot.slane %v3617, %v3621
  %v3623 = vlaneseq
  %v3624 = vshrl.u32 %v3623, 7
  %v3625 = vsub.s32 1, %v3624
  %v3626 = vrot.slane %v3617, %v3625
  %v3629 = vmul.f32 %v3612, %v3622
  %v3630 = vmul.f32 %v3614, %v3626
  %v3631 = vmul.f32 %v3613, %v3622
  %v3632 = vmul.f32 %v3615, %v3626
  %3633 = vset.pattern.permute.xlu0 74
  %3634 = vperm.xlu0 %3633, %v127
  %v3635 = vpop.permute.xlu0 %3634
  %3637 = vset.pattern.permute.xlu0 74
  %3638 = vperm.xlu0 %3637, %v128
  %v3639 = vpop.permute.xlu0 %3638
  %v3641 = vmul.f32 %v3629, %v3635
  %v3642 = vmul.f32 %v3630, %v3635
  %v3643 = vmul.f32 %v3631, %v3639
  %v3644 = vmul.f32 %v3632, %v3639
  %v3645 = vadd.f32 %v3599, %v3641
  %v3646 = vadd.f32 %v3600, %v3642
  %v3647 = vadd.f32 %v3601, %v3643
  %v3648 = vadd.f32 %v3602, %v3644
  %3649 = vrot.lane.b32.xlu0 %v123, 97
  %v3650 = vpop.permute.xlu0 %3649
  %3651 = vrot.lane.b32.xlu0 %v125, 97
  %v3652 = vpop.permute.xlu0 %3651
  %3653 = vrot.lane.b32.xlu0 %v124, 97
  %v3654 = vpop.permute.xlu0 %3653
  %3655 = vrot.lane.b32.xlu0 %v126, 97
  %v3656 = vpop.permute.xlu0 %3655
  %vm3657 = vcmp.lt.s32.totalorder %v138, 97
  %v3658 = vsel %vm3657, %v3650, %v3654
  %v3659 = vsel %vm3657, %v3652, %v3656
  %v3660 = vsel %vm3657, %v3654, %v3650
  %v3661 = vsel %vm3657, %v3656, %v3652
  %s3662 = scalar_lea.vmem %s1, 147
  %v3663 = vld [vmem:[%s3662] ss:$8 sm:$0x3]
  %v3665 = vlaneseq
  %v3666 = vshrl.u32 %v3665, 7
  %v3667 = vsub.s32 0, %v3666
  %v3668 = vrot.slane %v3663, %v3667
  %v3669 = vlaneseq
  %v3670 = vshrl.u32 %v3669, 7
  %v3671 = vsub.s32 1, %v3670
  %v3672 = vrot.slane %v3663, %v3671
  %v3675 = vmul.f32 %v3658, %v3668
  %v3676 = vmul.f32 %v3660, %v3672
  %v3677 = vmul.f32 %v3659, %v3668
  %v3678 = vmul.f32 %v3661, %v3672
  %3679 = vset.pattern.permute.xlu0 75
  %3680 = vperm.xlu0 %3679, %v127
  %v3681 = vpop.permute.xlu0 %3680
  %3683 = vset.pattern.permute.xlu0 75
  %3684 = vperm.xlu0 %3683, %v128
  %v3685 = vpop.permute.xlu0 %3684
  %v3687 = vmul.f32 %v3675, %v3681
  %v3688 = vmul.f32 %v3676, %v3681
  %v3689 = vmul.f32 %v3677, %v3685
  %v3690 = vmul.f32 %v3678, %v3685
  %v3691 = vadd.f32 %v3645, %v3687
  %v3692 = vadd.f32 %v3646, %v3688
  %v3693 = vadd.f32 %v3647, %v3689
  %v3694 = vadd.f32 %v3648, %v3690
  %3695 = vrot.lane.b32.xlu0 %v123, 96
  %v3696 = vpop.permute.xlu0 %3695
  %3697 = vrot.lane.b32.xlu0 %v125, 96
  %v3698 = vpop.permute.xlu0 %3697
  %3699 = vrot.lane.b32.xlu0 %v124, 96
  %v3700 = vpop.permute.xlu0 %3699
  %3701 = vrot.lane.b32.xlu0 %v126, 96
  %v3702 = vpop.permute.xlu0 %3701
  %vm3703 = vcmp.lt.s32.totalorder %v138, 96
  %v3704 = vsel %vm3703, %v3696, %v3700
  %v3705 = vsel %vm3703, %v3698, %v3702
  %v3706 = vsel %vm3703, %v3700, %v3696
  %v3707 = vsel %vm3703, %v3702, %v3698
  %s3708 = scalar_lea.vmem %s1, 148
  %v3709 = vld [vmem:[%s3708] ss:$8 sm:$0x3]
  %v3711 = vlaneseq
  %v3712 = vshrl.u32 %v3711, 7
  %v3713 = vsub.s32 0, %v3712
  %v3714 = vrot.slane %v3709, %v3713
  %v3715 = vlaneseq
  %v3716 = vshrl.u32 %v3715, 7
  %v3717 = vsub.s32 1, %v3716
  %v3718 = vrot.slane %v3709, %v3717
  %v3721 = vmul.f32 %v3704, %v3714
  %v3722 = vmul.f32 %v3706, %v3718
  %v3723 = vmul.f32 %v3705, %v3714
  %v3724 = vmul.f32 %v3707, %v3718
  %3725 = vset.pattern.permute.xlu0 76
  %3726 = vperm.xlu0 %3725, %v127
  %v3727 = vpop.permute.xlu0 %3726
  %3729 = vset.pattern.permute.xlu0 76
  %3730 = vperm.xlu0 %3729, %v128
  %v3731 = vpop.permute.xlu0 %3730
  %v3733 = vmul.f32 %v3721, %v3727
  %v3734 = vmul.f32 %v3722, %v3727
  %v3735 = vmul.f32 %v3723, %v3731
  %v3736 = vmul.f32 %v3724, %v3731
  %v3737 = vadd.f32 %v3691, %v3733
  %v3738 = vadd.f32 %v3692, %v3734
  %v3739 = vadd.f32 %v3693, %v3735
  %v3740 = vadd.f32 %v3694, %v3736
  %3741 = vrot.lane.b32.xlu0 %v123, 95
  %v3742 = vpop.permute.xlu0 %3741
  %3743 = vrot.lane.b32.xlu0 %v125, 95
  %v3744 = vpop.permute.xlu0 %3743
  %3745 = vrot.lane.b32.xlu0 %v124, 95
  %v3746 = vpop.permute.xlu0 %3745
  %3747 = vrot.lane.b32.xlu0 %v126, 95
  %v3748 = vpop.permute.xlu0 %3747
  %vm3749 = vcmp.lt.s32.totalorder %v138, 95
  %v3750 = vsel %vm3749, %v3742, %v3746
  %v3751 = vsel %vm3749, %v3744, %v3748
  %v3752 = vsel %vm3749, %v3746, %v3742
  %v3753 = vsel %vm3749, %v3748, %v3744
  %s3754 = scalar_lea.vmem %s1, 149
  %v3755 = vld [vmem:[%s3754] ss:$8 sm:$0x3]
  %v3757 = vlaneseq
  %v3758 = vshrl.u32 %v3757, 7
  %v3759 = vsub.s32 0, %v3758
  %v3760 = vrot.slane %v3755, %v3759
  %v3761 = vlaneseq
  %v3762 = vshrl.u32 %v3761, 7
  %v3763 = vsub.s32 1, %v3762
  %v3764 = vrot.slane %v3755, %v3763
  %v3767 = vmul.f32 %v3750, %v3760
  %v3768 = vmul.f32 %v3752, %v3764
  %v3769 = vmul.f32 %v3751, %v3760
  %v3770 = vmul.f32 %v3753, %v3764
  %3771 = vset.pattern.permute.xlu0 77
  %3772 = vperm.xlu0 %3771, %v127
  %v3773 = vpop.permute.xlu0 %3772
  %3775 = vset.pattern.permute.xlu0 77
  %3776 = vperm.xlu0 %3775, %v128
  %v3777 = vpop.permute.xlu0 %3776
  %v3779 = vmul.f32 %v3767, %v3773
  %v3780 = vmul.f32 %v3768, %v3773
  %v3781 = vmul.f32 %v3769, %v3777
  %v3782 = vmul.f32 %v3770, %v3777
  %v3783 = vadd.f32 %v3737, %v3779
  %v3784 = vadd.f32 %v3738, %v3780
  %v3785 = vadd.f32 %v3739, %v3781
  %v3786 = vadd.f32 %v3740, %v3782
  %3787 = vrot.lane.b32.xlu0 %v123, 94
  %v3788 = vpop.permute.xlu0 %3787
  %3789 = vrot.lane.b32.xlu0 %v125, 94
  %v3790 = vpop.permute.xlu0 %3789
  %3791 = vrot.lane.b32.xlu0 %v124, 94
  %v3792 = vpop.permute.xlu0 %3791
  %3793 = vrot.lane.b32.xlu0 %v126, 94
  %v3794 = vpop.permute.xlu0 %3793
  %vm3795 = vcmp.lt.s32.totalorder %v138, 94
  %v3796 = vsel %vm3795, %v3788, %v3792
  %v3797 = vsel %vm3795, %v3790, %v3794
  %v3798 = vsel %vm3795, %v3792, %v3788
  %v3799 = vsel %vm3795, %v3794, %v3790
  %s3800 = scalar_lea.vmem %s1, 150
  %v3801 = vld [vmem:[%s3800] ss:$8 sm:$0x3]
  %v3803 = vlaneseq
  %v3804 = vshrl.u32 %v3803, 7
  %v3805 = vsub.s32 0, %v3804
  %v3806 = vrot.slane %v3801, %v3805
  %v3807 = vlaneseq
  %v3808 = vshrl.u32 %v3807, 7
  %v3809 = vsub.s32 1, %v3808
  %v3810 = vrot.slane %v3801, %v3809
  %v3813 = vmul.f32 %v3796, %v3806
  %v3814 = vmul.f32 %v3798, %v3810
  %v3815 = vmul.f32 %v3797, %v3806
  %v3816 = vmul.f32 %v3799, %v3810
  %3817 = vset.pattern.permute.xlu0 78
  %3818 = vperm.xlu0 %3817, %v127
  %v3819 = vpop.permute.xlu0 %3818
  %3821 = vset.pattern.permute.xlu0 78
  %3822 = vperm.xlu0 %3821, %v128
  %v3823 = vpop.permute.xlu0 %3822
  %v3825 = vmul.f32 %v3813, %v3819
  %v3826 = vmul.f32 %v3814, %v3819
  %v3827 = vmul.f32 %v3815, %v3823
  %v3828 = vmul.f32 %v3816, %v3823
  %v3829 = vadd.f32 %v3783, %v3825
  %v3830 = vadd.f32 %v3784, %v3826
  %v3831 = vadd.f32 %v3785, %v3827
  %v3832 = vadd.f32 %v3786, %v3828
  %3833 = vrot.lane.b32.xlu0 %v123, 93
  %v3834 = vpop.permute.xlu0 %3833
  %3835 = vrot.lane.b32.xlu0 %v125, 93
  %v3836 = vpop.permute.xlu0 %3835
  %3837 = vrot.lane.b32.xlu0 %v124, 93
  %v3838 = vpop.permute.xlu0 %3837
  %3839 = vrot.lane.b32.xlu0 %v126, 93
  %v3840 = vpop.permute.xlu0 %3839
  %vm3841 = vcmp.lt.s32.totalorder %v138, 93
  %v3842 = vsel %vm3841, %v3834, %v3838
  %v3843 = vsel %vm3841, %v3836, %v3840
  %v3844 = vsel %vm3841, %v3838, %v3834
  %v3845 = vsel %vm3841, %v3840, %v3836
  %s3846 = scalar_lea.vmem %s1, 151
  %v3847 = vld [vmem:[%s3846] ss:$8 sm:$0x3]
  %v3849 = vlaneseq
  %v3850 = vshrl.u32 %v3849, 7
  %v3851 = vsub.s32 0, %v3850
  %v3852 = vrot.slane %v3847, %v3851
  %v3853 = vlaneseq
  %v3854 = vshrl.u32 %v3853, 7
  %v3855 = vsub.s32 1, %v3854
  %v3856 = vrot.slane %v3847, %v3855
  %v3859 = vmul.f32 %v3842, %v3852
  %v3860 = vmul.f32 %v3844, %v3856
  %v3861 = vmul.f32 %v3843, %v3852
  %v3862 = vmul.f32 %v3845, %v3856
  %3863 = vset.pattern.permute.xlu0 79
  %3864 = vperm.xlu0 %3863, %v127
  %v3865 = vpop.permute.xlu0 %3864
  %3867 = vset.pattern.permute.xlu0 79
  %3868 = vperm.xlu0 %3867, %v128
  %v3869 = vpop.permute.xlu0 %3868
  %v3871 = vmul.f32 %v3859, %v3865
  %v3872 = vmul.f32 %v3860, %v3865
  %v3873 = vmul.f32 %v3861, %v3869
  %v3874 = vmul.f32 %v3862, %v3869
  %v3875 = vadd.f32 %v3829, %v3871
  %v3876 = vadd.f32 %v3830, %v3872
  %v3877 = vadd.f32 %v3831, %v3873
  %v3878 = vadd.f32 %v3832, %v3874
  %3879 = vrot.lane.b32.xlu0 %v123, 92
  %v3880 = vpop.permute.xlu0 %3879
  %3881 = vrot.lane.b32.xlu0 %v125, 92
  %v3882 = vpop.permute.xlu0 %3881
  %3883 = vrot.lane.b32.xlu0 %v124, 92
  %v3884 = vpop.permute.xlu0 %3883
  %3885 = vrot.lane.b32.xlu0 %v126, 92
  %v3886 = vpop.permute.xlu0 %3885
  %vm3887 = vcmp.lt.s32.totalorder %v138, 92
  %v3888 = vsel %vm3887, %v3880, %v3884
  %v3889 = vsel %vm3887, %v3882, %v3886
  %v3890 = vsel %vm3887, %v3884, %v3880
  %v3891 = vsel %vm3887, %v3886, %v3882
  %s3892 = scalar_lea.vmem %s1, 160
  %v3893 = vld [vmem:[%s3892] ss:$8 sm:$0x3]
  %v3895 = vlaneseq
  %v3896 = vshrl.u32 %v3895, 7
  %v3897 = vsub.s32 0, %v3896
  %v3898 = vrot.slane %v3893, %v3897
  %v3899 = vlaneseq
  %v3900 = vshrl.u32 %v3899, 7
  %v3901 = vsub.s32 1, %v3900
  %v3902 = vrot.slane %v3893, %v3901
  %v3905 = vmul.f32 %v3888, %v3898
  %v3906 = vmul.f32 %v3890, %v3902
  %v3907 = vmul.f32 %v3889, %v3898
  %v3908 = vmul.f32 %v3891, %v3902
  %3909 = vset.pattern.permute.xlu0 80
  %3910 = vperm.xlu0 %3909, %v127
  %v3911 = vpop.permute.xlu0 %3910
  %3913 = vset.pattern.permute.xlu0 80
  %3914 = vperm.xlu0 %3913, %v128
  %v3915 = vpop.permute.xlu0 %3914
  %v3917 = vmul.f32 %v3905, %v3911
  %v3918 = vmul.f32 %v3906, %v3911
  %v3919 = vmul.f32 %v3907, %v3915
  %v3920 = vmul.f32 %v3908, %v3915
  %v3921 = vadd.f32 %v3875, %v3917
  %v3922 = vadd.f32 %v3876, %v3918
  %v3923 = vadd.f32 %v3877, %v3919
  %v3924 = vadd.f32 %v3878, %v3920
  %v3925 = vld [vmem:[%s7] sm:$0xff]
  %v3926 = vld [vmem:[%s7 + $0x8] sm:$0xf]
  %3928 = vset.pattern.permute.xlu0 0
  %3929 = vperm.xlu0 %3928, %v3925
  %v3930 = vpop.permute.xlu0 %3929
  %3933 = vset.pattern.permute.xlu0 0
  %3934 = vperm.xlu0 %3933, %v3926
  %v3935 = vpop.permute.xlu0 %3934
  %v3937 = vadd.f32 %v3921, %v3930
  %v3938 = vadd.f32 %v3922, %v3930
  %v3939 = vadd.f32 %v3923, %v3935
  %v3940 = vadd.f32 %v3924, %v3935
  %v3941 = vmul.f32 %v3937, %v3937
  %v3942 = vmul.f32 %v3938, %v3938
  %v3943 = vmul.f32 %v3939, %v3939
  %v3944 = vmul.f32 %v3940, %v3940
  %v3945 = vmul.f32 %v3937, %v3941
  %v3946 = vmul.f32 %v3938, %v3942
  %v3947 = vmul.f32 %v3939, %v3943
  %v3948 = vmul.f32 %v3940, %v3944
  %v3949 = vmul.f32 %v3945, 0.044715
  %v3950 = vmul.f32 %v3946, 0.044715
  %v3951 = vmul.f32 %v3947, 0.044715
  %v3952 = vmul.f32 %v3948, 0.044715
  %v3953 = vadd.f32 %v3937, %v3949
  %v3954 = vadd.f32 %v3938, %v3950
  %v3955 = vadd.f32 %v3939, %v3951
  %v3956 = vadd.f32 %v3940, %v3952
  %v3957 = vmul.f32 %v3953, 0.7978846
  %v3958 = vmul.f32 %v3954, 0.7978846
  %v3959 = vmul.f32 %v3955, 0.7978846
  %v3960 = vmul.f32 %v3956, 0.7978846
  %v3961 = vtanh.pop %v3957
  %v3962 = vtanh.pop %v3958
  %v3963 = vtanh.pop %v3959
  %v3964 = vtanh.pop %v3960
  %v3965 = vadd.f32 %v3961, 1.0
  %v3966 = vadd.f32 %v3962, 1.0
  %v3967 = vadd.f32 %v3963, 1.0
  %v3968 = vadd.f32 %v3964, 1.0
  %v3969 = vmul.f32 %v3965, 0.5
  %v3970 = vmul.f32 %v3966, 0.5
  %v3971 = vmul.f32 %v3967, 0.5
  %v3972 = vmul.f32 %v3968, 0.5
  %v3973 = vmul.f32 %v3937, %v3969
  %v3974 = vmul.f32 %v3938, %v3970
  %v3975 = vmul.f32 %v3939, %v3971
  %v3976 = vmul.f32 %v3940, %v3972
  %3977 = vst [vmem:[%s11] sm:$0xff] %v3973
  %3978 = vst [vmem:[%s11 + $0x8] sm:$0xff] %v3974
  %3979 = vst [vmem:[%s11 + $0x10] sm:$0xf] %v3975
  %3980 = vst [vmem:[%s11 + $0x18] sm:$0xf] %v3976
  %v3981 = vld [vmem:[%s8] sm:$0xf]
  %v3982 = vld [vmem:[%s8 + $0x4] sm:$0x3]
  %v3983 = vpack.c.bf16 %v2582, %v2580
  %v3984 = vpack.c.bf16 %v2583, %v2581
  %v3985 = vld [vmem:[%s9] sm:$0xff]
  %v3986 = vld [vmem:[%s9 + $0x8] sm:$0xf]
  %3988 = vset.pattern.permute.xlu0 0
  %3989 = vperm.xlu0 %3988, %v3985
  %v3990 = vpop.permute.xlu0 %3989
  %3993 = vset.pattern.permute.xlu0 0
  %3994 = vperm.xlu0 %3993, %v3986
  %v3995 = vpop.permute.xlu0 %3994
  %v3999 = vunpack.c.l.b16 %v3981
  %v4000 = vunpack.c.l.b16 %v3982
  %v4001 = vpack.c.b16 %v4000, %v3999
  %vm4002 = vcmask 97280
  %v4004 = vsel %vm4002, %v4001, 0
  %vm4006 = vcmask 1045504
  %v4008 = vsel %vm4006, %v3983, 0
  %v4011 = vsel %vm4006, %v3984, 0
  %4013 = vmatprep.subr.bf16.mxu0 %v4011
  %4014 = vmatpush1.bf16.msra.mxu0 %v4008
  %4015 = vmatprep.subr.bf16.mxu0 0
  %4016 = vmatpush1.bf16.msra.mxu0 0
  %4017 = vmatprep.subr.bf16.mxu0 0
  %4018 = vmatpush1.bf16.msra.mxu0 0
  %4019 = vmatprep.subr.bf16.mxu0 0
  %4020 = vmatpush1.bf16.msra.mxu0 0
  %4021 = vmatprep.subr.bf16.mxu0 0
  %4022 = vmatpush1.bf16.msra.mxu0 0
  %4023 = vmatprep.subr.bf16.mxu0 0
  %4024 = vmatpush1.bf16.msra.mxu0 0
  %4025 = vmatprep.subr.bf16.mxu0 0
  %4026 = vmatpush1.bf16.msra.mxu0 0
  %4027 = vmatprep.subr.bf16.mxu0 0
  %4028 = vmatpush1.bf16.msra.mxu0 0
  %4029 = vmatprep.subr.bf16.mxu0 0
  %4030 = vmatpush1.bf16.msra.mxu0 0
  %4031 = vmatprep.subr.bf16.mxu0 0
  %4032 = vmatpush1.bf16.msra.mxu0 0
  %4033 = vmatprep.subr.bf16.mxu0 0
  %4034 = vmatpush1.bf16.msra.mxu0 0
  %4035 = vmatprep.subr.bf16.mxu0 0
  %4036 = vmatpush1.bf16.msra.mxu0 0
  %4037 = vmatprep.subr.bf16.mxu0 0
  %4038 = vmatpush1.bf16.msra.mxu0 0
  %4039 = vmatprep.subr.bf16.mxu0 0
  %4040 = vmatpush1.bf16.msra.mxu0 0
  %4041 = vmatprep.subr.bf16.mxu0 0
  %4042 = vmatpush1.bf16.msra.mxu0 0
  %4043 = vmatprep.subr.bf16.mxu0 0
  %4044 = vmatpush1.bf16.msra.mxu0 0
  %4045 = vmatprep.mubr.bf16.mxu0 0
  %4046 = vmatmul.mubr.bf16.gmra.mrb[0].mxu0 %v4004
  %v4047 = vpop.f32.mrb[0].mxu0
  %v4048 = vadd.f32 %v3990, %v4047
  %v4049 = vpop.f32.mrb[0].mxu0
  %v4050 = vadd.f32 %v3990, %v4049
  %v4051 = vpop.f32.mrb[0].mxu0
  %v4052 = vadd.f32 %v3995, %v4051
  %v4053 = vpop.f32.mrb[0].mxu0
  %v4054 = vadd.f32 %v3995, %v4053
  %4055 = vdwg.mxu0
  %v4056 = vmul.f32 %v4048, %v4048
  %v4057 = vmul.f32 %v4050, %v4050
  %v4058 = vmul.f32 %v4052, %v4052
  %v4059 = vmul.f32 %v4054, %v4054
  %v4060 = vmul.f32 %v4048, %v4056
  %v4061 = vmul.f32 %v4050, %v4057
  %v4062 = vmul.f32 %v4052, %v4058
  %v4063 = vmul.f32 %v4054, %v4059
  %v4064 = vmul.f32 %v4060, 0.044715
  %v4065 = vmul.f32 %v4061, 0.044715
  %v4066 = vmul.f32 %v4062, 0.044715
  %v4067 = vmul.f32 %v4063, 0.044715
  %v4068 = vadd.f32 %v4048, %v4064
  %v4069 = vadd.f32 %v4050, %v4065
  %v4070 = vadd.f32 %v4052, %v4066
  %v4071 = vadd.f32 %v4054, %v4067
  %v4072 = vmul.f32 %v4068, 0.7978846
  %v4073 = vmul.f32 %v4069, 0.7978846
  %v4074 = vmul.f32 %v4070, 0.7978846
  %v4075 = vmul.f32 %v4071, 0.7978846
  %v4076 = vtanh.pop %v4072
  %v4077 = vtanh.pop %v4073
  %v4078 = vtanh.pop %v4074
  %v4079 = vtanh.pop %v4075
  %v4080 = vadd.f32 %v4076, 1.0
  %v4081 = vadd.f32 %v4077, 1.0
  %v4082 = vadd.f32 %v4078, 1.0
  %v4083 = vadd.f32 %v4079, 1.0
  %v4084 = vmul.f32 %v4080, 0.5
  %v4085 = vmul.f32 %v4081, 0.5
  %v4086 = vmul.f32 %v4082, 0.5
  %v4087 = vmul.f32 %v4083, 0.5
  %v4088 = vmul.f32 %v4048, %v4084
  %v4089 = vmul.f32 %v4050, %v4085
  %v4090 = vmul.f32 %v4052, %v4086
  %v4091 = vmul.f32 %v4054, %v4087
  %4092 = vst [vmem:[%s12] sm:$0xff] %v4088
  %4093 = vst [vmem:[%s12 + $0x8] sm:$0xff] %v4089
  %4094 = vst [vmem:[%s12 + $0x10] sm:$0xf] %v4090
  %4095 = vst [vmem:[%s12 + $0x18] sm:$0xf] %v4091
  %v4096 = vld [vmem:[%s10] sm:$0xf]
  %v4097 = vld [vmem:[%s10 + $0x4] sm:$0x3]
  %v4098 = vpack.c.bf16 %v125, %v125
  %v4099 = vpack.c.bf16 %v126, %v126
  %v4102 = vunpack.c.l.b16 %v4096
  %v4103 = vunpack.c.l.b16 %v4097
  %v4104 = vpack.c.b16 %v4103, %v4102
  %v4107 = vrot.slane %v4098, 2
  %v4108 = vrot.slane %v4099, 2
  %vm4109 = vcmask 31744
  %v4111 = vsel %vm4109, %v4104, 0
  %vm4113 = vcmask 1041408
  %v4115 = vsel %vm4113, %v4107, 0
  %v4118 = vsel %vm4113, %v4108, 0
  %4120 = vmatprep.subr.bf16.mxu0 %v4118
  %4121 = vmatpush1.bf16.msra.mxu0 %v4115
  %4122 = vmatprep.subr.bf16.mxu0 0
  %4123 = vmatpush1.bf16.msra.mxu0 0
  %4124 = vmatprep.subr.bf16.mxu0 0
  %4125 = vmatpush1.bf16.msra.mxu0 0
  %4126 = vmatprep.subr.bf16.mxu0 0
  %4127 = vmatpush1.bf16.msra.mxu0 0
  %4128 = vmatprep.subr.bf16.mxu0 0
  %4129 = vmatpush1.bf16.msra.mxu0 0
  %4130 = vmatprep.subr.bf16.mxu0 0
  %4131 = vmatpush1.bf16.msra.mxu0 0
  %4132 = vmatprep.subr.bf16.mxu0 0
  %4133 = vmatpush1.bf16.msra.mxu0 0
  %4134 = vmatprep.subr.bf16.mxu0 0
  %4135 = vmatpush1.bf16.msra.mxu0 0
  %4136 = vmatprep.subr.bf16.mxu0 0
  %4137 = vmatpush1.bf16.msra.mxu0 0
  %4138 = vmatprep.subr.bf16.mxu0 0
  %4139 = vmatpush1.bf16.msra.mxu0 0
  %4140 = vmatprep.subr.bf16.mxu0 0
  %4141 = vmatpush1.bf16.msra.mxu0 0
  %4142 = vmatprep.subr.bf16.mxu0 0
  %4143 = vmatpush1.bf16.msra.mxu0 0
  %4144 = vmatprep.subr.bf16.mxu0 0
  %4145 = vmatpush1.bf16.msra.mxu0 0
  %4146 = vmatprep.subr.bf16.mxu0 0
  %4147 = vmatpush1.bf16.msra.mxu0 0
  %4148 = vmatprep.subr.bf16.mxu0 0
  %4149 = vmatpush1.bf16.msra.mxu0 0
  %4150 = vmatprep.subr.bf16.mxu0 0
  %4151 = vmatpush1.bf16.msra.mxu0 0
  %4152 = vmatprep.mubr.bf16.mxu0 0
  %4153 = vmatmul.mubr.bf16.gmra.mrb[0].mxu0 %v4111
  %v4154 = vpop.f32.mrb[0].mxu0
  %v4155 = vadd.f32 0.0, %v4154
  %v4156 = vpop.f32.mrb[0].mxu0
  %v4157 = vadd.f32 0.0, %v4156
  %v4158 = vpop.f32.mrb[0].mxu0
  %v4159 = vadd.f32 0.0, %v4158
  %v4160 = vpop.f32.mrb[0].mxu0
  %v4161 = vadd.f32 0.0, %v4160
  %4162 = vdwg.mxu0
  %v4163 = vld [vmem:[%s3] sm:$0xff]
  %v4164 = vld [vmem:[%s3 + $0x8] sm:$0xff]
  %v4165 = vld [vmem:[%s3 + $0x10] sm:$0xff]
  %v4166 = vld [vmem:[%s3 + $0x18] sm:$0xff]
  %v4167 = vld [vmem:[%s3 + $0x20] sm:$0xff]
  %v4168 = vld [vmem:[%s3 + $0x28] sm:$0xff]
  %v4169 = vld [vmem:[%s3 + $0x30] sm:$0xff]
  %v4170 = vld [vmem:[%s3 + $0x38] sm:$0xff]
  %v4171 = vsub.f32 %v4155, %v4157
  %v4172 = vand.u32 2147483647, %v4171
  %vm4173 = vcmask 523264
  %v4175 = vsel %vm4173, %v4172, 0
  %4177 = vmatprep.subr.mxu0 0.0
  %4178 = vmatpush1.msra.mxu0 %v4163
  %4179 = vmatprep.subr.mxu0 0.0
  %4180 = vmatpush1.msra.mxu0 %v4164
  %4181 = vmatprep.subr.mxu0 0.0
  %4182 = vmatpush1.msra.mxu0 %v4165
  %4183 = vmatprep.subr.mxu0 0.0
  %4184 = vmatpush1.msra.mxu0 %v4166
  %4185 = vmatprep.subr.mxu0 0.0
  %4186 = vmatpush1.msra.mxu0 %v4167
  %4187 = vmatprep.subr.mxu0 0.0
  %4188 = vmatpush1.msra.mxu0 %v4168
  %4189 = vmatprep.subr.mxu0 0.0
  %4190 = vmatpush1.msra.mxu0 %v4169
  %4191 = vmatprep.subr.mxu0 0.0
  %4192 = vmatpush1.msra.mxu0 %v4170
  %4193 = vmatprep.subr.mxu0 0.0
  %4194 = vmatpush1.msra.mxu0 0.0
  %4195 = vmatprep.subr.mxu0 0.0
  %4196 = vmatpush1.msra.mxu0 0.0
  %4197 = vmatprep.subr.mxu0 0.0
  %4198 = vmatpush1.msra.mxu0 0.0
  %4199 = vmatprep.subr.mxu0 0.0
  %4200 = vmatpush1.msra.mxu0 0.0
  %4201 = vmatprep.subr.mxu0 0.0
  %4202 = vmatpush1.msra.mxu0 0.0
  %4203 = vmatprep.subr.mxu0 0.0
  %4204 = vmatpush1.msra.mxu0 0.0
  %4205 = vmatprep.subr.mxu0 0.0
  %4206 = vmatpush1.msra.mxu0 0.0
  %4207 = vmatprep.subr.mxu0 0.0
  %4208 = vmatpush1.msra.mxu0 0.0
  %4209 = vmatprep.subr.mxu0 0.0
  %4210 = vmatpush1.msra.mxu0 0.0
  %4211 = vmatprep.subr.mxu0 0.0
  %4212 = vmatpush1.msra.mxu0 0.0
  %4213 = vmatprep.subr.mxu0 0.0
  %4214 = vmatpush1.msra.mxu0 0.0
  %4215 = vmatprep.subr.mxu0 0.0
  %4216 = vmatpush1.msra.mxu0 0.0
  %4217 = vmatprep.subr.mxu0 0.0
  %4218 = vmatpush1.msra.mxu0 0.0
  %4219 = vmatprep.subr.mxu0 0.0
  %4220 = vmatpush1.msra.mxu0 0.0
  %4221 = vmatprep.subr.mxu0 0.0
  %4222 = vmatpush1.msra.mxu0 0.0
  %4223 = vmatprep.subr.mxu0 0.0
  %4224 = vmatpush1.msra.mxu0 0.0
  %4225 = vmatprep.subr.mxu0 0.0
  %4226 = vmatpush1.msra.mxu0 0.0
  %4227 = vmatprep.subr.mxu0 0.0
  %4228 = vmatpush1.msra.mxu0 0.0
  %4229 = vmatprep.subr.mxu0 0.0
  %4230 = vmatpush1.msra.mxu0 0.0
  %4231 = vmatprep.subr.mxu0 0.0
  %4232 = vmatpush1.msra.mxu0 0.0
  %4233 = vmatprep.subr.mxu0 0.0
  %4234 = vmatpush1.msra.mxu0 0.0
  %4235 = vmatprep.subr.mxu0 0.0
  %4236 = vmatpush1.msra.mxu0 0.0
  %4237 = vmatprep.subr.mxu0 0.0
  %4238 = vmatpush1.msra.mxu0 0.0
  %4239 = vmatprep.subr.mxu0 0.0
  %4240 = vmatpush1.msra.mxu0 0.0
  %4241 = vmatprep.mubr.f32.mxu0 0.0
  %4242 = vmatmul.mubr.f32.gmra.mrb[0].mxu0 %v4175
  %v4243 = vpop.f32.mrb[0].mxu0
  %v4244 = vadd.f32 0.0, %v4243
  %v4245 = vpop.f32.mrb[0].mxu0
  %4246 = vdwg.mxu0
  %v4247 = vmul.f32 %v4244, 0.5
  %v4248 = vpack.c.bf16 %v4247, %v4247
  %v4249 = vpack.c.bf16 %v4155, %v4155
  %4250 = vxpose.xlu0.c.b16.start [1/8] %v4248, 128
  %4251 = vxpose.xlu0.c.b16.cont [2/8] 0, 128
  %4252 = vxpose.xlu0.c.b16.cont [3/8] 0, 128
  %4253 = vxpose.xlu0.c.b16.cont [4/8] 0, 128
  %4254 = vxpose.xlu0.c.b16.cont [5/8] 0, 128
  %4255 = vxpose.xlu0.c.b16.cont [6/8] 0, 128
  %4256 = vxpose.xlu0.c.b16.cont [7/8] 0, 128
  %4257 = vxpose.xlu0.c.b16.end [8/8] 0, 128
  %v4258 = vpop.trf.xlu0
  %v4259 = vpop.trf.xlu0
  %v4260 = vpop.trf.xlu0
  %v4261 = vpop.trf.xlu0
  %v4262 = vpop.trf.xlu0
  %v4263 = vpop.trf.xlu0
  %v4264 = vpop.trf.xlu0
  %v4265 = vpop.trf.xlu0
  %v4267 = vrot.slane %v4249, 2
  %v4269 = vsel %vm4109, %v4258, 0
  %v4272 = vsel %vm4109, %v4259, 0
  %v4275 = vsel %vm4109, %v4260, 0
  %v4278 = vsel %vm4109, %v4261, 0
  %v4281 = vsel %vm4113, %v4267, 0
  %4283 = vmatprep.subr.bf16.mxu0 0
  %4284 = vmatpush1.bf16.msra.mxu0 %v4281
  %4285 = vmatprep.subr.bf16.mxu0 0
  %4286 = vmatpush1.bf16.msra.mxu0 0
  %4287 = vmatprep.subr.bf16.mxu0 0
  %4288 = vmatpush1.bf16.msra.mxu0 0
  %4289 = vmatprep.subr.bf16.mxu0 0
  %4290 = vmatpush1.bf16.msra.mxu0 0
  %4291 = vmatprep.subr.bf16.mxu0 0
  %4292 = vmatpush1.bf16.msra.mxu0 0
  %4293 = vmatprep.subr.bf16.mxu0 0
  %4294 = vmatpush1.bf16.msra.mxu0 0
  %4295 = vmatprep.subr.bf16.mxu0 0
  %4296 = vmatpush1.bf16.msra.mxu0 0
  %4297 = vmatprep.subr.bf16.mxu0 0
  %4298 = vmatpush1.bf16.msra.mxu0 0
  %4299 = vmatprep.subr.bf16.mxu0 0
  %4300 = vmatpush1.bf16.msra.mxu0 0
  %4301 = vmatprep.subr.bf16.mxu0 0
  %4302 = vmatpush1.bf16.msra.mxu0 0
  %4303 = vmatprep.subr.bf16.mxu0 0
  %4304 = vmatpush1.bf16.msra.mxu0 0
  %4305 = vmatprep.subr.bf16.mxu0 0
  %4306 = vmatpush1.bf16.msra.mxu0 0
  %4307 = vmatprep.subr.bf16.mxu0 0
  %4308 = vmatpush1.bf16.msra.mxu0 0
  %4309 = vmatprep.subr.bf16.mxu0 0
  %4310 = vmatpush1.bf16.msra.mxu0 0
  %4311 = vmatprep.subr.bf16.mxu0 0
  %4312 = vmatpush1.bf16.msra.mxu0 0
  %4313 = vmatprep.subr.bf16.mxu0 0
  %4314 = vmatpush1.bf16.msra.mxu0 0
  %4315 = vmatprep.mubr.bf16.mxu0 0
  %4316 = vmatmul.mubr.bf16.gmra.mrb[0].mxu0 %v4269
  %v4317 = vpop.f32.mrb[0].mxu0
  %v4318 = vadd.f32 0.0, %v4317
  %v4319 = vpop.f32.mrb[0].mxu0
  %v4320 = vpop.f32.mrb[0].mxu0
  %v4321 = vadd.f32 0.0, %v4320
  %v4322 = vpop.f32.mrb[0].mxu0
  %4323 = vmatprep.mubr.bf16.mxu0 0
  %4324 = vmatmul.mubr.bf16.gmra.mrb[0].mxu0 %v4272
  %v4325 = vpop.f32.mrb[0].mxu0
  %v4326 = vadd.f32 0.0, %v4325
  %v4327 = vpop.f32.mrb[0].mxu0
  %v4328 = vpop.f32.mrb[0].mxu0
  %v4329 = vadd.f32 0.0, %v4328
  %v4330 = vpop.f32.mrb[0].mxu0
  %4331 = vmatprep.mubr.bf16.mxu0 0
  %4332 = vmatmul.mubr.bf16.gmra.mrb[0].mxu0 %v4275
  %v4333 = vpop.f32.mrb[0].mxu0
  %v4334 = vadd.f32 0.0, %v4333
  %v4335 = vpop.f32.mrb[0].mxu0
  %v4336 = vpop.f32.mrb[0].mxu0
  %v4337 = vadd.f32 0.0, %v4336
  %v4338 = vpop.f32.mrb[0].mxu0
  %4339 = vmatprep.mubr.bf16.mxu0 0
  %4340 = vmatmul.mubr.bf16.gmra.mrb[0].mxu0 %v4278
  %v4341 = vpop.f32.mrb[0].mxu0
  %v4342 = vadd.f32 0.0, %v4341
  %v4343 = vpop.f32.mrb[0].mxu0
  %v4344 = vpop.f32.mrb[0].mxu0
  %v4345 = vadd.f32 0.0, %v4344
  %v4346 = vpop.f32.mrb[0].mxu0
  %4347 = vdwg.mxu0
  %v4348 = vsel %vm4173, %v4318, -inf
  %4349 = vmax.xlane.f32.xlu0 %v4348
  %v4350 = vpop.xlane.xlu0 %4349
  %v4351 = vsel %vm4173, %v4321, -inf
  %4352 = vmax.xlane.f32.xlu0 %v4351
  %v4353 = vpop.xlane.xlu0 %4352
  %v4354 = vsel %vm4173, %v4326, -inf
  %4355 = vmax.xlane.f32.xlu0 %v4354
  %v4356 = vpop.xlane.xlu0 %4355
  %v4357 = vsel %vm4173, %v4329, -inf
  %4358 = vmax.xlane.f32.xlu0 %v4357
  %v4359 = vpop.xlane.xlu0 %4358
  %v4360 = vsel %vm4173, %v4334, -inf
  %4361 = vmax.xlane.f32.xlu0 %v4360
  %v4362 = vpop.xlane.xlu0 %4361
  %v4363 = vsel %vm4173, %v4337, -inf
  %4364 = vmax.xlane.f32.xlu0 %v4363
  %v4365 = vpop.xlane.xlu0 %4364
  %v4366 = vsel %vm4173, %v4342, -inf
  %4367 = vmax.xlane.f32.xlu0 %v4366
  %v4368 = vpop.xlane.xlu0 %4367
  %v4369 = vsel %vm4173, %v4345, -inf
  %4370 = vmax.xlane.f32.xlu0 %v4369
  %v4371 = vpop.xlane.xlu0 %4370
  %v4372 = vsub.f32 %v4318, %v4350
  %v4373 = vsub.f32 %v4321, %v4353
  %v4374 = vsub.f32 %v4326, %v4356
  %v4375 = vsub.f32 %v4329, %v4359
  %v4376 = vsub.f32 %v4334, %v4362
  %v4377 = vsub.f32 %v4337, %v4365
  %v4378 = vsub.f32 %v4342, %v4368
  %v4379 = vsub.f32 %v4345, %v4371
  %v4380 = vmul.f32 %v4372, 1.442695
  %v4381 = vpow.pop %v4380
  %v4382 = vmul.f32 %v4373, 1.442695
  %v4383 = vpow.pop %v4382
  %v4384 = vmul.f32 %v4374, 1.442695
  %v4385 = vpow.pop %v4384
  %v4386 = vmul.f32 %v4375, 1.442695
  %v4387 = vpow.pop %v4386
  %v4388 = vmul.f32 %v4376, 1.442695
  %v4389 = vpow.pop %v4388
  %v4390 = vmul.f32 %v4377, 1.442695
  %v4391 = vpow.pop %v4390
  %v4392 = vmul.f32 %v4378, 1.442695
  %v4393 = vpow.pop %v4392
  %v4394 = vmul.f32 %v4379, 1.442695
  %v4395 = vpow.pop %v4394
  %v4396 = vsel %vm4173, %v4381, 0.0
  %4397 = vadd.xlane.f32.xlu0 %v4396
  %v4398 = vpop.xlane.xlu0 %4397
  %v4399 = vsel %vm4173, %v4383, 0.0
  %4400 = vadd.xlane.f32.xlu0 %v4399
  %v4401 = vpop.xlane.xlu0 %4400
  %v4402 = vsel %vm4173, %v4385, 0.0
  %4403 = vadd.xlane.f32.xlu0 %v4402
  %v4404 = vpop.xlane.xlu0 %4403
  %v4405 = vsel %vm4173, %v4387, 0.0
  %4406 = vadd.xlane.f32.xlu0 %v4405
  %v4407 = vpop.xlane.xlu0 %4406
  %v4408 = vsel %vm4173, %v4389, 0.0
  %4409 = vadd.xlane.f32.xlu0 %v4408
  %v4410 = vpop.xlane.xlu0 %4409
  %v4411 = vsel %vm4173, %v4391, 0.0
  %4412 = vadd.xlane.f32.xlu0 %v4411
  %v4413 = vpop.xlane.xlu0 %4412
  %v4414 = vsel %vm4173, %v4393, 0.0
  %4415 = vadd.xlane.f32.xlu0 %v4414
  %v4416 = vpop.xlane.xlu0 %4415
  %v4417 = vsel %vm4173, %v4395, 0.0
  %4418 = vadd.xlane.f32.xlu0 %v4417
  %v4419 = vpop.xlane.xlu0 %4418
  %v4420 = vrcp.pop %v4398
  %v4421 = vmul.f32 %v4381, %v4420
  %v4422 = vrcp.pop %v4401
  %v4423 = vmul.f32 %v4383, %v4422
  %v4424 = vrcp.pop %v4404
  %v4425 = vmul.f32 %v4385, %v4424
  %v4426 = vrcp.pop %v4407
  %v4427 = vmul.f32 %v4387, %v4426
  %v4428 = vrcp.pop %v4410
  %v4429 = vmul.f32 %v4389, %v4428
  %v4430 = vrcp.pop %v4413
  %v4431 = vmul.f32 %v4391, %v4430
  %v4432 = vrcp.pop %v4416
  %v4433 = vmul.f32 %v4393, %v4432
  %v4434 = vrcp.pop %v4419
  %v4435 = vmul.f32 %v4395, %v4434
  %v4436 = vpack.c.bf16 %v4423, %v4421
  %v4437 = vpack.c.bf16 %v4427, %v4425
  %v4438 = vpack.c.bf16 %v4431, %v4429
  %v4439 = vpack.c.bf16 %v4435, %v4433
  %v4440 = vpack.c.bf16 %v4159, %v4159
  %v4442 = vsel %vm4173, %v4436, 0
  %v4445 = vsel %vm4173, %v4437, 0
  %v4448 = vsel %vm4173, %v4438, 0
  %v4451 = vsel %vm4173, %v4439, 0
  %v4454 = vsel %vm4173, %v4440, 0
  %4456 = vmatprep.subr.bf16.mxu0 0
  %4457 = vmatpush1.bf16.xpose.msra.mxu0 %v4454
  %4458 = vmatprep.subr.bf16.mxu0 0
  %4459 = vmatpush1.bf16.xpose.msra.mxu0 0
  %4460 = vmatprep.subr.bf16.mxu0 0
  %4461 = vmatpush1.bf16.xpose.msra.mxu0 0
  %4462 = vmatprep.subr.bf16.mxu0 0
  %4463 = vmatpush1.bf16.xpose.msra.mxu0 0
  %4464 = vmatprep.subr.bf16.mxu0 0
  %4465 = vmatpush1.bf16.xpose.msra.mxu0 0
  %4466 = vmatprep.subr.bf16.mxu0 0
  %4467 = vmatpush1.bf16.xpose.msra.mxu0 0
  %4468 = vmatprep.subr.bf16.mxu0 0
  %4469 = vmatpush1.bf16.xpose.msra.mxu0 0
  %4470 = vmatprep.subr.bf16.mxu0 0
  %4471 = vmatpush1.bf16.xpose.msra.mxu0 0
  %4472 = vmatprep.subr.bf16.mxu0 0
  %4473 = vmatpush1.bf16.xpose.msra.mxu0 0
  %4474 = vmatprep.subr.bf16.mxu0 0
  %4475 = vmatpush1.bf16.xpose.msra.mxu0 0
  %4476 = vmatprep.subr.bf16.mxu0 0
  %4477 = vmatpush1.bf16.xpose.msra.mxu0 0
  %4478 = vmatprep.subr.bf16.mxu0 0
  %4479 = vmatpush1.bf16.xpose.msra.mxu0 0
  %4480 = vmatprep.subr.bf16.mxu0 0
  %4481 = vmatpush1.bf16.xpose.msra.mxu0 0
  %4482 = vmatprep.subr.bf16.mxu0 0
  %4483 = vmatpush1.bf16.xpose.msra.mxu0 0
  %4484 = vmatprep.subr.bf16.mxu0 0
  %4485 = vmatpush1.bf16.xpose.msra.mxu0 0
  %4486 = vmatprep.subr.bf16.mxu0 0
  %4487 = vmatpush1.bf16.xpose.msra.mxu0 0
  %4488 = vmatprep.mubr.bf16.mxu0 0
  %4489 = vmatmul.mubr.bf16.gmra.mrb[0].mxu0 %v4442
  %v4490 = vpop.f32.mrb[0].mxu0
  %v4491 = vadd.f32 0.0, %v4490
  %v4492 = vpop.f32.mrb[0].mxu0
  %v4493 = vpop.f32.mrb[0].mxu0
  %v4494 = vadd.f32 0.0, %v4493
  %v4495 = vpop.f32.mrb[0].mxu0
  %4496 = vmatprep.mubr.bf16.mxu0 0
  %4497 = vmatmul.mubr.bf16.gmra.mrb[0].mxu0 %v4445
  %v4498 = vpop.f32.mrb[0].mxu0
  %v4499 = vadd.f32 0.0, %v4498
  %v4500 = vpop.f32.mrb[0].mxu0
  %v4501 = vpop.f32.mrb[0].mxu0
  %v4502 = vadd.f32 0.0, %v4501
  %v4503 = vpop.f32.mrb[0].mxu0
  %4504 = vmatprep.mubr.bf16.mxu0 0
  %4505 = vmatmul.mubr.bf16.gmra.mrb[0].mxu0 %v4448
  %v4506 = vpop.f32.mrb[0].mxu0
  %v4507 = vadd.f32 0.0, %v4506
  %v4508 = vpop.f32.mrb[0].mxu0
  %v4509 = vpop.f32.mrb[0].mxu0
  %v4510 = vadd.f32 0.0, %v4509
  %v4511 = vpop.f32.mrb[0].mxu0
  %4512 = vmatprep.mubr.bf16.mxu0 0
  %4513 = vmatmul.mubr.bf16.gmra.mrb[0].mxu0 %v4451
  %v4514 = vpop.f32.mrb[0].mxu0
  %v4515 = vadd.f32 0.0, %v4514
  %v4516 = vpop.f32.mrb[0].mxu0
  %v4517 = vpop.f32.mrb[0].mxu0
  %v4518 = vadd.f32 0.0, %v4517
  %v4519 = vpop.f32.mrb[0].mxu0
  %4520 = vdwg.mxu0
  %v4521 = vmul.f32 %v4155, 0.5
  %v4522 = vpack.c.bf16 %v4521, %v4521
  %v4523 = vpack.c.bf16 %v4244, %v4244
  %4524 = vxpose.xlu0.c.b16.start [1/8] %v4522, 128
  %4525 = vxpose.xlu0.c.b16.cont [2/8] 0, 128
  %4526 = vxpose.xlu0.c.b16.cont [3/8] 0, 128
  %4527 = vxpose.xlu0.c.b16.cont [4/8] 0, 128
  %4528 = vxpose.xlu0.c.b16.cont [5/8] 0, 128
  %4529 = vxpose.xlu0.c.b16.cont [6/8] 0, 128
  %4530 = vxpose.xlu0.c.b16.cont [7/8] 0, 128
  %4531 = vxpose.xlu0.c.b16.end [8/8] 0, 128
  %v4532 = vpop.trf.xlu0
  %v4533 = vpop.trf.xlu0
  %v4534 = vpop.trf.xlu0
  %v4535 = vpop.trf.xlu0
  %v4536 = vpop.trf.xlu0
  %v4537 = vpop.trf.xlu0
  %v4538 = vpop.trf.xlu0
  %v4539 = vpop.trf.xlu0
  %v4541 = vsel %vm4109, %v4532, 0
  %v4544 = vsel %vm4109, %v4533, 0
  %v4547 = vsel %vm4109, %v4534, 0
  %v4550 = vsel %vm4109, %v4535, 0
  %v4553 = vsel %vm4113, %v4523, 0
  %4555 = vmatprep.subr.bf16.mxu0 0
  %4556 = vmatpush1.bf16.msra.mxu0 %v4553
  %4557 = vmatprep.subr.bf16.mxu0 0
  %4558 = vmatpush1.bf16.msra.mxu0 0
  %4559 = vmatprep.subr.bf16.mxu0 0
  %4560 = vmatpush1.bf16.msra.mxu0 0
  %4561 = vmatprep.subr.bf16.mxu0 0
  %4562 = vmatpush1.bf16.msra.mxu0 0
  %4563 = vmatprep.subr.bf16.mxu0 0
  %4564 = vmatpush1.bf16.msra.mxu0 0
  %4565 = vmatprep.subr.bf16.mxu0 0
  %4566 = vmatpush1.bf16.msra.mxu0 0
  %4567 = vmatprep.subr.bf16.mxu0 0
  %4568 = vmatpush1.bf16.msra.mxu0 0
  %4569 = vmatprep.subr.bf16.mxu0 0
  %4570 = vmatpush1.bf16.msra.mxu0 0
  %4571 = vmatprep.subr.bf16.mxu0 0
  %4572 = vmatpush1.bf16.msra.mxu0 0
  %4573 = vmatprep.subr.bf16.mxu0 0
  %4574 = vmatpush1.bf16.msra.mxu0 0
  %4575 = vmatprep.subr.bf16.mxu0 0
  %4576 = vmatpush1.bf16.msra.mxu0 0
  %4577 = vmatprep.subr.bf16.mxu0 0
  %4578 = vmatpush1.bf16.msra.mxu0 0
  %4579 = vmatprep.subr.bf16.mxu0 0
  %4580 = vmatpush1.bf16.msra.mxu0 0
  %4581 = vmatprep.subr.bf16.mxu0 0
  %4582 = vmatpush1.bf16.msra.mxu0 0
  %4583 = vmatprep.subr.bf16.mxu0 0
  %4584 = vmatpush1.bf16.msra.mxu0 0
  %4585 = vmatprep.subr.bf16.mxu0 0
  %4586 = vmatpush1.bf16.msra.mxu0 0
  %4587 = vmatprep.mubr.bf16.mxu0 0
  %4588 = vmatmul.mubr.bf16.gmra.mrb[0].mxu0 %v4541
  %v4589 = vpop.f32.mrb[0].mxu0
  %v4590 = vadd.f32 0.0, %v4589
  %v4591 = vpop.f32.mrb[0].mxu0
  %v4592 = vpop.f32.mrb[0].mxu0
  %v4593 = vadd.f32 0.0, %v4592
  %v4594 = vpop.f32.mrb[0].mxu0
  %4595 = vmatprep.mubr.bf16.mxu0 0
  %4596 = vmatmul.mubr.bf16.gmra.mrb[0].mxu0 %v4544
  %v4597 = vpop.f32.mrb[0].mxu0
  %v4598 = vadd.f32 0.0, %v4597
  %v4599 = vpop.f32.mrb[0].mxu0
  %v4600 = vpop.f32.mrb[0].mxu0
  %v4601 = vadd.f32 0.0, %v4600
  %v4602 = vpop.f32.mrb[0].mxu0
  %4603 = vmatprep.mubr.bf16.mxu0 0
  %4604 = vmatmul.mubr.bf16.gmra.mrb[0].mxu0 %v4547
  %v4605 = vpop.f32.mrb[0].mxu0
  %v4606 = vadd.f32 0.0, %v4605
  %v4607 = vpop.f32.mrb[0].mxu0
  %v4608 = vpop.f32.mrb[0].mxu0
  %v4609 = vadd.f32 0.0, %v4608
  %v4610 = vpop.f32.mrb[0].mxu0
  %4611 = vmatprep.mubr.bf16.mxu0 0
  %4612 = vmatmul.mubr.bf16.gmra.mrb[0].mxu0 %v4550
  %v4613 = vpop.f32.mrb[0].mxu0
  %v4614 = vadd.f32 0.0, %v4613
  %v4615 = vpop.f32.mrb[0].mxu0
  %v4616 = vpop.f32.mrb[0].mxu0
  %v4617 = vadd.f32 0.0, %v4616
  %v4618 = vpop.f32.mrb[0].mxu0
  %4619 = vdwg.mxu0
  %v4620 = vsel %vm4173, %v4590, -inf
  %4621 = vmax.xlane.f32.xlu0 %v4620
  %v4622 = vpop.xlane.xlu0 %4621
  %v4623 = vsel %vm4173, %v4593, -inf
  %4624 = vmax.xlane.f32.xlu0 %v4623
  %v4625 = vpop.xlane.xlu0 %4624
  %v4626 = vsel %vm4173, %v4598, -inf
  %4627 = vmax.xlane.f32.xlu0 %v4626
  %v4628 = vpop.xlane.xlu0 %4627
  %v4629 = vsel %vm4173, %v4601, -inf
  %4630 = vmax.xlane.f32.xlu0 %v4629
  %v4631 = vpop.xlane.xlu0 %4630
  %v4632 = vsel %vm4173, %v4606, -inf
  %4633 = vmax.xlane.f32.xlu0 %v4632
  %v4634 = vpop.xlane.xlu0 %4633
  %v4635 = vsel %vm4173, %v4609, -inf
  %4636 = vmax.xlane.f32.xlu0 %v4635
  %v4637 = vpop.xlane.xlu0 %4636
  %v4638 = vsel %vm4173, %v4614, -inf
  %4639 = vmax.xlane.f32.xlu0 %v4638
  %v4640 = vpop.xlane.xlu0 %4639
  %v4641 = vsel %vm4173, %v4617, -inf
  %4642 = vmax.xlane.f32.xlu0 %v4641
  %v4643 = vpop.xlane.xlu0 %4642
  %v4644 = vsub.f32 %v4590, %v4622
  %v4645 = vsub.f32 %v4593, %v4625
  %v4646 = vsub.f32 %v4598, %v4628
  %v4647 = vsub.f32 %v4601, %v4631
  %v4648 = vsub.f32 %v4606, %v4634
  %v4649 = vsub.f32 %v4609, %v4637
  %v4650 = vsub.f32 %v4614, %v4640
  %v4651 = vsub.f32 %v4617, %v4643
  %v4652 = vmul.f32 %v4644, 1.442695
  %v4653 = vpow.pop %v4652
  %v4654 = vmul.f32 %v4645, 1.442695
  %v4655 = vpow.pop %v4654
  %v4656 = vmul.f32 %v4646, 1.442695
  %v4657 = vpow.pop %v4656
  %v4658 = vmul.f32 %v4647, 1.442695
  %v4659 = vpow.pop %v4658
  %v4660 = vmul.f32 %v4648, 1.442695
  %v4661 = vpow.pop %v4660
  %v4662 = vmul.f32 %v4649, 1.442695
  %v4663 = vpow.pop %v4662
  %v4664 = vmul.f32 %v4650, 1.442695
  %v4665 = vpow.pop %v4664
  %v4666 = vmul.f32 %v4651, 1.442695
  %v4667 = vpow.pop %v4666
  %v4668 = vsel %vm4173, %v4653, 0.0
  %4669 = vadd.xlane.f32.xlu0 %v4668
  %v4670 = vpop.xlane.xlu0 %4669
  %v4671 = vsel %vm4173, %v4655, 0.0
  %4672 = vadd.xlane.f32.xlu0 %v4671
  %v4673 = vpop.xlane.xlu0 %4672
  %v4674 = vsel %vm4173, %v4657, 0.0
  %4675 = vadd.xlane.f32.xlu0 %v4674
  %v4676 = vpop.xlane.xlu0 %4675
  %v4677 = vsel %vm4173, %v4659, 0.0
  %4678 = vadd.xlane.f32.xlu0 %v4677
  %v4679 = vpop.xlane.xlu0 %4678
  %v4680 = vsel %vm4173, %v4661, 0.0
  %4681 = vadd.xlane.f32.xlu0 %v4680
  %v4682 = vpop.xlane.xlu0 %4681
  %v4683 = vsel %vm4173, %v4663, 0.0
  %4684 = vadd.xlane.f32.xlu0 %v4683
  %v4685 = vpop.xlane.xlu0 %4684
  %v4686 = vsel %vm4173, %v4665, 0.0
  %4687 = vadd.xlane.f32.xlu0 %v4686
  %v4688 = vpop.xlane.xlu0 %4687
  %v4689 = vsel %vm4173, %v4667, 0.0
  %4690 = vadd.xlane.f32.xlu0 %v4689
  %v4691 = vpop.xlane.xlu0 %4690
  %v4692 = vrcp.pop %v4670
  %v4693 = vmul.f32 %v4653, %v4692
  %v4694 = vrcp.pop %v4673
  %v4695 = vmul.f32 %v4655, %v4694
  %v4696 = vrcp.pop %v4676
  %v4697 = vmul.f32 %v4657, %v4696
  %v4698 = vrcp.pop %v4679
  %v4699 = vmul.f32 %v4659, %v4698
  %v4700 = vrcp.pop %v4682
  %v4701 = vmul.f32 %v4661, %v4700
  %v4702 = vrcp.pop %v4685
  %v4703 = vmul.f32 %v4663, %v4702
  %v4704 = vrcp.pop %v4688
  %v4705 = vmul.f32 %v4665, %v4704
  %v4706 = vrcp.pop %v4691
  %v4707 = vmul.f32 %v4667, %v4706
  %v4708 = vpack.c.bf16 %v4494, %v4491
  %v4709 = vpack.c.bf16 %v4502, %v4499
  %v4710 = vpack.c.bf16 %v4510, %v4507
  %v4711 = vpack.c.bf16 %v4518, %v4515
  %v4712 = vpack.c.bf16 %v4695, %v4693
  %v4713 = vpack.c.bf16 %v4699, %v4697
  %v4714 = vpack.c.bf16 %v4703, %v4701
  %v4715 = vpack.c.bf16 %v4707, %v4705
  %4716 = vxpose.xlu0.c.b16.start [1/8] %v4708, 128
  %4717 = vxpose.xlu0.c.b16.cont [2/8] %v4709, 128
  %4718 = vxpose.xlu0.c.b16.cont [3/8] %v4710, 128
  %4719 = vxpose.xlu0.c.b16.cont [4/8] %v4711, 128
  %4720 = vxpose.xlu0.c.b16.cont [5/8] 0, 128
  %4721 = vxpose.xlu0.c.b16.cont [6/8] 0, 128
  %4722 = vxpose.xlu0.c.b16.cont [7/8] 0, 128
  %4723 = vxpose.xlu0.c.b16.end [8/8] 0, 128
  %v4724 = vpop.trf.xlu0
  %v4725 = vpop.trf.xlu0
  %v4726 = vpop.trf.xlu0
  %v4727 = vpop.trf.xlu0
  %v4728 = vpop.trf.xlu0
  %v4729 = vpop.trf.xlu0
  %v4730 = vpop.trf.xlu0
  %v4731 = vpop.trf.xlu0
  %v4733 = vsel %vm4173, %v4724, 0
  %v4736 = vsel %vm4173, %v4712, 0
  %v4739 = vsel %vm4173, %v4713, 0
  %v4742 = vsel %vm4173, %v4714, 0
  %v4745 = vsel %vm4173, %v4715, 0
  %4747 = vmatprep.subr.bf16.mxu0 0
  %4748 = vmatpush1.bf16.xpose.msra.mxu0 %v4736
  %4749 = vmatprep.subr.bf16.mxu0 0
  %4750 = vmatpush1.bf16.xpose.msra.mxu0 %v4739
  %4751 = vmatprep.subr.bf16.mxu0 0
  %4752 = vmatpush1.bf16.xpose.msra.mxu0 %v4742
  %4753 = vmatprep.subr.bf16.mxu0 0
  %4754 = vmatpush1.bf16.xpose.msra.mxu0 %v4745
  %4755 = vmatprep.subr.bf16.mxu0 0
  %4756 = vmatpush1.bf16.xpose.msra.mxu0 0
  %4757 = vmatprep.subr.bf16.mxu0 0
  %4758 = vmatpush1.bf16.xpose.msra.mxu0 0
  %4759 = vmatprep.subr.bf16.mxu0 0
  %4760 = vmatpush1.bf16.xpose.msra.mxu0 0
  %4761 = vmatprep.subr.bf16.mxu0 0
  %4762 = vmatpush1.bf16.xpose.msra.mxu0 0
  %4763 = vmatprep.subr.bf16.mxu0 0
  %4764 = vmatpush1.bf16.xpose.msra.mxu0 0
  %4765 = vmatprep.subr.bf16.mxu0 0
  %4766 = vmatpush1.bf16.xpose.msra.mxu0 0
  %4767 = vmatprep.subr.bf16.mxu0 0
  %4768 = vmatpush1.bf16.xpose.msra.mxu0 0
  %4769 = vmatprep.subr.bf16.mxu0 0
  %4770 = vmatpush1.bf16.xpose.msra.mxu0 0
  %4771 = vmatprep.subr.bf16.mxu0 0
  %4772 = vmatpush1.bf16.xpose.msra.mxu0 0
  %4773 = vmatprep.subr.bf16.mxu0 0
  %4774 = vmatpush1.bf16.xpose.msra.mxu0 0
  %4775 = vmatprep.subr.bf16.mxu0 0
  %4776 = vmatpush1.bf16.xpose.msra.mxu0 0
  %4777 = vmatprep.subr.bf16.mxu0 0
  %4778 = vmatpush1.bf16.xpose.msra.mxu0 0
  %4779 = vmatprep.mubr.bf16.mxu0 0
  %4780 = vmatmul.mubr.bf16.gmra.mrb[0].mxu0 %v4733
  %v4781 = vpop.f32.mrb[0].mxu0
  %v4782 = vadd.f32 0.0, %v4781
  %v4783 = vpop.f32.mrb[0].mxu0
  %v4784 = vpop.f32.mrb[0].mxu0
  %v4785 = vpop.f32.mrb[0].mxu0
  %4786 = vdwg.mxu0
  %vm4787 = vcmask 519168
  %4788 = vst.msk [vmem:[%s13] sm:$0xf] %vm4787, %v4782
  %v4789 = vpack.c.bf16 %v4157, %v4157
  %v4791 = vrot.slane %v4789, 2
  %v4793 = vsel %vm4113, %v4791, 0
  %4795 = vmatprep.subr.bf16.mxu0 0
  %4796 = vmatpush1.bf16.msra.mxu0 %v4793
  %4797 = vmatprep.subr.bf16.mxu0 0
  %4798 = vmatpush1.bf16.msra.mxu0 0
  %4799 = vmatprep.subr.bf16.mxu0 0
  %4800 = vmatpush1.bf16.msra.mxu0 0
  %4801 = vmatprep.subr.bf16.mxu0 0
  %4802 = vmatpush1.bf16.msra.mxu0 0
  %4803 = vmatprep.subr.bf16.mxu0 0
  %4804 = vmatpush1.bf16.msra.mxu0 0
  %4805 = vmatprep.subr.bf16.mxu0 0
  %4806 = vmatpush1.bf16.msra.mxu0 0
  %4807 = vmatprep.subr.bf16.mxu0 0
  %4808 = vmatpush1.bf16.msra.mxu0 0
  %4809 = vmatprep.subr.bf16.mxu0 0
  %4810 = vmatpush1.bf16.msra.mxu0 0
  %4811 = vmatprep.subr.bf16.mxu0 0
  %4812 = vmatpush1.bf16.msra.mxu0 0
  %4813 = vmatprep.subr.bf16.mxu0 0
  %4814 = vmatpush1.bf16.msra.mxu0 0
  %4815 = vmatprep.subr.bf16.mxu0 0
  %4816 = vmatpush1.bf16.msra.mxu0 0
  %4817 = vmatprep.subr.bf16.mxu0 0
  %4818 = vmatpush1.bf16.msra.mxu0 0
  %4819 = vmatprep.subr.bf16.mxu0 0
  %4820 = vmatpush1.bf16.msra.mxu0 0
  %4821 = vmatprep.subr.bf16.mxu0 0
  %4822 = vmatpush1.bf16.msra.mxu0 0
  %4823 = vmatprep.subr.bf16.mxu0 0
  %4824 = vmatpush1.bf16.msra.mxu0 0
  %4825 = vmatprep.subr.bf16.mxu0 0
  %4826 = vmatpush1.bf16.msra.mxu0 0
  %4827 = vmatprep.mubr.bf16.mxu0 0
  %4828 = vmatmul.mubr.bf16.gmra.mrb[0].mxu0 %v4269
  %v4829 = vpop.f32.mrb[0].mxu0
  %v4830 = vadd.f32 0.0, %v4829
  %v4831 = vpop.f32.mrb[0].mxu0
  %v4832 = vpop.f32.mrb[0].mxu0
  %v4833 = vadd.f32 0.0, %v4832
  %v4834 = vpop.f32.mrb[0].mxu0
  %4835 = vmatprep.mubr.bf16.mxu0 0
  %4836 = vmatmul.mubr.bf16.gmra.mrb[0].mxu0 %v4272
  %v4837 = vpop.f32.mrb[0].mxu0
  %v4838 = vadd.f32 0.0, %v4837
  %v4839 = vpop.f32.mrb[0].mxu0
  %v4840 = vpop.f32.mrb[0].mxu0
  %v4841 = vadd.f32 0.0, %v4840
  %v4842 = vpop.f32.mrb[0].mxu0
  %4843 = vmatprep.mubr.bf16.mxu0 0
  %4844 = vmatmul.mubr.bf16.gmra.mrb[0].mxu0 %v4275
  %v4845 = vpop.f32.mrb[0].mxu0
  %v4846 = vadd.f32 0.0, %v4845
  %v4847 = vpop.f32.mrb[0].mxu0
  %v4848 = vpop.f32.mrb[0].mxu0
  %v4849 = vadd.f32 0.0, %v4848
  %v4850 = vpop.f32.mrb[0].mxu0
  %4851 = vmatprep.mubr.bf16.mxu0 0
  %4852 = vmatmul.mubr.bf16.gmra.mrb[0].mxu0 %v4278
  %v4853 = vpop.f32.mrb[0].mxu0
  %v4854 = vadd.f32 0.0, %v4853
  %v4855 = vpop.f32.mrb[0].mxu0
  %v4856 = vpop.f32.mrb[0].mxu0
  %v4857 = vadd.f32 0.0, %v4856
  %v4858 = vpop.f32.mrb[0].mxu0
  %4859 = vdwg.mxu0
  %v4860 = vsel %vm4173, %v4830, -inf
  %4861 = vmax.xlane.f32.xlu0 %v4860
  %v4862 = vpop.xlane.xlu0 %4861
  %v4863 = vsel %vm4173, %v4833, -inf
  %4864 = vmax.xlane.f32.xlu0 %v4863
  %v4865 = vpop.xlane.xlu0 %4864
  %v4866 = vsel %vm4173, %v4838, -inf
  %4867 = vmax.xlane.f32.xlu0 %v4866
  %v4868 = vpop.xlane.xlu0 %4867
  %v4869 = vsel %vm4173, %v4841, -inf
  %4870 = vmax.xlane.f32.xlu0 %v4869
  %v4871 = vpop.xlane.xlu0 %4870
  %v4872 = vsel %vm4173, %v4846, -inf
  %4873 = vmax.xlane.f32.xlu0 %v4872
  %v4874 = vpop.xlane.xlu0 %4873
  %v4875 = vsel %vm4173, %v4849, -inf
  %4876 = vmax.xlane.f32.xlu0 %v4875
  %v4877 = vpop.xlane.xlu0 %4876
  %v4878 = vsel %vm4173, %v4854, -inf
  %4879 = vmax.xlane.f32.xlu0 %v4878
  %v4880 = vpop.xlane.xlu0 %4879
  %v4881 = vsel %vm4173, %v4857, -inf
  %4882 = vmax.xlane.f32.xlu0 %v4881
  %v4883 = vpop.xlane.xlu0 %4882
  %v4884 = vsub.f32 %v4830, %v4862
  %v4885 = vsub.f32 %v4833, %v4865
  %v4886 = vsub.f32 %v4838, %v4868
  %v4887 = vsub.f32 %v4841, %v4871
  %v4888 = vsub.f32 %v4846, %v4874
  %v4889 = vsub.f32 %v4849, %v4877
  %v4890 = vsub.f32 %v4854, %v4880
  %v4891 = vsub.f32 %v4857, %v4883
  %v4892 = vmul.f32 %v4884, 1.442695
  %v4893 = vpow.pop %v4892
  %v4894 = vmul.f32 %v4885, 1.442695
  %v4895 = vpow.pop %v4894
  %v4896 = vmul.f32 %v4886, 1.442695
  %v4897 = vpow.pop %v4896
  %v4898 = vmul.f32 %v4887, 1.442695
  %v4899 = vpow.pop %v4898
  %v4900 = vmul.f32 %v4888, 1.442695
  %v4901 = vpow.pop %v4900
  %v4902 = vmul.f32 %v4889, 1.442695
  %v4903 = vpow.pop %v4902
  %v4904 = vmul.f32 %v4890, 1.442695
  %v4905 = vpow.pop %v4904
  %v4906 = vmul.f32 %v4891, 1.442695
  %v4907 = vpow.pop %v4906
  %v4908 = vsel %vm4173, %v4893, 0.0
  %4909 = vadd.xlane.f32.xlu0 %v4908
  %v4910 = vpop.xlane.xlu0 %4909
  %v4911 = vsel %vm4173, %v4895, 0.0
  %4912 = vadd.xlane.f32.xlu0 %v4911
  %v4913 = vpop.xlane.xlu0 %4912
  %v4914 = vsel %vm4173, %v4897, 0.0
  %4915 = vadd.xlane.f32.xlu0 %v4914
  %v4916 = vpop.xlane.xlu0 %4915
  %v4917 = vsel %vm4173, %v4899, 0.0
  %4918 = vadd.xlane.f32.xlu0 %v4917
  %v4919 = vpop.xlane.xlu0 %4918
  %v4920 = vsel %vm4173, %v4901, 0.0
  %4921 = vadd.xlane.f32.xlu0 %v4920
  %v4922 = vpop.xlane.xlu0 %4921
  %v4923 = vsel %vm4173, %v4903, 0.0
  %4924 = vadd.xlane.f32.xlu0 %v4923
  %v4925 = vpop.xlane.xlu0 %4924
  %v4926 = vsel %vm4173, %v4905, 0.0
  %4927 = vadd.xlane.f32.xlu0 %v4926
  %v4928 = vpop.xlane.xlu0 %4927
  %v4929 = vsel %vm4173, %v4907, 0.0
  %4930 = vadd.xlane.f32.xlu0 %v4929
  %v4931 = vpop.xlane.xlu0 %4930
  %v4932 = vrcp.pop %v4910
  %v4933 = vmul.f32 %v4893, %v4932
  %v4934 = vrcp.pop %v4913
  %v4935 = vmul.f32 %v4895, %v4934
  %v4936 = vrcp.pop %v4916
  %v4937 = vmul.f32 %v4897, %v4936
  %v4938 = vrcp.pop %v4919
  %v4939 = vmul.f32 %v4899, %v4938
  %v4940 = vrcp.pop %v4922
  %v4941 = vmul.f32 %v4901, %v4940
  %v4942 = vrcp.pop %v4925
  %v4943 = vmul.f32 %v4903, %v4942
  %v4944 = vrcp.pop %v4928
  %v4945 = vmul.f32 %v4905, %v4944
  %v4946 = vrcp.pop %v4931
  %v4947 = vmul.f32 %v4907, %v4946
  %v4948 = vpack.c.bf16 %v4935, %v4933
  %v4949 = vpack.c.bf16 %v4939, %v4937
  %v4950 = vpack.c.bf16 %v4943, %v4941
  %v4951 = vpack.c.bf16 %v4947, %v4945
  %v4952 = vpack.c.bf16 %v4161, %v4161
  %v4954 = vsel %vm4173, %v4948, 0
  %v4957 = vsel %vm4173, %v4949, 0
  %v4960 = vsel %vm4173, %v4950, 0
  %v4963 = vsel %vm4173, %v4951, 0
  %v4966 = vsel %vm4173, %v4952, 0
  %4968 = vmatprep.subr.bf16.mxu0 0
  %4969 = vmatpush1.bf16.xpose.msra.mxu0 %v4966
  %4970 = vmatprep.subr.bf16.mxu0 0
  %4971 = vmatpush1.bf16.xpose.msra.mxu0 0
  %4972 = vmatprep.subr.bf16.mxu0 0
  %4973 = vmatpush1.bf16.xpose.msra.mxu0 0
  %4974 = vmatprep.subr.bf16.mxu0 0
  %4975 = vmatpush1.bf16.xpose.msra.mxu0 0
  %4976 = vmatprep.subr.bf16.mxu0 0
  %4977 = vmatpush1.bf16.xpose.msra.mxu0 0
  %4978 = vmatprep.subr.bf16.mxu0 0
  %4979 = vmatpush1.bf16.xpose.msra.mxu0 0
  %4980 = vmatprep.subr.bf16.mxu0 0
  %4981 = vmatpush1.bf16.xpose.msra.mxu0 0
  %4982 = vmatprep.subr.bf16.mxu0 0
  %4983 = vmatpush1.bf16.xpose.msra.mxu0 0
  %4984 = vmatprep.subr.bf16.mxu0 0
  %4985 = vmatpush1.bf16.xpose.msra.mxu0 0
  %4986 = vmatprep.subr.bf16.mxu0 0
  %4987 = vmatpush1.bf16.xpose.msra.mxu0 0
  %4988 = vmatprep.subr.bf16.mxu0 0
  %4989 = vmatpush1.bf16.xpose.msra.mxu0 0
  %4990 = vmatprep.subr.bf16.mxu0 0
  %4991 = vmatpush1.bf16.xpose.msra.mxu0 0
  %4992 = vmatprep.subr.bf16.mxu0 0
  %4993 = vmatpush1.bf16.xpose.msra.mxu0 0
  %4994 = vmatprep.subr.bf16.mxu0 0
  %4995 = vmatpush1.bf16.xpose.msra.mxu0 0
  %4996 = vmatprep.subr.bf16.mxu0 0
  %4997 = vmatpush1.bf16.xpose.msra.mxu0 0
  %4998 = vmatprep.subr.bf16.mxu0 0
  %4999 = vmatpush1.bf16.xpose.msra.mxu0 0
  %5000 = vmatprep.mubr.bf16.mxu0 0
  %5001 = vmatmul.mubr.bf16.gmra.mrb[0].mxu0 %v4954
  %v5002 = vpop.f32.mrb[0].mxu0
  %v5003 = vadd.f32 0.0, %v5002
  %v5004 = vpop.f32.mrb[0].mxu0
  %v5005 = vpop.f32.mrb[0].mxu0
  %v5006 = vadd.f32 0.0, %v5005
  %v5007 = vpop.f32.mrb[0].mxu0
  %5008 = vmatprep.mubr.bf16.mxu0 0
  %5009 = vmatmul.mubr.bf16.gmra.mrb[0].mxu0 %v4957
  %v5010 = vpop.f32.mrb[0].mxu0
  %v5011 = vadd.f32 0.0, %v5010
  %v5012 = vpop.f32.mrb[0].mxu0
  %v5013 = vpop.f32.mrb[0].mxu0
  %v5014 = vadd.f32 0.0, %v5013
  %v5015 = vpop.f32.mrb[0].mxu0
  %5016 = vmatprep.mubr.bf16.mxu0 0
  %5017 = vmatmul.mubr.bf16.gmra.mrb[0].mxu0 %v4960
  %v5018 = vpop.f32.mrb[0].mxu0
  %v5019 = vadd.f32 0.0, %v5018
  %v5020 = vpop.f32.mrb[0].mxu0
  %v5021 = vpop.f32.mrb[0].mxu0
  %v5022 = vadd.f32 0.0, %v5021
  %v5023 = vpop.f32.mrb[0].mxu0
  %5024 = vmatprep.mubr.bf16.mxu0 0
  %5025 = vmatmul.mubr.bf16.gmra.mrb[0].mxu0 %v4963
  %v5026 = vpop.f32.mrb[0].mxu0
  %v5027 = vadd.f32 0.0, %v5026
  %v5028 = vpop.f32.mrb[0].mxu0
  %v5029 = vpop.f32.mrb[0].mxu0
  %v5030 = vadd.f32 0.0, %v5029
  %v5031 = vpop.f32.mrb[0].mxu0
  %5032 = vdwg.mxu0
  %v5033 = vmul.f32 %v4157, 0.5
  %v5034 = vpack.c.bf16 %v5033, %v5033
  %5035 = vxpose.xlu0.c.b16.start [1/8] %v5034, 128
  %5036 = vxpose.xlu0.c.b16.cont [2/8] 0, 128
  %5037 = vxpose.xlu0.c.b16.cont [3/8] 0, 128
  %5038 = vxpose.xlu0.c.b16.cont [4/8] 0, 128
  %5039 = vxpose.xlu0.c.b16.cont [5/8] 0, 128
  %5040 = vxpose.xlu0.c.b16.cont [6/8] 0, 128
  %5041 = vxpose.xlu0.c.b16.cont [7/8] 0, 128
  %5042 = vxpose.xlu0.c.b16.end [8/8] 0, 128
  %v5043 = vpop.trf.xlu0
  %v5044 = vpop.trf.xlu0
  %v5045 = vpop.trf.xlu0
  %v5046 = vpop.trf.xlu0
  %v5047 = vpop.trf.xlu0
  %v5048 = vpop.trf.xlu0
  %v5049 = vpop.trf.xlu0
  %v5050 = vpop.trf.xlu0
  %v5052 = vsel %vm4109, %v5043, 0
  %v5055 = vsel %vm4109, %v5044, 0
  %v5058 = vsel %vm4109, %v5045, 0
  %v5061 = vsel %vm4109, %v5046, 0
  %5063 = vmatprep.subr.bf16.mxu0 0
  %5064 = vmatpush1.bf16.msra.mxu0 %v4553
  %5065 = vmatprep.subr.bf16.mxu0 0
  %5066 = vmatpush1.bf16.msra.mxu0 0
  %5067 = vmatprep.subr.bf16.mxu0 0
  %5068 = vmatpush1.bf16.msra.mxu0 0
  %5069 = vmatprep.subr.bf16.mxu0 0
  %5070 = vmatpush1.bf16.msra.mxu0 0
  %5071 = vmatprep.subr.bf16.mxu0 0
  %5072 = vmatpush1.bf16.msra.mxu0 0
  %5073 = vmatprep.subr.bf16.mxu0 0
  %5074 = vmatpush1.bf16.msra.mxu0 0
  %5075 = vmatprep.subr.bf16.mxu0 0
  %5076 = vmatpush1.bf16.msra.mxu0 0
  %5077 = vmatprep.subr.bf16.mxu0 0
  %5078 = vmatpush1.bf16.msra.mxu0 0
  %5079 = vmatprep.subr.bf16.mxu0 0
  %5080 = vmatpush1.bf16.msra.mxu0 0
  %5081 = vmatprep.subr.bf16.mxu0 0
  %5082 = vmatpush1.bf16.msra.mxu0 0
  %5083 = vmatprep.subr.bf16.mxu0 0
  %5084 = vmatpush1.bf16.msra.mxu0 0
  %5085 = vmatprep.subr.bf16.mxu0 0
  %5086 = vmatpush1.bf16.msra.mxu0 0
  %5087 = vmatprep.subr.bf16.mxu0 0
  %5088 = vmatpush1.bf16.msra.mxu0 0
  %5089 = vmatprep.subr.bf16.mxu0 0
  %5090 = vmatpush1.bf16.msra.mxu0 0
  %5091 = vmatprep.subr.bf16.mxu0 0
  %5092 = vmatpush1.bf16.msra.mxu0 0
  %5093 = vmatprep.subr.bf16.mxu0 0
  %5094 = vmatpush1.bf16.msra.mxu0 0
  %5095 = vmatprep.mubr.bf16.mxu0 0
  %5096 = vmatmul.mubr.bf16.gmra.mrb[0].mxu0 %v5052
  %v5097 = vpop.f32.mrb[0].mxu0
  %v5098 = vadd.f32 0.0, %v5097
  %v5099 = vpop.f32.mrb[0].mxu0
  %v5100 = vpop.f32.mrb[0].mxu0
  %v5101 = vadd.f32 0.0, %v5100
  %v5102 = vpop.f32.mrb[0].mxu0
  %5103 = vmatprep.mubr.bf16.mxu0 0
  %5104 = vmatmul.mubr.bf16.gmra.mrb[0].mxu0 %v5055
  %v5105 = vpop.f32.mrb[0].mxu0
  %v5106 = vadd.f32 0.0, %v5105
  %v5107 = vpop.f32.mrb[0].mxu0
  %v5108 = vpop.f32.mrb[0].mxu0
  %v5109 = vadd.f32 0.0, %v5108
  %v5110 = vpop.f32.mrb[0].mxu0
  %5111 = vmatprep.mubr.bf16.mxu0 0
  %5112 = vmatmul.mubr.bf16.gmra.mrb[0].mxu0 %v5058
  %v5113 = vpop.f32.mrb[0].mxu0
  %v5114 = vadd.f32 0.0, %v5113
  %v5115 = vpop.f32.mrb[0].mxu0
  %v5116 = vpop.f32.mrb[0].mxu0
  %v5117 = vadd.f32 0.0, %v5116
  %v5118 = vpop.f32.mrb[0].mxu0
  %5119 = vmatprep.mubr.bf16.mxu0 0
  %5120 = vmatmul.mubr.bf16.gmra.mrb[0].mxu0 %v5061
  %v5121 = vpop.f32.mrb[0].mxu0
  %v5122 = vadd.f32 0.0, %v5121
  %v5123 = vpop.f32.mrb[0].mxu0
  %v5124 = vpop.f32.mrb[0].mxu0
  %v5125 = vadd.f32 0.0, %v5124
  %v5126 = vpop.f32.mrb[0].mxu0
  %5127 = vdwg.mxu0
  %v5128 = vsel %vm4173, %v5098, -inf
  %5129 = vmax.xlane.f32.xlu0 %v5128
  %v5130 = vpop.xlane.xlu0 %5129
  %v5131 = vsel %vm4173, %v5101, -inf
  %5132 = vmax.xlane.f32.xlu0 %v5131
  %v5133 = vpop.xlane.xlu0 %5132
  %v5134 = vsel %vm4173, %v5106, -inf
  %5135 = vmax.xlane.f32.xlu0 %v5134
  %v5136 = vpop.xlane.xlu0 %5135
  %v5137 = vsel %vm4173, %v5109, -inf
  %5138 = vmax.xlane.f32.xlu0 %v5137
  %v5139 = vpop.xlane.xlu0 %5138
  %v5140 = vsel %vm4173, %v5114, -inf
  %5141 = vmax.xlane.f32.xlu0 %v5140
  %v5142 = vpop.xlane.xlu0 %5141
  %v5143 = vsel %vm4173, %v5117, -inf
  %5144 = vmax.xlane.f32.xlu0 %v5143
  %v5145 = vpop.xlane.xlu0 %5144
  %v5146 = vsel %vm4173, %v5122, -inf
  %5147 = vmax.xlane.f32.xlu0 %v5146
  %v5148 = vpop.xlane.xlu0 %5147
  %v5149 = vsel %vm4173, %v5125, -inf
  %5150 = vmax.xlane.f32.xlu0 %v5149
  %v5151 = vpop.xlane.xlu0 %5150
  %v5152 = vsub.f32 %v5098, %v5130
  %v5153 = vsub.f32 %v5101, %v5133
  %v5154 = vsub.f32 %v5106, %v5136
  %v5155 = vsub.f32 %v5109, %v5139
  %v5156 = vsub.f32 %v5114, %v5142
  %v5157 = vsub.f32 %v5117, %v5145
  %v5158 = vsub.f32 %v5122, %v5148
  %v5159 = vsub.f32 %v5125, %v5151
  %v5160 = vmul.f32 %v5152, 1.442695
  %v5161 = vpow.pop %v5160
  %v5162 = vmul.f32 %v5153, 1.442695
  %v5163 = vpow.pop %v5162
  %v5164 = vmul.f32 %v5154, 1.442695
  %v5165 = vpow.pop %v5164
  %v5166 = vmul.f32 %v5155, 1.442695
  %v5167 = vpow.pop %v5166
  %v5168 = vmul.f32 %v5156, 1.442695
  %v5169 = vpow.pop %v5168
  %v5170 = vmul.f32 %v5157, 1.442695
  %v5171 = vpow.pop %v5170
  %v5172 = vmul.f32 %v5158, 1.442695
  %v5173 = vpow.pop %v5172
  %v5174 = vmul.f32 %v5159, 1.442695
  %v5175 = vpow.pop %v5174
  %v5176 = vsel %vm4173, %v5161, 0.0
  %5177 = vadd.xlane.f32.xlu0 %v5176
  %v5178 = vpop.xlane.xlu0 %5177
  %v5179 = vsel %vm4173, %v5163, 0.0
  %5180 = vadd.xlane.f32.xlu0 %v5179
  %v5181 = vpop.xlane.xlu0 %5180
  %v5182 = vsel %vm4173, %v5165, 0.0
  %5183 = vadd.xlane.f32.xlu0 %v5182
  %v5184 = vpop.xlane.xlu0 %5183
  %v5185 = vsel %vm4173, %v5167, 0.0
  %5186 = vadd.xlane.f32.xlu0 %v5185
  %v5187 = vpop.xlane.xlu0 %5186
  %v5188 = vsel %vm4173, %v5169, 0.0
  %5189 = vadd.xlane.f32.xlu0 %v5188
  %v5190 = vpop.xlane.xlu0 %5189
  %v5191 = vsel %vm4173, %v5171, 0.0
  %5192 = vadd.xlane.f32.xlu0 %v5191
  %v5193 = vpop.xlane.xlu0 %5192
  %v5194 = vsel %vm4173, %v5173, 0.0
  %5195 = vadd.xlane.f32.xlu0 %v5194
  %v5196 = vpop.xlane.xlu0 %5195
  %v5197 = vsel %vm4173, %v5175, 0.0
  %5198 = vadd.xlane.f32.xlu0 %v5197
  %v5199 = vpop.xlane.xlu0 %5198
  %v5200 = vrcp.pop %v5178
  %v5201 = vmul.f32 %v5161, %v5200
  %v5202 = vrcp.pop %v5181
  %v5203 = vmul.f32 %v5163, %v5202
  %v5204 = vrcp.pop %v5184
  %v5205 = vmul.f32 %v5165, %v5204
  %v5206 = vrcp.pop %v5187
  %v5207 = vmul.f32 %v5167, %v5206
  %v5208 = vrcp.pop %v5190
  %v5209 = vmul.f32 %v5169, %v5208
  %v5210 = vrcp.pop %v5193
  %v5211 = vmul.f32 %v5171, %v5210
  %v5212 = vrcp.pop %v5196
  %v5213 = vmul.f32 %v5173, %v5212
  %v5214 = vrcp.pop %v5199
  %v5215 = vmul.f32 %v5175, %v5214
  %v5216 = vpack.c.bf16 %v5006, %v5003
  %v5217 = vpack.c.bf16 %v5014, %v5011
  %v5218 = vpack.c.bf16 %v5022, %v5019
  %v5219 = vpack.c.bf16 %v5030, %v5027
  %v5220 = vpack.c.bf16 %v5203, %v5201
  %v5221 = vpack.c.bf16 %v5207, %v5205
  %v5222 = vpack.c.bf16 %v5211, %v5209
  %v5223 = vpack.c.bf16 %v5215, %v5213
  %5224 = vxpose.xlu0.c.b16.start [1/8] %v5216, 128
  %5225 = vxpose.xlu0.c.b16.cont [2/8] %v5217, 128
  %5226 = vxpose.xlu0.c.b16.cont [3/8] %v5218, 128
  %5227 = vxpose.xlu0.c.b16.cont [4/8] %v5219, 128
  %5228 = vxpose.xlu0.c.b16.cont [5/8] 0, 128
  %5229 = vxpose.xlu0.c.b16.cont [6/8] 0, 128
  %5230 = vxpose.xlu0.c.b16.cont [7/8] 0, 128
  %5231 = vxpose.xlu0.c.b16.end [8/8] 0, 128
  %v5232 = vpop.trf.xlu0
  %v5233 = vpop.trf.xlu0
  %v5234 = vpop.trf.xlu0
  %v5235 = vpop.trf.xlu0
  %v5236 = vpop.trf.xlu0
  %v5237 = vpop.trf.xlu0
  %v5238 = vpop.trf.xlu0
  %v5239 = vpop.trf.xlu0
  %v5241 = vsel %vm4173, %v5232, 0
  %v5244 = vsel %vm4173, %v5220, 0
  %v5247 = vsel %vm4173, %v5221, 0
  %v5250 = vsel %vm4173, %v5222, 0
  %v5253 = vsel %vm4173, %v5223, 0
  %5255 = vmatprep.subr.bf16.mxu0 0
  %5256 = vmatpush1.bf16.xpose.msra.mxu0 %v5244
  %5257 = vmatprep.subr.bf16.mxu0 0
  %5258 = vmatpush1.bf16.xpose.msra.mxu0 %v5247
  %5259 = vmatprep.subr.bf16.mxu0 0
  %5260 = vmatpush1.bf16.xpose.msra.mxu0 %v5250
  %5261 = vmatprep.subr.bf16.mxu0 0
  %5262 = vmatpush1.bf16.xpose.msra.mxu0 %v5253
  %5263 = vmatprep.subr.bf16.mxu0 0
  %5264 = vmatpush1.bf16.xpose.msra.mxu0 0
  %5265 = vmatprep.subr.bf16.mxu0 0
  %5266 = vmatpush1.bf16.xpose.msra.mxu0 0
  %5267 = vmatprep.subr.bf16.mxu0 0
  %5268 = vmatpush1.bf16.xpose.msra.mxu0 0
  %5269 = vmatprep.subr.bf16.mxu0 0
  %5270 = vmatpush1.bf16.xpose.msra.mxu0 0
  %5271 = vmatprep.subr.bf16.mxu0 0
  %5272 = vmatpush1.bf16.xpose.msra.mxu0 0
  %5273 = vmatprep.subr.bf16.mxu0 0
  %5274 = vmatpush1.bf16.xpose.msra.mxu0 0
  %5275 = vmatprep.subr.bf16.mxu0 0
  %5276 = vmatpush1.bf16.xpose.msra.mxu0 0
  %5277 = vmatprep.subr.bf16.mxu0 0
  %5278 = vmatpush1.bf16.xpose.msra.mxu0 0
  %5279 = vmatprep.subr.bf16.mxu0 0
  %5280 = vmatpush1.bf16.xpose.msra.mxu0 0
  %5281 = vmatprep.subr.bf16.mxu0 0
  %5282 = vmatpush1.bf16.xpose.msra.mxu0 0
  %5283 = vmatprep.subr.bf16.mxu0 0
  %5284 = vmatpush1.bf16.xpose.msra.mxu0 0
  %5285 = vmatprep.subr.bf16.mxu0 0
  %5286 = vmatpush1.bf16.xpose.msra.mxu0 0
  %5287 = vmatprep.mubr.bf16.mxu0 0
  %5288 = vmatmul.mubr.bf16.gmra.mrb[0].mxu0 %v5241
  %v5289 = vpop.f32.mrb[0].mxu0
  %v5290 = vadd.f32 0.0, %v5289
  %v5291 = vpop.f32.mrb[0].mxu0
  %v5292 = vpop.f32.mrb[0].mxu0
  %v5293 = vpop.f32.mrb[0].mxu0
  %5294 = vdwg.mxu0
  %5295 = vst.msk [vmem:[%s13 + $0x4] sm:$0xf] %vm4787, %v5290
  %5296 = vrot.lane.b32.xlu0 %v4172, 64
  %v5297 = vpop.permute.xlu0 %5296
  %v5298 = vsel %vm4173, %v5297, 0
  %5300 = vmatprep.subr.mxu0 0.0
  %5301 = vmatpush1.msra.mxu0 %v4163
  %5302 = vmatprep.subr.mxu0 0.0
  %5303 = vmatpush1.msra.mxu0 %v4164
  %5304 = vmatprep.subr.mxu0 0.0
  %5305 = vmatpush1.msra.mxu0 %v4165
  %5306 = vmatprep.subr.mxu0 0.0
  %5307 = vmatpush1.msra.mxu0 %v4166
  %5308 = vmatprep.subr.mxu0 0.0
  %5309 = vmatpush1.msra.mxu0 %v4167
  %5310 = vmatprep.subr.mxu0 0.0
  %5311 = vmatpush1.msra.mxu0 %v4168
  %5312 = vmatprep.subr.mxu0 0.0
  %5313 = vmatpush1.msra.mxu0 %v4169
  %5314 = vmatprep.subr.mxu0 0.0
  %5315 = vmatpush1.msra.mxu0 %v4170
  %5316 = vmatprep.subr.mxu0 0.0
  %5317 = vmatpush1.msra.mxu0 0.0
  %5318 = vmatprep.subr.mxu0 0.0
  %5319 = vmatpush1.msra.mxu0 0.0
  %5320 = vmatprep.subr.mxu0 0.0
  %5321 = vmatpush1.msra.mxu0 0.0
  %5322 = vmatprep.subr.mxu0 0.0
  %5323 = vmatpush1.msra.mxu0 0.0
  %5324 = vmatprep.subr.mxu0 0.0
  %5325 = vmatpush1.msra.mxu0 0.0
  %5326 = vmatprep.subr.mxu0 0.0
  %5327 = vmatpush1.msra.mxu0 0.0
  %5328 = vmatprep.subr.mxu0 0.0
  %5329 = vmatpush1.msra.mxu0 0.0
  %5330 = vmatprep.subr.mxu0 0.0
  %5331 = vmatpush1.msra.mxu0 0.0
  %5332 = vmatprep.subr.mxu0 0.0
  %5333 = vmatpush1.msra.mxu0 0.0
  %5334 = vmatprep.subr.mxu0 0.0
  %5335 = vmatpush1.msra.mxu0 0.0
  %5336 = vmatprep.subr.mxu0 0.0
  %5337 = vmatpush1.msra.mxu0 0.0
  %5338 = vmatprep.subr.mxu0 0.0
  %5339 = vmatpush1.msra.mxu0 0.0
  %5340 = vmatprep.subr.mxu0 0.0
  %5341 = vmatpush1.msra.mxu0 0.0
  %5342 = vmatprep.subr.mxu0 0.0
  %5343 = vmatpush1.msra.mxu0 0.0
  %5344 = vmatprep.subr.mxu0 0.0
  %5345 = vmatpush1.msra.mxu0 0.0
  %5346 = vmatprep.subr.mxu0 0.0
  %5347 = vmatpush1.msra.mxu0 0.0
  %5348 = vmatprep.subr.mxu0 0.0
  %5349 = vmatpush1.msra.mxu0 0.0
  %5350 = vmatprep.subr.mxu0 0.0
  %5351 = vmatpush1.msra.mxu0 0.0
  %5352 = vmatprep.subr.mxu0 0.0
  %5353 = vmatpush1.msra.mxu0 0.0
  %5354 = vmatprep.subr.mxu0 0.0
  %5355 = vmatpush1.msra.mxu0 0.0
  %5356 = vmatprep.subr.mxu0 0.0
  %5357 = vmatpush1.msra.mxu0 0.0
  %5358 = vmatprep.subr.mxu0 0.0
  %5359 = vmatpush1.msra.mxu0 0.0
  %5360 = vmatprep.subr.mxu0 0.0
  %5361 = vmatpush1.msra.mxu0 0.0
  %5362 = vmatprep.subr.mxu0 0.0
  %5363 = vmatpush1.msra.mxu0 0.0
  %5364 = vmatprep.mubr.f32.mxu0 0.0
  %5365 = vmatmul.mubr.f32.gmra.mrb[0].mxu0 %v5298
  %v5366 = vpop.f32.mrb[0].mxu0
  %v5367 = vadd.f32 0.0, %v5366
  %v5368 = vpop.f32.mrb[0].mxu0
  %5369 = vdwg.mxu0
  %v5370 = vmul.f32 %v5367, 0.5
  %v5371 = vpack.c.bf16 %v5370, %v5370
  %5372 = vxpose.xlu0.c.b16.start [1/8] %v5371, 128
  %5373 = vxpose.xlu0.c.b16.cont [2/8] 0, 128
  %5374 = vxpose.xlu0.c.b16.cont [3/8] 0, 128
  %5375 = vxpose.xlu0.c.b16.cont [4/8] 0, 128
  %5376 = vxpose.xlu0.c.b16.cont [5/8] 0, 128
  %5377 = vxpose.xlu0.c.b16.cont [6/8] 0, 128
  %5378 = vxpose.xlu0.c.b16.cont [7/8] 0, 128
  %5379 = vxpose.xlu0.c.b16.end [8/8] 0, 128
  %v5380 = vpop.trf.xlu0
  %v5381 = vpop.trf.xlu0
  %v5382 = vpop.trf.xlu0
  %v5383 = vpop.trf.xlu0
  %v5384 = vpop.trf.xlu0
  %v5385 = vpop.trf.xlu0
  %v5386 = vpop.trf.xlu0
  %v5387 = vpop.trf.xlu0
  %5388 = vrot.lane.b32.xlu0 %v4267, 64
  %v5389 = vpop.permute.xlu0 %5388
  %v5391 = vsel %vm4109, %v5380, 0
  %v5394 = vsel %vm4109, %v5381, 0
  %v5397 = vsel %vm4109, %v5382, 0
  %v5400 = vsel %vm4109, %v5383, 0
  %v5403 = vsel %vm4113, %v5389, 0
  %5405 = vmatprep.subr.bf16.mxu0 0
  %5406 = vmatpush1.bf16.msra.mxu0 %v5403
  %5407 = vmatprep.subr.bf16.mxu0 0
  %5408 = vmatpush1.bf16.msra.mxu0 0
  %5409 = vmatprep.subr.bf16.mxu0 0
  %5410 = vmatpush1.bf16.msra.mxu0 0
  %5411 = vmatprep.subr.bf16.mxu0 0
  %5412 = vmatpush1.bf16.msra.mxu0 0
  %5413 = vmatprep.subr.bf16.mxu0 0
  %5414 = vmatpush1.bf16.msra.mxu0 0
  %5415 = vmatprep.subr.bf16.mxu0 0
  %5416 = vmatpush1.bf16.msra.mxu0 0
  %5417 = vmatprep.subr.bf16.mxu0 0
  %5418 = vmatpush1.bf16.msra.mxu0 0
  %5419 = vmatprep.subr.bf16.mxu0 0
  %5420 = vmatpush1.bf16.msra.mxu0 0
  %5421 = vmatprep.subr.bf16.mxu0 0
  %5422 = vmatpush1.bf16.msra.mxu0 0
  %5423 = vmatprep.subr.bf16.mxu0 0
  %5424 = vmatpush1.bf16.msra.mxu0 0
  %5425 = vmatprep.subr.bf16.mxu0 0
  %5426 = vmatpush1.bf16.msra.mxu0 0
  %5427 = vmatprep.subr.bf16.mxu0 0
  %5428 = vmatpush1.bf16.msra.mxu0 0
  %5429 = vmatprep.subr.bf16.mxu0 0
  %5430 = vmatpush1.bf16.msra.mxu0 0
  %5431 = vmatprep.subr.bf16.mxu0 0
  %5432 = vmatpush1.bf16.msra.mxu0 0
  %5433 = vmatprep.subr.bf16.mxu0 0
  %5434 = vmatpush1.bf16.msra.mxu0 0
  %5435 = vmatprep.subr.bf16.mxu0 0
  %5436 = vmatpush1.bf16.msra.mxu0 0
  %5437 = vmatprep.mubr.bf16.mxu0 0
  %5438 = vmatmul.mubr.bf16.gmra.mrb[0].mxu0 %v5391
  %v5439 = vpop.f32.mrb[0].mxu0
  %v5440 = vadd.f32 0.0, %v5439
  %v5441 = vpop.f32.mrb[0].mxu0
  %v5442 = vpop.f32.mrb[0].mxu0
  %v5443 = vadd.f32 0.0, %v5442
  %v5444 = vpop.f32.mrb[0].mxu0
  %5445 = vmatprep.mubr.bf16.mxu0 0
  %5446 = vmatmul.mubr.bf16.gmra.mrb[0].mxu0 %v5394
  %v5447 = vpop.f32.mrb[0].mxu0
  %v5448 = vadd.f32 0.0, %v5447
  %v5449 = vpop.f32.mrb[0].mxu0
  %v5450 = vpop.f32.mrb[0].mxu0
  %v5451 = vadd.f32 0.0, %v5450
  %v5452 = vpop.f32.mrb[0].mxu0
  %5453 = vmatprep.mubr.bf16.mxu0 0
  %5454 = vmatmul.mubr.bf16.gmra.mrb[0].mxu0 %v5397
  %v5455 = vpop.f32.mrb[0].mxu0
  %v5456 = vadd.f32 0.0, %v5455
  %v5457 = vpop.f32.mrb[0].mxu0
  %v5458 = vpop.f32.mrb[0].mxu0
  %v5459 = vadd.f32 0.0, %v5458
  %v5460 = vpop.f32.mrb[0].mxu0
  %5461 = vmatprep.mubr.bf16.mxu0 0
  %5462 = vmatmul.mubr.bf16.gmra.mrb[0].mxu0 %v5400
  %v5463 = vpop.f32.mrb[0].mxu0
  %v5464 = vadd.f32 0.0, %v5463
  %v5465 = vpop.f32.mrb[0].mxu0
  %v5466 = vpop.f32.mrb[0].mxu0
  %v5467 = vadd.f32 0.0, %v5466
  %v5468 = vpop.f32.mrb[0].mxu0
  %5469 = vdwg.mxu0
  %v5470 = vsel %vm4173, %v5440, -inf
  %5471 = vmax.xlane.f32.xlu0 %v5470
  %v5472 = vpop.xlane.xlu0 %5471
  %v5473 = vsel %vm4173, %v5443, -inf
  %5474 = vmax.xlane.f32.xlu0 %v5473
  %v5475 = vpop.xlane.xlu0 %5474
  %v5476 = vsel %vm4173, %v5448, -inf
  %5477 = vmax.xlane.f32.xlu0 %v5476
  %v5478 = vpop.xlane.xlu0 %5477
  %v5479 = vsel %vm4173, %v5451, -inf
  %5480 = vmax.xlane.f32.xlu0 %v5479
  %v5481 = vpop.xlane.xlu0 %5480
  %v5482 = vsel %vm4173, %v5456, -inf
  %5483 = vmax.xlane.f32.xlu0 %v5482
  %v5484 = vpop.xlane.xlu0 %5483
  %v5485 = vsel %vm4173, %v5459, -inf
  %5486 = vmax.xlane.f32.xlu0 %v5485
  %v5487 = vpop.xlane.xlu0 %5486
  %v5488 = vsel %vm4173, %v5464, -inf
  %5489 = vmax.xlane.f32.xlu0 %v5488
  %v5490 = vpop.xlane.xlu0 %5489
  %v5491 = vsel %vm4173, %v5467, -inf
  %5492 = vmax.xlane.f32.xlu0 %v5491
  %v5493 = vpop.xlane.xlu0 %5492
  %v5494 = vsub.f32 %v5440, %v5472
  %v5495 = vsub.f32 %v5443, %v5475
  %v5496 = vsub.f32 %v5448, %v5478
  %v5497 = vsub.f32 %v5451, %v5481
  %v5498 = vsub.f32 %v5456, %v5484
  %v5499 = vsub.f32 %v5459, %v5487
  %v5500 = vsub.f32 %v5464, %v5490
  %v5501 = vsub.f32 %v5467, %v5493
  %v5502 = vmul.f32 %v5494, 1.442695
  %v5503 = vpow.pop %v5502
  %v5504 = vmul.f32 %v5495, 1.442695
  %v5505 = vpow.pop %v5504
  %v5506 = vmul.f32 %v5496, 1.442695
  %v5507 = vpow.pop %v5506
  %v5508 = vmul.f32 %v5497, 1.442695
  %v5509 = vpow.pop %v5508
  %v5510 = vmul.f32 %v5498, 1.442695
  %v5511 = vpow.pop %v5510
  %v5512 = vmul.f32 %v5499, 1.442695
  %v5513 = vpow.pop %v5512
  %v5514 = vmul.f32 %v5500, 1.442695
  %v5515 = vpow.pop %v5514
  %v5516 = vmul.f32 %v5501, 1.442695
  %v5517 = vpow.pop %v5516
  %v5518 = vsel %vm4173, %v5503, 0.0
  %5519 = vadd.xlane.f32.xlu0 %v5518
  %v5520 = vpop.xlane.xlu0 %5519
  %v5521 = vsel %vm4173, %v5505, 0.0
  %5522 = vadd.xlane.f32.xlu0 %v5521
  %v5523 = vpop.xlane.xlu0 %5522
  %v5524 = vsel %vm4173, %v5507, 0.0
  %5525 = vadd.xlane.f32.xlu0 %v5524
  %v5526 = vpop.xlane.xlu0 %5525
  %v5527 = vsel %vm4173, %v5509, 0.0
  %5528 = vadd.xlane.f32.xlu0 %v5527
  %v5529 = vpop.xlane.xlu0 %5528
  %v5530 = vsel %vm4173, %v5511, 0.0
  %5531 = vadd.xlane.f32.xlu0 %v5530
  %v5532 = vpop.xlane.xlu0 %5531
  %v5533 = vsel %vm4173, %v5513, 0.0
  %5534 = vadd.xlane.f32.xlu0 %v5533
  %v5535 = vpop.xlane.xlu0 %5534
  %v5536 = vsel %vm4173, %v5515, 0.0
  %5537 = vadd.xlane.f32.xlu0 %v5536
  %v5538 = vpop.xlane.xlu0 %5537
  %v5539 = vsel %vm4173, %v5517, 0.0
  %5540 = vadd.xlane.f32.xlu0 %v5539
  %v5541 = vpop.xlane.xlu0 %5540
  %v5542 = vrcp.pop %v5520
  %v5543 = vmul.f32 %v5503, %v5542
  %v5544 = vrcp.pop %v5523
  %v5545 = vmul.f32 %v5505, %v5544
  %v5546 = vrcp.pop %v5526
  %v5547 = vmul.f32 %v5507, %v5546
  %v5548 = vrcp.pop %v5529
  %v5549 = vmul.f32 %v5509, %v5548
  %v5550 = vrcp.pop %v5532
  %v5551 = vmul.f32 %v5511, %v5550
  %v5552 = vrcp.pop %v5535
  %v5553 = vmul.f32 %v5513, %v5552
  %v5554 = vrcp.pop %v5538
  %v5555 = vmul.f32 %v5515, %v5554
  %v5556 = vrcp.pop %v5541
  %v5557 = vmul.f32 %v5517, %v5556
  %v5558 = vpack.c.bf16 %v5545, %v5543
  %v5559 = vpack.c.bf16 %v5549, %v5547
  %v5560 = vpack.c.bf16 %v5553, %v5551
  %v5561 = vpack.c.bf16 %v5557, %v5555
  %5563 = vrot.lane.b32.xlu0 %v4440, 64
  %v5564 = vpop.permute.xlu0 %5563
  %v5566 = vsel %vm4173, %v5558, 0
  %v5569 = vsel %vm4173, %v5559, 0
  %v5572 = vsel %vm4173, %v5560, 0
  %v5575 = vsel %vm4173, %v5561, 0
  %v5578 = vsel %vm4173, %v5564, 0
  %5580 = vmatprep.subr.bf16.mxu0 0
  %5581 = vmatpush1.bf16.xpose.msra.mxu0 %v5578
  %5582 = vmatprep.subr.bf16.mxu0 0
  %5583 = vmatpush1.bf16.xpose.msra.mxu0 0
  %5584 = vmatprep.subr.bf16.mxu0 0
  %5585 = vmatpush1.bf16.xpose.msra.mxu0 0
  %5586 = vmatprep.subr.bf16.mxu0 0
  %5587 = vmatpush1.bf16.xpose.msra.mxu0 0
  %5588 = vmatprep.subr.bf16.mxu0 0
  %5589 = vmatpush1.bf16.xpose.msra.mxu0 0
  %5590 = vmatprep.subr.bf16.mxu0 0
  %5591 = vmatpush1.bf16.xpose.msra.mxu0 0
  %5592 = vmatprep.subr.bf16.mxu0 0
  %5593 = vmatpush1.bf16.xpose.msra.mxu0 0
  %5594 = vmatprep.subr.bf16.mxu0 0
  %5595 = vmatpush1.bf16.xpose.msra.mxu0 0
  %5596 = vmatprep.subr.bf16.mxu0 0
  %5597 = vmatpush1.bf16.xpose.msra.mxu0 0
  %5598 = vmatprep.subr.bf16.mxu0 0
  %5599 = vmatpush1.bf16.xpose.msra.mxu0 0
  %5600 = vmatprep.subr.bf16.mxu0 0
  %5601 = vmatpush1.bf16.xpose.msra.mxu0 0
  %5602 = vmatprep.subr.bf16.mxu0 0
  %5603 = vmatpush1.bf16.xpose.msra.mxu0 0
  %5604 = vmatprep.subr.bf16.mxu0 0
  %5605 = vmatpush1.bf16.xpose.msra.mxu0 0
  %5606 = vmatprep.subr.bf16.mxu0 0
  %5607 = vmatpush1.bf16.xpose.msra.mxu0 0
  %5608 = vmatprep.subr.bf16.mxu0 0
  %5609 = vmatpush1.bf16.xpose.msra.mxu0 0
  %5610 = vmatprep.subr.bf16.mxu0 0
  %5611 = vmatpush1.bf16.xpose.msra.mxu0 0
  %5612 = vmatprep.mubr.bf16.mxu0 0
  %5613 = vmatmul.mubr.bf16.gmra.mrb[0].mxu0 %v5566
  %v5614 = vpop.f32.mrb[0].mxu0
  %v5615 = vadd.f32 0.0, %v5614
  %v5616 = vpop.f32.mrb[0].mxu0
  %v5617 = vpop.f32.mrb[0].mxu0
  %v5618 = vadd.f32 0.0, %v5617
  %v5619 = vpop.f32.mrb[0].mxu0
  %5620 = vmatprep.mubr.bf16.mxu0 0
  %5621 = vmatmul.mubr.bf16.gmra.mrb[0].mxu0 %v5569
  %v5622 = vpop.f32.mrb[0].mxu0
  %v5623 = vadd.f32 0.0, %v5622
  %v5624 = vpop.f32.mrb[0].mxu0
  %v5625 = vpop.f32.mrb[0].mxu0
  %v5626 = vadd.f32 0.0, %v5625
  %v5627 = vpop.f32.mrb[0].mxu0
  %5628 = vmatprep.mubr.bf16.mxu0 0
  %5629 = vmatmul.mubr.bf16.gmra.mrb[0].mxu0 %v5572
  %v5630 = vpop.f32.mrb[0].mxu0
  %v5631 = vadd.f32 0.0, %v5630
  %v5632 = vpop.f32.mrb[0].mxu0
  %v5633 = vpop.f32.mrb[0].mxu0
  %v5634 = vadd.f32 0.0, %v5633
  %v5635 = vpop.f32.mrb[0].mxu0
  %5636 = vmatprep.mubr.bf16.mxu0 0
  %5637 = vmatmul.mubr.bf16.gmra.mrb[0].mxu0 %v5575
  %v5638 = vpop.f32.mrb[0].mxu0
  %v5639 = vadd.f32 0.0, %v5638
  %v5640 = vpop.f32.mrb[0].mxu0
  %v5641 = vpop.f32.mrb[0].mxu0
  %v5642 = vadd.f32 0.0, %v5641
  %v5643 = vpop.f32.mrb[0].mxu0
  %5644 = vdwg.mxu0
  %v5645 = vpack.c.bf16 %v5367, %v5367
  %5647 = vrot.lane.b32.xlu0 %v4522, 64
  %v5648 = vpop.permute.xlu0 %5647
  %5650 = vxpose.xlu0.c.b16.start [1/8] %v5648, 128
  %5651 = vxpose.xlu0.c.b16.cont [2/8] 0, 128
  %5652 = vxpose.xlu0.c.b16.cont [3/8] 0, 128
  %5653 = vxpose.xlu0.c.b16.cont [4/8] 0, 128
  %5654 = vxpose.xlu0.c.b16.cont [5/8] 0, 128
  %5655 = vxpose.xlu0.c.b16.cont [6/8] 0, 128
  %5656 = vxpose.xlu0.c.b16.cont [7/8] 0, 128
  %5657 = vxpose.xlu0.c.b16.end [8/8] 0, 128
  %v5658 = vpop.trf.xlu0
  %v5659 = vpop.trf.xlu0
  %v5660 = vpop.trf.xlu0
  %v5661 = vpop.trf.xlu0
  %v5662 = vpop.trf.xlu0
  %v5663 = vpop.trf.xlu0
  %v5664 = vpop.trf.xlu0
  %v5665 = vpop.trf.xlu0
  %v5667 = vsel %vm4109, %v5658, 0
  %v5670 = vsel %vm4109, %v5659, 0
  %v5673 = vsel %vm4109, %v5660, 0
  %v5676 = vsel %vm4109, %v5661, 0
  %v5679 = vsel %vm4113, %v5645, 0
  %5681 = vmatprep.subr.bf16.mxu0 0
  %5682 = vmatpush1.bf16.msra.mxu0 %v5679
  %5683 = vmatprep.subr.bf16.mxu0 0
  %5684 = vmatpush1.bf16.msra.mxu0 0
  %5685 = vmatprep.subr.bf16.mxu0 0
  %5686 = vmatpush1.bf16.msra.mxu0 0
  %5687 = vmatprep.subr.bf16.mxu0 0
  %5688 = vmatpush1.bf16.msra.mxu0 0
  %5689 = vmatprep.subr.bf16.mxu0 0
  %5690 = vmatpush1.bf16.msra.mxu0 0
  %5691 = vmatprep.subr.bf16.mxu0 0
  %5692 = vmatpush1.bf16.msra.mxu0 0
  %5693 = vmatprep.subr.bf16.mxu0 0
  %5694 = vmatpush1.bf16.msra.mxu0 0
  %5695 = vmatprep.subr.bf16.mxu0 0
  %5696 = vmatpush1.bf16.msra.mxu0 0
  %5697 = vmatprep.subr.bf16.mxu0 0
  %5698 = vmatpush1.bf16.msra.mxu0 0
  %5699 = vmatprep.subr.bf16.mxu0 0
  %5700 = vmatpush1.bf16.msra.mxu0 0
  %5701 = vmatprep.subr.bf16.mxu0 0
  %5702 = vmatpush1.bf16.msra.mxu0 0
  %5703 = vmatprep.subr.bf16.mxu0 0
  %5704 = vmatpush1.bf16.msra.mxu0 0
  %5705 = vmatprep.subr.bf16.mxu0 0
  %5706 = vmatpush1.bf16.msra.mxu0 0
  %5707 = vmatprep.subr.bf16.mxu0 0
  %5708 = vmatpush1.bf16.msra.mxu0 0
  %5709 = vmatprep.subr.bf16.mxu0 0
  %5710 = vmatpush1.bf16.msra.mxu0 0
  %5711 = vmatprep.subr.bf16.mxu0 0
  %5712 = vmatpush1.bf16.msra.mxu0 0
  %5713 = vmatprep.mubr.bf16.mxu0 0
  %5714 = vmatmul.mubr.bf16.gmra.mrb[0].mxu0 %v5667
  %v5715 = vpop.f32.mrb[0].mxu0
  %v5716 = vadd.f32 0.0, %v5715
  %v5717 = vpop.f32.mrb[0].mxu0
  %v5718 = vpop.f32.mrb[0].mxu0
  %v5719 = vadd.f32 0.0, %v5718
  %v5720 = vpop.f32.mrb[0].mxu0
  %5721 = vmatprep.mubr.bf16.mxu0 0
  %5722 = vmatmul.mubr.bf16.gmra.mrb[0].mxu0 %v5670
  %v5723 = vpop.f32.mrb[0].mxu0
  %v5724 = vadd.f32 0.0, %v5723
  %v5725 = vpop.f32.mrb[0].mxu0
  %v5726 = vpop.f32.mrb[0].mxu0
  %v5727 = vadd.f32 0.0, %v5726
  %v5728 = vpop.f32.mrb[0].mxu0
  %5729 = vmatprep.mubr.bf16.mxu0 0
  %5730 = vmatmul.mubr.bf16.gmra.mrb[0].mxu0 %v5673
  %v5731 = vpop.f32.mrb[0].mxu0
  %v5732 = vadd.f32 0.0, %v5731
  %v5733 = vpop.f32.mrb[0].mxu0
  %v5734 = vpop.f32.mrb[0].mxu0
  %v5735 = vadd.f32 0.0, %v5734
  %v5736 = vpop.f32.mrb[0].mxu0
  %5737 = vmatprep.mubr.bf16.mxu0 0
  %5738 = vmatmul.mubr.bf16.gmra.mrb[0].mxu0 %v5676
  %v5739 = vpop.f32.mrb[0].mxu0
  %v5740 = vadd.f32 0.0, %v5739
  %v5741 = vpop.f32.mrb[0].mxu0
  %v5742 = vpop.f32.mrb[0].mxu0
  %v5743 = vadd.f32 0.0, %v5742
  %v5744 = vpop.f32.mrb[0].mxu0
  %5745 = vdwg.mxu0
  %v5746 = vsel %vm4173, %v5716, -inf
  %5747 = vmax.xlane.f32.xlu0 %v5746
  %v5748 = vpop.xlane.xlu0 %5747
  %v5749 = vsel %vm4173, %v5719, -inf
  %5750 = vmax.xlane.f32.xlu0 %v5749
  %v5751 = vpop.xlane.xlu0 %5750
  %v5752 = vsel %vm4173, %v5724, -inf
  %5753 = vmax.xlane.f32.xlu0 %v5752
  %v5754 = vpop.xlane.xlu0 %5753
  %v5755 = vsel %vm4173, %v5727, -inf
  %5756 = vmax.xlane.f32.xlu0 %v5755
  %v5757 = vpop.xlane.xlu0 %5756
  %v5758 = vsel %vm4173, %v5732, -inf
  %5759 = vmax.xlane.f32.xlu0 %v5758
  %v5760 = vpop.xlane.xlu0 %5759
  %v5761 = vsel %vm4173, %v5735, -inf
  %5762 = vmax.xlane.f32.xlu0 %v5761
  %v5763 = vpop.xlane.xlu0 %5762
  %v5764 = vsel %vm4173, %v5740, -inf
  %5765 = vmax.xlane.f32.xlu0 %v5764
  %v5766 = vpop.xlane.xlu0 %5765
  %v5767 = vsel %vm4173, %v5743, -inf
  %5768 = vmax.xlane.f32.xlu0 %v5767
  %v5769 = vpop.xlane.xlu0 %5768
  %v5770 = vsub.f32 %v5716, %v5748
  %v5771 = vsub.f32 %v5719, %v5751
  %v5772 = vsub.f32 %v5724, %v5754
  %v5773 = vsub.f32 %v5727, %v5757
  %v5774 = vsub.f32 %v5732, %v5760
  %v5775 = vsub.f32 %v5735, %v5763
  %v5776 = vsub.f32 %v5740, %v5766
  %v5777 = vsub.f32 %v5743, %v5769
  %v5778 = vmul.f32 %v5770, 1.442695
  %v5779 = vpow.pop %v5778
  %v5780 = vmul.f32 %v5771, 1.442695
  %v5781 = vpow.pop %v5780
  %v5782 = vmul.f32 %v5772, 1.442695
  %v5783 = vpow.pop %v5782
  %v5784 = vmul.f32 %v5773, 1.442695
  %v5785 = vpow.pop %v5784
  %v5786 = vmul.f32 %v5774, 1.442695
  %v5787 = vpow.pop %v5786
  %v5788 = vmul.f32 %v5775, 1.442695
  %v5789 = vpow.pop %v5788
  %v5790 = vmul.f32 %v5776, 1.442695
  %v5791 = vpow.pop %v5790
  %v5792 = vmul.f32 %v5777, 1.442695
  %v5793 = vpow.pop %v5792
  %v5794 = vsel %vm4173, %v5779, 0.0
  %5795 = vadd.xlane.f32.xlu0 %v5794
  %v5796 = vpop.xlane.xlu0 %5795
  %v5797 = vsel %vm4173, %v5781, 0.0
  %5798 = vadd.xlane.f32.xlu0 %v5797
  %v5799 = vpop.xlane.xlu0 %5798
  %v5800 = vsel %vm4173, %v5783, 0.0
  %5801 = vadd.xlane.f32.xlu0 %v5800
  %v5802 = vpop.xlane.xlu0 %5801
  %v5803 = vsel %vm4173, %v5785, 0.0
  %5804 = vadd.xlane.f32.xlu0 %v5803
  %v5805 = vpop.xlane.xlu0 %5804
  %v5806 = vsel %vm4173, %v5787, 0.0
  %5807 = vadd.xlane.f32.xlu0 %v5806
  %v5808 = vpop.xlane.xlu0 %5807
  %v5809 = vsel %vm4173, %v5789, 0.0
  %5810 = vadd.xlane.f32.xlu0 %v5809
  %v5811 = vpop.xlane.xlu0 %5810
  %v5812 = vsel %vm4173, %v5791, 0.0
  %5813 = vadd.xlane.f32.xlu0 %v5812
  %v5814 = vpop.xlane.xlu0 %5813
  %v5815 = vsel %vm4173, %v5793, 0.0
  %5816 = vadd.xlane.f32.xlu0 %v5815
  %v5817 = vpop.xlane.xlu0 %5816
  %v5818 = vrcp.pop %v5796
  %v5819 = vmul.f32 %v5779, %v5818
  %v5820 = vrcp.pop %v5799
  %v5821 = vmul.f32 %v5781, %v5820
  %v5822 = vrcp.pop %v5802
  %v5823 = vmul.f32 %v5783, %v5822
  %v5824 = vrcp.pop %v5805
  %v5825 = vmul.f32 %v5785, %v5824
  %v5826 = vrcp.pop %v5808
  %v5827 = vmul.f32 %v5787, %v5826
  %v5828 = vrcp.pop %v5811
  %v5829 = vmul.f32 %v5789, %v5828
  %v5830 = vrcp.pop %v5814
  %v5831 = vmul.f32 %v5791, %v5830
  %v5832 = vrcp.pop %v5817
  %v5833 = vmul.f32 %v5793, %v5832
  %v5834 = vpack.c.bf16 %v5618, %v5615
  %v5835 = vpack.c.bf16 %v5626, %v5623
  %v5836 = vpack.c.bf16 %v5634, %v5631
  %v5837 = vpack.c.bf16 %v5642, %v5639
  %v5838 = vpack.c.bf16 %v5821, %v5819
  %v5839 = vpack.c.bf16 %v5825, %v5823
  %v5840 = vpack.c.bf16 %v5829, %v5827
  %v5841 = vpack.c.bf16 %v5833, %v5831
  %5842 = vxpose.xlu0.c.b16.start [1/8] %v5834, 128
  %5843 = vxpose.xlu0.c.b16.cont [2/8] %v5835, 128
  %5844 = vxpose.xlu0.c.b16.cont [3/8] %v5836, 128
  %5845 = vxpose.xlu0.c.b16.cont [4/8] %v5837, 128
  %5846 = vxpose.xlu0.c.b16.cont [5/8] 0, 128
  %5847 = vxpose.xlu0.c.b16.cont [6/8] 0, 128
  %5848 = vxpose.xlu0.c.b16.cont [7/8] 0, 128
  %5849 = vxpose.xlu0.c.b16.end [8/8] 0, 128
  %v5850 = vpop.trf.xlu0
  %v5851 = vpop.trf.xlu0
  %v5852 = vpop.trf.xlu0
  %v5853 = vpop.trf.xlu0
  %v5854 = vpop.trf.xlu0
  %v5855 = vpop.trf.xlu0
  %v5856 = vpop.trf.xlu0
  %v5857 = vpop.trf.xlu0
  %v5859 = vsel %vm4173, %v5850, 0
  %v5862 = vsel %vm4173, %v5838, 0
  %v5865 = vsel %vm4173, %v5839, 0
  %v5868 = vsel %vm4173, %v5840, 0
  %v5871 = vsel %vm4173, %v5841, 0
  %5873 = vmatprep.subr.bf16.mxu0 0
  %5874 = vmatpush1.bf16.xpose.msra.mxu0 %v5862
  %5875 = vmatprep.subr.bf16.mxu0 0
  %5876 = vmatpush1.bf16.xpose.msra.mxu0 %v5865
  %5877 = vmatprep.subr.bf16.mxu0 0
  %5878 = vmatpush1.bf16.xpose.msra.mxu0 %v5868
  %5879 = vmatprep.subr.bf16.mxu0 0
  %5880 = vmatpush1.bf16.xpose.msra.mxu0 %v5871
  %5881 = vmatprep.subr.bf16.mxu0 0
  %5882 = vmatpush1.bf16.xpose.msra.mxu0 0
  %5883 = vmatprep.subr.bf16.mxu0 0
  %5884 = vmatpush1.bf16.xpose.msra.mxu0 0
  %5885 = vmatprep.subr.bf16.mxu0 0
  %5886 = vmatpush1.bf16.xpose.msra.mxu0 0
  %5887 = vmatprep.subr.bf16.mxu0 0
  %5888 = vmatpush1.bf16.xpose.msra.mxu0 0
  %5889 = vmatprep.subr.bf16.mxu0 0
  %5890 = vmatpush1.bf16.xpose.msra.mxu0 0
  %5891 = vmatprep.subr.bf16.mxu0 0
  %5892 = vmatpush1.bf16.xpose.msra.mxu0 0
  %5893 = vmatprep.subr.bf16.mxu0 0
  %5894 = vmatpush1.bf16.xpose.msra.mxu0 0
  %5895 = vmatprep.subr.bf16.mxu0 0
  %5896 = vmatpush1.bf16.xpose.msra.mxu0 0
  %5897 = vmatprep.subr.bf16.mxu0 0
  %5898 = vmatpush1.bf16.xpose.msra.mxu0 0
  %5899 = vmatprep.subr.bf16.mxu0 0
  %5900 = vmatpush1.bf16.xpose.msra.mxu0 0
  %5901 = vmatprep.subr.bf16.mxu0 0
  %5902 = vmatpush1.bf16.xpose.msra.mxu0 0
  %5903 = vmatprep.subr.bf16.mxu0 0
  %5904 = vmatpush1.bf16.xpose.msra.mxu0 0
  %5905 = vmatprep.mubr.bf16.mxu0 0
  %5906 = vmatmul.mubr.bf16.gmra.mrb[0].mxu0 %v5859
  %v5907 = vpop.f32.mrb[0].mxu0
  %v5908 = vadd.f32 0.0, %v5907
  %v5909 = vpop.f32.mrb[0].mxu0
  %v5910 = vpop.f32.mrb[0].mxu0
  %v5911 = vpop.f32.mrb[0].mxu0
  %5912 = vdwg.mxu0
  %5914 = vrot.lane.b32.xlu0 %v5908, 64
  %v5915 = vpop.permute.xlu0 %5914
  %vm5917 = vcmask 1043968
  %5918 = vst.msk [vmem:[%s13] sm:$0xf] %vm5917, %v5915
  %5919 = vrot.lane.b32.xlu0 %v4791, 64
  %v5920 = vpop.permute.xlu0 %5919
  %v5922 = vsel %vm4113, %v5920, 0
  %5924 = vmatprep.subr.bf16.mxu0 0
  %5925 = vmatpush1.bf16.msra.mxu0 %v5922
  %5926 = vmatprep.subr.bf16.mxu0 0
  %5927 = vmatpush1.bf16.msra.mxu0 0
  %5928 = vmatprep.subr.bf16.mxu0 0
  %5929 = vmatpush1.bf16.msra.mxu0 0
  %5930 = vmatprep.subr.bf16.mxu0 0
  %5931 = vmatpush1.bf16.msra.mxu0 0
  %5932 = vmatprep.subr.bf16.mxu0 0
  %5933 = vmatpush1.bf16.msra.mxu0 0
  %5934 = vmatprep.subr.bf16.mxu0 0
  %5935 = vmatpush1.bf16.msra.mxu0 0
  %5936 = vmatprep.subr.bf16.mxu0 0
  %5937 = vmatpush1.bf16.msra.mxu0 0
  %5938 = vmatprep.subr.bf16.mxu0 0
  %5939 = vmatpush1.bf16.msra.mxu0 0
  %5940 = vmatprep.subr.bf16.mxu0 0
  %5941 = vmatpush1.bf16.msra.mxu0 0
  %5942 = vmatprep.subr.bf16.mxu0 0
  %5943 = vmatpush1.bf16.msra.mxu0 0
  %5944 = vmatprep.subr.bf16.mxu0 0
  %5945 = vmatpush1.bf16.msra.mxu0 0
  %5946 = vmatprep.subr.bf16.mxu0 0
  %5947 = vmatpush1.bf16.msra.mxu0 0
  %5948 = vmatprep.subr.bf16.mxu0 0
  %5949 = vmatpush1.bf16.msra.mxu0 0
  %5950 = vmatprep.subr.bf16.mxu0 0
  %5951 = vmatpush1.bf16.msra.mxu0 0
  %5952 = vmatprep.subr.bf16.mxu0 0
  %5953 = vmatpush1.bf16.msra.mxu0 0
  %5954 = vmatprep.subr.bf16.mxu0 0
  %5955 = vmatpush1.bf16.msra.mxu0 0
  %5956 = vmatprep.mubr.bf16.mxu0 0
  %5957 = vmatmul.mubr.bf16.gmra.mrb[0].mxu0 %v5391
  %v5958 = vpop.f32.mrb[0].mxu0
  %v5959 = vadd.f32 0.0, %v5958
  %v5960 = vpop.f32.mrb[0].mxu0
  %v5961 = vpop.f32.mrb[0].mxu0
  %v5962 = vadd.f32 0.0, %v5961
  %v5963 = vpop.f32.mrb[0].mxu0
  %5964 = vmatprep.mubr.bf16.mxu0 0
  %5965 = vmatmul.mubr.bf16.gmra.mrb[0].mxu0 %v5394
  %v5966 = vpop.f32.mrb[0].mxu0
  %v5967 = vadd.f32 0.0, %v5966
  %v5968 = vpop.f32.mrb[0].mxu0
  %v5969 = vpop.f32.mrb[0].mxu0
  %v5970 = vadd.f32 0.0, %v5969
  %v5971 = vpop.f32.mrb[0].mxu0
  %5972 = vmatprep.mubr.bf16.mxu0 0
  %5973 = vmatmul.mubr.bf16.gmra.mrb[0].mxu0 %v5397
  %v5974 = vpop.f32.mrb[0].mxu0
  %v5975 = vadd.f32 0.0, %v5974
  %v5976 = vpop.f32.mrb[0].mxu0
  %v5977 = vpop.f32.mrb[0].mxu0
  %v5978 = vadd.f32 0.0, %v5977
  %v5979 = vpop.f32.mrb[0].mxu0
  %5980 = vmatprep.mubr.bf16.mxu0 0
  %5981 = vmatmul.mubr.bf16.gmra.mrb[0].mxu0 %v5400
  %v5982 = vpop.f32.mrb[0].mxu0
  %v5983 = vadd.f32 0.0, %v5982
  %v5984 = vpop.f32.mrb[0].mxu0
  %v5985 = vpop.f32.mrb[0].mxu0
  %v5986 = vadd.f32 0.0, %v5985
  %v5987 = vpop.f32.mrb[0].mxu0
  %5988 = vdwg.mxu0
  %v5989 = vsel %vm4173, %v5959, -inf
  %5990 = vmax.xlane.f32.xlu0 %v5989
  %v5991 = vpop.xlane.xlu0 %5990
  %v5992 = vsel %vm4173, %v5962, -inf
  %5993 = vmax.xlane.f32.xlu0 %v5992
  %v5994 = vpop.xlane.xlu0 %5993
  %v5995 = vsel %vm4173, %v5967, -inf
  %5996 = vmax.xlane.f32.xlu0 %v5995
  %v5997 = vpop.xlane.xlu0 %5996
  %v5998 = vsel %vm4173, %v5970, -inf
  %5999 = vmax.xlane.f32.xlu0 %v5998
  %v6000 = vpop.xlane.xlu0 %5999
  %v6001 = vsel %vm4173, %v5975, -inf
  %6002 = vmax.xlane.f32.xlu0 %v6001
  %v6003 = vpop.xlane.xlu0 %6002
  %v6004 = vsel %vm4173, %v5978, -inf
  %6005 = vmax.xlane.f32.xlu0 %v6004
  %v6006 = vpop.xlane.xlu0 %6005
  %v6007 = vsel %vm4173, %v5983, -inf
  %6008 = vmax.xlane.f32.xlu0 %v6007
  %v6009 = vpop.xlane.xlu0 %6008
  %v6010 = vsel %vm4173, %v5986, -inf
  %6011 = vmax.xlane.f32.xlu0 %v6010
  %v6012 = vpop.xlane.xlu0 %6011
  %v6013 = vsub.f32 %v5959, %v5991
  %v6014 = vsub.f32 %v5962, %v5994
  %v6015 = vsub.f32 %v5967, %v5997
  %v6016 = vsub.f32 %v5970, %v6000
  %v6017 = vsub.f32 %v5975, %v6003
  %v6018 = vsub.f32 %v5978, %v6006
  %v6019 = vsub.f32 %v5983, %v6009
  %v6020 = vsub.f32 %v5986, %v6012
  %v6021 = vmul.f32 %v6013, 1.442695
  %v6022 = vpow.pop %v6021
  %v6023 = vmul.f32 %v6014, 1.442695
  %v6024 = vpow.pop %v6023
  %v6025 = vmul.f32 %v6015, 1.442695
  %v6026 = vpow.pop %v6025
  %v6027 = vmul.f32 %v6016, 1.442695
  %v6028 = vpow.pop %v6027
  %v6029 = vmul.f32 %v6017, 1.442695
  %v6030 = vpow.pop %v6029
  %v6031 = vmul.f32 %v6018, 1.442695
  %v6032 = vpow.pop %v6031
  %v6033 = vmul.f32 %v6019, 1.442695
  %v6034 = vpow.pop %v6033
  %v6035 = vmul.f32 %v6020, 1.442695
  %v6036 = vpow.pop %v6035
  %v6037 = vsel %vm4173, %v6022, 0.0
  %6038 = vadd.xlane.f32.xlu0 %v6037
  %v6039 = vpop.xlane.xlu0 %6038
  %v6040 = vsel %vm4173, %v6024, 0.0
  %6041 = vadd.xlane.f32.xlu0 %v6040
  %v6042 = vpop.xlane.xlu0 %6041
  %v6043 = vsel %vm4173, %v6026, 0.0
  %6044 = vadd.xlane.f32.xlu0 %v6043
  %v6045 = vpop.xlane.xlu0 %6044
  %v6046 = vsel %vm4173, %v6028, 0.0
  %6047 = vadd.xlane.f32.xlu0 %v6046
  %v6048 = vpop.xlane.xlu0 %6047
  %v6049 = vsel %vm4173, %v6030, 0.0
  %6050 = vadd.xlane.f32.xlu0 %v6049
  %v6051 = vpop.xlane.xlu0 %6050
  %v6052 = vsel %vm4173, %v6032, 0.0
  %6053 = vadd.xlane.f32.xlu0 %v6052
  %v6054 = vpop.xlane.xlu0 %6053
  %v6055 = vsel %vm4173, %v6034, 0.0
  %6056 = vadd.xlane.f32.xlu0 %v6055
  %v6057 = vpop.xlane.xlu0 %6056
  %v6058 = vsel %vm4173, %v6036, 0.0
  %6059 = vadd.xlane.f32.xlu0 %v6058
  %v6060 = vpop.xlane.xlu0 %6059
  %v6061 = vrcp.pop %v6039
  %v6062 = vmul.f32 %v6022, %v6061
  %v6063 = vrcp.pop %v6042
  %v6064 = vmul.f32 %v6024, %v6063
  %v6065 = vrcp.pop %v6045
  %v6066 = vmul.f32 %v6026, %v6065
  %v6067 = vrcp.pop %v6048
  %v6068 = vmul.f32 %v6028, %v6067
  %v6069 = vrcp.pop %v6051
  %v6070 = vmul.f32 %v6030, %v6069
  %v6071 = vrcp.pop %v6054
  %v6072 = vmul.f32 %v6032, %v6071
  %v6073 = vrcp.pop %v6057
  %v6074 = vmul.f32 %v6034, %v6073
  %v6075 = vrcp.pop %v6060
  %v6076 = vmul.f32 %v6036, %v6075
  %v6077 = vpack.c.bf16 %v6064, %v6062
  %v6078 = vpack.c.bf16 %v6068, %v6066
  %v6079 = vpack.c.bf16 %v6072, %v6070
  %v6080 = vpack.c.bf16 %v6076, %v6074
  %6082 = vrot.lane.b32.xlu0 %v4952, 64
  %v6083 = vpop.permute.xlu0 %6082
  %v6085 = vsel %vm4173, %v6077, 0
  %v6088 = vsel %vm4173, %v6078, 0
  %v6091 = vsel %vm4173, %v6079, 0
  %v6094 = vsel %vm4173, %v6080, 0
  %v6097 = vsel %vm4173, %v6083, 0
  %6099 = vmatprep.subr.bf16.mxu0 0
  %6100 = vmatpush1.bf16.xpose.msra.mxu0 %v6097
  %6101 = vmatprep.subr.bf16.mxu0 0
  %6102 = vmatpush1.bf16.xpose.msra.mxu0 0
  %6103 = vmatprep.subr.bf16.mxu0 0
  %6104 = vmatpush1.bf16.xpose.msra.mxu0 0
  %6105 = vmatprep.subr.bf16.mxu0 0
  %6106 = vmatpush1.bf16.xpose.msra.mxu0 0
  %6107 = vmatprep.subr.bf16.mxu0 0
  %6108 = vmatpush1.bf16.xpose.msra.mxu0 0
  %6109 = vmatprep.subr.bf16.mxu0 0
  %6110 = vmatpush1.bf16.xpose.msra.mxu0 0
  %6111 = vmatprep.subr.bf16.mxu0 0
  %6112 = vmatpush1.bf16.xpose.msra.mxu0 0
  %6113 = vmatprep.subr.bf16.mxu0 0
  %6114 = vmatpush1.bf16.xpose.msra.mxu0 0
  %6115 = vmatprep.subr.bf16.mxu0 0
  %6116 = vmatpush1.bf16.xpose.msra.mxu0 0
  %6117 = vmatprep.subr.bf16.mxu0 0
  %6118 = vmatpush1.bf16.xpose.msra.mxu0 0
  %6119 = vmatprep.subr.bf16.mxu0 0
  %6120 = vmatpush1.bf16.xpose.msra.mxu0 0
  %6121 = vmatprep.subr.bf16.mxu0 0
  %6122 = vmatpush1.bf16.xpose.msra.mxu0 0
  %6123 = vmatprep.subr.bf16.mxu0 0
  %6124 = vmatpush1.bf16.xpose.msra.mxu0 0
  %6125 = vmatprep.subr.bf16.mxu0 0
  %6126 = vmatpush1.bf16.xpose.msra.mxu0 0
  %6127 = vmatprep.subr.bf16.mxu0 0
  %6128 = vmatpush1.bf16.xpose.msra.mxu0 0
  %6129 = vmatprep.subr.bf16.mxu0 0
  %6130 = vmatpush1.bf16.xpose.msra.mxu0 0
  %6131 = vmatprep.mubr.bf16.mxu0 0
  %6132 = vmatmul.mubr.bf16.gmra.mrb[0].mxu0 %v6085
  %v6133 = vpop.f32.mrb[0].mxu0
  %v6134 = vadd.f32 0.0, %v6133
  %v6135 = vpop.f32.mrb[0].mxu0
  %v6136 = vpop.f32.mrb[0].mxu0
  %v6137 = vadd.f32 0.0, %v6136
  %v6138 = vpop.f32.mrb[0].mxu0
  %6139 = vmatprep.mubr.bf16.mxu0 0
  %6140 = vmatmul.mubr.bf16.gmra.mrb[0].mxu0 %v6088
  %v6141 = vpop.f32.mrb[0].mxu0
  %v6142 = vadd.f32 0.0, %v6141
  %v6143 = vpop.f32.mrb[0].mxu0
  %v6144 = vpop.f32.mrb[0].mxu0
  %v6145 = vadd.f32 0.0, %v6144
  %v6146 = vpop.f32.mrb[0].mxu0
  %6147 = vmatprep.mubr.bf16.mxu0 0
  %6148 = vmatmul.mubr.bf16.gmra.mrb[0].mxu0 %v6091
  %v6149 = vpop.f32.mrb[0].mxu0
  %v6150 = vadd.f32 0.0, %v6149
  %v6151 = vpop.f32.mrb[0].mxu0
  %v6152 = vpop.f32.mrb[0].mxu0
  %v6153 = vadd.f32 0.0, %v6152
  %v6154 = vpop.f32.mrb[0].mxu0
  %6155 = vmatprep.mubr.bf16.mxu0 0
  %6156 = vmatmul.mubr.bf16.gmra.mrb[0].mxu0 %v6094
  %v6157 = vpop.f32.mrb[0].mxu0
  %v6158 = vadd.f32 0.0, %v6157
  %v6159 = vpop.f32.mrb[0].mxu0
  %v6160 = vpop.f32.mrb[0].mxu0
  %v6161 = vadd.f32 0.0, %v6160
  %v6162 = vpop.f32.mrb[0].mxu0
  %6163 = vdwg.mxu0
  %6165 = vrot.lane.b32.xlu0 %v5034, 64
  %v6166 = vpop.permute.xlu0 %6165
  %6168 = vxpose.xlu0.c.b16.start [1/8] %v6166, 128
  %6169 = vxpose.xlu0.c.b16.cont [2/8] 0, 128
  %6170 = vxpose.xlu0.c.b16.cont [3/8] 0, 128
  %6171 = vxpose.xlu0.c.b16.cont [4/8] 0, 128
  %6172 = vxpose.xlu0.c.b16.cont [5/8] 0, 128
  %6173 = vxpose.xlu0.c.b16.cont [6/8] 0, 128
  %6174 = vxpose.xlu0.c.b16.cont [7/8] 0, 128
  %6175 = vxpose.xlu0.c.b16.end [8/8] 0, 128
  %v6176 = vpop.trf.xlu0
  %v6177 = vpop.trf.xlu0
  %v6178 = vpop.trf.xlu0
  %v6179 = vpop.trf.xlu0
  %v6180 = vpop.trf.xlu0
  %v6181 = vpop.trf.xlu0
  %v6182 = vpop.trf.xlu0
  %v6183 = vpop.trf.xlu0
  %v6185 = vsel %vm4109, %v6176, 0
  %v6188 = vsel %vm4109, %v6177, 0
  %v6191 = vsel %vm4109, %v6178, 0
  %v6194 = vsel %vm4109, %v6179, 0
  %6196 = vmatprep.subr.bf16.mxu0 0
  %6197 = vmatpush1.bf16.msra.mxu0 %v5679
  %6198 = vmatprep.subr.bf16.mxu0 0
  %6199 = vmatpush1.bf16.msra.mxu0 0
  %6200 = vmatprep.subr.bf16.mxu0 0
  %6201 = vmatpush1.bf16.msra.mxu0 0
  %6202 = vmatprep.subr.bf16.mxu0 0
  %6203 = vmatpush1.bf16.msra.mxu0 0
  %6204 = vmatprep.subr.bf16.mxu0 0
  %6205 = vmatpush1.bf16.msra.mxu0 0
  %6206 = vmatprep.subr.bf16.mxu0 0
  %6207 = vmatpush1.bf16.msra.mxu0 0
  %6208 = vmatprep.subr.bf16.mxu0 0
  %6209 = vmatpush1.bf16.msra.mxu0 0
  %6210 = vmatprep.subr.bf16.mxu0 0
  %6211 = vmatpush1.bf16.msra.mxu0 0
  %6212 = vmatprep.subr.bf16.mxu0 0
  %6213 = vmatpush1.bf16.msra.mxu0 0
  %6214 = vmatprep.subr.bf16.mxu0 0
  %6215 = vmatpush1.bf16.msra.mxu0 0
  %6216 = vmatprep.subr.bf16.mxu0 0
  %6217 = vmatpush1.bf16.msra.mxu0 0
  %6218 = vmatprep.subr.bf16.mxu0 0
  %6219 = vmatpush1.bf16.msra.mxu0 0
  %6220 = vmatprep.subr.bf16.mxu0 0
  %6221 = vmatpush1.bf16.msra.mxu0 0
  %6222 = vmatprep.subr.bf16.mxu0 0
  %6223 = vmatpush1.bf16.msra.mxu0 0
  %6224 = vmatprep.subr.bf16.mxu0 0
  %6225 = vmatpush1.bf16.msra.mxu0 0
  %6226 = vmatprep.subr.bf16.mxu0 0
  %6227 = vmatpush1.bf16.msra.mxu0 0
  %6228 = vmatprep.mubr.bf16.mxu0 0
  %6229 = vmatmul.mubr.bf16.gmra.mrb[0].mxu0 %v6185
  %v6230 = vpop.f32.mrb[0].mxu0
  %v6231 = vadd.f32 0.0, %v6230
  %v6232 = vpop.f32.mrb[0].mxu0
  %v6233 = vpop.f32.mrb[0].mxu0
  %v6234 = vadd.f32 0.0, %v6233
  %v6235 = vpop.f32.mrb[0].mxu0
  %6236 = vmatprep.mubr.bf16.mxu0 0
  %6237 = vmatmul.mubr.bf16.gmra.mrb[0].mxu0 %v6188
  %v6238 = vpop.f32.mrb[0].mxu0
  %v6239 = vadd.f32 0.0, %v6238
  %v6240 = vpop.f32.mrb[0].mxu0
  %v6241 = vpop.f32.mrb[0].mxu0
  %v6242 = vadd.f32 0.0, %v6241
  %v6243 = vpop.f32.mrb[0].mxu0
  %6244 = vmatprep.mubr.bf16.mxu0 0
  %6245 = vmatmul.mubr.bf16.gmra.mrb[0].mxu0 %v6191
  %v6246 = vpop.f32.mrb[0].mxu0
  %v6247 = vadd.f32 0.0, %v6246
  %v6248 = vpop.f32.mrb[0].mxu0
  %v6249 = vpop.f32.mrb[0].mxu0
  %v6250 = vadd.f32 0.0, %v6249
  %v6251 = vpop.f32.mrb[0].mxu0
  %6252 = vmatprep.mubr.bf16.mxu0 0
  %6253 = vmatmul.mubr.bf16.gmra.mrb[0].mxu0 %v6194
  %v6254 = vpop.f32.mrb[0].mxu0
  %v6255 = vadd.f32 0.0, %v6254
  %v6256 = vpop.f32.mrb[0].mxu0
  %v6257 = vpop.f32.mrb[0].mxu0
  %v6258 = vadd.f32 0.0, %v6257
  %v6259 = vpop.f32.mrb[0].mxu0
  %6260 = vdwg.mxu0
  %v6261 = vsel %vm4173, %v6231, -inf
  %6262 = vmax.xlane.f32.xlu0 %v6261
  %v6263 = vpop.xlane.xlu0 %6262
  %v6264 = vsel %vm4173, %v6234, -inf
  %6265 = vmax.xlane.f32.xlu0 %v6264
  %v6266 = vpop.xlane.xlu0 %6265
  %v6267 = vsel %vm4173, %v6239, -inf
  %6268 = vmax.xlane.f32.xlu0 %v6267
  %v6269 = vpop.xlane.xlu0 %6268
  %v6270 = vsel %vm4173, %v6242, -inf
  %6271 = vmax.xlane.f32.xlu0 %v6270
  %v6272 = vpop.xlane.xlu0 %6271
  %v6273 = vsel %vm4173, %v6247, -inf
  %6274 = vmax.xlane.f32.xlu0 %v6273
  %v6275 = vpop.xlane.xlu0 %6274
  %v6276 = vsel %vm4173, %v6250, -inf
  %6277 = vmax.xlane.f32.xlu0 %v6276
  %v6278 = vpop.xlane.xlu0 %6277
  %v6279 = vsel %vm4173, %v6255, -inf
  %6280 = vmax.xlane.f32.xlu0 %v6279
  %v6281 = vpop.xlane.xlu0 %6280
  %v6282 = vsel %vm4173, %v6258, -inf
  %6283 = vmax.xlane.f32.xlu0 %v6282
  %v6284 = vpop.xlane.xlu0 %6283
  %v6285 = vsub.f32 %v6231, %v6263
  %v6286 = vsub.f32 %v6234, %v6266
  %v6287 = vsub.f32 %v6239, %v6269
  %v6288 = vsub.f32 %v6242, %v6272
  %v6289 = vsub.f32 %v6247, %v6275
  %v6290 = vsub.f32 %v6250, %v6278
  %v6291 = vsub.f32 %v6255, %v6281
  %v6292 = vsub.f32 %v6258, %v6284
  %v6293 = vmul.f32 %v6285, 1.442695
  %v6294 = vpow.pop %v6293
  %v6295 = vmul.f32 %v6286, 1.442695
  %v6296 = vpow.pop %v6295
  %v6297 = vmul.f32 %v6287, 1.442695
  %v6298 = vpow.pop %v6297
  %v6299 = vmul.f32 %v6288, 1.442695
  %v6300 = vpow.pop %v6299
  %v6301 = vmul.f32 %v6289, 1.442695
  %v6302 = vpow.pop %v6301
  %v6303 = vmul.f32 %v6290, 1.442695
  %v6304 = vpow.pop %v6303
  %v6305 = vmul.f32 %v6291, 1.442695
  %v6306 = vpow.pop %v6305
  %v6307 = vmul.f32 %v6292, 1.442695
  %v6308 = vpow.pop %v6307
  %v6309 = vsel %vm4173, %v6294, 0.0
  %6310 = vadd.xlane.f32.xlu0 %v6309
  %v6311 = vpop.xlane.xlu0 %6310
  %v6312 = vsel %vm4173, %v6296, 0.0
  %6313 = vadd.xlane.f32.xlu0 %v6312
  %v6314 = vpop.xlane.xlu0 %6313
  %v6315 = vsel %vm4173, %v6298, 0.0
  %6316 = vadd.xlane.f32.xlu0 %v6315
  %v6317 = vpop.xlane.xlu0 %6316
  %v6318 = vsel %vm4173, %v6300, 0.0
  %6319 = vadd.xlane.f32.xlu0 %v6318
  %v6320 = vpop.xlane.xlu0 %6319
  %v6321 = vsel %vm4173, %v6302, 0.0
  %6322 = vadd.xlane.f32.xlu0 %v6321
  %v6323 = vpop.xlane.xlu0 %6322
  %v6324 = vsel %vm4173, %v6304, 0.0
  %6325 = vadd.xlane.f32.xlu0 %v6324
  %v6326 = vpop.xlane.xlu0 %6325
  %v6327 = vsel %vm4173, %v6306, 0.0
  %6328 = vadd.xlane.f32.xlu0 %v6327
  %v6329 = vpop.xlane.xlu0 %6328
  %v6330 = vsel %vm4173, %v6308, 0.0
  %6331 = vadd.xlane.f32.xlu0 %v6330
  %v6332 = vpop.xlane.xlu0 %6331
  %v6333 = vrcp.pop %v6311
  %v6334 = vmul.f32 %v6294, %v6333
  %v6335 = vrcp.pop %v6314
  %v6336 = vmul.f32 %v6296, %v6335
  %v6337 = vrcp.pop %v6317
  %v6338 = vmul.f32 %v6298, %v6337
  %v6339 = vrcp.pop %v6320
  %v6340 = vmul.f32 %v6300, %v6339
  %v6341 = vrcp.pop %v6323
  %v6342 = vmul.f32 %v6302, %v6341
  %v6343 = vrcp.pop %v6326
  %v6344 = vmul.f32 %v6304, %v6343
  %v6345 = vrcp.pop %v6329
  %v6346 = vmul.f32 %v6306, %v6345
  %v6347 = vrcp.pop %v6332
  %v6348 = vmul.f32 %v6308, %v6347
  %v6349 = vpack.c.bf16 %v6137, %v6134
  %v6350 = vpack.c.bf16 %v6145, %v6142
  %v6351 = vpack.c.bf16 %v6153, %v6150
  %v6352 = vpack.c.bf16 %v6161, %v6158
  %v6353 = vpack.c.bf16 %v6336, %v6334
  %v6354 = vpack.c.bf16 %v6340, %v6338
  %v6355 = vpack.c.bf16 %v6344, %v6342
  %v6356 = vpack.c.bf16 %v6348, %v6346
  %6357 = vxpose.xlu0.c.b16.start [1/8] %v6349, 128
  %6358 = vxpose.xlu0.c.b16.cont [2/8] %v6350, 128
  %6359 = vxpose.xlu0.c.b16.cont [3/8] %v6351, 128
  %6360 = vxpose.xlu0.c.b16.cont [4/8] %v6352, 128
  %6361 = vxpose.xlu0.c.b16.cont [5/8] 0, 128
  %6362 = vxpose.xlu0.c.b16.cont [6/8] 0, 128
  %6363 = vxpose.xlu0.c.b16.cont [7/8] 0, 128
  %6364 = vxpose.xlu0.c.b16.end [8/8] 0, 128
  %v6365 = vpop.trf.xlu0
  %v6366 = vpop.trf.xlu0
  %v6367 = vpop.trf.xlu0
  %v6368 = vpop.trf.xlu0
  %v6369 = vpop.trf.xlu0
  %v6370 = vpop.trf.xlu0
  %v6371 = vpop.trf.xlu0
  %v6372 = vpop.trf.xlu0
  %v6374 = vsel %vm4173, %v6365, 0
  %v6377 = vsel %vm4173, %v6353, 0
  %v6380 = vsel %vm4173, %v6354, 0
  %v6383 = vsel %vm4173, %v6355, 0
  %v6386 = vsel %vm4173, %v6356, 0
  %6388 = vmatprep.subr.bf16.mxu0 0
  %6389 = vmatpush1.bf16.xpose.msra.mxu0 %v6377
  %6390 = vmatprep.subr.bf16.mxu0 0
  %6391 = vmatpush1.bf16.xpose.msra.mxu0 %v6380
  %6392 = vmatprep.subr.bf16.mxu0 0
  %6393 = vmatpush1.bf16.xpose.msra.mxu0 %v6383
  %6394 = vmatprep.subr.bf16.mxu0 0
  %6395 = vmatpush1.bf16.xpose.msra.mxu0 %v6386
  %6396 = vmatprep.subr.bf16.mxu0 0
  %6397 = vmatpush1.bf16.xpose.msra.mxu0 0
  %6398 = vmatprep.subr.bf16.mxu0 0
  %6399 = vmatpush1.bf16.xpose.msra.mxu0 0
  %6400 = vmatprep.subr.bf16.mxu0 0
  %6401 = vmatpush1.bf16.xpose.msra.mxu0 0
  %6402 = vmatprep.subr.bf16.mxu0 0
  %6403 = vmatpush1.bf16.xpose.msra.mxu0 0
  %6404 = vmatprep.subr.bf16.mxu0 0
  %6405 = vmatpush1.bf16.xpose.msra.mxu0 0
  %6406 = vmatprep.subr.bf16.mxu0 0
  %6407 = vmatpush1.bf16.xpose.msra.mxu0 0
  %6408 = vmatprep.subr.bf16.mxu0 0
  %6409 = vmatpush1.bf16.xpose.msra.mxu0 0
  %6410 = vmatprep.subr.bf16.mxu0 0
  %6411 = vmatpush1.bf16.xpose.msra.mxu0 0
  %6412 = vmatprep.subr.bf16.mxu0 0
  %6413 = vmatpush1.bf16.xpose.msra.mxu0 0
  %6414 = vmatprep.subr.bf16.mxu0 0
  %6415 = vmatpush1.bf16.xpose.msra.mxu0 0
  %6416 = vmatprep.subr.bf16.mxu0 0
  %6417 = vmatpush1.bf16.xpose.msra.mxu0 0
  %6418 = vmatprep.subr.bf16.mxu0 0
  %6419 = vmatpush1.bf16.xpose.msra.mxu0 0
  %6420 = vmatprep.mubr.bf16.mxu0 0
  %6421 = vmatmul.mubr.bf16.gmra.mrb[0].mxu0 %v6374
  %v6422 = vpop.f32.mrb[0].mxu0
  %v6423 = vadd.f32 0.0, %v6422
  %v6424 = vpop.f32.mrb[0].mxu0
  %v6425 = vpop.f32.mrb[0].mxu0
  %v6426 = vpop.f32.mrb[0].mxu0
  %6427 = vdwg.mxu0
  %6429 = vrot.lane.b32.xlu0 %v6423, 64
  %v6430 = vpop.permute.xlu0 %6429
  %6432 = vst.msk [vmem:[%s13 + $0x4] sm:$0xf] %vm5917, %v6430
  // Predicated region
  $region46: #{cbf_block.2} parent=0 // pred_check
    _
  $region47: #{cbf_block.2} parent=0 // pred_check_branch
    %6434 = sbr.rel (0) target = $region49
  $region48: #{cbf_block.2} parent=0 // pred_region
    _
  $region49: #{cbf_block.2} parent=0 // pred_fallthru
    _
  // Predicated region
  $region50: #{cbf_block.2} parent=0 // pred_check
    _
  $region51: #{cbf_block.2} parent=0 // pred_check_branch
    %6436 = sbr.rel (0) target = $region53
  $region52: #{cbf_block.2} parent=0 // pred_region
    _
  $region53: #{cbf_block.2} parent=0 // pred_fallthru
    _
  // Predicated region
  $region54: #{cbf_block.2} parent=0 // pred_check
    _
  $region55: #{cbf_block.2} parent=0 // pred_check_branch
    %6438 = sbr.rel (0) target = $region57
  $region56: #{cbf_block.2} parent=0 // pred_region
    _
  $region57: #{cbf_block.2} parent=0 // pred_fallthru
    _
  // Predicated region
  $region58: #{cbf_block.2} parent=0 // pred_check
    _
  $region59: #{cbf_block.2} parent=0 // pred_check_branch
    %6440 = sbr.rel (0) target = $region61
  $region60: #{cbf_block.2} parent=0 // pred_region
    _
  $region61: #{cbf_block.2} parent=0 // pred_fallthru
    _
  // Predicated region
  $region62: #{cbf_block.2} parent=0 // pred_check
    _
  $region63: #{cbf_block.2} parent=0 // pred_check_branch
    %6442 = sbr.rel (0) target = $region65
  $region64: #{cbf_block.2} parent=0 // pred_region
    _
  $region65: #{cbf_block.2} parent=0 // pred_fallthru
    _
  // Predicated region
  $region66: #{cbf_block.2} parent=0 // pred_check
    _
  $region67: #{cbf_block.2} parent=0 // pred_check_branch
    %6444 = sbr.rel (0) target = $region69
  $region68: #{cbf_block.2} parent=0 // pred_region
    _
  $region69: #{cbf_block.2} parent=0 // pred_fallthru
    _

</llo_original>
